<compile_context>
chip_gen: v5e
topology: v5e:2x2
jax: 0.10.0
libtpu: 0.0.40
codegen_flags: <defaults>
</compile_context>

<pallas_src>
import math

import jax
import jax.numpy as jnp
from jax.experimental import pallas as pl
from jax.experimental.pallas import tpu as pltpu

HIDDEN = 96
HPAD = 128                       # hidden padded to full lane width
GRU_LAYERS = 4
GRU_BATCH = 12                   # must be 12 (96*12 == 1152 input to the first Linear)
NPAD = 16                        # GRU batch padded to a sublane multiple
FEAT = 40                        # history_window_length
GC_DIMS = [HIDDEN * GRU_BATCH, 60, 52, 24, 10, 3]
GCPAD = 64                       # MLP intermediate lane padding


# ----------------------------- fused kernel ---------------------------------
def _fused_rnn_kernel(x_ref, wih_ref, whh_ref, bias_ref,
                      gcw1_ref, gcwr_ref, gcb_ref,
                      act_ref, hn_ref, res_ref, inter_ref):
    """4-layer GRU (padded batch NPAD, hidden HPAD, T steps) + MLP head, one call.

    x_ref    (T*NPAD, HPAD)            zero-padded input (feat 40->128, batch 12->16)
    wih_ref  (L, HPAD, 3*HPAD)         fused per-gate input weights  [r | z | n]
    whh_ref  (L, HPAD, 3*HPAD)         fused per-gate hidden weights [r | z | n]
    bias_ref (L, 2, 3*HPAD)            row0: b_ir+b_hr | b_iz+b_hz | b_in ; row1: 0|0|b_hn
    gcw1_ref (12*HPAD, GCPAD)          first Linear as 12 stacked (HPAD, GCPAD) blocks
    gcwr_ref (4*GCPAD, GCPAD)          Linears 2..5, each (GCPAD, GCPAD), stacked
    gcb_ref  (5, GCPAD)                MLP biases, lane-padded
    act_ref  (T*NPAD, HPAD)   out      last-layer activations (t-major)
    hn_ref   (L, NPAD, HPAD)  out      final hidden state per layer
    res_ref  (T, 3)           out      softmax head output
    inter_ref(T*NPAD, HPAD)   scratch  intermediate-layer activation slab
    """
    T = res_ref.shape[0]
    NP = NPAD
    HP = HPAD

    for layer in range(GRU_LAYERS):
        xin = x_ref[...] if layer == 0 else inter_ref[...]         # (T*NP, HP)
        wih = wih_ref[layer]                                       # (HP, 3*HP)
        whh = whh_ref[layer]                                       # (HP, 3*HP)
        b = bias_ref[layer]                                        # (2, 3*HP)
        b_gi = b[0:1, :]
        b_gh = b[1:2, :]

        # Hoisted, fused input-to-hidden matmul: one (T*NP, HP) @ (HP, 3*HP) per layer.
        gi = jnp.dot(xin, wih, preferred_element_type=jnp.float32) + b_gi

        # Intermediate layers write the scratch slab; only the last layer writes the
        # output ref (intermediate stores to an output buffer are wasted work).
        dst = act_ref if layer == GRU_LAYERS - 1 else inter_ref

        h = jnp.zeros((NP, HP), jnp.float32)
        for t in range(T):                                         # fully unrolled recurrence
            lo = t * NP
            # ONE fused hidden matmul per step; gate slices are 128-lane aligned.
            gh = jnp.dot(h, whh, preferred_element_type=jnp.float32) + b_gh
            gi_t = gi[lo:lo + NP, :]
            r = jax.nn.sigmoid(gi_t[:, 0:HP] + gh[:, 0:HP])
            z = jax.nn.sigmoid(gi_t[:, HP:2 * HP] + gh[:, HP:2 * HP])
            n = jnp.tanh(gi_t[:, 2 * HP:3 * HP] + r * gh[:, 2 * HP:3 * HP])
            h = (1.0 - z) * n + z * h
            dst[lo:lo + NP, :] = h                                 # full-lane (16,128) store
        hn_ref[layer] = h                                          # last-step hidden state

    # ------------- MLP head on out = reshape(temp_out, (T, 12*96)) -----------
    # out[:, n*96:(n+1)*96] == temp_out[:, n, :] == act[n::NPAD, :96], so the first
    # Linear is a sum of 12 matmuls over strided row-gathers of the activation slab.
    acc = jnp.zeros((T, GCPAD), jnp.float32)
    for nidx in range(GRU_BATCH):
        x_n = act_ref[pl.ds(nidx, T, stride=NP), :]                # (T, HP)
        acc = acc + jnp.dot(x_n, gcw1_ref[nidx * HP:(nidx + 1) * HP, :],
                            preferred_element_type=jnp.float32)
    h1 = jnp.maximum(acc + gcb_ref[0:1, :], 0.0)
    h2 = jnp.maximum(jnp.dot(h1, gcwr_ref[0:GCPAD, :],
                             preferred_element_type=jnp.float32) + gcb_ref[1:2, :], 0.0)
    h3 = jnp.maximum(jnp.dot(h2, gcwr_ref[GCPAD:2 * GCPAD, :],
                             preferred_element_type=jnp.float32) + gcb_ref[2:3, :], 0.0)
    h4 = jnp.maximum(jnp.dot(h3, gcwr_ref[2 * GCPAD:3 * GCPAD, :],
                             preferred_element_type=jnp.float32) + gcb_ref[3:4, :], 0.0)
    logits_full = jnp.dot(h4, gcwr_ref[3 * GCPAD:4 * GCPAD, :],
                          preferred_element_type=jnp.float32) + gcb_ref[4:5, :]
    logits = logits_full[:, :GC_DIMS[-1]]                          # (T, 3)

    m = jnp.max(logits, axis=1, keepdims=True)                     # exact softmax(dim=1)
    e = jnp.exp(logits - m)
    res_ref[...] = (e / jnp.sum(e, axis=1, keepdims=True)).astype(res_ref.dtype)


# ------------------------------- parameters ----------------------------------
def init_params(key):
    """Parameters in PyTorch layout: GRU w_ih (3H, D), w_hh (3H, H), biases (3H,);
    Linear w (out, in), b (out,). Gate order (r, z, n) as in nn.GRU."""
    params = {"gru": [], "gc": []}
    stdv = 1.0 / math.sqrt(HIDDEN)
    for layer in range(GRU_LAYERS):
        d_in = FEAT if layer == 0 else HIDDEN
        key, k1, k2, k3, k4 = jax.random.split(key, 5)
        w_ih = jax.random.uniform(k1, (3 * HIDDEN, d_in), jnp.float32, -stdv, stdv)
        w_hh = jax.random.uniform(k2, (3 * HIDDEN, HIDDEN), jnp.float32, -stdv, stdv)
        b_ih = jax.random.uniform(k3, (3 * HIDDEN,), jnp.float32, -stdv, stdv)
        b_hh = jax.random.uniform(k4, (3 * HIDDEN,), jnp.float32, -stdv, stdv)
        params["gru"].append((w_ih, w_hh, b_ih, b_hh))
    for d_in, d_out in zip(GC_DIMS[:-1], GC_DIMS[1:]):
        key, k1, k2 = jax.random.split(key, 3)
        bound = 1.0 / math.sqrt(d_in)
        w = jax.random.uniform(k1, (d_out, d_in), jnp.float32, -bound, bound)
        b = jax.random.uniform(k2, (d_out,), jnp.float32, -bound, bound)
        params["gc"].append((w, b))
    return params


def prepare_params(params):
    """One-time packing of PyTorch-layout weights into the kernel's 7 fused/padded
    operands. Runs once at init, NOT inside the jitted per-call forward."""
    H, HP = HIDDEN, HPAD

    def pad2(w, rows, cols):
        return jnp.pad(w, ((0, rows - w.shape[0]), (0, cols - w.shape[1])))

    wih_l, whh_l, bias_l = [], [], []
    for (w_ih, w_hh, b_ih, b_hh) in params["gru"]:
        # Per-gate (H,D)/(H,H) blocks, transposed, each gate zero-padded into its own
        # 128-lane block and concatenated -> (HP, 3*HP).
        wih = jnp.concatenate(
            [pad2(w_ih[g * H:(g + 1) * H].T, HP, HP) for g in range(3)], axis=1)
        whh = jnp.concatenate(
            [pad2(w_hh[g * H:(g + 1) * H].T, HP, HP) for g in range(3)], axis=1)
        padb = lambda v: jnp.pad(v, (0, HP - H))
        b_gi = jnp.concatenate([padb(b_ih[:H] + b_hh[:H]),
                                padb(b_ih[H:2 * H] + b_hh[H:2 * H]),
                                padb(b_ih[2 * H:])])
        b_gh = jnp.concatenate([jnp.zeros((2 * HP,), jnp.float32), padb(b_hh[2 * H:])])
        wih_l.append(wih)
        whh_l.append(whh)
        bias_l.append(jnp.stack([b_gi, b_gh]))

    (w1, b1), (w2, b2), (w3, b3), (w4, b4), (w5, b5) = params["gc"]
    gc_w1 = jnp.concatenate(
        [pad2(w1[:, n * H:(n + 1) * H].T, HP, GCPAD) for n in range(GRU_BATCH)], axis=0)
    gc_wrest = jnp.concatenate([pad2(w.T, GCPAD, GCPAD) for w in (w2, w3, w4, w5)], axis=0)
    gc_b = jnp.stack([jnp.pad(b, (0, GCPAD - b.shape[0])) for b in (b1, b2, b3, b4, b5)])

    return dict(wih=jnp.stack(wih_l),       # (4, 128, 384)
                whh=jnp.stack(whh_l),       # (4, 128, 384)
                bias=jnp.stack(bias_l),     # (4, 2, 384)
                gc_w1=gc_w1,                # (1536, 64)
                gc_wrest=gc_wrest,          # (256, 64)
                gc_b=gc_b)                  # (5, 64)


# --------------------------------- forward -----------------------------------
@jax.jit
def forward(prepped, x):
    """Matches testRNN.forward: returns (out (T,1152), hn (4,12,96), res (T,3))."""
    T = x.shape[0]
    # Pad GRU batch 12 -> 16 and features 40 -> 128 (zero rows/cols never contribute),
    # flatten t-major so all in-kernel sublane slices are 8-aligned.
    x_pad = jnp.pad(x, ((0, 0), (0, NPAD - GRU_BATCH), (0, HPAD - FEAT)))
    x_flat = x_pad.reshape(T * NPAD, HPAD)

    act, hn_pad, res = pl.pallas_call(
        _fused_rnn_kernel,
        out_shape=(
            jax.ShapeDtypeStruct((T * NPAD, HPAD), jnp.float32),          # last-layer acts
            jax.ShapeDtypeStruct((GRU_LAYERS, NPAD, HPAD), jnp.float32),  # hn (padded)
            jax.ShapeDtypeStruct((T, GC_DIMS[-1]), jnp.float32),          # softmax head
        ),
        scratch_shapes=[pltpu.VMEM((T * NPAD, HPAD), jnp.float32)],       # layer 0-2 acts
    )(x_flat, prepped["wih"], prepped["whh"], prepped["bias"],
      prepped["gc_w1"], prepped["gc_wrest"], prepped["gc_b"])

    temp_out = act.reshape(T, NPAD, HPAD)[:, :GRU_BATCH, :HIDDEN]         # (T, 12, 96)
    out = temp_out.reshape(T, GRU_BATCH * HIDDEN)                         # (T, 1152)
    hn = hn_pad[:, :GRU_BATCH, :HIDDEN]                                   # (4, 12, 96)
    return out, hn, res


# ------------------------- pure-JAX reference (XLA) ---------------------------
def _mm(a, b):
    return jnp.dot(a, b, precision=jax.lax.Precision.HIGHEST)


def reference_forward(params, x):
    T = x.shape[0]
    H = HIDDEN
    inp = x
    lasts = []
    for (w_ih, w_hh, b_ih, b_hh) in params["gru"]:
        h = jnp.zeros((inp.shape[1], H), jnp.float32)
        outs = []
        for t in range(T):
            gi = _mm(inp[t], w_ih.T) + b_ih
            gh = _mm(h, w_hh.T) + b_hh
            r = jax.nn.sigmoid(gi[:, :H] + gh[:, :H])
            z = jax.nn.sigmoid(gi[:, H:2 * H] + gh[:, H:2 * H])
            n = jnp.tanh(gi[:, 2 * H:] + r * gh[:, 2 * H:])
            h = (1.0 - z) * n + z * h
            outs.append(h)
        inp = jnp.stack(outs, axis=0)
        lasts.append(h)
    hn = jnp.stack(lasts, axis=0)
    out = inp.reshape(T, -1)
    a = out
    n_gc = len(params["gc"])
    for i, (w, b) in enumerate(params["gc"]):
        a = _mm(a, w.T) + b
        if i < n_gc - 1:
            a = jnp.maximum(a, 0.0)
    res = jax.nn.softmax(a, axis=1)
    return out, hn, res


if __name__ == "__main__":
    key = jax.random.PRNGKey(0)
    kx, kp = jax.random.split(key)
    T = 8  # x.shape[0] (the module calls it "batch_size"; it is the GRU seq dim)
    x = jax.random.normal(kx, (T, GRU_BATCH, FEAT), jnp.float32)
    params = init_params(kp)
    prepped = prepare_params(params)          # one-time weight packing (outside jit)

    out, hn, res = forward(prepped, x)
    jax.block_until_ready((out, hn, res))

    assert out.shape == (T, GRU_BATCH * HIDDEN)
    assert hn.shape == (GRU_LAYERS, GRU_BATCH, HIDDEN)
    assert res.shape == (T, GC_DIMS[-1])

    # Cross-check against a pure-JAX implementation of the same module.
    out_r, hn_r, res_r = jax.jit(reference_forward)(params, x)
    for name, a, b in (("out", out, out_r), ("hn", hn, hn_r), ("res", res, res_r)):
        err = float(jnp.max(jnp.abs(a - b)))
        assert err < 5e-3, f"{name} mismatch: max abs err {err}"

    print("KERNEL_OK")
</pallas_src>

<mosaic_0001>
module attributes {stable_mosaic.version = 11 : i64} {
  func.func @_fused_rnn_kernel(%arg0: memref<128x128xf32, #tpu.memory_space<vmem>>, %arg1: memref<4x128x384xf32, #tpu.memory_space<vmem>>, %arg2: memref<4x128x384xf32, #tpu.memory_space<vmem>>, %arg3: memref<4x2x384xf32, #tpu.memory_space<vmem>>, %arg4: memref<1536x64xf32, #tpu.memory_space<vmem>>, %arg5: memref<256x64xf32, #tpu.memory_space<vmem>>, %arg6: memref<5x64xf32, #tpu.memory_space<vmem>>, %arg7: memref<128x128xf32, #tpu.memory_space<vmem>>, %arg8: memref<4x16x128xf32, #tpu.memory_space<vmem>>, %arg9: memref<8x3xf32, #tpu.memory_space<vmem>>, %arg10: memref<128x128xf32, #tpu.memory_space<vmem>>) attributes {dimension_semantics = [], scalar_prefetch = 0 : i64, scratch_operands = 1 : i64, tpu.core_type = #tpu.core_type<tc>} {
    %c0 = arith.constant 0 : index
    %c0_0 = arith.constant 0 : index
    %0 = vector.load %arg0[%c0, %c0_0] : memref<128x128xf32, #tpu.memory_space<vmem>>, vector<128x128xf32>
    %c0_1 = arith.constant 0 : index
    %c0_2 = arith.constant 0 : index
    %c0_3 = arith.constant 0 : index
    %1 = vector.load %arg1[%c0_1, %c0_2, %c0_3] : memref<4x128x384xf32, #tpu.memory_space<vmem>>, vector<1x128x384xf32>
    %2 = vector.shape_cast %1 : vector<1x128x384xf32> to vector<128x384xf32>
    %c0_4 = arith.constant 0 : index
    %c0_5 = arith.constant 0 : index
    %c0_6 = arith.constant 0 : index
    %3 = vector.load %arg2[%c0_4, %c0_5, %c0_6] : memref<4x128x384xf32, #tpu.memory_space<vmem>>, vector<1x128x384xf32>
    %4 = vector.shape_cast %3 : vector<1x128x384xf32> to vector<128x384xf32>
    %c0_7 = arith.constant 0 : index
    %c0_8 = arith.constant 0 : index
    %c0_9 = arith.constant 0 : index
    %5 = vector.load %arg3[%c0_7, %c0_8, %c0_9] : memref<4x2x384xf32, #tpu.memory_space<vmem>>, vector<1x2x384xf32>
    %6 = vector.shape_cast %5 : vector<1x2x384xf32> to vector<2x384xf32>
    %7 = vector.extract_strided_slice %6 {offsets = [0, 0], sizes = [1, 384], strides = [1, 1]} : vector<2x384xf32> to vector<1x384xf32>
    %8 = vector.extract_strided_slice %6 {offsets = [1, 0], sizes = [1, 384], strides = [1, 1]} : vector<2x384xf32> to vector<1x384xf32>
    %cst = arith.constant dense<0.000000e+00> : vector<128x384xf32>
    %9 = tpu.matmul %0, %2, %cst {dimension_numbers = #tpu.dot_dimension_numbers<[1], [0], [0], [1], [0, 0, 1, 1], [], []>} : vector<128x128xf32>, vector<128x384xf32>, vector<128x384xf32> -> vector<128x384xf32>
    %10 = vector.broadcast %7 : vector<1x384xf32> to vector<128x384xf32>
    %11 = arith.addf %9, %10 : vector<128x384xf32>
    %cst_10 = arith.constant 0.000000e+00 : f32
    %12 = vector.broadcast %cst_10 : f32 to vector<16x128xf32>
    %cst_11 = arith.constant dense<0.000000e+00> : vector<16x384xf32>
    %13 = tpu.matmul %12, %4, %cst_11 {dimension_numbers = #tpu.dot_dimension_numbers<[1], [0], [0], [1], [0, 0, 1, 1], [], []>} : vector<16x128xf32>, vector<128x384xf32>, vector<16x384xf32> -> vector<16x384xf32>
    %14 = vector.broadcast %8 : vector<1x384xf32> to vector<16x384xf32>
    %15 = arith.addf %13, %14 : vector<16x384xf32>
    %16 = vector.extract_strided_slice %11 {offsets = [0, 0], sizes = [16, 384], strides = [1, 1]} : vector<128x384xf32> to vector<16x384xf32>
    %17 = vector.extract_strided_slice %16 {offsets = [0, 0], sizes = [16, 128], strides = [1, 1]} : vector<16x384xf32> to vector<16x128xf32>
    %18 = vector.extract_strided_slice %15 {offsets = [0, 0], sizes = [16, 128], strides = [1, 1]} : vector<16x384xf32> to vector<16x128xf32>
    %19 = arith.addf %17, %18 : vector<16x128xf32>
    %20 = arith.negf %19 : vector<16x128xf32>
    %21 = math.exp %20 : vector<16x128xf32>
    %cst_12 = arith.constant 1.000000e+00 : f32
    %22 = vector.broadcast %cst_12 : f32 to vector<16x128xf32>
    %23 = arith.addf %22, %21 : vector<16x128xf32>
    %24 = arith.divf %22, %23 : vector<16x128xf32>
    %25 = vector.extract_strided_slice %16 {offsets = [0, 128], sizes = [16, 128], strides = [1, 1]} : vector<16x384xf32> to vector<16x128xf32>
    %26 = vector.extract_strided_slice %15 {offsets = [0, 128], sizes = [16, 128], strides = [1, 1]} : vector<16x384xf32> to vector<16x128xf32>
    %27 = arith.addf %25, %26 : vector<16x128xf32>
    %28 = arith.negf %27 : vector<16x128xf32>
    %29 = math.exp %28 : vector<16x128xf32>
    %cst_13 = arith.constant 1.000000e+00 : f32
    %30 = vector.broadcast %cst_13 : f32 to vector<16x128xf32>
    %31 = arith.addf %30, %29 : vector<16x128xf32>
    %32 = arith.divf %30, %31 : vector<16x128xf32>
    %33 = vector.extract_strided_slice %16 {offsets = [0, 256], sizes = [16, 128], strides = [1, 1]} : vector<16x384xf32> to vector<16x128xf32>
    %34 = vector.extract_strided_slice %15 {offsets = [0, 256], sizes = [16, 128], strides = [1, 1]} : vector<16x384xf32> to vector<16x128xf32>
    %35 = arith.mulf %24, %34 : vector<16x128xf32>
    %36 = arith.addf %33, %35 : vector<16x128xf32>
    %37 = math.tanh %36 : vector<16x128xf32>
    %cst_14 = arith.constant 1.000000e+00 : f32
    %38 = vector.broadcast %cst_14 : f32 to vector<16x128xf32>
    %39 = arith.subf %38, %32 : vector<16x128xf32>
    %40 = arith.mulf %39, %37 : vector<16x128xf32>
    %41 = arith.mulf %32, %12 : vector<16x128xf32>
    %42 = arith.addf %40, %41 : vector<16x128xf32>
    %c0_15 = arith.constant 0 : index
    %c0_16 = arith.constant 0 : index
    %43 = vector.load %arg10[%c0_15, %c0_16] : memref<128x128xf32, #tpu.memory_space<vmem>>, vector<16x128xf32>
    tpu.vector_store %arg10[%c0_15, %c0_16], %42 {strides = array<i32>} : memref<128x128xf32, #tpu.memory_space<vmem>>, vector<16x128xf32>,
    %cst_17 = arith.constant dense<0.000000e+00> : vector<16x384xf32>
    %44 = tpu.matmul %42, %4, %cst_17 {dimension_numbers = #tpu.dot_dimension_numbers<[1], [0], [0], [1], [0, 0, 1, 1], [], []>} : vector<16x128xf32>, vector<128x384xf32>, vector<16x384xf32> -> vector<16x384xf32>
    %45 = vector.broadcast %8 : vector<1x384xf32> to vector<16x384xf32>
    %46 = arith.addf %44, %45 : vector<16x384xf32>
    %47 = vector.extract_strided_slice %11 {offsets = [16, 0], sizes = [16, 384], strides = [1, 1]} : vector<128x384xf32> to vector<16x384xf32>
    %48 = vector.extract_strided_slice %47 {offsets = [0, 0], sizes = [16, 128], strides = [1, 1]} : vector<16x384xf32> to vector<16x128xf32>
    %49 = vector.extract_strided_slice %46 {offsets = [0, 0], sizes = [16, 128], strides = [1, 1]} : vector<16x384xf32> to vector<16x128xf32>
    %50 = arith.addf %48, %49 : vector<16x128xf32>
    %51 = arith.negf %50 : vector<16x128xf32>
    %52 = math.exp %51 : vector<16x128xf32>
    %cst_18 = arith.constant 1.000000e+00 : f32
    %53 = vector.broadcast %cst_18 : f32 to vector<16x128xf32>
    %54 = arith.addf %53, %52 : vector<16x128xf32>
    %55 = arith.divf %53, %54 : vector<16x128xf32>
    %56 = vector.extract_strided_slice %47 {offsets = [0, 128], sizes = [16, 128], strides = [1, 1]} : vector<16x384xf32> to vector<16x128xf32>
    %57 = vector.extract_strided_slice %46 {offsets = [0, 128], sizes = [16, 128], strides = [1, 1]} : vector<16x384xf32> to vector<16x128xf32>
    %58 = arith.addf %56, %57 : vector<16x128xf32>
    %59 = arith.negf %58 : vector<16x128xf32>
    %60 = math.exp %59 : vector<16x128xf32>
    %cst_19 = arith.constant 1.000000e+00 : f32
    %61 = vector.broadcast %cst_19 : f32 to vector<16x128xf32>
    %62 = arith.addf %61, %60 : vector<16x128xf32>
    %63 = arith.divf %61, %62 : vector<16x128xf32>
    %64 = vector.extract_strided_slice %47 {offsets = [0, 256], sizes = [16, 128], strides = [1, 1]} : vector<16x384xf32> to vector<16x128xf32>
    %65 = vector.extract_strided_slice %46 {offsets = [0, 256], sizes = [16, 128], strides = [1, 1]} : vector<16x384xf32> to vector<16x128xf32>
    %66 = arith.mulf %55, %65 : vector<16x128xf32>
    %67 = arith.addf %64, %66 : vector<16x128xf32>
    %68 = math.tanh %67 : vector<16x128xf32>
    %cst_20 = arith.constant 1.000000e+00 : f32
    %69 = vector.broadcast %cst_20 : f32 to vector<16x128xf32>
    %70 = arith.subf %69, %63 : vector<16x128xf32>
    %71 = arith.mulf %70, %68 : vector<16x128xf32>
    %72 = arith.mulf %63, %42 : vector<16x128xf32>
    %73 = arith.addf %71, %72 : vector<16x128xf32>
    %c16 = arith.constant 16 : index
    %c0_21 = arith.constant 0 : index
    %74 = vector.load %arg10[%c16, %c0_21] : memref<128x128xf32, #tpu.memory_space<vmem>>, vector<16x128xf32>
    tpu.vector_store %arg10[%c16, %c0_21], %73 {strides = array<i32>} : memref<128x128xf32, #tpu.memory_space<vmem>>, vector<16x128xf32>,
    %cst_22 = arith.constant dense<0.000000e+00> : vector<16x384xf32>
    %75 = tpu.matmul %73, %4, %cst_22 {dimension_numbers = #tpu.dot_dimension_numbers<[1], [0], [0], [1], [0, 0, 1, 1], [], []>} : vector<16x128xf32>, vector<128x384xf32>, vector<16x384xf32> -> vector<16x384xf32>
    %76 = vector.broadcast %8 : vector<1x384xf32> to vector<16x384xf32>
    %77 = arith.addf %75, %76 : vector<16x384xf32>
    %78 = vector.extract_strided_slice %11 {offsets = [32, 0], sizes = [16, 384], strides = [1, 1]} : vector<128x384xf32> to vector<16x384xf32>
    %79 = vector.extract_strided_slice %78 {offsets = [0, 0], sizes = [16, 128], strides = [1, 1]} : vector<16x384xf32> to vector<16x128xf32>
    %80 = vector.extract_strided_slice %77 {offsets = [0, 0], sizes = [16, 128], strides = [1, 1]} : vector<16x384xf32> to vector<16x128xf32>
    %81 = arith.addf %79, %80 : vector<16x128xf32>
    %82 = arith.negf %81 : vector<16x128xf32>
    %83 = math.exp %82 : vector<16x128xf32>
    %cst_23 = arith.constant 1.000000e+00 : f32
    %84 = vector.broadcast %cst_23 : f32 to vector<16x128xf32>
    %85 = arith.addf %84, %83 : vector<16x128xf32>
    %86 = arith.divf %84, %85 : vector<16x128xf32>
    %87 = vector.extract_strided_slice %78 {offsets = [0, 128], sizes = [16, 128], strides = [1, 1]} : vector<16x384xf32> to vector<16x128xf32>
    %88 = vector.extract_strided_slice %77 {offsets = [0, 128], sizes = [16, 128], strides = [1, 1]} : vector<16x384xf32> to vector<16x128xf32>
    %89 = arith.addf %87, %88 : vector<16x128xf32>
    %90 = arith.negf %89 : vector<16x128xf32>
    %91 = math.exp %90 : vector<16x128xf32>
    %cst_24 = arith.constant 1.000000e+00 : f32
    %92 = vector.broadcast %cst_24 : f32 to vector<16x128xf32>
    %93 = arith.addf %92, %91 : vector<16x128xf32>
    %94 = arith.divf %92, %93 : vector<16x128xf32>
    %95 = vector.extract_strided_slice %78 {offsets = [0, 256], sizes = [16, 128], strides = [1, 1]} : vector<16x384xf32> to vector<16x128xf32>
    %96 = vector.extract_strided_slice %77 {offsets = [0, 256], sizes = [16, 128], strides = [1, 1]} : vector<16x384xf32> to vector<16x128xf32>
    %97 = arith.mulf %86, %96 : vector<16x128xf32>
    %98 = arith.addf %95, %97 : vector<16x128xf32>
    %99 = math.tanh %98 : vector<16x128xf32>
    %cst_25 = arith.constant 1.000000e+00 : f32
    %100 = vector.broadcast %cst_25 : f32 to vector<16x128xf32>
    %101 = arith.subf %100, %94 : vector<16x128xf32>
    %102 = arith.mulf %101, %99 : vector<16x128xf32>
    %103 = arith.mulf %94, %73 : vector<16x128xf32>
    %104 = arith.addf %102, %103 : vector<16x128xf32>
    %c32 = arith.constant 32 : index
    %c0_26 = arith.constant 0 : index
    %105 = vector.load %arg10[%c32, %c0_26] : memref<128x128xf32, #tpu.memory_space<vmem>>, vector<16x128xf32>
    tpu.vector_store %arg10[%c32, %c0_26], %104 {strides = array<i32>} : memref<128x128xf32, #tpu.memory_space<vmem>>, vector<16x128xf32>,
    %cst_27 = arith.constant dense<0.000000e+00> : vector<16x384xf32>
    %106 = tpu.matmul %104, %4, %cst_27 {dimension_numbers = #tpu.dot_dimension_numbers<[1], [0], [0], [1], [0, 0, 1, 1], [], []>} : vector<16x128xf32>, vector<128x384xf32>, vector<16x384xf32> -> vector<16x384xf32>
    %107 = vector.broadcast %8 : vector<1x384xf32> to vector<16x384xf32>
    %108 = arith.addf %106, %107 : vector<16x384xf32>
    %109 = vector.extract_strided_slice %11 {offsets = [48, 0], sizes = [16, 384], strides = [1, 1]} : vector<128x384xf32> to vector<16x384xf32>
    %110 = vector.extract_strided_slice %109 {offsets = [0, 0], sizes = [16, 128], strides = [1, 1]} : vector<16x384xf32> to vector<16x128xf32>
    %111 = vector.extract_strided_slice %108 {offsets = [0, 0], sizes = [16, 128], strides = [1, 1]} : vector<16x384xf32> to vector<16x128xf32>
    %112 = arith.addf %110, %111 : vector<16x128xf32>
    %113 = arith.negf %112 : vector<16x128xf32>
    %114 = math.exp %113 : vector<16x128xf32>
    %cst_28 = arith.constant 1.000000e+00 : f32
    %115 = vector.broadcast %cst_28 : f32 to vector<16x128xf32>
    %116 = arith.addf %115, %114 : vector<16x128xf32>
    %117 = arith.divf %115, %116 : vector<16x128xf32>
    %118 = vector.extract_strided_slice %109 {offsets = [0, 128], sizes = [16, 128], strides = [1, 1]} : vector<16x384xf32> to vector<16x128xf32>
    %119 = vector.extract_strided_slice %108 {offsets = [0, 128], sizes = [16, 128], strides = [1, 1]} : vector<16x384xf32> to vector<16x128xf32>
    %120 = arith.addf %118, %119 : vector<16x128xf32>
    %121 = arith.negf %120 : vector<16x128xf32>
    %122 = math.exp %121 : vector<16x128xf32>
    %cst_29 = arith.constant 1.000000e+00 : f32
    %123 = vector.broadcast %cst_29 : f32 to vector<16x128xf32>
    %124 = arith.addf %123, %122 : vector<16x128xf32>
    %125 = arith.divf %123, %124 : vector<16x128xf32>
    %126 = vector.extract_strided_slice %109 {offsets = [0, 256], sizes = [16, 128], strides = [1, 1]} : vector<16x384xf32> to vector<16x128xf32>
    %127 = vector.extract_strided_slice %108 {offsets = [0, 256], sizes = [16, 128], strides = [1, 1]} : vector<16x384xf32> to vector<16x128xf32>
    %128 = arith.mulf %117, %127 : vector<16x128xf32>
    %129 = arith.addf %126, %128 : vector<16x128xf32>
    %130 = math.tanh %129 : vector<16x128xf32>
    %cst_30 = arith.constant 1.000000e+00 : f32
    %131 = vector.broadcast %cst_30 : f32 to vector<16x128xf32>
    %132 = arith.subf %131, %125 : vector<16x128xf32>
    %133 = arith.mulf %132, %130 : vector<16x128xf32>
    %134 = arith.mulf %125, %104 : vector<16x128xf32>
    %135 = arith.addf %133, %134 : vector<16x128xf32>
    %c48 = arith.constant 48 : index
    %c0_31 = arith.constant 0 : index
    %136 = vector.load %arg10[%c48, %c0_31] : memref<128x128xf32, #tpu.memory_space<vmem>>, vector<16x128xf32>
    tpu.vector_store %arg10[%c48, %c0_31], %135 {strides = array<i32>} : memref<128x128xf32, #tpu.memory_space<vmem>>, vector<16x128xf32>,
    %cst_32 = arith.constant dense<0.000000e+00> : vector<16x384xf32>
    %137 = tpu.matmul %135, %4, %cst_32 {dimension_numbers = #tpu.dot_dimension_numbers<[1], [0], [0], [1], [0, 0, 1, 1], [], []>} : vector<16x128xf32>, vector<128x384xf32>, vector<16x384xf32> -> vector<16x384xf32>
    %138 = vector.broadcast %8 : vector<1x384xf32> to vector<16x384xf32>
    %139 = arith.addf %137, %138 : vector<16x384xf32>
    %140 = vector.extract_strided_slice %11 {offsets = [64, 0], sizes = [16, 384], strides = [1, 1]} : vector<128x384xf32> to vector<16x384xf32>
    %141 = vector.extract_strided_slice %140 {offsets = [0, 0], sizes = [16, 128], strides = [1, 1]} : vector<16x384xf32> to vector<16x128xf32>
    %142 = vector.extract_strided_slice %139 {offsets = [0, 0], sizes = [16, 128], strides = [1, 1]} : vector<16x384xf32> to vector<16x128xf32>
    %143 = arith.addf %141, %142 : vector<16x128xf32>
    %144 = arith.negf %143 : vector<16x128xf32>
    %145 = math.exp %144 : vector<16x128xf32>
    %cst_33 = arith.constant 1.000000e+00 : f32
    %146 = vector.broadcast %cst_33 : f32 to vector<16x128xf32>
    %147 = arith.addf %146, %145 : vector<16x128xf32>
    %148 = arith.divf %146, %147 : vector<16x128xf32>
    %149 = vector.extract_strided_slice %140 {offsets = [0, 128], sizes = [16, 128], strides = [1, 1]} : vector<16x384xf32> to vector<16x128xf32>
    %150 = vector.extract_strided_slice %139 {offsets = [0, 128], sizes = [16, 128], strides = [1, 1]} : vector<16x384xf32> to vector<16x128xf32>
    %151 = arith.addf %149, %150 : vector<16x128xf32>
    %152 = arith.negf %151 : vector<16x128xf32>
    %153 = math.exp %152 : vector<16x128xf32>
    %cst_34 = arith.constant 1.000000e+00 : f32
    %154 = vector.broadcast %cst_34 : f32 to vector<16x128xf32>
    %155 = arith.addf %154, %153 : vector<16x128xf32>
    %156 = arith.divf %154, %155 : vector<16x128xf32>
    %157 = vector.extract_strided_slice %140 {offsets = [0, 256], sizes = [16, 128], strides = [1, 1]} : vector<16x384xf32> to vector<16x128xf32>
    %158 = vector.extract_strided_slice %139 {offsets = [0, 256], sizes = [16, 128], strides = [1, 1]} : vector<16x384xf32> to vector<16x128xf32>
    %159 = arith.mulf %148, %158 : vector<16x128xf32>
    %160 = arith.addf %157, %159 : vector<16x128xf32>
    %161 = math.tanh %160 : vector<16x128xf32>
    %cst_35 = arith.constant 1.000000e+00 : f32
    %162 = vector.broadcast %cst_35 : f32 to vector<16x128xf32>
    %163 = arith.subf %162, %156 : vector<16x128xf32>
    %164 = arith.mulf %163, %161 : vector<16x128xf32>
    %165 = arith.mulf %156, %135 : vector<16x128xf32>
    %166 = arith.addf %164, %165 : vector<16x128xf32>
    %c64 = arith.constant 64 : index
    %c0_36 = arith.constant 0 : index
    %167 = vector.load %arg10[%c64, %c0_36] : memref<128x128xf32, #tpu.memory_space<vmem>>, vector<16x128xf32>
    tpu.vector_store %arg10[%c64, %c0_36], %166 {strides = array<i32>} : memref<128x128xf32, #tpu.memory_space<vmem>>, vector<16x128xf32>,
    %cst_37 = arith.constant dense<0.000000e+00> : vector<16x384xf32>
    %168 = tpu.matmul %166, %4, %cst_37 {dimension_numbers = #tpu.dot_dimension_numbers<[1], [0], [0], [1], [0, 0, 1, 1], [], []>} : vector<16x128xf32>, vector<128x384xf32>, vector<16x384xf32> -> vector<16x384xf32>
    %169 = vector.broadcast %8 : vector<1x384xf32> to vector<16x384xf32>
    %170 = arith.addf %168, %169 : vector<16x384xf32>
    %171 = vector.extract_strided_slice %11 {offsets = [80, 0], sizes = [16, 384], strides = [1, 1]} : vector<128x384xf32> to vector<16x384xf32>
    %172 = vector.extract_strided_slice %171 {offsets = [0, 0], sizes = [16, 128], strides = [1, 1]} : vector<16x384xf32> to vector<16x128xf32>
    %173 = vector.extract_strided_slice %170 {offsets = [0, 0], sizes = [16, 128], strides = [1, 1]} : vector<16x384xf32> to vector<16x128xf32>
    %174 = arith.addf %172, %173 : vector<16x128xf32>
    %175 = arith.negf %174 : vector<16x128xf32>
    %176 = math.exp %175 : vector<16x128xf32>
    %cst_38 = arith.constant 1.000000e+00 : f32
    %177 = vector.broadcast %cst_38 : f32 to vector<16x128xf32>
    %178 = arith.addf %177, %176 : vector<16x128xf32>
    %179 = arith.divf %177, %178 : vector<16x128xf32>
    %180 = vector.extract_strided_slice %171 {offsets = [0, 128], sizes = [16, 128], strides = [1, 1]} : vector<16x384xf32> to vector<16x128xf32>
    %181 = vector.extract_strided_slice %170 {offsets = [0, 128], sizes = [16, 128], strides = [1, 1]} : vector<16x384xf32> to vector<16x128xf32>
    %182 = arith.addf %180, %181 : vector<16x128xf32>
    %183 = arith.negf %182 : vector<16x128xf32>
    %184 = math.exp %183 : vector<16x128xf32>
    %cst_39 = arith.constant 1.000000e+00 : f32
    %185 = vector.broadcast %cst_39 : f32 to vector<16x128xf32>
    %186 = arith.addf %185, %184 : vector<16x128xf32>
    %187 = arith.divf %185, %186 : vector<16x128xf32>
    %188 = vector.extract_strided_slice %171 {offsets = [0, 256], sizes = [16, 128], strides = [1, 1]} : vector<16x384xf32> to vector<16x128xf32>
    %189 = vector.extract_strided_slice %170 {offsets = [0, 256], sizes = [16, 128], strides = [1, 1]} : vector<16x384xf32> to vector<16x128xf32>
    %190 = arith.mulf %179, %189 : vector<16x128xf32>
    %191 = arith.addf %188, %190 : vector<16x128xf32>
    %192 = math.tanh %191 : vector<16x128xf32>
    %cst_40 = arith.constant 1.000000e+00 : f32
    %193 = vector.broadcast %cst_40 : f32 to vector<16x128xf32>
    %194 = arith.subf %193, %187 : vector<16x128xf32>
    %195 = arith.mulf %194, %192 : vector<16x128xf32>
    %196 = arith.mulf %187, %166 : vector<16x128xf32>
    %197 = arith.addf %195, %196 : vector<16x128xf32>
    %c80 = arith.constant 80 : index
    %c0_41 = arith.constant 0 : index
    %198 = vector.load %arg10[%c80, %c0_41] : memref<128x128xf32, #tpu.memory_space<vmem>>, vector<16x128xf32>
    tpu.vector_store %arg10[%c80, %c0_41], %197 {strides = array<i32>} : memref<128x128xf32, #tpu.memory_space<vmem>>, vector<16x128xf32>,
    %cst_42 = arith.constant dense<0.000000e+00> : vector<16x384xf32>
    %199 = tpu.matmul %197, %4, %cst_42 {dimension_numbers = #tpu.dot_dimension_numbers<[1], [0], [0], [1], [0, 0, 1, 1], [], []>} : vector<16x128xf32>, vector<128x384xf32>, vector<16x384xf32> -> vector<16x384xf32>
    %200 = vector.broadcast %8 : vector<1x384xf32> to vector<16x384xf32>
    %201 = arith.addf %199, %200 : vector<16x384xf32>
    %202 = vector.extract_strided_slice %11 {offsets = [96, 0], sizes = [16, 384], strides = [1, 1]} : vector<128x384xf32> to vector<16x384xf32>
    %203 = vector.extract_strided_slice %202 {offsets = [0, 0], sizes = [16, 128], strides = [1, 1]} : vector<16x384xf32> to vector<16x128xf32>
    %204 = vector.extract_strided_slice %201 {offsets = [0, 0], sizes = [16, 128], strides = [1, 1]} : vector<16x384xf32> to vector<16x128xf32>
    %205 = arith.addf %203, %204 : vector<16x128xf32>
    %206 = arith.negf %205 : vector<16x128xf32>
    %207 = math.exp %206 : vector<16x128xf32>
    %cst_43 = arith.constant 1.000000e+00 : f32
    %208 = vector.broadcast %cst_43 : f32 to vector<16x128xf32>
    %209 = arith.addf %208, %207 : vector<16x128xf32>
    %210 = arith.divf %208, %209 : vector<16x128xf32>
    %211 = vector.extract_strided_slice %202 {offsets = [0, 128], sizes = [16, 128], strides = [1, 1]} : vector<16x384xf32> to vector<16x128xf32>
    %212 = vector.extract_strided_slice %201 {offsets = [0, 128], sizes = [16, 128], strides = [1, 1]} : vector<16x384xf32> to vector<16x128xf32>
    %213 = arith.addf %211, %212 : vector<16x128xf32>
    %214 = arith.negf %213 : vector<16x128xf32>
    %215 = math.exp %214 : vector<16x128xf32>
    %cst_44 = arith.constant 1.000000e+00 : f32
    %216 = vector.broadcast %cst_44 : f32 to vector<16x128xf32>
    %217 = arith.addf %216, %215 : vector<16x128xf32>
    %218 = arith.divf %216, %217 : vector<16x128xf32>
    %219 = vector.extract_strided_slice %202 {offsets = [0, 256], sizes = [16, 128], strides = [1, 1]} : vector<16x384xf32> to vector<16x128xf32>
    %220 = vector.extract_strided_slice %201 {offsets = [0, 256], sizes = [16, 128], strides = [1, 1]} : vector<16x384xf32> to vector<16x128xf32>
    %221 = arith.mulf %210, %220 : vector<16x128xf32>
    %222 = arith.addf %219, %221 : vector<16x128xf32>
    %223 = math.tanh %222 : vector<16x128xf32>
    %cst_45 = arith.constant 1.000000e+00 : f32
    %224 = vector.broadcast %cst_45 : f32 to vector<16x128xf32>
    %225 = arith.subf %224, %218 : vector<16x128xf32>
    %226 = arith.mulf %225, %223 : vector<16x128xf32>
    %227 = arith.mulf %218, %197 : vector<16x128xf32>
    %228 = arith.addf %226, %227 : vector<16x128xf32>
    %c96 = arith.constant 96 : index
    %c0_46 = arith.constant 0 : index
    %229 = vector.load %arg10[%c96, %c0_46] : memref<128x128xf32, #tpu.memory_space<vmem>>, vector<16x128xf32>
    tpu.vector_store %arg10[%c96, %c0_46], %228 {strides = array<i32>} : memref<128x128xf32, #tpu.memory_space<vmem>>, vector<16x128xf32>,
    %cst_47 = arith.constant dense<0.000000e+00> : vector<16x384xf32>
    %230 = tpu.matmul %228, %4, %cst_47 {dimension_numbers = #tpu.dot_dimension_numbers<[1], [0], [0], [1], [0, 0, 1, 1], [], []>} : vector<16x128xf32>, vector<128x384xf32>, vector<16x384xf32> -> vector<16x384xf32>
    %231 = vector.broadcast %8 : vector<1x384xf32> to vector<16x384xf32>
    %232 = arith.addf %230, %231 : vector<16x384xf32>
    %233 = vector.extract_strided_slice %11 {offsets = [112, 0], sizes = [16, 384], strides = [1, 1]} : vector<128x384xf32> to vector<16x384xf32>
    %234 = vector.extract_strided_slice %233 {offsets = [0, 0], sizes = [16, 128], strides = [1, 1]} : vector<16x384xf32> to vector<16x128xf32>
    %235 = vector.extract_strided_slice %232 {offsets = [0, 0], sizes = [16, 128], strides = [1, 1]} : vector<16x384xf32> to vector<16x128xf32>
    %236 = arith.addf %234, %235 : vector<16x128xf32>
    %237 = arith.negf %236 : vector<16x128xf32>
    %238 = math.exp %237 : vector<16x128xf32>
    %cst_48 = arith.constant 1.000000e+00 : f32
    %239 = vector.broadcast %cst_48 : f32 to vector<16x128xf32>
    %240 = arith.addf %239, %238 : vector<16x128xf32>
    %241 = arith.divf %239, %240 : vector<16x128xf32>
    %242 = vector.extract_strided_slice %233 {offsets = [0, 128], sizes = [16, 128], strides = [1, 1]} : vector<16x384xf32> to vector<16x128xf32>
    %243 = vector.extract_strided_slice %232 {offsets = [0, 128], sizes = [16, 128], strides = [1, 1]} : vector<16x384xf32> to vector<16x128xf32>
    %244 = arith.addf %242, %243 : vector<16x128xf32>
    %245 = arith.negf %244 : vector<16x128xf32>
    %246 = math.exp %245 : vector<16x128xf32>
    %cst_49 = arith.constant 1.000000e+00 : f32
    %247 = vector.broadcast %cst_49 : f32 to vector<16x128xf32>
    %248 = arith.addf %247, %246 : vector<16x128xf32>
    %249 = arith.divf %247, %248 : vector<16x128xf32>
    %250 = vector.extract_strided_slice %233 {offsets = [0, 256], sizes = [16, 128], strides = [1, 1]} : vector<16x384xf32> to vector<16x128xf32>
    %251 = vector.extract_strided_slice %232 {offsets = [0, 256], sizes = [16, 128], strides = [1, 1]} : vector<16x384xf32> to vector<16x128xf32>
    %252 = arith.mulf %241, %251 : vector<16x128xf32>
    %253 = arith.addf %250, %252 : vector<16x128xf32>
    %254 = math.tanh %253 : vector<16x128xf32>
    %cst_50 = arith.constant 1.000000e+00 : f32
    %255 = vector.broadcast %cst_50 : f32 to vector<16x128xf32>
    %256 = arith.subf %255, %249 : vector<16x128xf32>
    %257 = arith.mulf %256, %254 : vector<16x128xf32>
    %258 = arith.mulf %249, %228 : vector<16x128xf32>
    %259 = arith.addf %257, %258 : vector<16x128xf32>
    %c112 = arith.constant 112 : index
    %c0_51 = arith.constant 0 : index
    %260 = vector.load %arg10[%c112, %c0_51] : memref<128x128xf32, #tpu.memory_space<vmem>>, vector<16x128xf32>
    tpu.vector_store %arg10[%c112, %c0_51], %259 {strides = array<i32>} : memref<128x128xf32, #tpu.memory_space<vmem>>, vector<16x128xf32>,
    %c0_52 = arith.constant 0 : index
    %c0_53 = arith.constant 0 : index
    %c0_54 = arith.constant 0 : index
    %261 = vector.load %arg8[%c0_52, %c0_53, %c0_54] : memref<4x16x128xf32, #tpu.memory_space<vmem>>, vector<1x16x128xf32>
    %262 = vector.shape_cast %261 : vector<1x16x128xf32> to vector<16x128xf32>
    %263 = vector.shape_cast %259 : vector<16x128xf32> to vector<1x16x128xf32>
    tpu.vector_store %arg8[%c0_52, %c0_53, %c0_54], %263 {strides = array<i32>} : memref<4x16x128xf32, #tpu.memory_space<vmem>>, vector<1x16x128xf32>,
    %c0_55 = arith.constant 0 : index
    %c0_56 = arith.constant 0 : index
    %264 = vector.load %arg10[%c0_55, %c0_56] : memref<128x128xf32, #tpu.memory_space<vmem>>, vector<128x128xf32>
    %c1 = arith.constant 1 : index
    %c0_57 = arith.constant 0 : index
    %c0_58 = arith.constant 0 : index
    %265 = vector.load %arg1[%c1, %c0_57, %c0_58] : memref<4x128x384xf32, #tpu.memory_space<vmem>>, vector<1x128x384xf32>
    %266 = vector.shape_cast %265 : vector<1x128x384xf32> to vector<128x384xf32>
    %c1_59 = arith.constant 1 : index
    %c0_60 = arith.constant 0 : index
    %c0_61 = arith.constant 0 : index
    %267 = vector.load %arg2[%c1_59, %c0_60, %c0_61] : memref<4x128x384xf32, #tpu.memory_space<vmem>>, vector<1x128x384xf32>
    %268 = vector.shape_cast %267 : vector<1x128x384xf32> to vector<128x384xf32>
    %c1_62 = arith.constant 1 : index
    %c0_63 = arith.constant 0 : index
    %c0_64 = arith.constant 0 : index
    %269 = vector.load %arg3[%c1_62, %c0_63, %c0_64] : memref<4x2x384xf32, #tpu.memory_space<vmem>>, vector<1x2x384xf32>
    %270 = vector.shape_cast %269 : vector<1x2x384xf32> to vector<2x384xf32>
    %271 = vector.extract_strided_slice %270 {offsets = [0, 0], sizes = [1, 384], strides = [1, 1]} : vector<2x384xf32> to vector<1x384xf32>
    %272 = vector.extract_strided_slice %270 {offsets = [1, 0], sizes = [1, 384], strides = [1, 1]} : vector<2x384xf32> to vector<1x384xf32>
    %cst_65 = arith.constant dense<0.000000e+00> : vector<128x384xf32>
    %273 = tpu.matmul %264, %266, %cst_65 {dimension_numbers = #tpu.dot_dimension_numbers<[1], [0], [0], [1], [0, 0, 1, 1], [], []>} : vector<128x128xf32>, vector<128x384xf32>, vector<128x384xf32> -> vector<128x384xf32>
    %274 = vector.broadcast %271 : vector<1x384xf32> to vector<128x384xf32>
    %275 = arith.addf %273, %274 : vector<128x384xf32>
    %cst_66 = arith.constant 0.000000e+00 : f32
    %276 = vector.broadcast %cst_66 : f32 to vector<16x128xf32>
    %cst_67 = arith.constant dense<0.000000e+00> : vector<16x384xf32>
    %277 = tpu.matmul %276, %268, %cst_67 {dimension_numbers = #tpu.dot_dimension_numbers<[1], [0], [0], [1], [0, 0, 1, 1], [], []>} : vector<16x128xf32>, vector<128x384xf32>, vector<16x384xf32> -> vector<16x384xf32>
    %278 = vector.broadcast %272 : vector<1x384xf32> to vector<16x384xf32>
    %279 = arith.addf %277, %278 : vector<16x384xf32>
    %280 = vector.extract_strided_slice %275 {offsets = [0, 0], sizes = [16, 384], strides = [1, 1]} : vector<128x384xf32> to vector<16x384xf32>
    %281 = vector.extract_strided_slice %280 {offsets = [0, 0], sizes = [16, 128], strides = [1, 1]} : vector<16x384xf32> to vector<16x128xf32>
    %282 = vector.extract_strided_slice %279 {offsets = [0, 0], sizes = [16, 128], strides = [1, 1]} : vector<16x384xf32> to vector<16x128xf32>
    %283 = arith.addf %281, %282 : vector<16x128xf32>
    %284 = arith.negf %283 : vector<16x128xf32>
    %285 = math.exp %284 : vector<16x128xf32>
    %cst_68 = arith.constant 1.000000e+00 : f32
    %286 = vector.broadcast %cst_68 : f32 to vector<16x128xf32>
    %287 = arith.addf %286, %285 : vector<16x128xf32>
    %288 = arith.divf %286, %287 : vector<16x128xf32>
    %289 = vector.extract_strided_slice %280 {offsets = [0, 128], sizes = [16, 128], strides = [1, 1]} : vector<16x384xf32> to vector<16x128xf32>
    %290 = vector.extract_strided_slice %279 {offsets = [0, 128], sizes = [16, 128], strides = [1, 1]} : vector<16x384xf32> to vector<16x128xf32>
    %291 = arith.addf %289, %290 : vector<16x128xf32>
    %292 = arith.negf %291 : vector<16x128xf32>
    %293 = math.exp %292 : vector<16x128xf32>
    %cst_69 = arith.constant 1.000000e+00 : f32
    %294 = vector.broadcast %cst_69 : f32 to vector<16x128xf32>
    %295 = arith.addf %294, %293 : vector<16x128xf32>
    %296 = arith.divf %294, %295 : vector<16x128xf32>
    %297 = vector.extract_strided_slice %280 {offsets = [0, 256], sizes = [16, 128], strides = [1, 1]} : vector<16x384xf32> to vector<16x128xf32>
    %298 = vector.extract_strided_slice %279 {offsets = [0, 256], sizes = [16, 128], strides = [1, 1]} : vector<16x384xf32> to vector<16x128xf32>
    %299 = arith.mulf %288, %298 : vector<16x128xf32>
    %300 = arith.addf %297, %299 : vector<16x128xf32>
    %301 = math.tanh %300 : vector<16x128xf32>
    %cst_70 = arith.constant 1.000000e+00 : f32
    %302 = vector.broadcast %cst_70 : f32 to vector<16x128xf32>
    %303 = arith.subf %302, %296 : vector<16x128xf32>
    %304 = arith.mulf %303, %301 : vector<16x128xf32>
    %305 = arith.mulf %296, %276 : vector<16x128xf32>
    %306 = arith.addf %304, %305 : vector<16x128xf32>
    %c0_71 = arith.constant 0 : index
    %c0_72 = arith.constant 0 : index
    %307 = vector.load %arg10[%c0_71, %c0_72] : memref<128x128xf32, #tpu.memory_space<vmem>>, vector<16x128xf32>
    tpu.vector_store %arg10[%c0_71, %c0_72], %306 {strides = array<i32>} : memref<128x128xf32, #tpu.memory_space<vmem>>, vector<16x128xf32>,
    %cst_73 = arith.constant dense<0.000000e+00> : vector<16x384xf32>
    %308 = tpu.matmul %306, %268, %cst_73 {dimension_numbers = #tpu.dot_dimension_numbers<[1], [0], [0], [1], [0, 0, 1, 1], [], []>} : vector<16x128xf32>, vector<128x384xf32>, vector<16x384xf32> -> vector<16x384xf32>
    %309 = vector.broadcast %272 : vector<1x384xf32> to vector<16x384xf32>
    %310 = arith.addf %308, %309 : vector<16x384xf32>
    %311 = vector.extract_strided_slice %275 {offsets = [16, 0], sizes = [16, 384], strides = [1, 1]} : vector<128x384xf32> to vector<16x384xf32>
    %312 = vector.extract_strided_slice %311 {offsets = [0, 0], sizes = [16, 128], strides = [1, 1]} : vector<16x384xf32> to vector<16x128xf32>
    %313 = vector.extract_strided_slice %310 {offsets = [0, 0], sizes = [16, 128], strides = [1, 1]} : vector<16x384xf32> to vector<16x128xf32>
    %314 = arith.addf %312, %313 : vector<16x128xf32>
    %315 = arith.negf %314 : vector<16x128xf32>
    %316 = math.exp %315 : vector<16x128xf32>
    %cst_74 = arith.constant 1.000000e+00 : f32
    %317 = vector.broadcast %cst_74 : f32 to vector<16x128xf32>
    %318 = arith.addf %317, %316 : vector<16x128xf32>
    %319 = arith.divf %317, %318 : vector<16x128xf32>
    %320 = vector.extract_strided_slice %311 {offsets = [0, 128], sizes = [16, 128], strides = [1, 1]} : vector<16x384xf32> to vector<16x128xf32>
    %321 = vector.extract_strided_slice %310 {offsets = [0, 128], sizes = [16, 128], strides = [1, 1]} : vector<16x384xf32> to vector<16x128xf32>
    %322 = arith.addf %320, %321 : vector<16x128xf32>
    %323 = arith.negf %322 : vector<16x128xf32>
    %324 = math.exp %323 : vector<16x128xf32>
    %cst_75 = arith.constant 1.000000e+00 : f32
    %325 = vector.broadcast %cst_75 : f32 to vector<16x128xf32>
    %326 = arith.addf %325, %324 : vector<16x128xf32>
    %327 = arith.divf %325, %326 : vector<16x128xf32>
    %328 = vector.extract_strided_slice %311 {offsets = [0, 256], sizes = [16, 128], strides = [1, 1]} : vector<16x384xf32> to vector<16x128xf32>
    %329 = vector.extract_strided_slice %310 {offsets = [0, 256], sizes = [16, 128], strides = [1, 1]} : vector<16x384xf32> to vector<16x128xf32>
    %330 = arith.mulf %319, %329 : vector<16x128xf32>
    %331 = arith.addf %328, %330 : vector<16x128xf32>
    %332 = math.tanh %331 : vector<16x128xf32>
    %cst_76 = arith.constant 1.000000e+00 : f32
    %333 = vector.broadcast %cst_76 : f32 to vector<16x128xf32>
    %334 = arith.subf %333, %327 : vector<16x128xf32>
    %335 = arith.mulf %334, %332 : vector<16x128xf32>
    %336 = arith.mulf %327, %306 : vector<16x128xf32>
    %337 = arith.addf %335, %336 : vector<16x128xf32>
    %c16_77 = arith.constant 16 : index
    %c0_78 = arith.constant 0 : index
    %338 = vector.load %arg10[%c16_77, %c0_78] : memref<128x128xf32, #tpu.memory_space<vmem>>, vector<16x128xf32>
    tpu.vector_store %arg10[%c16_77, %c0_78], %337 {strides = array<i32>} : memref<128x128xf32, #tpu.memory_space<vmem>>, vector<16x128xf32>,
    %cst_79 = arith.constant dense<0.000000e+00> : vector<16x384xf32>
    %339 = tpu.matmul %337, %268, %cst_79 {dimension_numbers = #tpu.dot_dimension_numbers<[1], [0], [0], [1], [0, 0, 1, 1], [], []>} : vector<16x128xf32>, vector<128x384xf32>, vector<16x384xf32> -> vector<16x384xf32>
    %340 = vector.broadcast %272 : vector<1x384xf32> to vector<16x384xf32>
    %341 = arith.addf %339, %340 : vector<16x384xf32>
    %342 = vector.extract_strided_slice %275 {offsets = [32, 0], sizes = [16, 384], strides = [1, 1]} : vector<128x384xf32> to vector<16x384xf32>
    %343 = vector.extract_strided_slice %342 {offsets = [0, 0], sizes = [16, 128], strides = [1, 1]} : vector<16x384xf32> to vector<16x128xf32>
    %344 = vector.extract_strided_slice %341 {offsets = [0, 0], sizes = [16, 128], strides = [1, 1]} : vector<16x384xf32> to vector<16x128xf32>
    %345 = arith.addf %343, %344 : vector<16x128xf32>
    %346 = arith.negf %345 : vector<16x128xf32>
    %347 = math.exp %346 : vector<16x128xf32>
    %cst_80 = arith.constant 1.000000e+00 : f32
    %348 = vector.broadcast %cst_80 : f32 to vector<16x128xf32>
    %349 = arith.addf %348, %347 : vector<16x128xf32>
    %350 = arith.divf %348, %349 : vector<16x128xf32>
    %351 = vector.extract_strided_slice %342 {offsets = [0, 128], sizes = [16, 128], strides = [1, 1]} : vector<16x384xf32> to vector<16x128xf32>
    %352 = vector.extract_strided_slice %341 {offsets = [0, 128], sizes = [16, 128], strides = [1, 1]} : vector<16x384xf32> to vector<16x128xf32>
    %353 = arith.addf %351, %352 : vector<16x128xf32>
    %354 = arith.negf %353 : vector<16x128xf32>
    %355 = math.exp %354 : vector<16x128xf32>
    %cst_81 = arith.constant 1.000000e+00 : f32
    %356 = vector.broadcast %cst_81 : f32 to vector<16x128xf32>
    %357 = arith.addf %356, %355 : vector<16x128xf32>
    %358 = arith.divf %356, %357 : vector<16x128xf32>
    %359 = vector.extract_strided_slice %342 {offsets = [0, 256], sizes = [16, 128], strides = [1, 1]} : vector<16x384xf32> to vector<16x128xf32>
    %360 = vector.extract_strided_slice %341 {offsets = [0, 256], sizes = [16, 128], strides = [1, 1]} : vector<16x384xf32> to vector<16x128xf32>
    %361 = arith.mulf %350, %360 : vector<16x128xf32>
    %362 = arith.addf %359, %361 : vector<16x128xf32>
    %363 = math.tanh %362 : vector<16x128xf32>
    %cst_82 = arith.constant 1.000000e+00 : f32
    %364 = vector.broadcast %cst_82 : f32 to vector<16x128xf32>
    %365 = arith.subf %364, %358 : vector<16x128xf32>
    %366 = arith.mulf %365, %363 : vector<16x128xf32>
    %367 = arith.mulf %358, %337 : vector<16x128xf32>
    %368 = arith.addf %366, %367 : vector<16x128xf32>
    %c32_83 = arith.constant 32 : index
    %c0_84 = arith.constant 0 : index
    %369 = vector.load %arg10[%c32_83, %c0_84] : memref<128x128xf32, #tpu.memory_space<vmem>>, vector<16x128xf32>
    tpu.vector_store %arg10[%c32_83, %c0_84], %368 {strides = array<i32>} : memref<128x128xf32, #tpu.memory_space<vmem>>, vector<16x128xf32>,
    %cst_85 = arith.constant dense<0.000000e+00> : vector<16x384xf32>
    %370 = tpu.matmul %368, %268, %cst_85 {dimension_numbers = #tpu.dot_dimension_numbers<[1], [0], [0], [1], [0, 0, 1, 1], [], []>} : vector<16x128xf32>, vector<128x384xf32>, vector<16x384xf32> -> vector<16x384xf32>
    %371 = vector.broadcast %272 : vector<1x384xf32> to vector<16x384xf32>
    %372 = arith.addf %370, %371 : vector<16x384xf32>
    %373 = vector.extract_strided_slice %275 {offsets = [48, 0], sizes = [16, 384], strides = [1, 1]} : vector<128x384xf32> to vector<16x384xf32>
    %374 = vector.extract_strided_slice %373 {offsets = [0, 0], sizes = [16, 128], strides = [1, 1]} : vector<16x384xf32> to vector<16x128xf32>
    %375 = vector.extract_strided_slice %372 {offsets = [0, 0], sizes = [16, 128], strides = [1, 1]} : vector<16x384xf32> to vector<16x128xf32>
    %376 = arith.addf %374, %375 : vector<16x128xf32>
    %377 = arith.negf %376 : vector<16x128xf32>
    %378 = math.exp %377 : vector<16x128xf32>
    %cst_86 = arith.constant 1.000000e+00 : f32
    %379 = vector.broadcast %cst_86 : f32 to vector<16x128xf32>
    %380 = arith.addf %379, %378 : vector<16x128xf32>
    %381 = arith.divf %379, %380 : vector<16x128xf32>
    %382 = vector.extract_strided_slice %373 {offsets = [0, 128], sizes = [16, 128], strides = [1, 1]} : vector<16x384xf32> to vector<16x128xf32>
    %383 = vector.extract_strided_slice %372 {offsets = [0, 128], sizes = [16, 128], strides = [1, 1]} : vector<16x384xf32> to vector<16x128xf32>
    %384 = arith.addf %382, %383 : vector<16x128xf32>
    %385 = arith.negf %384 : vector<16x128xf32>
    %386 = math.exp %385 : vector<16x128xf32>
    %cst_87 = arith.constant 1.000000e+00 : f32
    %387 = vector.broadcast %cst_87 : f32 to vector<16x128xf32>
    %388 = arith.addf %387, %386 : vector<16x128xf32>
    %389 = arith.divf %387, %388 : vector<16x128xf32>
    %390 = vector.extract_strided_slice %373 {offsets = [0, 256], sizes = [16, 128], strides = [1, 1]} : vector<16x384xf32> to vector<16x128xf32>
    %391 = vector.extract_strided_slice %372 {offsets = [0, 256], sizes = [16, 128], strides = [1, 1]} : vector<16x384xf32> to vector<16x128xf32>
    %392 = arith.mulf %381, %391 : vector<16x128xf32>
    %393 = arith.addf %390, %392 : vector<16x128xf32>
    %394 = math.tanh %393 : vector<16x128xf32>
    %cst_88 = arith.constant 1.000000e+00 : f32
    %395 = vector.broadcast %cst_88 : f32 to vector<16x128xf32>
    %396 = arith.subf %395, %389 : vector<16x128xf32>
    %397 = arith.mulf %396, %394 : vector<16x128xf32>
    %398 = arith.mulf %389, %368 : vector<16x128xf32>
    %399 = arith.addf %397, %398 : vector<16x128xf32>
    %c48_89 = arith.constant 48 : index
    %c0_90 = arith.constant 0 : index
    %400 = vector.load %arg10[%c48_89, %c0_90] : memref<128x128xf32, #tpu.memory_space<vmem>>, vector<16x128xf32>
    tpu.vector_store %arg10[%c48_89, %c0_90], %399 {strides = array<i32>} : memref<128x128xf32, #tpu.memory_space<vmem>>, vector<16x128xf32>,
    %cst_91 = arith.constant dense<0.000000e+00> : vector<16x384xf32>
    %401 = tpu.matmul %399, %268, %cst_91 {dimension_numbers = #tpu.dot_dimension_numbers<[1], [0], [0], [1], [0, 0, 1, 1], [], []>} : vector<16x128xf32>, vector<128x384xf32>, vector<16x384xf32> -> vector<16x384xf32>
    %402 = vector.broadcast %272 : vector<1x384xf32> to vector<16x384xf32>
    %403 = arith.addf %401, %402 : vector<16x384xf32>
    %404 = vector.extract_strided_slice %275 {offsets = [64, 0], sizes = [16, 384], strides = [1, 1]} : vector<128x384xf32> to vector<16x384xf32>
    %405 = vector.extract_strided_slice %404 {offsets = [0, 0], sizes = [16, 128], strides = [1, 1]} : vector<16x384xf32> to vector<16x128xf32>
    %406 = vector.extract_strided_slice %403 {offsets = [0, 0], sizes = [16, 128], strides = [1, 1]} : vector<16x384xf32> to vector<16x128xf32>
    %407 = arith.addf %405, %406 : vector<16x128xf32>
    %408 = arith.negf %407 : vector<16x128xf32>
    %409 = math.exp %408 : vector<16x128xf32>
    %cst_92 = arith.constant 1.000000e+00 : f32
    %410 = vector.broadcast %cst_92 : f32 to vector<16x128xf32>
    %411 = arith.addf %410, %409 : vector<16x128xf32>
    %412 = arith.divf %410, %411 : vector<16x128xf32>
    %413 = vector.extract_strided_slice %404 {offsets = [0, 128], sizes = [16, 128], strides = [1, 1]} : vector<16x384xf32> to vector<16x128xf32>
    %414 = vector.extract_strided_slice %403 {offsets = [0, 128], sizes = [16, 128], strides = [1, 1]} : vector<16x384xf32> to vector<16x128xf32>
    %415 = arith.addf %413, %414 : vector<16x128xf32>
    %416 = arith.negf %415 : vector<16x128xf32>
    %417 = math.exp %416 : vector<16x128xf32>
    %cst_93 = arith.constant 1.000000e+00 : f32
    %418 = vector.broadcast %cst_93 : f32 to vector<16x128xf32>
    %419 = arith.addf %418, %417 : vector<16x128xf32>
    %420 = arith.divf %418, %419 : vector<16x128xf32>
    %421 = vector.extract_strided_slice %404 {offsets = [0, 256], sizes = [16, 128], strides = [1, 1]} : vector<16x384xf32> to vector<16x128xf32>
    %422 = vector.extract_strided_slice %403 {offsets = [0, 256], sizes = [16, 128], strides = [1, 1]} : vector<16x384xf32> to vector<16x128xf32>
    %423 = arith.mulf %412, %422 : vector<16x128xf32>
    %424 = arith.addf %421, %423 : vector<16x128xf32>
    %425 = math.tanh %424 : vector<16x128xf32>
    %cst_94 = arith.constant 1.000000e+00 : f32
    %426 = vector.broadcast %cst_94 : f32 to vector<16x128xf32>
    %427 = arith.subf %426, %420 : vector<16x128xf32>
    %428 = arith.mulf %427, %425 : vector<16x128xf32>
    %429 = arith.mulf %420, %399 : vector<16x128xf32>
    %430 = arith.addf %428, %429 : vector<16x128xf32>
    %c64_95 = arith.constant 64 : index
    %c0_96 = arith.constant 0 : index
    %431 = vector.load %arg10[%c64_95, %c0_96] : memref<128x128xf32, #tpu.memory_space<vmem>>, vector<16x128xf32>
    tpu.vector_store %arg10[%c64_95, %c0_96], %430 {strides = array<i32>} : memref<128x128xf32, #tpu.memory_space<vmem>>, vector<16x128xf32>,
    %cst_97 = arith.constant dense<0.000000e+00> : vector<16x384xf32>
    %432 = tpu.matmul %430, %268, %cst_97 {dimension_numbers = #tpu.dot_dimension_numbers<[1], [0], [0], [1], [0, 0, 1, 1], [], []>} : vector<16x128xf32>, vector<128x384xf32>, vector<16x384xf32> -> vector<16x384xf32>
    %433 = vector.broadcast %272 : vector<1x384xf32> to vector<16x384xf32>
    %434 = arith.addf %432, %433 : vector<16x384xf32>
    %435 = vector.extract_strided_slice %275 {offsets = [80, 0], sizes = [16, 384], strides = [1, 1]} : vector<128x384xf32> to vector<16x384xf32>
    %436 = vector.extract_strided_slice %435 {offsets = [0, 0], sizes = [16, 128], strides = [1, 1]} : vector<16x384xf32> to vector<16x128xf32>
    %437 = vector.extract_strided_slice %434 {offsets = [0, 0], sizes = [16, 128], strides = [1, 1]} : vector<16x384xf32> to vector<16x128xf32>
    %438 = arith.addf %436, %437 : vector<16x128xf32>
    %439 = arith.negf %438 : vector<16x128xf32>
    %440 = math.exp %439 : vector<16x128xf32>
    %cst_98 = arith.constant 1.000000e+00 : f32
    %441 = vector.broadcast %cst_98 : f32 to vector<16x128xf32>
    %442 = arith.addf %441, %440 : vector<16x128xf32>
    %443 = arith.divf %441, %442 : vector<16x128xf32>
    %444 = vector.extract_strided_slice %435 {offsets = [0, 128], sizes = [16, 128], strides = [1, 1]} : vector<16x384xf32> to vector<16x128xf32>
    %445 = vector.extract_strided_slice %434 {offsets = [0, 128], sizes = [16, 128], strides = [1, 1]} : vector<16x384xf32> to vector<16x128xf32>
    %446 = arith.addf %444, %445 : vector<16x128xf32>
    %447 = arith.negf %446 : vector<16x128xf32>
    %448 = math.exp %447 : vector<16x128xf32>
    %cst_99 = arith.constant 1.000000e+00 : f32
    %449 = vector.broadcast %cst_99 : f32 to vector<16x128xf32>
    %450 = arith.addf %449, %448 : vector<16x128xf32>
    %451 = arith.divf %449, %450 : vector<16x128xf32>
    %452 = vector.extract_strided_slice %435 {offsets = [0, 256], sizes = [16, 128], strides = [1, 1]} : vector<16x384xf32> to vector<16x128xf32>
    %453 = vector.extract_strided_slice %434 {offsets = [0, 256], sizes = [16, 128], strides = [1, 1]} : vector<16x384xf32> to vector<16x128xf32>
    %454 = arith.mulf %443, %453 : vector<16x128xf32>
    %455 = arith.addf %452, %454 : vector<16x128xf32>
    %456 = math.tanh %455 : vector<16x128xf32>
    %cst_100 = arith.constant 1.000000e+00 : f32
    %457 = vector.broadcast %cst_100 : f32 to vector<16x128xf32>
    %458 = arith.subf %457, %451 : vector<16x128xf32>
    %459 = arith.mulf %458, %456 : vector<16x128xf32>
    %460 = arith.mulf %451, %430 : vector<16x128xf32>
    %461 = arith.addf %459, %460 : vector<16x128xf32>
    %c80_101 = arith.constant 80 : index
    %c0_102 = arith.constant 0 : index
    %462 = vector.load %arg10[%c80_101, %c0_102] : memref<128x128xf32, #tpu.memory_space<vmem>>, vector<16x128xf32>
    tpu.vector_store %arg10[%c80_101, %c0_102], %461 {strides = array<i32>} : memref<128x128xf32, #tpu.memory_space<vmem>>, vector<16x128xf32>,
    %cst_103 = arith.constant dense<0.000000e+00> : vector<16x384xf32>
    %463 = tpu.matmul %461, %268, %cst_103 {dimension_numbers = #tpu.dot_dimension_numbers<[1], [0], [0], [1], [0, 0, 1, 1], [], []>} : vector<16x128xf32>, vector<128x384xf32>, vector<16x384xf32> -> vector<16x384xf32>
    %464 = vector.broadcast %272 : vector<1x384xf32> to vector<16x384xf32>
    %465 = arith.addf %463, %464 : vector<16x384xf32>
    %466 = vector.extract_strided_slice %275 {offsets = [96, 0], sizes = [16, 384], strides = [1, 1]} : vector<128x384xf32> to vector<16x384xf32>
    %467 = vector.extract_strided_slice %466 {offsets = [0, 0], sizes = [16, 128], strides = [1, 1]} : vector<16x384xf32> to vector<16x128xf32>
    %468 = vector.extract_strided_slice %465 {offsets = [0, 0], sizes = [16, 128], strides = [1, 1]} : vector<16x384xf32> to vector<16x128xf32>
    %469 = arith.addf %467, %468 : vector<16x128xf32>
    %470 = arith.negf %469 : vector<16x128xf32>
    %471 = math.exp %470 : vector<16x128xf32>
    %cst_104 = arith.constant 1.000000e+00 : f32
    %472 = vector.broadcast %cst_104 : f32 to vector<16x128xf32>
    %473 = arith.addf %472, %471 : vector<16x128xf32>
    %474 = arith.divf %472, %473 : vector<16x128xf32>
    %475 = vector.extract_strided_slice %466 {offsets = [0, 128], sizes = [16, 128], strides = [1, 1]} : vector<16x384xf32> to vector<16x128xf32>
    %476 = vector.extract_strided_slice %465 {offsets = [0, 128], sizes = [16, 128], strides = [1, 1]} : vector<16x384xf32> to vector<16x128xf32>
    %477 = arith.addf %475, %476 : vector<16x128xf32>
    %478 = arith.negf %477 : vector<16x128xf32>
    %479 = math.exp %478 : vector<16x128xf32>
    %cst_105 = arith.constant 1.000000e+00 : f32
    %480 = vector.broadcast %cst_105 : f32 to vector<16x128xf32>
    %481 = arith.addf %480, %479 : vector<16x128xf32>
    %482 = arith.divf %480, %481 : vector<16x128xf32>
    %483 = vector.extract_strided_slice %466 {offsets = [0, 256], sizes = [16, 128], strides = [1, 1]} : vector<16x384xf32> to vector<16x128xf32>
    %484 = vector.extract_strided_slice %465 {offsets = [0, 256], sizes = [16, 128], strides = [1, 1]} : vector<16x384xf32> to vector<16x128xf32>
    %485 = arith.mulf %474, %484 : vector<16x128xf32>
    %486 = arith.addf %483, %485 : vector<16x128xf32>
    %487 = math.tanh %486 : vector<16x128xf32>
    %cst_106 = arith.constant 1.000000e+00 : f32
    %488 = vector.broadcast %cst_106 : f32 to vector<16x128xf32>
    %489 = arith.subf %488, %482 : vector<16x128xf32>
    %490 = arith.mulf %489, %487 : vector<16x128xf32>
    %491 = arith.mulf %482, %461 : vector<16x128xf32>
    %492 = arith.addf %490, %491 : vector<16x128xf32>
    %c96_107 = arith.constant 96 : index
    %c0_108 = arith.constant 0 : index
    %493 = vector.load %arg10[%c96_107, %c0_108] : memref<128x128xf32, #tpu.memory_space<vmem>>, vector<16x128xf32>
    tpu.vector_store %arg10[%c96_107, %c0_108], %492 {strides = array<i32>} : memref<128x128xf32, #tpu.memory_space<vmem>>, vector<16x128xf32>,
    %cst_109 = arith.constant dense<0.000000e+00> : vector<16x384xf32>
    %494 = tpu.matmul %492, %268, %cst_109 {dimension_numbers = #tpu.dot_dimension_numbers<[1], [0], [0], [1], [0, 0, 1, 1], [], []>} : vector<16x128xf32>, vector<128x384xf32>, vector<16x384xf32> -> vector<16x384xf32>
    %495 = vector.broadcast %272 : vector<1x384xf32> to vector<16x384xf32>
    %496 = arith.addf %494, %495 : vector<16x384xf32>
    %497 = vector.extract_strided_slice %275 {offsets = [112, 0], sizes = [16, 384], strides = [1, 1]} : vector<128x384xf32> to vector<16x384xf32>
    %498 = vector.extract_strided_slice %497 {offsets = [0, 0], sizes = [16, 128], strides = [1, 1]} : vector<16x384xf32> to vector<16x128xf32>
    %499 = vector.extract_strided_slice %496 {offsets = [0, 0], sizes = [16, 128], strides = [1, 1]} : vector<16x384xf32> to vector<16x128xf32>
    %500 = arith.addf %498, %499 : vector<16x128xf32>
    %501 = arith.negf %500 : vector<16x128xf32>
    %502 = math.exp %501 : vector<16x128xf32>
    %cst_110 = arith.constant 1.000000e+00 : f32
    %503 = vector.broadcast %cst_110 : f32 to vector<16x128xf32>
    %504 = arith.addf %503, %502 : vector<16x128xf32>
    %505 = arith.divf %503, %504 : vector<16x128xf32>
    %506 = vector.extract_strided_slice %497 {offsets = [0, 128], sizes = [16, 128], strides = [1, 1]} : vector<16x384xf32> to vector<16x128xf32>
    %507 = vector.extract_strided_slice %496 {offsets = [0, 128], sizes = [16, 128], strides = [1, 1]} : vector<16x384xf32> to vector<16x128xf32>
    %508 = arith.addf %506, %507 : vector<16x128xf32>
    %509 = arith.negf %508 : vector<16x128xf32>
    %510 = math.exp %509 : vector<16x128xf32>
    %cst_111 = arith.constant 1.000000e+00 : f32
    %511 = vector.broadcast %cst_111 : f32 to vector<16x128xf32>
    %512 = arith.addf %511, %510 : vector<16x128xf32>
    %513 = arith.divf %511, %512 : vector<16x128xf32>
    %514 = vector.extract_strided_slice %497 {offsets = [0, 256], sizes = [16, 128], strides = [1, 1]} : vector<16x384xf32> to vector<16x128xf32>
    %515 = vector.extract_strided_slice %496 {offsets = [0, 256], sizes = [16, 128], strides = [1, 1]} : vector<16x384xf32> to vector<16x128xf32>
    %516 = arith.mulf %505, %515 : vector<16x128xf32>
    %517 = arith.addf %514, %516 : vector<16x128xf32>
    %518 = math.tanh %517 : vector<16x128xf32>
    %cst_112 = arith.constant 1.000000e+00 : f32
    %519 = vector.broadcast %cst_112 : f32 to vector<16x128xf32>
    %520 = arith.subf %519, %513 : vector<16x128xf32>
    %521 = arith.mulf %520, %518 : vector<16x128xf32>
    %522 = arith.mulf %513, %492 : vector<16x128xf32>
    %523 = arith.addf %521, %522 : vector<16x128xf32>
    %c112_113 = arith.constant 112 : index
    %c0_114 = arith.constant 0 : index
    %524 = vector.load %arg10[%c112_113, %c0_114] : memref<128x128xf32, #tpu.memory_space<vmem>>, vector<16x128xf32>
    tpu.vector_store %arg10[%c112_113, %c0_114], %523 {strides = array<i32>} : memref<128x128xf32, #tpu.memory_space<vmem>>, vector<16x128xf32>,
    %c1_115 = arith.constant 1 : index
    %c0_116 = arith.constant 0 : index
    %c0_117 = arith.constant 0 : index
    %525 = vector.load %arg8[%c1_115, %c0_116, %c0_117] : memref<4x16x128xf32, #tpu.memory_space<vmem>>, vector<1x16x128xf32>
    %526 = vector.shape_cast %525 : vector<1x16x128xf32> to vector<16x128xf32>
    %527 = vector.shape_cast %523 : vector<16x128xf32> to vector<1x16x128xf32>
    tpu.vector_store %arg8[%c1_115, %c0_116, %c0_117], %527 {strides = array<i32>} : memref<4x16x128xf32, #tpu.memory_space<vmem>>, vector<1x16x128xf32>,
    %c0_118 = arith.constant 0 : index
    %c0_119 = arith.constant 0 : index
    %528 = vector.load %arg10[%c0_118, %c0_119] : memref<128x128xf32, #tpu.memory_space<vmem>>, vector<128x128xf32>
    %c2 = arith.constant 2 : index
    %c0_120 = arith.constant 0 : index
    %c0_121 = arith.constant 0 : index
    %529 = vector.load %arg1[%c2, %c0_120, %c0_121] : memref<4x128x384xf32, #tpu.memory_space<vmem>>, vector<1x128x384xf32>
    %530 = vector.shape_cast %529 : vector<1x128x384xf32> to vector<128x384xf32>
    %c2_122 = arith.constant 2 : index
    %c0_123 = arith.constant 0 : index
    %c0_124 = arith.constant 0 : index
    %531 = vector.load %arg2[%c2_122, %c0_123, %c0_124] : memref<4x128x384xf32, #tpu.memory_space<vmem>>, vector<1x128x384xf32>
    %532 = vector.shape_cast %531 : vector<1x128x384xf32> to vector<128x384xf32>
    %c2_125 = arith.constant 2 : index
    %c0_126 = arith.constant 0 : index
    %c0_127 = arith.constant 0 : index
    %533 = vector.load %arg3[%c2_125, %c0_126, %c0_127] : memref<4x2x384xf32, #tpu.memory_space<vmem>>, vector<1x2x384xf32>
    %534 = vector.shape_cast %533 : vector<1x2x384xf32> to vector<2x384xf32>
    %535 = vector.extract_strided_slice %534 {offsets = [0, 0], sizes = [1, 384], strides = [1, 1]} : vector<2x384xf32> to vector<1x384xf32>
    %536 = vector.extract_strided_slice %534 {offsets = [1, 0], sizes = [1, 384], strides = [1, 1]} : vector<2x384xf32> to vector<1x384xf32>
    %cst_128 = arith.constant dense<0.000000e+00> : vector<128x384xf32>
    %537 = tpu.matmul %528, %530, %cst_128 {dimension_numbers = #tpu.dot_dimension_numbers<[1], [0], [0], [1], [0, 0, 1, 1], [], []>} : vector<128x128xf32>, vector<128x384xf32>, vector<128x384xf32> -> vector<128x384xf32>
    %538 = vector.broadcast %535 : vector<1x384xf32> to vector<128x384xf32>
    %539 = arith.addf %537, %538 : vector<128x384xf32>
    %cst_129 = arith.constant 0.000000e+00 : f32
    %540 = vector.broadcast %cst_129 : f32 to vector<16x128xf32>
    %cst_130 = arith.constant dense<0.000000e+00> : vector<16x384xf32>
    %541 = tpu.matmul %540, %532, %cst_130 {dimension_numbers = #tpu.dot_dimension_numbers<[1], [0], [0], [1], [0, 0, 1, 1], [], []>} : vector<16x128xf32>, vector<128x384xf32>, vector<16x384xf32> -> vector<16x384xf32>
    %542 = vector.broadcast %536 : vector<1x384xf32> to vector<16x384xf32>
    %543 = arith.addf %541, %542 : vector<16x384xf32>
    %544 = vector.extract_strided_slice %539 {offsets = [0, 0], sizes = [16, 384], strides = [1, 1]} : vector<128x384xf32> to vector<16x384xf32>
    %545 = vector.extract_strided_slice %544 {offsets = [0, 0], sizes = [16, 128], strides = [1, 1]} : vector<16x384xf32> to vector<16x128xf32>
    %546 = vector.extract_strided_slice %543 {offsets = [0, 0], sizes = [16, 128], strides = [1, 1]} : vector<16x384xf32> to vector<16x128xf32>
    %547 = arith.addf %545, %546 : vector<16x128xf32>
    %548 = arith.negf %547 : vector<16x128xf32>
    %549 = math.exp %548 : vector<16x128xf32>
    %cst_131 = arith.constant 1.000000e+00 : f32
    %550 = vector.broadcast %cst_131 : f32 to vector<16x128xf32>
    %551 = arith.addf %550, %549 : vector<16x128xf32>
    %552 = arith.divf %550, %551 : vector<16x128xf32>
    %553 = vector.extract_strided_slice %544 {offsets = [0, 128], sizes = [16, 128], strides = [1, 1]} : vector<16x384xf32> to vector<16x128xf32>
    %554 = vector.extract_strided_slice %543 {offsets = [0, 128], sizes = [16, 128], strides = [1, 1]} : vector<16x384xf32> to vector<16x128xf32>
    %555 = arith.addf %553, %554 : vector<16x128xf32>
    %556 = arith.negf %555 : vector<16x128xf32>
    %557 = math.exp %556 : vector<16x128xf32>
    %cst_132 = arith.constant 1.000000e+00 : f32
    %558 = vector.broadcast %cst_132 : f32 to vector<16x128xf32>
    %559 = arith.addf %558, %557 : vector<16x128xf32>
    %560 = arith.divf %558, %559 : vector<16x128xf32>
    %561 = vector.extract_strided_slice %544 {offsets = [0, 256], sizes = [16, 128], strides = [1, 1]} : vector<16x384xf32> to vector<16x128xf32>
    %562 = vector.extract_strided_slice %543 {offsets = [0, 256], sizes = [16, 128], strides = [1, 1]} : vector<16x384xf32> to vector<16x128xf32>
    %563 = arith.mulf %552, %562 : vector<16x128xf32>
    %564 = arith.addf %561, %563 : vector<16x128xf32>
    %565 = math.tanh %564 : vector<16x128xf32>
    %cst_133 = arith.constant 1.000000e+00 : f32
    %566 = vector.broadcast %cst_133 : f32 to vector<16x128xf32>
    %567 = arith.subf %566, %560 : vector<16x128xf32>
    %568 = arith.mulf %567, %565 : vector<16x128xf32>
    %569 = arith.mulf %560, %540 : vector<16x128xf32>
    %570 = arith.addf %568, %569 : vector<16x128xf32>
    %c0_134 = arith.constant 0 : index
    %c0_135 = arith.constant 0 : index
    %571 = vector.load %arg10[%c0_134, %c0_135] : memref<128x128xf32, #tpu.memory_space<vmem>>, vector<16x128xf32>
    tpu.vector_store %arg10[%c0_134, %c0_135], %570 {strides = array<i32>} : memref<128x128xf32, #tpu.memory_space<vmem>>, vector<16x128xf32>,
    %cst_136 = arith.constant dense<0.000000e+00> : vector<16x384xf32>
    %572 = tpu.matmul %570, %532, %cst_136 {dimension_numbers = #tpu.dot_dimension_numbers<[1], [0], [0], [1], [0, 0, 1, 1], [], []>} : vector<16x128xf32>, vector<128x384xf32>, vector<16x384xf32> -> vector<16x384xf32>
    %573 = vector.broadcast %536 : vector<1x384xf32> to vector<16x384xf32>
    %574 = arith.addf %572, %573 : vector<16x384xf32>
    %575 = vector.extract_strided_slice %539 {offsets = [16, 0], sizes = [16, 384], strides = [1, 1]} : vector<128x384xf32> to vector<16x384xf32>
    %576 = vector.extract_strided_slice %575 {offsets = [0, 0], sizes = [16, 128], strides = [1, 1]} : vector<16x384xf32> to vector<16x128xf32>
    %577 = vector.extract_strided_slice %574 {offsets = [0, 0], sizes = [16, 128], strides = [1, 1]} : vector<16x384xf32> to vector<16x128xf32>
    %578 = arith.addf %576, %577 : vector<16x128xf32>
    %579 = arith.negf %578 : vector<16x128xf32>
    %580 = math.exp %579 : vector<16x128xf32>
    %cst_137 = arith.constant 1.000000e+00 : f32
    %581 = vector.broadcast %cst_137 : f32 to vector<16x128xf32>
    %582 = arith.addf %581, %580 : vector<16x128xf32>
    %583 = arith.divf %581, %582 : vector<16x128xf32>
    %584 = vector.extract_strided_slice %575 {offsets = [0, 128], sizes = [16, 128], strides = [1, 1]} : vector<16x384xf32> to vector<16x128xf32>
    %585 = vector.extract_strided_slice %574 {offsets = [0, 128], sizes = [16, 128], strides = [1, 1]} : vector<16x384xf32> to vector<16x128xf32>
    %586 = arith.addf %584, %585 : vector<16x128xf32>
    %587 = arith.negf %586 : vector<16x128xf32>
    %588 = math.exp %587 : vector<16x128xf32>
    %cst_138 = arith.constant 1.000000e+00 : f32
    %589 = vector.broadcast %cst_138 : f32 to vector<16x128xf32>
    %590 = arith.addf %589, %588 : vector<16x128xf32>
    %591 = arith.divf %589, %590 : vector<16x128xf32>
    %592 = vector.extract_strided_slice %575 {offsets = [0, 256], sizes = [16, 128], strides = [1, 1]} : vector<16x384xf32> to vector<16x128xf32>
    %593 = vector.extract_strided_slice %574 {offsets = [0, 256], sizes = [16, 128], strides = [1, 1]} : vector<16x384xf32> to vector<16x128xf32>
    %594 = arith.mulf %583, %593 : vector<16x128xf32>
    %595 = arith.addf %592, %594 : vector<16x128xf32>
    %596 = math.tanh %595 : vector<16x128xf32>
    %cst_139 = arith.constant 1.000000e+00 : f32
    %597 = vector.broadcast %cst_139 : f32 to vector<16x128xf32>
    %598 = arith.subf %597, %591 : vector<16x128xf32>
    %599 = arith.mulf %598, %596 : vector<16x128xf32>
    %600 = arith.mulf %591, %570 : vector<16x128xf32>
    %601 = arith.addf %599, %600 : vector<16x128xf32>
    %c16_140 = arith.constant 16 : index
    %c0_141 = arith.constant 0 : index
    %602 = vector.load %arg10[%c16_140, %c0_141] : memref<128x128xf32, #tpu.memory_space<vmem>>, vector<16x128xf32>
    tpu.vector_store %arg10[%c16_140, %c0_141], %601 {strides = array<i32>} : memref<128x128xf32, #tpu.memory_space<vmem>>, vector<16x128xf32>,
    %cst_142 = arith.constant dense<0.000000e+00> : vector<16x384xf32>
    %603 = tpu.matmul %601, %532, %cst_142 {dimension_numbers = #tpu.dot_dimension_numbers<[1], [0], [0], [1], [0, 0, 1, 1], [], []>} : vector<16x128xf32>, vector<128x384xf32>, vector<16x384xf32> -> vector<16x384xf32>
    %604 = vector.broadcast %536 : vector<1x384xf32> to vector<16x384xf32>
    %605 = arith.addf %603, %604 : vector<16x384xf32>
    %606 = vector.extract_strided_slice %539 {offsets = [32, 0], sizes = [16, 384], strides = [1, 1]} : vector<128x384xf32> to vector<16x384xf32>
    %607 = vector.extract_strided_slice %606 {offsets = [0, 0], sizes = [16, 128], strides = [1, 1]} : vector<16x384xf32> to vector<16x128xf32>
    %608 = vector.extract_strided_slice %605 {offsets = [0, 0], sizes = [16, 128], strides = [1, 1]} : vector<16x384xf32> to vector<16x128xf32>
    %609 = arith.addf %607, %608 : vector<16x128xf32>
    %610 = arith.negf %609 : vector<16x128xf32>
    %611 = math.exp %610 : vector<16x128xf32>
    %cst_143 = arith.constant 1.000000e+00 : f32
    %612 = vector.broadcast %cst_143 : f32 to vector<16x128xf32>
    %613 = arith.addf %612, %611 : vector<16x128xf32>
    %614 = arith.divf %612, %613 : vector<16x128xf32>
    %615 = vector.extract_strided_slice %606 {offsets = [0, 128], sizes = [16, 128], strides = [1, 1]} : vector<16x384xf32> to vector<16x128xf32>
    %616 = vector.extract_strided_slice %605 {offsets = [0, 128], sizes = [16, 128], strides = [1, 1]} : vector<16x384xf32> to vector<16x128xf32>
    %617 = arith.addf %615, %616 : vector<16x128xf32>
    %618 = arith.negf %617 : vector<16x128xf32>
    %619 = math.exp %618 : vector<16x128xf32>
    %cst_144 = arith.constant 1.000000e+00 : f32
    %620 = vector.broadcast %cst_144 : f32 to vector<16x128xf32>
    %621 = arith.addf %620, %619 : vector<16x128xf32>
    %622 = arith.divf %620, %621 : vector<16x128xf32>
    %623 = vector.extract_strided_slice %606 {offsets = [0, 256], sizes = [16, 128], strides = [1, 1]} : vector<16x384xf32> to vector<16x128xf32>
    %624 = vector.extract_strided_slice %605 {offsets = [0, 256], sizes = [16, 128], strides = [1, 1]} : vector<16x384xf32> to vector<16x128xf32>
    %625 = arith.mulf %614, %624 : vector<16x128xf32>
    %626 = arith.addf %623, %625 : vector<16x128xf32>
    %627 = math.tanh %626 : vector<16x128xf32>
    %cst_145 = arith.constant 1.000000e+00 : f32
    %628 = vector.broadcast %cst_145 : f32 to vector<16x128xf32>
    %629 = arith.subf %628, %622 : vector<16x128xf32>
    %630 = arith.mulf %629, %627 : vector<16x128xf32>
    %631 = arith.mulf %622, %601 : vector<16x128xf32>
    %632 = arith.addf %630, %631 : vector<16x128xf32>
    %c32_146 = arith.constant 32 : index
    %c0_147 = arith.constant 0 : index
    %633 = vector.load %arg10[%c32_146, %c0_147] : memref<128x128xf32, #tpu.memory_space<vmem>>, vector<16x128xf32>
    tpu.vector_store %arg10[%c32_146, %c0_147], %632 {strides = array<i32>} : memref<128x128xf32, #tpu.memory_space<vmem>>, vector<16x128xf32>,
    %cst_148 = arith.constant dense<0.000000e+00> : vector<16x384xf32>
    %634 = tpu.matmul %632, %532, %cst_148 {dimension_numbers = #tpu.dot_dimension_numbers<[1], [0], [0], [1], [0, 0, 1, 1], [], []>} : vector<16x128xf32>, vector<128x384xf32>, vector<16x384xf32> -> vector<16x384xf32>
    %635 = vector.broadcast %536 : vector<1x384xf32> to vector<16x384xf32>
    %636 = arith.addf %634, %635 : vector<16x384xf32>
    %637 = vector.extract_strided_slice %539 {offsets = [48, 0], sizes = [16, 384], strides = [1, 1]} : vector<128x384xf32> to vector<16x384xf32>
    %638 = vector.extract_strided_slice %637 {offsets = [0, 0], sizes = [16, 128], strides = [1, 1]} : vector<16x384xf32> to vector<16x128xf32>
    %639 = vector.extract_strided_slice %636 {offsets = [0, 0], sizes = [16, 128], strides = [1, 1]} : vector<16x384xf32> to vector<16x128xf32>
    %640 = arith.addf %638, %639 : vector<16x128xf32>
    %641 = arith.negf %640 : vector<16x128xf32>
    %642 = math.exp %641 : vector<16x128xf32>
    %cst_149 = arith.constant 1.000000e+00 : f32
    %643 = vector.broadcast %cst_149 : f32 to vector<16x128xf32>
    %644 = arith.addf %643, %642 : vector<16x128xf32>
    %645 = arith.divf %643, %644 : vector<16x128xf32>
    %646 = vector.extract_strided_slice %637 {offsets = [0, 128], sizes = [16, 128], strides = [1, 1]} : vector<16x384xf32> to vector<16x128xf32>
    %647 = vector.extract_strided_slice %636 {offsets = [0, 128], sizes = [16, 128], strides = [1, 1]} : vector<16x384xf32> to vector<16x128xf32>
    %648 = arith.addf %646, %647 : vector<16x128xf32>
    %649 = arith.negf %648 : vector<16x128xf32>
    %650 = math.exp %649 : vector<16x128xf32>
    %cst_150 = arith.constant 1.000000e+00 : f32
    %651 = vector.broadcast %cst_150 : f32 to vector<16x128xf32>
    %652 = arith.addf %651, %650 : vector<16x128xf32>
    %653 = arith.divf %651, %652 : vector<16x128xf32>
    %654 = vector.extract_strided_slice %637 {offsets = [0, 256], sizes = [16, 128], strides = [1, 1]} : vector<16x384xf32> to vector<16x128xf32>
    %655 = vector.extract_strided_slice %636 {offsets = [0, 256], sizes = [16, 128], strides = [1, 1]} : vector<16x384xf32> to vector<16x128xf32>
    %656 = arith.mulf %645, %655 : vector<16x128xf32>
    %657 = arith.addf %654, %656 : vector<16x128xf32>
    %658 = math.tanh %657 : vector<16x128xf32>
    %cst_151 = arith.constant 1.000000e+00 : f32
    %659 = vector.broadcast %cst_151 : f32 to vector<16x128xf32>
    %660 = arith.subf %659, %653 : vector<16x128xf32>
    %661 = arith.mulf %660, %658 : vector<16x128xf32>
    %662 = arith.mulf %653, %632 : vector<16x128xf32>
    %663 = arith.addf %661, %662 : vector<16x128xf32>
    %c48_152 = arith.constant 48 : index
    %c0_153 = arith.constant 0 : index
    %664 = vector.load %arg10[%c48_152, %c0_153] : memref<128x128xf32, #tpu.memory_space<vmem>>, vector<16x128xf32>
    tpu.vector_store %arg10[%c48_152, %c0_153], %663 {strides = array<i32>} : memref<128x128xf32, #tpu.memory_space<vmem>>, vector<16x128xf32>,
    %cst_154 = arith.constant dense<0.000000e+00> : vector<16x384xf32>
    %665 = tpu.matmul %663, %532, %cst_154 {dimension_numbers = #tpu.dot_dimension_numbers<[1], [0], [0], [1], [0, 0, 1, 1], [], []>} : vector<16x128xf32>, vector<128x384xf32>, vector<16x384xf32> -> vector<16x384xf32>
    %666 = vector.broadcast %536 : vector<1x384xf32> to vector<16x384xf32>
    %667 = arith.addf %665, %666 : vector<16x384xf32>
    %668 = vector.extract_strided_slice %539 {offsets = [64, 0], sizes = [16, 384], strides = [1, 1]} : vector<128x384xf32> to vector<16x384xf32>
    %669 = vector.extract_strided_slice %668 {offsets = [0, 0], sizes = [16, 128], strides = [1, 1]} : vector<16x384xf32> to vector<16x128xf32>
    %670 = vector.extract_strided_slice %667 {offsets = [0, 0], sizes = [16, 128], strides = [1, 1]} : vector<16x384xf32> to vector<16x128xf32>
    %671 = arith.addf %669, %670 : vector<16x128xf32>
    %672 = arith.negf %671 : vector<16x128xf32>
    %673 = math.exp %672 : vector<16x128xf32>
    %cst_155 = arith.constant 1.000000e+00 : f32
    %674 = vector.broadcast %cst_155 : f32 to vector<16x128xf32>
    %675 = arith.addf %674, %673 : vector<16x128xf32>
    %676 = arith.divf %674, %675 : vector<16x128xf32>
    %677 = vector.extract_strided_slice %668 {offsets = [0, 128], sizes = [16, 128], strides = [1, 1]} : vector<16x384xf32> to vector<16x128xf32>
    %678 = vector.extract_strided_slice %667 {offsets = [0, 128], sizes = [16, 128], strides = [1, 1]} : vector<16x384xf32> to vector<16x128xf32>
    %679 = arith.addf %677, %678 : vector<16x128xf32>
    %680 = arith.negf %679 : vector<16x128xf32>
    %681 = math.exp %680 : vector<16x128xf32>
    %cst_156 = arith.constant 1.000000e+00 : f32
    %682 = vector.broadcast %cst_156 : f32 to vector<16x128xf32>
    %683 = arith.addf %682, %681 : vector<16x128xf32>
    %684 = arith.divf %682, %683 : vector<16x128xf32>
    %685 = vector.extract_strided_slice %668 {offsets = [0, 256], sizes = [16, 128], strides = [1, 1]} : vector<16x384xf32> to vector<16x128xf32>
    %686 = vector.extract_strided_slice %667 {offsets = [0, 256], sizes = [16, 128], strides = [1, 1]} : vector<16x384xf32> to vector<16x128xf32>
    %687 = arith.mulf %676, %686 : vector<16x128xf32>
    %688 = arith.addf %685, %687 : vector<16x128xf32>
    %689 = math.tanh %688 : vector<16x128xf32>
    %cst_157 = arith.constant 1.000000e+00 : f32
    %690 = vector.broadcast %cst_157 : f32 to vector<16x128xf32>
    %691 = arith.subf %690, %684 : vector<16x128xf32>
    %692 = arith.mulf %691, %689 : vector<16x128xf32>
    %693 = arith.mulf %684, %663 : vector<16x128xf32>
    %694 = arith.addf %692, %693 : vector<16x128xf32>
    %c64_158 = arith.constant 64 : index
    %c0_159 = arith.constant 0 : index
    %695 = vector.load %arg10[%c64_158, %c0_159] : memref<128x128xf32, #tpu.memory_space<vmem>>, vector<16x128xf32>
    tpu.vector_store %arg10[%c64_158, %c0_159], %694 {strides = array<i32>} : memref<128x128xf32, #tpu.memory_space<vmem>>, vector<16x128xf32>,
    %cst_160 = arith.constant dense<0.000000e+00> : vector<16x384xf32>
    %696 = tpu.matmul %694, %532, %cst_160 {dimension_numbers = #tpu.dot_dimension_numbers<[1], [0], [0], [1], [0, 0, 1, 1], [], []>} : vector<16x128xf32>, vector<128x384xf32>, vector<16x384xf32> -> vector<16x384xf32>
    %697 = vector.broadcast %536 : vector<1x384xf32> to vector<16x384xf32>
    %698 = arith.addf %696, %697 : vector<16x384xf32>
    %699 = vector.extract_strided_slice %539 {offsets = [80, 0], sizes = [16, 384], strides = [1, 1]} : vector<128x384xf32> to vector<16x384xf32>
    %700 = vector.extract_strided_slice %699 {offsets = [0, 0], sizes = [16, 128], strides = [1, 1]} : vector<16x384xf32> to vector<16x128xf32>
    %701 = vector.extract_strided_slice %698 {offsets = [0, 0], sizes = [16, 128], strides = [1, 1]} : vector<16x384xf32> to vector<16x128xf32>
    %702 = arith.addf %700, %701 : vector<16x128xf32>
    %703 = arith.negf %702 : vector<16x128xf32>
    %704 = math.exp %703 : vector<16x128xf32>
    %cst_161 = arith.constant 1.000000e+00 : f32
    %705 = vector.broadcast %cst_161 : f32 to vector<16x128xf32>
    %706 = arith.addf %705, %704 : vector<16x128xf32>
    %707 = arith.divf %705, %706 : vector<16x128xf32>
    %708 = vector.extract_strided_slice %699 {offsets = [0, 128], sizes = [16, 128], strides = [1, 1]} : vector<16x384xf32> to vector<16x128xf32>
    %709 = vector.extract_strided_slice %698 {offsets = [0, 128], sizes = [16, 128], strides = [1, 1]} : vector<16x384xf32> to vector<16x128xf32>
    %710 = arith.addf %708, %709 : vector<16x128xf32>
    %711 = arith.negf %710 : vector<16x128xf32>
    %712 = math.exp %711 : vector<16x128xf32>
    %cst_162 = arith.constant 1.000000e+00 : f32
    %713 = vector.broadcast %cst_162 : f32 to vector<16x128xf32>
    %714 = arith.addf %713, %712 : vector<16x128xf32>
    %715 = arith.divf %713, %714 : vector<16x128xf32>
    %716 = vector.extract_strided_slice %699 {offsets = [0, 256], sizes = [16, 128], strides = [1, 1]} : vector<16x384xf32> to vector<16x128xf32>
    %717 = vector.extract_strided_slice %698 {offsets = [0, 256], sizes = [16, 128], strides = [1, 1]} : vector<16x384xf32> to vector<16x128xf32>
    %718 = arith.mulf %707, %717 : vector<16x128xf32>
    %719 = arith.addf %716, %718 : vector<16x128xf32>
    %720 = math.tanh %719 : vector<16x128xf32>
    %cst_163 = arith.constant 1.000000e+00 : f32
    %721 = vector.broadcast %cst_163 : f32 to vector<16x128xf32>
    %722 = arith.subf %721, %715 : vector<16x128xf32>
    %723 = arith.mulf %722, %720 : vector<16x128xf32>
    %724 = arith.mulf %715, %694 : vector<16x128xf32>
    %725 = arith.addf %723, %724 : vector<16x128xf32>
    %c80_164 = arith.constant 80 : index
    %c0_165 = arith.constant 0 : index
    %726 = vector.load %arg10[%c80_164, %c0_165] : memref<128x128xf32, #tpu.memory_space<vmem>>, vector<16x128xf32>
    tpu.vector_store %arg10[%c80_164, %c0_165], %725 {strides = array<i32>} : memref<128x128xf32, #tpu.memory_space<vmem>>, vector<16x128xf32>,
    %cst_166 = arith.constant dense<0.000000e+00> : vector<16x384xf32>
    %727 = tpu.matmul %725, %532, %cst_166 {dimension_numbers = #tpu.dot_dimension_numbers<[1], [0], [0], [1], [0, 0, 1, 1], [], []>} : vector<16x128xf32>, vector<128x384xf32>, vector<16x384xf32> -> vector<16x384xf32>
    %728 = vector.broadcast %536 : vector<1x384xf32> to vector<16x384xf32>
    %729 = arith.addf %727, %728 : vector<16x384xf32>
    %730 = vector.extract_strided_slice %539 {offsets = [96, 0], sizes = [16, 384], strides = [1, 1]} : vector<128x384xf32> to vector<16x384xf32>
    %731 = vector.extract_strided_slice %730 {offsets = [0, 0], sizes = [16, 128], strides = [1, 1]} : vector<16x384xf32> to vector<16x128xf32>
    %732 = vector.extract_strided_slice %729 {offsets = [0, 0], sizes = [16, 128], strides = [1, 1]} : vector<16x384xf32> to vector<16x128xf32>
    %733 = arith.addf %731, %732 : vector<16x128xf32>
    %734 = arith.negf %733 : vector<16x128xf32>
    %735 = math.exp %734 : vector<16x128xf32>
    %cst_167 = arith.constant 1.000000e+00 : f32
    %736 = vector.broadcast %cst_167 : f32 to vector<16x128xf32>
    %737 = arith.addf %736, %735 : vector<16x128xf32>
    %738 = arith.divf %736, %737 : vector<16x128xf32>
    %739 = vector.extract_strided_slice %730 {offsets = [0, 128], sizes = [16, 128], strides = [1, 1]} : vector<16x384xf32> to vector<16x128xf32>
    %740 = vector.extract_strided_slice %729 {offsets = [0, 128], sizes = [16, 128], strides = [1, 1]} : vector<16x384xf32> to vector<16x128xf32>
    %741 = arith.addf %739, %740 : vector<16x128xf32>
    %742 = arith.negf %741 : vector<16x128xf32>
    %743 = math.exp %742 : vector<16x128xf32>
    %cst_168 = arith.constant 1.000000e+00 : f32
    %744 = vector.broadcast %cst_168 : f32 to vector<16x128xf32>
    %745 = arith.addf %744, %743 : vector<16x128xf32>
    %746 = arith.divf %744, %745 : vector<16x128xf32>
    %747 = vector.extract_strided_slice %730 {offsets = [0, 256], sizes = [16, 128], strides = [1, 1]} : vector<16x384xf32> to vector<16x128xf32>
    %748 = vector.extract_strided_slice %729 {offsets = [0, 256], sizes = [16, 128], strides = [1, 1]} : vector<16x384xf32> to vector<16x128xf32>
    %749 = arith.mulf %738, %748 : vector<16x128xf32>
    %750 = arith.addf %747, %749 : vector<16x128xf32>
    %751 = math.tanh %750 : vector<16x128xf32>
    %cst_169 = arith.constant 1.000000e+00 : f32
    %752 = vector.broadcast %cst_169 : f32 to vector<16x128xf32>
    %753 = arith.subf %752, %746 : vector<16x128xf32>
    %754 = arith.mulf %753, %751 : vector<16x128xf32>
    %755 = arith.mulf %746, %725 : vector<16x128xf32>
    %756 = arith.addf %754, %755 : vector<16x128xf32>
    %c96_170 = arith.constant 96 : index
    %c0_171 = arith.constant 0 : index
    %757 = vector.load %arg10[%c96_170, %c0_171] : memref<128x128xf32, #tpu.memory_space<vmem>>, vector<16x128xf32>
    tpu.vector_store %arg10[%c96_170, %c0_171], %756 {strides = array<i32>} : memref<128x128xf32, #tpu.memory_space<vmem>>, vector<16x128xf32>,
    %cst_172 = arith.constant dense<0.000000e+00> : vector<16x384xf32>
    %758 = tpu.matmul %756, %532, %cst_172 {dimension_numbers = #tpu.dot_dimension_numbers<[1], [0], [0], [1], [0, 0, 1, 1], [], []>} : vector<16x128xf32>, vector<128x384xf32>, vector<16x384xf32> -> vector<16x384xf32>
    %759 = vector.broadcast %536 : vector<1x384xf32> to vector<16x384xf32>
    %760 = arith.addf %758, %759 : vector<16x384xf32>
    %761 = vector.extract_strided_slice %539 {offsets = [112, 0], sizes = [16, 384], strides = [1, 1]} : vector<128x384xf32> to vector<16x384xf32>
    %762 = vector.extract_strided_slice %761 {offsets = [0, 0], sizes = [16, 128], strides = [1, 1]} : vector<16x384xf32> to vector<16x128xf32>
    %763 = vector.extract_strided_slice %760 {offsets = [0, 0], sizes = [16, 128], strides = [1, 1]} : vector<16x384xf32> to vector<16x128xf32>
    %764 = arith.addf %762, %763 : vector<16x128xf32>
    %765 = arith.negf %764 : vector<16x128xf32>
    %766 = math.exp %765 : vector<16x128xf32>
    %cst_173 = arith.constant 1.000000e+00 : f32
    %767 = vector.broadcast %cst_173 : f32 to vector<16x128xf32>
    %768 = arith.addf %767, %766 : vector<16x128xf32>
    %769 = arith.divf %767, %768 : vector<16x128xf32>
    %770 = vector.extract_strided_slice %761 {offsets = [0, 128], sizes = [16, 128], strides = [1, 1]} : vector<16x384xf32> to vector<16x128xf32>
    %771 = vector.extract_strided_slice %760 {offsets = [0, 128], sizes = [16, 128], strides = [1, 1]} : vector<16x384xf32> to vector<16x128xf32>
    %772 = arith.addf %770, %771 : vector<16x128xf32>
    %773 = arith.negf %772 : vector<16x128xf32>
    %774 = math.exp %773 : vector<16x128xf32>
    %cst_174 = arith.constant 1.000000e+00 : f32
    %775 = vector.broadcast %cst_174 : f32 to vector<16x128xf32>
    %776 = arith.addf %775, %774 : vector<16x128xf32>
    %777 = arith.divf %775, %776 : vector<16x128xf32>
    %778 = vector.extract_strided_slice %761 {offsets = [0, 256], sizes = [16, 128], strides = [1, 1]} : vector<16x384xf32> to vector<16x128xf32>
    %779 = vector.extract_strided_slice %760 {offsets = [0, 256], sizes = [16, 128], strides = [1, 1]} : vector<16x384xf32> to vector<16x128xf32>
    %780 = arith.mulf %769, %779 : vector<16x128xf32>
    %781 = arith.addf %778, %780 : vector<16x128xf32>
    %782 = math.tanh %781 : vector<16x128xf32>
    %cst_175 = arith.constant 1.000000e+00 : f32
    %783 = vector.broadcast %cst_175 : f32 to vector<16x128xf32>
    %784 = arith.subf %783, %777 : vector<16x128xf32>
    %785 = arith.mulf %784, %782 : vector<16x128xf32>
    %786 = arith.mulf %777, %756 : vector<16x128xf32>
    %787 = arith.addf %785, %786 : vector<16x128xf32>
    %c112_176 = arith.constant 112 : index
    %c0_177 = arith.constant 0 : index
    %788 = vector.load %arg10[%c112_176, %c0_177] : memref<128x128xf32, #tpu.memory_space<vmem>>, vector<16x128xf32>
    tpu.vector_store %arg10[%c112_176, %c0_177], %787 {strides = array<i32>} : memref<128x128xf32, #tpu.memory_space<vmem>>, vector<16x128xf32>,
    %c2_178 = arith.constant 2 : index
    %c0_179 = arith.constant 0 : index
    %c0_180 = arith.constant 0 : index
    %789 = vector.load %arg8[%c2_178, %c0_179, %c0_180] : memref<4x16x128xf32, #tpu.memory_space<vmem>>, vector<1x16x128xf32>
    %790 = vector.shape_cast %789 : vector<1x16x128xf32> to vector<16x128xf32>
    %791 = vector.shape_cast %787 : vector<16x128xf32> to vector<1x16x128xf32>
    tpu.vector_store %arg8[%c2_178, %c0_179, %c0_180], %791 {strides = array<i32>} : memref<4x16x128xf32, #tpu.memory_space<vmem>>, vector<1x16x128xf32>,
    %c0_181 = arith.constant 0 : index
    %c0_182 = arith.constant 0 : index
    %792 = vector.load %arg10[%c0_181, %c0_182] : memref<128x128xf32, #tpu.memory_space<vmem>>, vector<128x128xf32>
    %c3 = arith.constant 3 : index
    %c0_183 = arith.constant 0 : index
    %c0_184 = arith.constant 0 : index
    %793 = vector.load %arg1[%c3, %c0_183, %c0_184] : memref<4x128x384xf32, #tpu.memory_space<vmem>>, vector<1x128x384xf32>
    %794 = vector.shape_cast %793 : vector<1x128x384xf32> to vector<128x384xf32>
    %c3_185 = arith.constant 3 : index
    %c0_186 = arith.constant 0 : index
    %c0_187 = arith.constant 0 : index
    %795 = vector.load %arg2[%c3_185, %c0_186, %c0_187] : memref<4x128x384xf32, #tpu.memory_space<vmem>>, vector<1x128x384xf32>
    %796 = vector.shape_cast %795 : vector<1x128x384xf32> to vector<128x384xf32>
    %c3_188 = arith.constant 3 : index
    %c0_189 = arith.constant 0 : index
    %c0_190 = arith.constant 0 : index
    %797 = vector.load %arg3[%c3_188, %c0_189, %c0_190] : memref<4x2x384xf32, #tpu.memory_space<vmem>>, vector<1x2x384xf32>
    %798 = vector.shape_cast %797 : vector<1x2x384xf32> to vector<2x384xf32>
    %799 = vector.extract_strided_slice %798 {offsets = [0, 0], sizes = [1, 384], strides = [1, 1]} : vector<2x384xf32> to vector<1x384xf32>
    %800 = vector.extract_strided_slice %798 {offsets = [1, 0], sizes = [1, 384], strides = [1, 1]} : vector<2x384xf32> to vector<1x384xf32>
    %cst_191 = arith.constant dense<0.000000e+00> : vector<128x384xf32>
    %801 = tpu.matmul %792, %794, %cst_191 {dimension_numbers = #tpu.dot_dimension_numbers<[1], [0], [0], [1], [0, 0, 1, 1], [], []>} : vector<128x128xf32>, vector<128x384xf32>, vector<128x384xf32> -> vector<128x384xf32>
    %802 = vector.broadcast %799 : vector<1x384xf32> to vector<128x384xf32>
    %803 = arith.addf %801, %802 : vector<128x384xf32>
    %cst_192 = arith.constant 0.000000e+00 : f32
    %804 = vector.broadcast %cst_192 : f32 to vector<16x128xf32>
    %cst_193 = arith.constant dense<0.000000e+00> : vector<16x384xf32>
    %805 = tpu.matmul %804, %796, %cst_193 {dimension_numbers = #tpu.dot_dimension_numbers<[1], [0], [0], [1], [0, 0, 1, 1], [], []>} : vector<16x128xf32>, vector<128x384xf32>, vector<16x384xf32> -> vector<16x384xf32>
    %806 = vector.broadcast %800 : vector<1x384xf32> to vector<16x384xf32>
    %807 = arith.addf %805, %806 : vector<16x384xf32>
    %808 = vector.extract_strided_slice %803 {offsets = [0, 0], sizes = [16, 384], strides = [1, 1]} : vector<128x384xf32> to vector<16x384xf32>
    %809 = vector.extract_strided_slice %808 {offsets = [0, 0], sizes = [16, 128], strides = [1, 1]} : vector<16x384xf32> to vector<16x128xf32>
    %810 = vector.extract_strided_slice %807 {offsets = [0, 0], sizes = [16, 128], strides = [1, 1]} : vector<16x384xf32> to vector<16x128xf32>
    %811 = arith.addf %809, %810 : vector<16x128xf32>
    %812 = arith.negf %811 : vector<16x128xf32>
    %813 = math.exp %812 : vector<16x128xf32>
    %cst_194 = arith.constant 1.000000e+00 : f32
    %814 = vector.broadcast %cst_194 : f32 to vector<16x128xf32>
    %815 = arith.addf %814, %813 : vector<16x128xf32>
    %816 = arith.divf %814, %815 : vector<16x128xf32>
    %817 = vector.extract_strided_slice %808 {offsets = [0, 128], sizes = [16, 128], strides = [1, 1]} : vector<16x384xf32> to vector<16x128xf32>
    %818 = vector.extract_strided_slice %807 {offsets = [0, 128], sizes = [16, 128], strides = [1, 1]} : vector<16x384xf32> to vector<16x128xf32>
    %819 = arith.addf %817, %818 : vector<16x128xf32>
    %820 = arith.negf %819 : vector<16x128xf32>
    %821 = math.exp %820 : vector<16x128xf32>
    %cst_195 = arith.constant 1.000000e+00 : f32
    %822 = vector.broadcast %cst_195 : f32 to vector<16x128xf32>
    %823 = arith.addf %822, %821 : vector<16x128xf32>
    %824 = arith.divf %822, %823 : vector<16x128xf32>
    %825 = vector.extract_strided_slice %808 {offsets = [0, 256], sizes = [16, 128], strides = [1, 1]} : vector<16x384xf32> to vector<16x128xf32>
    %826 = vector.extract_strided_slice %807 {offsets = [0, 256], sizes = [16, 128], strides = [1, 1]} : vector<16x384xf32> to vector<16x128xf32>
    %827 = arith.mulf %816, %826 : vector<16x128xf32>
    %828 = arith.addf %825, %827 : vector<16x128xf32>
    %829 = math.tanh %828 : vector<16x128xf32>
    %cst_196 = arith.constant 1.000000e+00 : f32
    %830 = vector.broadcast %cst_196 : f32 to vector<16x128xf32>
    %831 = arith.subf %830, %824 : vector<16x128xf32>
    %832 = arith.mulf %831, %829 : vector<16x128xf32>
    %833 = arith.mulf %824, %804 : vector<16x128xf32>
    %834 = arith.addf %832, %833 : vector<16x128xf32>
    %c0_197 = arith.constant 0 : index
    %c0_198 = arith.constant 0 : index
    %835 = vector.load %arg7[%c0_197, %c0_198] : memref<128x128xf32, #tpu.memory_space<vmem>>, vector<16x128xf32>
    tpu.vector_store %arg7[%c0_197, %c0_198], %834 {strides = array<i32>} : memref<128x128xf32, #tpu.memory_space<vmem>>, vector<16x128xf32>,
    %cst_199 = arith.constant dense<0.000000e+00> : vector<16x384xf32>
    %836 = tpu.matmul %834, %796, %cst_199 {dimension_numbers = #tpu.dot_dimension_numbers<[1], [0], [0], [1], [0, 0, 1, 1], [], []>} : vector<16x128xf32>, vector<128x384xf32>, vector<16x384xf32> -> vector<16x384xf32>
    %837 = vector.broadcast %800 : vector<1x384xf32> to vector<16x384xf32>
    %838 = arith.addf %836, %837 : vector<16x384xf32>
    %839 = vector.extract_strided_slice %803 {offsets = [16, 0], sizes = [16, 384], strides = [1, 1]} : vector<128x384xf32> to vector<16x384xf32>
    %840 = vector.extract_strided_slice %839 {offsets = [0, 0], sizes = [16, 128], strides = [1, 1]} : vector<16x384xf32> to vector<16x128xf32>
    %841 = vector.extract_strided_slice %838 {offsets = [0, 0], sizes = [16, 128], strides = [1, 1]} : vector<16x384xf32> to vector<16x128xf32>
    %842 = arith.addf %840, %841 : vector<16x128xf32>
    %843 = arith.negf %842 : vector<16x128xf32>
    %844 = math.exp %843 : vector<16x128xf32>
    %cst_200 = arith.constant 1.000000e+00 : f32
    %845 = vector.broadcast %cst_200 : f32 to vector<16x128xf32>
    %846 = arith.addf %845, %844 : vector<16x128xf32>
    %847 = arith.divf %845, %846 : vector<16x128xf32>
    %848 = vector.extract_strided_slice %839 {offsets = [0, 128], sizes = [16, 128], strides = [1, 1]} : vector<16x384xf32> to vector<16x128xf32>
    %849 = vector.extract_strided_slice %838 {offsets = [0, 128], sizes = [16, 128], strides = [1, 1]} : vector<16x384xf32> to vector<16x128xf32>
    %850 = arith.addf %848, %849 : vector<16x128xf32>
    %851 = arith.negf %850 : vector<16x128xf32>
    %852 = math.exp %851 : vector<16x128xf32>
    %cst_201 = arith.constant 1.000000e+00 : f32
    %853 = vector.broadcast %cst_201 : f32 to vector<16x128xf32>
    %854 = arith.addf %853, %852 : vector<16x128xf32>
    %855 = arith.divf %853, %854 : vector<16x128xf32>
    %856 = vector.extract_strided_slice %839 {offsets = [0, 256], sizes = [16, 128], strides = [1, 1]} : vector<16x384xf32> to vector<16x128xf32>
    %857 = vector.extract_strided_slice %838 {offsets = [0, 256], sizes = [16, 128], strides = [1, 1]} : vector<16x384xf32> to vector<16x128xf32>
    %858 = arith.mulf %847, %857 : vector<16x128xf32>
    %859 = arith.addf %856, %858 : vector<16x128xf32>
    %860 = math.tanh %859 : vector<16x128xf32>
    %cst_202 = arith.constant 1.000000e+00 : f32
    %861 = vector.broadcast %cst_202 : f32 to vector<16x128xf32>
    %862 = arith.subf %861, %855 : vector<16x128xf32>
    %863 = arith.mulf %862, %860 : vector<16x128xf32>
    %864 = arith.mulf %855, %834 : vector<16x128xf32>
    %865 = arith.addf %863, %864 : vector<16x128xf32>
    %c16_203 = arith.constant 16 : index
    %c0_204 = arith.constant 0 : index
    %866 = vector.load %arg7[%c16_203, %c0_204] : memref<128x128xf32, #tpu.memory_space<vmem>>, vector<16x128xf32>
    tpu.vector_store %arg7[%c16_203, %c0_204], %865 {strides = array<i32>} : memref<128x128xf32, #tpu.memory_space<vmem>>, vector<16x128xf32>,
    %cst_205 = arith.constant dense<0.000000e+00> : vector<16x384xf32>
    %867 = tpu.matmul %865, %796, %cst_205 {dimension_numbers = #tpu.dot_dimension_numbers<[1], [0], [0], [1], [0, 0, 1, 1], [], []>} : vector<16x128xf32>, vector<128x384xf32>, vector<16x384xf32> -> vector<16x384xf32>
    %868 = vector.broadcast %800 : vector<1x384xf32> to vector<16x384xf32>
    %869 = arith.addf %867, %868 : vector<16x384xf32>
    %870 = vector.extract_strided_slice %803 {offsets = [32, 0], sizes = [16, 384], strides = [1, 1]} : vector<128x384xf32> to vector<16x384xf32>
    %871 = vector.extract_strided_slice %870 {offsets = [0, 0], sizes = [16, 128], strides = [1, 1]} : vector<16x384xf32> to vector<16x128xf32>
    %872 = vector.extract_strided_slice %869 {offsets = [0, 0], sizes = [16, 128], strides = [1, 1]} : vector<16x384xf32> to vector<16x128xf32>
    %873 = arith.addf %871, %872 : vector<16x128xf32>
    %874 = arith.negf %873 : vector<16x128xf32>
    %875 = math.exp %874 : vector<16x128xf32>
    %cst_206 = arith.constant 1.000000e+00 : f32
    %876 = vector.broadcast %cst_206 : f32 to vector<16x128xf32>
    %877 = arith.addf %876, %875 : vector<16x128xf32>
    %878 = arith.divf %876, %877 : vector<16x128xf32>
    %879 = vector.extract_strided_slice %870 {offsets = [0, 128], sizes = [16, 128], strides = [1, 1]} : vector<16x384xf32> to vector<16x128xf32>
    %880 = vector.extract_strided_slice %869 {offsets = [0, 128], sizes = [16, 128], strides = [1, 1]} : vector<16x384xf32> to vector<16x128xf32>
    %881 = arith.addf %879, %880 : vector<16x128xf32>
    %882 = arith.negf %881 : vector<16x128xf32>
    %883 = math.exp %882 : vector<16x128xf32>
    %cst_207 = arith.constant 1.000000e+00 : f32
    %884 = vector.broadcast %cst_207 : f32 to vector<16x128xf32>
    %885 = arith.addf %884, %883 : vector<16x128xf32>
    %886 = arith.divf %884, %885 : vector<16x128xf32>
    %887 = vector.extract_strided_slice %870 {offsets = [0, 256], sizes = [16, 128], strides = [1, 1]} : vector<16x384xf32> to vector<16x128xf32>
    %888 = vector.extract_strided_slice %869 {offsets = [0, 256], sizes = [16, 128], strides = [1, 1]} : vector<16x384xf32> to vector<16x128xf32>
    %889 = arith.mulf %878, %888 : vector<16x128xf32>
    %890 = arith.addf %887, %889 : vector<16x128xf32>
    %891 = math.tanh %890 : vector<16x128xf32>
    %cst_208 = arith.constant 1.000000e+00 : f32
    %892 = vector.broadcast %cst_208 : f32 to vector<16x128xf32>
    %893 = arith.subf %892, %886 : vector<16x128xf32>
    %894 = arith.mulf %893, %891 : vector<16x128xf32>
    %895 = arith.mulf %886, %865 : vector<16x128xf32>
    %896 = arith.addf %894, %895 : vector<16x128xf32>
    %c32_209 = arith.constant 32 : index
    %c0_210 = arith.constant 0 : index
    %897 = vector.load %arg7[%c32_209, %c0_210] : memref<128x128xf32, #tpu.memory_space<vmem>>, vector<16x128xf32>
    tpu.vector_store %arg7[%c32_209, %c0_210], %896 {strides = array<i32>} : memref<128x128xf32, #tpu.memory_space<vmem>>, vector<16x128xf32>,
    %cst_211 = arith.constant dense<0.000000e+00> : vector<16x384xf32>
    %898 = tpu.matmul %896, %796, %cst_211 {dimension_numbers = #tpu.dot_dimension_numbers<[1], [0], [0], [1], [0, 0, 1, 1], [], []>} : vector<16x128xf32>, vector<128x384xf32>, vector<16x384xf32> -> vector<16x384xf32>
    %899 = vector.broadcast %800 : vector<1x384xf32> to vector<16x384xf32>
    %900 = arith.addf %898, %899 : vector<16x384xf32>
    %901 = vector.extract_strided_slice %803 {offsets = [48, 0], sizes = [16, 384], strides = [1, 1]} : vector<128x384xf32> to vector<16x384xf32>
    %902 = vector.extract_strided_slice %901 {offsets = [0, 0], sizes = [16, 128], strides = [1, 1]} : vector<16x384xf32> to vector<16x128xf32>
    %903 = vector.extract_strided_slice %900 {offsets = [0, 0], sizes = [16, 128], strides = [1, 1]} : vector<16x384xf32> to vector<16x128xf32>
    %904 = arith.addf %902, %903 : vector<16x128xf32>
    %905 = arith.negf %904 : vector<16x128xf32>
    %906 = math.exp %905 : vector<16x128xf32>
    %cst_212 = arith.constant 1.000000e+00 : f32
    %907 = vector.broadcast %cst_212 : f32 to vector<16x128xf32>
    %908 = arith.addf %907, %906 : vector<16x128xf32>
    %909 = arith.divf %907, %908 : vector<16x128xf32>
    %910 = vector.extract_strided_slice %901 {offsets = [0, 128], sizes = [16, 128], strides = [1, 1]} : vector<16x384xf32> to vector<16x128xf32>
    %911 = vector.extract_strided_slice %900 {offsets = [0, 128], sizes = [16, 128], strides = [1, 1]} : vector<16x384xf32> to vector<16x128xf32>
    %912 = arith.addf %910, %911 : vector<16x128xf32>
    %913 = arith.negf %912 : vector<16x128xf32>
    %914 = math.exp %913 : vector<16x128xf32>
    %cst_213 = arith.constant 1.000000e+00 : f32
    %915 = vector.broadcast %cst_213 : f32 to vector<16x128xf32>
    %916 = arith.addf %915, %914 : vector<16x128xf32>
    %917 = arith.divf %915, %916 : vector<16x128xf32>
    %918 = vector.extract_strided_slice %901 {offsets = [0, 256], sizes = [16, 128], strides = [1, 1]} : vector<16x384xf32> to vector<16x128xf32>
    %919 = vector.extract_strided_slice %900 {offsets = [0, 256], sizes = [16, 128], strides = [1, 1]} : vector<16x384xf32> to vector<16x128xf32>
    %920 = arith.mulf %909, %919 : vector<16x128xf32>
    %921 = arith.addf %918, %920 : vector<16x128xf32>
    %922 = math.tanh %921 : vector<16x128xf32>
    %cst_214 = arith.constant 1.000000e+00 : f32
    %923 = vector.broadcast %cst_214 : f32 to vector<16x128xf32>
    %924 = arith.subf %923, %917 : vector<16x128xf32>
    %925 = arith.mulf %924, %922 : vector<16x128xf32>
    %926 = arith.mulf %917, %896 : vector<16x128xf32>
    %927 = arith.addf %925, %926 : vector<16x128xf32>
    %c48_215 = arith.constant 48 : index
    %c0_216 = arith.constant 0 : index
    %928 = vector.load %arg7[%c48_215, %c0_216] : memref<128x128xf32, #tpu.memory_space<vmem>>, vector<16x128xf32>
    tpu.vector_store %arg7[%c48_215, %c0_216], %927 {strides = array<i32>} : memref<128x128xf32, #tpu.memory_space<vmem>>, vector<16x128xf32>,
    %cst_217 = arith.constant dense<0.000000e+00> : vector<16x384xf32>
    %929 = tpu.matmul %927, %796, %cst_217 {dimension_numbers = #tpu.dot_dimension_numbers<[1], [0], [0], [1], [0, 0, 1, 1], [], []>} : vector<16x128xf32>, vector<128x384xf32>, vector<16x384xf32> -> vector<16x384xf32>
    %930 = vector.broadcast %800 : vector<1x384xf32> to vector<16x384xf32>
    %931 = arith.addf %929, %930 : vector<16x384xf32>
    %932 = vector.extract_strided_slice %803 {offsets = [64, 0], sizes = [16, 384], strides = [1, 1]} : vector<128x384xf32> to vector<16x384xf32>
    %933 = vector.extract_strided_slice %932 {offsets = [0, 0], sizes = [16, 128], strides = [1, 1]} : vector<16x384xf32> to vector<16x128xf32>
    %934 = vector.extract_strided_slice %931 {offsets = [0, 0], sizes = [16, 128], strides = [1, 1]} : vector<16x384xf32> to vector<16x128xf32>
    %935 = arith.addf %933, %934 : vector<16x128xf32>
    %936 = arith.negf %935 : vector<16x128xf32>
    %937 = math.exp %936 : vector<16x128xf32>
    %cst_218 = arith.constant 1.000000e+00 : f32
    %938 = vector.broadcast %cst_218 : f32 to vector<16x128xf32>
    %939 = arith.addf %938, %937 : vector<16x128xf32>
    %940 = arith.divf %938, %939 : vector<16x128xf32>
    %941 = vector.extract_strided_slice %932 {offsets = [0, 128], sizes = [16, 128], strides = [1, 1]} : vector<16x384xf32> to vector<16x128xf32>
    %942 = vector.extract_strided_slice %931 {offsets = [0, 128], sizes = [16, 128], strides = [1, 1]} : vector<16x384xf32> to vector<16x128xf32>
    %943 = arith.addf %941, %942 : vector<16x128xf32>
    %944 = arith.negf %943 : vector<16x128xf32>
    %945 = math.exp %944 : vector<16x128xf32>
    %cst_219 = arith.constant 1.000000e+00 : f32
    %946 = vector.broadcast %cst_219 : f32 to vector<16x128xf32>
    %947 = arith.addf %946, %945 : vector<16x128xf32>
    %948 = arith.divf %946, %947 : vector<16x128xf32>
    %949 = vector.extract_strided_slice %932 {offsets = [0, 256], sizes = [16, 128], strides = [1, 1]} : vector<16x384xf32> to vector<16x128xf32>
    %950 = vector.extract_strided_slice %931 {offsets = [0, 256], sizes = [16, 128], strides = [1, 1]} : vector<16x384xf32> to vector<16x128xf32>
    %951 = arith.mulf %940, %950 : vector<16x128xf32>
    %952 = arith.addf %949, %951 : vector<16x128xf32>
    %953 = math.tanh %952 : vector<16x128xf32>
    %cst_220 = arith.constant 1.000000e+00 : f32
    %954 = vector.broadcast %cst_220 : f32 to vector<16x128xf32>
    %955 = arith.subf %954, %948 : vector<16x128xf32>
    %956 = arith.mulf %955, %953 : vector<16x128xf32>
    %957 = arith.mulf %948, %927 : vector<16x128xf32>
    %958 = arith.addf %956, %957 : vector<16x128xf32>
    %c64_221 = arith.constant 64 : index
    %c0_222 = arith.constant 0 : index
    %959 = vector.load %arg7[%c64_221, %c0_222] : memref<128x128xf32, #tpu.memory_space<vmem>>, vector<16x128xf32>
    tpu.vector_store %arg7[%c64_221, %c0_222], %958 {strides = array<i32>} : memref<128x128xf32, #tpu.memory_space<vmem>>, vector<16x128xf32>,
    %cst_223 = arith.constant dense<0.000000e+00> : vector<16x384xf32>
    %960 = tpu.matmul %958, %796, %cst_223 {dimension_numbers = #tpu.dot_dimension_numbers<[1], [0], [0], [1], [0, 0, 1, 1], [], []>} : vector<16x128xf32>, vector<128x384xf32>, vector<16x384xf32> -> vector<16x384xf32>
    %961 = vector.broadcast %800 : vector<1x384xf32> to vector<16x384xf32>
    %962 = arith.addf %960, %961 : vector<16x384xf32>
    %963 = vector.extract_strided_slice %803 {offsets = [80, 0], sizes = [16, 384], strides = [1, 1]} : vector<128x384xf32> to vector<16x384xf32>
    %964 = vector.extract_strided_slice %963 {offsets = [0, 0], sizes = [16, 128], strides = [1, 1]} : vector<16x384xf32> to vector<16x128xf32>
    %965 = vector.extract_strided_slice %962 {offsets = [0, 0], sizes = [16, 128], strides = [1, 1]} : vector<16x384xf32> to vector<16x128xf32>
    %966 = arith.addf %964, %965 : vector<16x128xf32>
    %967 = arith.negf %966 : vector<16x128xf32>
    %968 = math.exp %967 : vector<16x128xf32>
    %cst_224 = arith.constant 1.000000e+00 : f32
    %969 = vector.broadcast %cst_224 : f32 to vector<16x128xf32>
    %970 = arith.addf %969, %968 : vector<16x128xf32>
    %971 = arith.divf %969, %970 : vector<16x128xf32>
    %972 = vector.extract_strided_slice %963 {offsets = [0, 128], sizes = [16, 128], strides = [1, 1]} : vector<16x384xf32> to vector<16x128xf32>
    %973 = vector.extract_strided_slice %962 {offsets = [0, 128], sizes = [16, 128], strides = [1, 1]} : vector<16x384xf32> to vector<16x128xf32>
    %974 = arith.addf %972, %973 : vector<16x128xf32>
    %975 = arith.negf %974 : vector<16x128xf32>
    %976 = math.exp %975 : vector<16x128xf32>
    %cst_225 = arith.constant 1.000000e+00 : f32
    %977 = vector.broadcast %cst_225 : f32 to vector<16x128xf32>
    %978 = arith.addf %977, %976 : vector<16x128xf32>
    %979 = arith.divf %977, %978 : vector<16x128xf32>
    %980 = vector.extract_strided_slice %963 {offsets = [0, 256], sizes = [16, 128], strides = [1, 1]} : vector<16x384xf32> to vector<16x128xf32>
    %981 = vector.extract_strided_slice %962 {offsets = [0, 256], sizes = [16, 128], strides = [1, 1]} : vector<16x384xf32> to vector<16x128xf32>
    %982 = arith.mulf %971, %981 : vector<16x128xf32>
    %983 = arith.addf %980, %982 : vector<16x128xf32>
    %984 = math.tanh %983 : vector<16x128xf32>
    %cst_226 = arith.constant 1.000000e+00 : f32
    %985 = vector.broadcast %cst_226 : f32 to vector<16x128xf32>
    %986 = arith.subf %985, %979 : vector<16x128xf32>
    %987 = arith.mulf %986, %984 : vector<16x128xf32>
    %988 = arith.mulf %979, %958 : vector<16x128xf32>
    %989 = arith.addf %987, %988 : vector<16x128xf32>
    %c80_227 = arith.constant 80 : index
    %c0_228 = arith.constant 0 : index
    %990 = vector.load %arg7[%c80_227, %c0_228] : memref<128x128xf32, #tpu.memory_space<vmem>>, vector<16x128xf32>
    tpu.vector_store %arg7[%c80_227, %c0_228], %989 {strides = array<i32>} : memref<128x128xf32, #tpu.memory_space<vmem>>, vector<16x128xf32>,
    %cst_229 = arith.constant dense<0.000000e+00> : vector<16x384xf32>
    %991 = tpu.matmul %989, %796, %cst_229 {dimension_numbers = #tpu.dot_dimension_numbers<[1], [0], [0], [1], [0, 0, 1, 1], [], []>} : vector<16x128xf32>, vector<128x384xf32>, vector<16x384xf32> -> vector<16x384xf32>
    %992 = vector.broadcast %800 : vector<1x384xf32> to vector<16x384xf32>
    %993 = arith.addf %991, %992 : vector<16x384xf32>
    %994 = vector.extract_strided_slice %803 {offsets = [96, 0], sizes = [16, 384], strides = [1, 1]} : vector<128x384xf32> to vector<16x384xf32>
    %995 = vector.extract_strided_slice %994 {offsets = [0, 0], sizes = [16, 128], strides = [1, 1]} : vector<16x384xf32> to vector<16x128xf32>
    %996 = vector.extract_strided_slice %993 {offsets = [0, 0], sizes = [16, 128], strides = [1, 1]} : vector<16x384xf32> to vector<16x128xf32>
    %997 = arith.addf %995, %996 : vector<16x128xf32>
    %998 = arith.negf %997 : vector<16x128xf32>
    %999 = math.exp %998 : vector<16x128xf32>
    %cst_230 = arith.constant 1.000000e+00 : f32
    %1000 = vector.broadcast %cst_230 : f32 to vector<16x128xf32>
    %1001 = arith.addf %1000, %999 : vector<16x128xf32>
    %1002 = arith.divf %1000, %1001 : vector<16x128xf32>
    %1003 = vector.extract_strided_slice %994 {offsets = [0, 128], sizes = [16, 128], strides = [1, 1]} : vector<16x384xf32> to vector<16x128xf32>
    %1004 = vector.extract_strided_slice %993 {offsets = [0, 128], sizes = [16, 128], strides = [1, 1]} : vector<16x384xf32> to vector<16x128xf32>
    %1005 = arith.addf %1003, %1004 : vector<16x128xf32>
    %1006 = arith.negf %1005 : vector<16x128xf32>
    %1007 = math.exp %1006 : vector<16x128xf32>
    %cst_231 = arith.constant 1.000000e+00 : f32
    %1008 = vector.broadcast %cst_231 : f32 to vector<16x128xf32>
    %1009 = arith.addf %1008, %1007 : vector<16x128xf32>
    %1010 = arith.divf %1008, %1009 : vector<16x128xf32>
    %1011 = vector.extract_strided_slice %994 {offsets = [0, 256], sizes = [16, 128], strides = [1, 1]} : vector<16x384xf32> to vector<16x128xf32>
    %1012 = vector.extract_strided_slice %993 {offsets = [0, 256], sizes = [16, 128], strides = [1, 1]} : vector<16x384xf32> to vector<16x128xf32>
    %1013 = arith.mulf %1002, %1012 : vector<16x128xf32>
    %1014 = arith.addf %1011, %1013 : vector<16x128xf32>
    %1015 = math.tanh %1014 : vector<16x128xf32>
    %cst_232 = arith.constant 1.000000e+00 : f32
    %1016 = vector.broadcast %cst_232 : f32 to vector<16x128xf32>
    %1017 = arith.subf %1016, %1010 : vector<16x128xf32>
    %1018 = arith.mulf %1017, %1015 : vector<16x128xf32>
    %1019 = arith.mulf %1010, %989 : vector<16x128xf32>
    %1020 = arith.addf %1018, %1019 : vector<16x128xf32>
    %c96_233 = arith.constant 96 : index
    %c0_234 = arith.constant 0 : index
    %1021 = vector.load %arg7[%c96_233, %c0_234] : memref<128x128xf32, #tpu.memory_space<vmem>>, vector<16x128xf32>
    tpu.vector_store %arg7[%c96_233, %c0_234], %1020 {strides = array<i32>} : memref<128x128xf32, #tpu.memory_space<vmem>>, vector<16x128xf32>,
    %cst_235 = arith.constant dense<0.000000e+00> : vector<16x384xf32>
    %1022 = tpu.matmul %1020, %796, %cst_235 {dimension_numbers = #tpu.dot_dimension_numbers<[1], [0], [0], [1], [0, 0, 1, 1], [], []>} : vector<16x128xf32>, vector<128x384xf32>, vector<16x384xf32> -> vector<16x384xf32>
    %1023 = vector.broadcast %800 : vector<1x384xf32> to vector<16x384xf32>
    %1024 = arith.addf %1022, %1023 : vector<16x384xf32>
    %1025 = vector.extract_strided_slice %803 {offsets = [112, 0], sizes = [16, 384], strides = [1, 1]} : vector<128x384xf32> to vector<16x384xf32>
    %1026 = vector.extract_strided_slice %1025 {offsets = [0, 0], sizes = [16, 128], strides = [1, 1]} : vector<16x384xf32> to vector<16x128xf32>
    %1027 = vector.extract_strided_slice %1024 {offsets = [0, 0], sizes = [16, 128], strides = [1, 1]} : vector<16x384xf32> to vector<16x128xf32>
    %1028 = arith.addf %1026, %1027 : vector<16x128xf32>
    %1029 = arith.negf %1028 : vector<16x128xf32>
    %1030 = math.exp %1029 : vector<16x128xf32>
    %cst_236 = arith.constant 1.000000e+00 : f32
    %1031 = vector.broadcast %cst_236 : f32 to vector<16x128xf32>
    %1032 = arith.addf %1031, %1030 : vector<16x128xf32>
    %1033 = arith.divf %1031, %1032 : vector<16x128xf32>
    %1034 = vector.extract_strided_slice %1025 {offsets = [0, 128], sizes = [16, 128], strides = [1, 1]} : vector<16x384xf32> to vector<16x128xf32>
    %1035 = vector.extract_strided_slice %1024 {offsets = [0, 128], sizes = [16, 128], strides = [1, 1]} : vector<16x384xf32> to vector<16x128xf32>
    %1036 = arith.addf %1034, %1035 : vector<16x128xf32>
    %1037 = arith.negf %1036 : vector<16x128xf32>
    %1038 = math.exp %1037 : vector<16x128xf32>
    %cst_237 = arith.constant 1.000000e+00 : f32
    %1039 = vector.broadcast %cst_237 : f32 to vector<16x128xf32>
    %1040 = arith.addf %1039, %1038 : vector<16x128xf32>
    %1041 = arith.divf %1039, %1040 : vector<16x128xf32>
    %1042 = vector.extract_strided_slice %1025 {offsets = [0, 256], sizes = [16, 128], strides = [1, 1]} : vector<16x384xf32> to vector<16x128xf32>
    %1043 = vector.extract_strided_slice %1024 {offsets = [0, 256], sizes = [16, 128], strides = [1, 1]} : vector<16x384xf32> to vector<16x128xf32>
    %1044 = arith.mulf %1033, %1043 : vector<16x128xf32>
    %1045 = arith.addf %1042, %1044 : vector<16x128xf32>
    %1046 = math.tanh %1045 : vector<16x128xf32>
    %cst_238 = arith.constant 1.000000e+00 : f32
    %1047 = vector.broadcast %cst_238 : f32 to vector<16x128xf32>
    %1048 = arith.subf %1047, %1041 : vector<16x128xf32>
    %1049 = arith.mulf %1048, %1046 : vector<16x128xf32>
    %1050 = arith.mulf %1041, %1020 : vector<16x128xf32>
    %1051 = arith.addf %1049, %1050 : vector<16x128xf32>
    %c112_239 = arith.constant 112 : index
    %c0_240 = arith.constant 0 : index
    %1052 = vector.load %arg7[%c112_239, %c0_240] : memref<128x128xf32, #tpu.memory_space<vmem>>, vector<16x128xf32>
    tpu.vector_store %arg7[%c112_239, %c0_240], %1051 {strides = array<i32>} : memref<128x128xf32, #tpu.memory_space<vmem>>, vector<16x128xf32>,
    %c3_241 = arith.constant 3 : index
    %c0_242 = arith.constant 0 : index
    %c0_243 = arith.constant 0 : index
    %1053 = vector.load %arg8[%c3_241, %c0_242, %c0_243] : memref<4x16x128xf32, #tpu.memory_space<vmem>>, vector<1x16x128xf32>
    %1054 = vector.shape_cast %1053 : vector<1x16x128xf32> to vector<16x128xf32>
    %1055 = vector.shape_cast %1051 : vector<16x128xf32> to vector<1x16x128xf32>
    tpu.vector_store %arg8[%c3_241, %c0_242, %c0_243], %1055 {strides = array<i32>} : memref<4x16x128xf32, #tpu.memory_space<vmem>>, vector<1x16x128xf32>,
    %cst_244 = arith.constant 0.000000e+00 : f32
    %1056 = vector.broadcast %cst_244 : f32 to vector<8x64xf32>
    %c0_245 = arith.constant 0 : index
    %c0_246 = arith.constant 0 : index
    %1057 = tpu.strided_load %arg7[%c0_245, %c0_246] {strides = array<i32: 16, 1>} : memref<128x128xf32, #tpu.memory_space<vmem>>, vector<8x128xf32>
    %c0_247 = arith.constant 0 : index
    %c0_248 = arith.constant 0 : index
    %1058 = vector.load %arg4[%c0_247, %c0_248] : memref<1536x64xf32, #tpu.memory_space<vmem>>, vector<128x64xf32>
    %cst_249 = arith.constant dense<0.000000e+00> : vector<8x64xf32>
    %1059 = tpu.matmul %1057, %1058, %cst_249 {dimension_numbers = #tpu.dot_dimension_numbers<[1], [0], [0], [1], [0, 0, 1, 1], [], []>} : vector<8x128xf32>, vector<128x64xf32>, vector<8x64xf32> -> vector<8x64xf32>
    %1060 = arith.addf %1056, %1059 : vector<8x64xf32>
    %c1_250 = arith.constant 1 : index
    %c0_251 = arith.constant 0 : index
    %1061 = tpu.strided_load %arg7[%c1_250, %c0_251] {strides = array<i32: 16, 1>} : memref<128x128xf32, #tpu.memory_space<vmem>>, vector<8x128xf32>
    %c128 = arith.constant 128 : index
    %c0_252 = arith.constant 0 : index
    %1062 = vector.load %arg4[%c128, %c0_252] : memref<1536x64xf32, #tpu.memory_space<vmem>>, vector<128x64xf32>
    %cst_253 = arith.constant dense<0.000000e+00> : vector<8x64xf32>
    %1063 = tpu.matmul %1061, %1062, %cst_253 {dimension_numbers = #tpu.dot_dimension_numbers<[1], [0], [0], [1], [0, 0, 1, 1], [], []>} : vector<8x128xf32>, vector<128x64xf32>, vector<8x64xf32> -> vector<8x64xf32>
    %1064 = arith.addf %1060, %1063 : vector<8x64xf32>
    %c2_254 = arith.constant 2 : index
    %c0_255 = arith.constant 0 : index
    %1065 = tpu.strided_load %arg7[%c2_254, %c0_255] {strides = array<i32: 16, 1>} : memref<128x128xf32, #tpu.memory_space<vmem>>, vector<8x128xf32>
    %c256 = arith.constant 256 : index
    %c0_256 = arith.constant 0 : index
    %1066 = vector.load %arg4[%c256, %c0_256] : memref<1536x64xf32, #tpu.memory_space<vmem>>, vector<128x64xf32>
    %cst_257 = arith.constant dense<0.000000e+00> : vector<8x64xf32>
    %1067 = tpu.matmul %1065, %1066, %cst_257 {dimension_numbers = #tpu.dot_dimension_numbers<[1], [0], [0], [1], [0, 0, 1, 1], [], []>} : vector<8x128xf32>, vector<128x64xf32>, vector<8x64xf32> -> vector<8x64xf32>
    %1068 = arith.addf %1064, %1067 : vector<8x64xf32>
    %c3_258 = arith.constant 3 : index
    %c0_259 = arith.constant 0 : index
    %1069 = tpu.strided_load %arg7[%c3_258, %c0_259] {strides = array<i32: 16, 1>} : memref<128x128xf32, #tpu.memory_space<vmem>>, vector<8x128xf32>
    %c384 = arith.constant 384 : index
    %c0_260 = arith.constant 0 : index
    %1070 = vector.load %arg4[%c384, %c0_260] : memref<1536x64xf32, #tpu.memory_space<vmem>>, vector<128x64xf32>
    %cst_261 = arith.constant dense<0.000000e+00> : vector<8x64xf32>
    %1071 = tpu.matmul %1069, %1070, %cst_261 {dimension_numbers = #tpu.dot_dimension_numbers<[1], [0], [0], [1], [0, 0, 1, 1], [], []>} : vector<8x128xf32>, vector<128x64xf32>, vector<8x64xf32> -> vector<8x64xf32>
    %1072 = arith.addf %1068, %1071 : vector<8x64xf32>
    %c4 = arith.constant 4 : index
    %c0_262 = arith.constant 0 : index
    %1073 = tpu.strided_load %arg7[%c4, %c0_262] {strides = array<i32: 16, 1>} : memref<128x128xf32, #tpu.memory_space<vmem>>, vector<8x128xf32>
    %c512 = arith.constant 512 : index
    %c0_263 = arith.constant 0 : index
    %1074 = vector.load %arg4[%c512, %c0_263] : memref<1536x64xf32, #tpu.memory_space<vmem>>, vector<128x64xf32>
    %cst_264 = arith.constant dense<0.000000e+00> : vector<8x64xf32>
    %1075 = tpu.matmul %1073, %1074, %cst_264 {dimension_numbers = #tpu.dot_dimension_numbers<[1], [0], [0], [1], [0, 0, 1, 1], [], []>} : vector<8x128xf32>, vector<128x64xf32>, vector<8x64xf32> -> vector<8x64xf32>
    %1076 = arith.addf %1072, %1075 : vector<8x64xf32>
    %c5 = arith.constant 5 : index
    %c0_265 = arith.constant 0 : index
    %1077 = tpu.strided_load %arg7[%c5, %c0_265] {strides = array<i32: 16, 1>} : memref<128x128xf32, #tpu.memory_space<vmem>>, vector<8x128xf32>
    %c640 = arith.constant 640 : index
    %c0_266 = arith.constant 0 : index
    %1078 = vector.load %arg4[%c640, %c0_266] : memref<1536x64xf32, #tpu.memory_space<vmem>>, vector<128x64xf32>
    %cst_267 = arith.constant dense<0.000000e+00> : vector<8x64xf32>
    %1079 = tpu.matmul %1077, %1078, %cst_267 {dimension_numbers = #tpu.dot_dimension_numbers<[1], [0], [0], [1], [0, 0, 1, 1], [], []>} : vector<8x128xf32>, vector<128x64xf32>, vector<8x64xf32> -> vector<8x64xf32>
    %1080 = arith.addf %1076, %1079 : vector<8x64xf32>
    %c6 = arith.constant 6 : index
    %c0_268 = arith.constant 0 : index
    %1081 = tpu.strided_load %arg7[%c6, %c0_268] {strides = array<i32: 16, 1>} : memref<128x128xf32, #tpu.memory_space<vmem>>, vector<8x128xf32>
    %c768 = arith.constant 768 : index
    %c0_269 = arith.constant 0 : index
    %1082 = vector.load %arg4[%c768, %c0_269] : memref<1536x64xf32, #tpu.memory_space<vmem>>, vector<128x64xf32>
    %cst_270 = arith.constant dense<0.000000e+00> : vector<8x64xf32>
    %1083 = tpu.matmul %1081, %1082, %cst_270 {dimension_numbers = #tpu.dot_dimension_numbers<[1], [0], [0], [1], [0, 0, 1, 1], [], []>} : vector<8x128xf32>, vector<128x64xf32>, vector<8x64xf32> -> vector<8x64xf32>
    %1084 = arith.addf %1080, %1083 : vector<8x64xf32>
    %c7 = arith.constant 7 : index
    %c0_271 = arith.constant 0 : index
    %1085 = tpu.strided_load %arg7[%c7, %c0_271] {strides = array<i32: 16, 1>} : memref<128x128xf32, #tpu.memory_space<vmem>>, vector<8x128xf32>
    %c896 = arith.constant 896 : index
    %c0_272 = arith.constant 0 : index
    %1086 = vector.load %arg4[%c896, %c0_272] : memref<1536x64xf32, #tpu.memory_space<vmem>>, vector<128x64xf32>
    %cst_273 = arith.constant dense<0.000000e+00> : vector<8x64xf32>
    %1087 = tpu.matmul %1085, %1086, %cst_273 {dimension_numbers = #tpu.dot_dimension_numbers<[1], [0], [0], [1], [0, 0, 1, 1], [], []>} : vector<8x128xf32>, vector<128x64xf32>, vector<8x64xf32> -> vector<8x64xf32>
    %1088 = arith.addf %1084, %1087 : vector<8x64xf32>
    %c8 = arith.constant 8 : index
    %c0_274 = arith.constant 0 : index
    %1089 = tpu.strided_load %arg7[%c8, %c0_274] {strides = array<i32: 16, 1>} : memref<128x128xf32, #tpu.memory_space<vmem>>, vector<8x128xf32>
    %c1024 = arith.constant 1024 : index
    %c0_275 = arith.constant 0 : index
    %1090 = vector.load %arg4[%c1024, %c0_275] : memref<1536x64xf32, #tpu.memory_space<vmem>>, vector<128x64xf32>
    %cst_276 = arith.constant dense<0.000000e+00> : vector<8x64xf32>
    %1091 = tpu.matmul %1089, %1090, %cst_276 {dimension_numbers = #tpu.dot_dimension_numbers<[1], [0], [0], [1], [0, 0, 1, 1], [], []>} : vector<8x128xf32>, vector<128x64xf32>, vector<8x64xf32> -> vector<8x64xf32>
    %1092 = arith.addf %1088, %1091 : vector<8x64xf32>
    %c9 = arith.constant 9 : index
    %c0_277 = arith.constant 0 : index
    %1093 = tpu.strided_load %arg7[%c9, %c0_277] {strides = array<i32: 16, 1>} : memref<128x128xf32, #tpu.memory_space<vmem>>, vector<8x128xf32>
    %c1152 = arith.constant 1152 : index
    %c0_278 = arith.constant 0 : index
    %1094 = vector.load %arg4[%c1152, %c0_278] : memref<1536x64xf32, #tpu.memory_space<vmem>>, vector<128x64xf32>
    %cst_279 = arith.constant dense<0.000000e+00> : vector<8x64xf32>
    %1095 = tpu.matmul %1093, %1094, %cst_279 {dimension_numbers = #tpu.dot_dimension_numbers<[1], [0], [0], [1], [0, 0, 1, 1], [], []>} : vector<8x128xf32>, vector<128x64xf32>, vector<8x64xf32> -> vector<8x64xf32>
    %1096 = arith.addf %1092, %1095 : vector<8x64xf32>
    %c10 = arith.constant 10 : index
    %c0_280 = arith.constant 0 : index
    %1097 = tpu.strided_load %arg7[%c10, %c0_280] {strides = array<i32: 16, 1>} : memref<128x128xf32, #tpu.memory_space<vmem>>, vector<8x128xf32>
    %c1280 = arith.constant 1280 : index
    %c0_281 = arith.constant 0 : index
    %1098 = vector.load %arg4[%c1280, %c0_281] : memref<1536x64xf32, #tpu.memory_space<vmem>>, vector<128x64xf32>
    %cst_282 = arith.constant dense<0.000000e+00> : vector<8x64xf32>
    %1099 = tpu.matmul %1097, %1098, %cst_282 {dimension_numbers = #tpu.dot_dimension_numbers<[1], [0], [0], [1], [0, 0, 1, 1], [], []>} : vector<8x128xf32>, vector<128x64xf32>, vector<8x64xf32> -> vector<8x64xf32>
    %1100 = arith.addf %1096, %1099 : vector<8x64xf32>
    %c11 = arith.constant 11 : index
    %c0_283 = arith.constant 0 : index
    %1101 = tpu.strided_load %arg7[%c11, %c0_283] {strides = array<i32: 16, 1>} : memref<128x128xf32, #tpu.memory_space<vmem>>, vector<8x128xf32>
    %c1408 = arith.constant 1408 : index
    %c0_284 = arith.constant 0 : index
    %1102 = vector.load %arg4[%c1408, %c0_284] : memref<1536x64xf32, #tpu.memory_space<vmem>>, vector<128x64xf32>
    %cst_285 = arith.constant dense<0.000000e+00> : vector<8x64xf32>
    %1103 = tpu.matmul %1101, %1102, %cst_285 {dimension_numbers = #tpu.dot_dimension_numbers<[1], [0], [0], [1], [0, 0, 1, 1], [], []>} : vector<8x128xf32>, vector<128x64xf32>, vector<8x64xf32> -> vector<8x64xf32>
    %1104 = arith.addf %1100, %1103 : vector<8x64xf32>
    %c0_286 = arith.constant 0 : index
    %c0_287 = arith.constant 0 : index
    %1105 = vector.load %arg6[%c0_286, %c0_287] : memref<5x64xf32, #tpu.memory_space<vmem>>, vector<1x64xf32>
    %1106 = vector.broadcast %1105 : vector<1x64xf32> to vector<8x64xf32>
    %1107 = arith.addf %1104, %1106 : vector<8x64xf32>
    %cst_288 = arith.constant 0.000000e+00 : f32
    %1108 = vector.broadcast %cst_288 : f32 to vector<8x64xf32>
    %1109 = arith.maximumf %1107, %1108 : vector<8x64xf32>
    %c0_289 = arith.constant 0 : index
    %c0_290 = arith.constant 0 : index
    %1110 = vector.load %arg5[%c0_289, %c0_290] : memref<256x64xf32, #tpu.memory_space<vmem>>, vector<64x64xf32>
    %cst_291 = arith.constant dense<0.000000e+00> : vector<8x64xf32>
    %1111 = tpu.matmul %1109, %1110, %cst_291 {dimension_numbers = #tpu.dot_dimension_numbers<[1], [0], [0], [1], [0, 0, 1, 1], [], []>} : vector<8x64xf32>, vector<64x64xf32>, vector<8x64xf32> -> vector<8x64xf32>
    %c1_292 = arith.constant 1 : index
    %c0_293 = arith.constant 0 : index
    %1112 = vector.load %arg6[%c1_292, %c0_293] : memref<5x64xf32, #tpu.memory_space<vmem>>, vector<1x64xf32>
    %1113 = vector.broadcast %1112 : vector<1x64xf32> to vector<8x64xf32>
    %1114 = arith.addf %1111, %1113 : vector<8x64xf32>
    %cst_294 = arith.constant 0.000000e+00 : f32
    %1115 = vector.broadcast %cst_294 : f32 to vector<8x64xf32>
    %1116 = arith.maximumf %1114, %1115 : vector<8x64xf32>
    %c64_295 = arith.constant 64 : index
    %c0_296 = arith.constant 0 : index
    %1117 = vector.load %arg5[%c64_295, %c0_296] : memref<256x64xf32, #tpu.memory_space<vmem>>, vector<64x64xf32>
    %cst_297 = arith.constant dense<0.000000e+00> : vector<8x64xf32>
    %1118 = tpu.matmul %1116, %1117, %cst_297 {dimension_numbers = #tpu.dot_dimension_numbers<[1], [0], [0], [1], [0, 0, 1, 1], [], []>} : vector<8x64xf32>, vector<64x64xf32>, vector<8x64xf32> -> vector<8x64xf32>
    %c2_298 = arith.constant 2 : index
    %c0_299 = arith.constant 0 : index
    %1119 = vector.load %arg6[%c2_298, %c0_299] : memref<5x64xf32, #tpu.memory_space<vmem>>, vector<1x64xf32>
    %1120 = vector.broadcast %1119 : vector<1x64xf32> to vector<8x64xf32>
    %1121 = arith.addf %1118, %1120 : vector<8x64xf32>
    %cst_300 = arith.constant 0.000000e+00 : f32
    %1122 = vector.broadcast %cst_300 : f32 to vector<8x64xf32>
    %1123 = arith.maximumf %1121, %1122 : vector<8x64xf32>
    %c128_301 = arith.constant 128 : index
    %c0_302 = arith.constant 0 : index
    %1124 = vector.load %arg5[%c128_301, %c0_302] : memref<256x64xf32, #tpu.memory_space<vmem>>, vector<64x64xf32>
    %cst_303 = arith.constant dense<0.000000e+00> : vector<8x64xf32>
    %1125 = tpu.matmul %1123, %1124, %cst_303 {dimension_numbers = #tpu.dot_dimension_numbers<[1], [0], [0], [1], [0, 0, 1, 1], [], []>} : vector<8x64xf32>, vector<64x64xf32>, vector<8x64xf32> -> vector<8x64xf32>
    %c3_304 = arith.constant 3 : index
    %c0_305 = arith.constant 0 : index
    %1126 = vector.load %arg6[%c3_304, %c0_305] : memref<5x64xf32, #tpu.memory_space<vmem>>, vector<1x64xf32>
    %1127 = vector.broadcast %1126 : vector<1x64xf32> to vector<8x64xf32>
    %1128 = arith.addf %1125, %1127 : vector<8x64xf32>
    %cst_306 = arith.constant 0.000000e+00 : f32
    %1129 = vector.broadcast %cst_306 : f32 to vector<8x64xf32>
    %1130 = arith.maximumf %1128, %1129 : vector<8x64xf32>
    %c192 = arith.constant 192 : index
    %c0_307 = arith.constant 0 : index
    %1131 = vector.load %arg5[%c192, %c0_307] : memref<256x64xf32, #tpu.memory_space<vmem>>, vector<64x64xf32>
    %cst_308 = arith.constant dense<0.000000e+00> : vector<8x64xf32>
    %1132 = tpu.matmul %1130, %1131, %cst_308 {dimension_numbers = #tpu.dot_dimension_numbers<[1], [0], [0], [1], [0, 0, 1, 1], [], []>} : vector<8x64xf32>, vector<64x64xf32>, vector<8x64xf32> -> vector<8x64xf32>
    %c4_309 = arith.constant 4 : index
    %c0_310 = arith.constant 0 : index
    %1133 = vector.load %arg6[%c4_309, %c0_310] : memref<5x64xf32, #tpu.memory_space<vmem>>, vector<1x64xf32>
    %1134 = vector.broadcast %1133 : vector<1x64xf32> to vector<8x64xf32>
    %1135 = arith.addf %1132, %1134 : vector<8x64xf32>
    %1136 = vector.extract_strided_slice %1135 {offsets = [0, 0], sizes = [8, 3], strides = [1, 1]} : vector<8x64xf32> to vector<8x3xf32>
    %cst_311 = arith.constant dense<0xFF800000> : vector<8xf32>
    %1137 = vector.multi_reduction <maximumf>, %1136, %cst_311 [1] : vector<8x3xf32> to vector<8xf32>
    %1138 = vector.shape_cast %1137 : vector<8xf32> to vector<8x1xf32>
    %1139 = vector.broadcast %1138 : vector<8x1xf32> to vector<8x3xf32>
    %1140 = arith.subf %1136, %1139 : vector<8x3xf32>
    %1141 = math.exp %1140 : vector<8x3xf32>
    %cst_312 = arith.constant dense<0.000000e+00> : vector<8xf32>
    %1142 = vector.multi_reduction <add>, %1141, %cst_312 [1] : vector<8x3xf32> to vector<8xf32>
    %1143 = vector.shape_cast %1142 : vector<8xf32> to vector<8x1xf32>
    %1144 = vector.broadcast %1143 : vector<8x1xf32> to vector<8x3xf32>
    %1145 = arith.divf %1141, %1144 : vector<8x3xf32>
    %c0_313 = arith.constant 0 : index
    %c0_314 = arith.constant 0 : index
    %1146 = vector.load %arg9[%c0_313, %c0_314] : memref<8x3xf32, #tpu.memory_space<vmem>>, vector<8x3xf32>
    tpu.vector_store %arg9[%c0_313, %c0_314], %1145 {strides = array<i32>} : memref<8x3xf32, #tpu.memory_space<vmem>>, vector<8x3xf32>,
    return
  }
}

</mosaic_0001>

<llo_original>
// kernel: forward.1
$region0: #{forward.1}
  #allocation0 [shape = 'u32[]', space=smem, size = 0x4, offset = 0x4, fixed_abs, tag = 'smem constant byte address 0x4 - core index']
  #allocation1 [shape = 'u32[72,128]{1,0:T(1,128)}', space=vmem, size = 0x9000, scoped, tag = 'internal scratch']
  #allocation2 [shape = 'f32[128,128]{1,0:T(8,128)}', space=vmem, size = 0x10000, scoped, tag = 'scratch operand']
  %s0 = inlined_call_operand.vmem [shape: f32[128,128], index: 0, kind: input, shape index: {}]
  %s1 = inlined_call_operand.vmem [shape: f32[4,128,384], index: 1, kind: input, shape index: {}]
  %s2 = inlined_call_operand.hbm [shape: f32[4,128,384], index: 2, kind: input, shape index: {}]
  %s3 = inlined_call_operand.vmem [shape: f32[4,2,384], index: 3, kind: input, shape index: {}]
  %s4 = inlined_call_operand.vmem [shape: f32[1536,64], index: 4, kind: input, shape index: {}]
  %s5 = inlined_call_operand.vmem [shape: f32[256,64], index: 5, kind: input, shape index: {}]
  %s6 = inlined_call_operand.vmem [shape: f32[5,64], index: 6, kind: input, shape index: {}]
  %s7 = inlined_call_operand.vmem [shape: f32[128,128], index: 7, kind: output, shape index: {0}]
  %s8 = inlined_call_operand.vmem [shape: f32[4,16,128], index: 8, kind: output, shape index: {1}]
  %s9 = inlined_call_operand.vmem [shape: f32[8,3], index: 9, kind: output, shape index: {2}]
  %10 = xla_tuple %s7, %s8, %s9
  %s11 = sld [smem:[#allocation0]]
  $region58: #{forward.1} parent=0
    _
  %s13 = ssub.s32 1, %s11
  %s14 = scalar_select 0, %s13, %s11
  $region1: #{forward.1} parent=0
    #allocation3 [shape = 'u8[786432]{0}', space=vmem, size = 0xc0000, scoped, tag = 'input window, operand 2, single buffered']
    #allocation4 [shape = 's32[1]{0}', space=sflag, size = 0x4, scoped, tag = 'scoped memory for forward.1']
    %15 = vsyncpa [#allocation4], 0
    // Predicated region
    $region2: #{forward.1} parent=1 // pred_check
      _
    $region3: #{forward.1} parent=1 // pred_check_branch
      %17 = sbr.rel (0) target = $region5
    $region4: #{forward.1} parent=1 // pred_region
      _
    $region5: #{forward.1} parent=1 // pred_fallthru
      _
    // Predicated region
    $region6: #{forward.1} parent=1 // pred_check
      _
    $region7: #{forward.1} parent=1 // pred_check_branch
      %19 = sbr.rel (0) target = $region9
    $region8: #{forward.1} parent=1 // pred_region
      _
    $region9: #{forward.1} parent=1 // pred_fallthru
      _
    // Predicated region
    $region10: #{forward.1} parent=1 // pred_check
      _
    $region11: #{forward.1} parent=1 // pred_check_branch
      %21 = sbr.rel (0) target = $region13
    $region12: #{forward.1} parent=1 // pred_region
      %23 = vsyncadd [#allocation4], 0
      %s24 = sshll.u32 %s2, 4
      %s25 = int_to_ptr.hbm [resolvable:$true] %s24
      %s26 = sshll.u32 [#allocation3], 4
      %s27 = int_to_ptr.vmem [resolvable:$true] %s26
      %32 = dma.hbm_to_vmem [thread:$0]  %s25, 24576, %s27, [#allocation4], 384, 384, 24
    $region13: #{forward.1} parent=1 // pred_fallthru
      _
    // Predicated region
    $region14: #{forward.1} parent=1 // pred_check
      _
    $region15: #{forward.1} parent=1 // pred_check_branch
      %34 = sbr.rel (0) target = $region17
    $region16: #{forward.1} parent=1 // pred_region
      _
    $region17: #{forward.1} parent=1 // pred_fallthru
      _
    // Predicated region
    $region18: #{forward.1} parent=1 // pred_check
      _
    $region19: #{forward.1} parent=1 // pred_check_branch
      %36 = sbr.rel (0) target = $region21
    $region20: #{forward.1} parent=1 // pred_region
      _
    $region21: #{forward.1} parent=1 // pred_fallthru
      _
    // Predicated region
    $region22: #{forward.1} parent=1 // pred_check
      _
    $region23: #{forward.1} parent=1 // pred_check_branch
      %38 = sbr.rel (0) target = $region25
    $region24: #{forward.1} parent=1 // pred_region
      _
    $region25: #{forward.1} parent=1 // pred_fallthru
      _
    // Predicated region
    $region26: #{forward.1} parent=1 // pred_check
      _
    $region27: #{forward.1} parent=1 // pred_check_branch
      %40 = sbr.rel (0) target = $region29
    $region28: #{forward.1} parent=1 // pred_region
      _
    $region29: #{forward.1} parent=1 // pred_fallthru
      _
    // Predicated region
    $region30: #{forward.1} parent=1 // pred_check
      _
    $region31: #{forward.1} parent=1 // pred_check_branch
      %42 = sbr.rel (0) target = $region33
    $region32: #{forward.1} parent=1 // pred_region
      %44 = dma.done [#allocation4], 24576
    $region33: #{forward.1} parent=1 // pred_fallthru
      _
    %v45 = vld [vmem:[%s0] sm:$0xff]
    %v46 = vld [vmem:[%s0 + $0x8] sm:$0xff]
    %v47 = vld [vmem:[%s0 + $0x10] sm:$0xff]
    %v48 = vld [vmem:[%s0 + $0x18] sm:$0xff]
    %v49 = vld [vmem:[%s0 + $0x20] sm:$0xff]
    %v50 = vld [vmem:[%s0 + $0x28] sm:$0xff]
    %v51 = vld [vmem:[%s0 + $0x30] sm:$0xff]
    %v52 = vld [vmem:[%s0 + $0x38] sm:$0xff]
    %v53 = vld [vmem:[%s0 + $0x40] sm:$0xff]
    %v54 = vld [vmem:[%s0 + $0x48] sm:$0xff]
    %v55 = vld [vmem:[%s0 + $0x50] sm:$0xff]
    %v56 = vld [vmem:[%s0 + $0x58] sm:$0xff]
    %v57 = vld [vmem:[%s0 + $0x60] sm:$0xff]
    %v58 = vld [vmem:[%s0 + $0x68] sm:$0xff]
    %v59 = vld [vmem:[%s0 + $0x70] sm:$0xff]
    %v60 = vld [vmem:[%s0 + $0x78] sm:$0xff]
    %v61 = vld [vmem:[%s1] sm:$0xff]
    %v62 = vld [vmem:[%s1 + $0x8] sm:$0xff]
    %v63 = vld [vmem:[%s1 + $0x10] sm:$0xff]
    %v64 = vld [vmem:[%s1 + $0x18] sm:$0xff]
    %v65 = vld [vmem:[%s1 + $0x20] sm:$0xff]
    %v66 = vld [vmem:[%s1 + $0x28] sm:$0xff]
    %v67 = vld [vmem:[%s1 + $0x30] sm:$0xff]
    %v68 = vld [vmem:[%s1 + $0x38] sm:$0xff]
    %v69 = vld [vmem:[%s1 + $0x40] sm:$0xff]
    %v70 = vld [vmem:[%s1 + $0x48] sm:$0xff]
    %v71 = vld [vmem:[%s1 + $0x50] sm:$0xff]
    %v72 = vld [vmem:[%s1 + $0x58] sm:$0xff]
    %v73 = vld [vmem:[%s1 + $0x60] sm:$0xff]
    %v74 = vld [vmem:[%s1 + $0x68] sm:$0xff]
    %v75 = vld [vmem:[%s1 + $0x70] sm:$0xff]
    %v76 = vld [vmem:[%s1 + $0x78] sm:$0xff]
    %v77 = vld [vmem:[%s1 + $0x80] sm:$0xff]
    %v78 = vld [vmem:[%s1 + $0x88] sm:$0xff]
    %v79 = vld [vmem:[%s1 + $0x90] sm:$0xff]
    %v80 = vld [vmem:[%s1 + $0x98] sm:$0xff]
    %v81 = vld [vmem:[%s1 + $0xa0] sm:$0xff]
    %v82 = vld [vmem:[%s1 + $0xa8] sm:$0xff]
    %v83 = vld [vmem:[%s1 + $0xb0] sm:$0xff]
    %v84 = vld [vmem:[%s1 + $0xb8] sm:$0xff]
    %v85 = vld [vmem:[%s1 + $0xc0] sm:$0xff]
    %v86 = vld [vmem:[%s1 + $0xc8] sm:$0xff]
    %v87 = vld [vmem:[%s1 + $0xd0] sm:$0xff]
    %v88 = vld [vmem:[%s1 + $0xd8] sm:$0xff]
    %v89 = vld [vmem:[%s1 + $0xe0] sm:$0xff]
    %v90 = vld [vmem:[%s1 + $0xe8] sm:$0xff]
    %v91 = vld [vmem:[%s1 + $0xf0] sm:$0xff]
    %v92 = vld [vmem:[%s1 + $0xf8] sm:$0xff]
    %v93 = vld [vmem:[%s1 + $0x100] sm:$0xff]
    %v94 = vld [vmem:[%s1 + $0x108] sm:$0xff]
    %v95 = vld [vmem:[%s1 + $0x110] sm:$0xff]
    %v96 = vld [vmem:[%s1 + $0x118] sm:$0xff]
    %v97 = vld [vmem:[%s1 + $0x120] sm:$0xff]
    %v98 = vld [vmem:[%s1 + $0x128] sm:$0xff]
    %v99 = vld [vmem:[%s1 + $0x130] sm:$0xff]
    %v100 = vld [vmem:[%s1 + $0x138] sm:$0xff]
    %v101 = vld [vmem:[%s1 + $0x140] sm:$0xff]
    %v102 = vld [vmem:[%s1 + $0x148] sm:$0xff]
    %v103 = vld [vmem:[%s1 + $0x150] sm:$0xff]
    %v104 = vld [vmem:[%s1 + $0x158] sm:$0xff]
    %v105 = vld [vmem:[%s1 + $0x160] sm:$0xff]
    %v106 = vld [vmem:[%s1 + $0x168] sm:$0xff]
    %v107 = vld [vmem:[%s1 + $0x170] sm:$0xff]
    %v108 = vld [vmem:[%s1 + $0x178] sm:$0xff]
    %v109 = vld [vmem:[#allocation3] sm:$0xff]
    %v110 = vld [vmem:[#allocation3 + $0x8] sm:$0xff]
    %v111 = vld [vmem:[#allocation3 + $0x10] sm:$0xff]
    %v112 = vld [vmem:[#allocation3 + $0x18] sm:$0xff]
    %v113 = vld [vmem:[#allocation3 + $0x20] sm:$0xff]
    %v114 = vld [vmem:[#allocation3 + $0x28] sm:$0xff]
    %v115 = vld [vmem:[#allocation3 + $0x30] sm:$0xff]
    %v116 = vld [vmem:[#allocation3 + $0x38] sm:$0xff]
    %v117 = vld [vmem:[#allocation3 + $0x40] sm:$0xff]
    %v118 = vld [vmem:[#allocation3 + $0x48] sm:$0xff]
    %v119 = vld [vmem:[#allocation3 + $0x50] sm:$0xff]
    %v120 = vld [vmem:[#allocation3 + $0x58] sm:$0xff]
    %v121 = vld [vmem:[#allocation3 + $0x60] sm:$0xff]
    %v122 = vld [vmem:[#allocation3 + $0x68] sm:$0xff]
    %v123 = vld [vmem:[#allocation3 + $0x70] sm:$0xff]
    %v124 = vld [vmem:[#allocation3 + $0x78] sm:$0xff]
    %v125 = vld [vmem:[#allocation3 + $0x80] sm:$0xff]
    %v126 = vld [vmem:[#allocation3 + $0x88] sm:$0xff]
    %v127 = vld [vmem:[#allocation3 + $0x90] sm:$0xff]
    %v128 = vld [vmem:[#allocation3 + $0x98] sm:$0xff]
    %v129 = vld [vmem:[#allocation3 + $0xa0] sm:$0xff]
    %v130 = vld [vmem:[#allocation3 + $0xa8] sm:$0xff]
    %v131 = vld [vmem:[#allocation3 + $0xb0] sm:$0xff]
    %v132 = vld [vmem:[#allocation3 + $0xb8] sm:$0xff]
    %v133 = vld [vmem:[#allocation3 + $0xc0] sm:$0xff]
    %v134 = vld [vmem:[#allocation3 + $0xc8] sm:$0xff]
    %v135 = vld [vmem:[#allocation3 + $0xd0] sm:$0xff]
    %v136 = vld [vmem:[#allocation3 + $0xd8] sm:$0xff]
    %v137 = vld [vmem:[#allocation3 + $0xe0] sm:$0xff]
    %v138 = vld [vmem:[#allocation3 + $0xe8] sm:$0xff]
    %v139 = vld [vmem:[#allocation3 + $0xf0] sm:$0xff]
    %v140 = vld [vmem:[#allocation3 + $0xf8] sm:$0xff]
    %v141 = vld [vmem:[#allocation3 + $0x100] sm:$0xff]
    %v142 = vld [vmem:[#allocation3 + $0x108] sm:$0xff]
    %v143 = vld [vmem:[#allocation3 + $0x110] sm:$0xff]
    %v144 = vld [vmem:[#allocation3 + $0x118] sm:$0xff]
    %v145 = vld [vmem:[#allocation3 + $0x120] sm:$0xff]
    %v146 = vld [vmem:[#allocation3 + $0x128] sm:$0xff]
    %v147 = vld [vmem:[#allocation3 + $0x130] sm:$0xff]
    %v148 = vld [vmem:[#allocation3 + $0x138] sm:$0xff]
    %v149 = vld [vmem:[#allocation3 + $0x140] sm:$0xff]
    %v150 = vld [vmem:[#allocation3 + $0x148] sm:$0xff]
    %v151 = vld [vmem:[#allocation3 + $0x150] sm:$0xff]
    %v152 = vld [vmem:[#allocation3 + $0x158] sm:$0xff]
    %v153 = vld [vmem:[#allocation3 + $0x160] sm:$0xff]
    %v154 = vld [vmem:[#allocation3 + $0x168] sm:$0xff]
    %v155 = vld [vmem:[#allocation3 + $0x170] sm:$0xff]
    %v156 = vld [vmem:[#allocation3 + $0x178] sm:$0xff]
    %v157 = vld [vmem:[%s3] sm:$0x3f]
    %v159 = vperm.slane %v157, 0
    %v160 = vperm.slane %v157, 2
    %v161 = vperm.slane %v157, 4
    %v165 = vperm.slane %v159, 0
    %v166 = vperm.slane %v160, 0
    %v167 = vperm.slane %v161, 0
    %168 = vmatpush.msra.mxu0 %v106
    %169 = vmatpush.msra.mxu0 %v103
    %170 = vmatpush.msra.mxu0 %v100
    %171 = vmatpush.msra.mxu0 %v97
    %172 = vmatpush.msra.mxu0 %v94
    %173 = vmatpush.msra.mxu0 %v91
    %174 = vmatpush.msra.mxu0 %v88
    %175 = vmatpush.msra.mxu0 %v85
    %176 = vmatpush.msra.mxu0 %v82
    %177 = vmatpush.msra.mxu0 %v79
    %178 = vmatpush.msra.mxu0 %v76
    %179 = vmatpush.msra.mxu0 %v73
    %180 = vmatpush.msra.mxu0 %v70
    %181 = vmatpush.msra.mxu0 %v67
    %182 = vmatpush.msra.mxu0 %v64
    %183 = vmatpush.msra.mxu0 %v61
    %184 = vmatmul.f32.gmra.mxu0 %v45
    %v185 = vpop.f32.mrf.mxu0
    %v186 = vadd.f32 %v165, %v185
    %187 = vmatmul.f32.gmra.mxu0 %v46
    %v188 = vpop.f32.mrf.mxu0
    %v189 = vadd.f32 %v165, %v188
    %190 = vmatmul.f32.gmra.mxu0 %v47
    %v191 = vpop.f32.mrf.mxu0
    %v192 = vadd.f32 %v165, %v191
    %193 = vmatmul.f32.gmra.mxu0 %v48
    %v194 = vpop.f32.mrf.mxu0
    %v195 = vadd.f32 %v165, %v194
    %196 = vmatmul.f32.gmra.mxu0 %v49
    %v197 = vpop.f32.mrf.mxu0
    %v198 = vadd.f32 %v165, %v197
    %199 = vmatmul.f32.gmra.mxu0 %v50
    %v200 = vpop.f32.mrf.mxu0
    %v201 = vadd.f32 %v165, %v200
    %202 = vmatmul.f32.gmra.mxu0 %v51
    %v203 = vpop.f32.mrf.mxu0
    %v204 = vadd.f32 %v165, %v203
    %205 = vmatmul.f32.gmra.mxu0 %v52
    %v206 = vpop.f32.mrf.mxu0
    %v207 = vadd.f32 %v165, %v206
    %208 = vmatmul.f32.gmra.mxu0 %v53
    %v209 = vpop.f32.mrf.mxu0
    %v210 = vadd.f32 %v165, %v209
    %211 = vmatmul.f32.gmra.mxu0 %v54
    %v212 = vpop.f32.mrf.mxu0
    %v213 = vadd.f32 %v165, %v212
    %214 = vmatmul.f32.gmra.mxu0 %v55
    %v215 = vpop.f32.mrf.mxu0
    %v216 = vadd.f32 %v165, %v215
    %217 = vmatmul.f32.gmra.mxu0 %v56
    %v218 = vpop.f32.mrf.mxu0
    %v219 = vadd.f32 %v165, %v218
    %220 = vmatmul.f32.gmra.mxu0 %v57
    %v221 = vpop.f32.mrf.mxu0
    %v222 = vadd.f32 %v165, %v221
    %223 = vmatmul.f32.gmra.mxu0 %v58
    %v224 = vpop.f32.mrf.mxu0
    %v225 = vadd.f32 %v165, %v224
    %226 = vmatmul.f32.gmra.mxu0 %v59
    %v227 = vpop.f32.mrf.mxu0
    %v228 = vadd.f32 %v165, %v227
    %229 = vmatmul.f32.gmra.mxu0 %v60
    %v230 = vpop.f32.mrf.mxu0
    %v231 = vadd.f32 %v165, %v230
    %232 = vdwg.mxu0
    %233 = vmatpush.msra.mxu0 %v107
    %234 = vmatpush.msra.mxu0 %v104
    %235 = vmatpush.msra.mxu0 %v101
    %236 = vmatpush.msra.mxu0 %v98
    %237 = vmatpush.msra.mxu0 %v95
    %238 = vmatpush.msra.mxu0 %v92
    %239 = vmatpush.msra.mxu0 %v89
    %240 = vmatpush.msra.mxu0 %v86
    %241 = vmatpush.msra.mxu0 %v83
    %242 = vmatpush.msra.mxu0 %v80
    %243 = vmatpush.msra.mxu0 %v77
    %244 = vmatpush.msra.mxu0 %v74
    %245 = vmatpush.msra.mxu0 %v71
    %246 = vmatpush.msra.mxu0 %v68
    %247 = vmatpush.msra.mxu0 %v65
    %248 = vmatpush.msra.mxu0 %v62
    %249 = vmatmul.f32.gmra.mxu0 %v45
    %v250 = vpop.f32.mrf.mxu0
    %v251 = vadd.f32 %v166, %v250
    %252 = vmatmul.f32.gmra.mxu0 %v46
    %v253 = vpop.f32.mrf.mxu0
    %v254 = vadd.f32 %v166, %v253
    %255 = vmatmul.f32.gmra.mxu0 %v47
    %v256 = vpop.f32.mrf.mxu0
    %v257 = vadd.f32 %v166, %v256
    %258 = vmatmul.f32.gmra.mxu0 %v48
    %v259 = vpop.f32.mrf.mxu0
    %v260 = vadd.f32 %v166, %v259
    %261 = vmatmul.f32.gmra.mxu0 %v49
    %v262 = vpop.f32.mrf.mxu0
    %v263 = vadd.f32 %v166, %v262
    %264 = vmatmul.f32.gmra.mxu0 %v50
    %v265 = vpop.f32.mrf.mxu0
    %v266 = vadd.f32 %v166, %v265
    %267 = vmatmul.f32.gmra.mxu0 %v51
    %v268 = vpop.f32.mrf.mxu0
    %v269 = vadd.f32 %v166, %v268
    %270 = vmatmul.f32.gmra.mxu0 %v52
    %v271 = vpop.f32.mrf.mxu0
    %v272 = vadd.f32 %v166, %v271
    %273 = vmatmul.f32.gmra.mxu0 %v53
    %v274 = vpop.f32.mrf.mxu0
    %v275 = vadd.f32 %v166, %v274
    %276 = vmatmul.f32.gmra.mxu0 %v54
    %v277 = vpop.f32.mrf.mxu0
    %v278 = vadd.f32 %v166, %v277
    %279 = vmatmul.f32.gmra.mxu0 %v55
    %v280 = vpop.f32.mrf.mxu0
    %v281 = vadd.f32 %v166, %v280
    %282 = vmatmul.f32.gmra.mxu0 %v56
    %v283 = vpop.f32.mrf.mxu0
    %v284 = vadd.f32 %v166, %v283
    %285 = vmatmul.f32.gmra.mxu0 %v57
    %v286 = vpop.f32.mrf.mxu0
    %v287 = vadd.f32 %v166, %v286
    %288 = vmatmul.f32.gmra.mxu0 %v58
    %v289 = vpop.f32.mrf.mxu0
    %v290 = vadd.f32 %v166, %v289
    %291 = vmatmul.f32.gmra.mxu0 %v59
    %v292 = vpop.f32.mrf.mxu0
    %v293 = vadd.f32 %v166, %v292
    %294 = vmatmul.f32.gmra.mxu0 %v60
    %v295 = vpop.f32.mrf.mxu0
    %v296 = vadd.f32 %v166, %v295
    %297 = vdwg.mxu0
    %298 = vmatpush.msra.mxu0 %v108
    %299 = vmatpush.msra.mxu0 %v105
    %300 = vmatpush.msra.mxu0 %v102
    %301 = vmatpush.msra.mxu0 %v99
    %302 = vmatpush.msra.mxu0 %v96
    %303 = vmatpush.msra.mxu0 %v93
    %304 = vmatpush.msra.mxu0 %v90
    %305 = vmatpush.msra.mxu0 %v87
    %306 = vmatpush.msra.mxu0 %v84
    %307 = vmatpush.msra.mxu0 %v81
    %308 = vmatpush.msra.mxu0 %v78
    %309 = vmatpush.msra.mxu0 %v75
    %310 = vmatpush.msra.mxu0 %v72
    %311 = vmatpush.msra.mxu0 %v69
    %312 = vmatpush.msra.mxu0 %v66
    %313 = vmatpush.msra.mxu0 %v63
    %314 = vmatmul.f32.gmra.mxu0 %v45
    %v315 = vpop.f32.mrf.mxu0
    %v316 = vadd.f32 %v167, %v315
    %317 = vmatmul.f32.gmra.mxu0 %v46
    %v318 = vpop.f32.mrf.mxu0
    %v319 = vadd.f32 %v167, %v318
    %320 = vmatmul.f32.gmra.mxu0 %v47
    %v321 = vpop.f32.mrf.mxu0
    %v322 = vadd.f32 %v167, %v321
    %323 = vmatmul.f32.gmra.mxu0 %v48
    %v324 = vpop.f32.mrf.mxu0
    %v325 = vadd.f32 %v167, %v324
    %326 = vmatmul.f32.gmra.mxu0 %v49
    %v327 = vpop.f32.mrf.mxu0
    %v328 = vadd.f32 %v167, %v327
    %329 = vmatmul.f32.gmra.mxu0 %v50
    %v330 = vpop.f32.mrf.mxu0
    %v331 = vadd.f32 %v167, %v330
    %332 = vmatmul.f32.gmra.mxu0 %v51
    %v333 = vpop.f32.mrf.mxu0
    %v334 = vadd.f32 %v167, %v333
    %335 = vmatmul.f32.gmra.mxu0 %v52
    %v336 = vpop.f32.mrf.mxu0
    %v337 = vadd.f32 %v167, %v336
    %338 = vmatmul.f32.gmra.mxu0 %v53
    %v339 = vpop.f32.mrf.mxu0
    %v340 = vadd.f32 %v167, %v339
    %341 = vmatmul.f32.gmra.mxu0 %v54
    %v342 = vpop.f32.mrf.mxu0
    %v343 = vadd.f32 %v167, %v342
    %344 = vmatmul.f32.gmra.mxu0 %v55
    %v345 = vpop.f32.mrf.mxu0
    %v346 = vadd.f32 %v167, %v345
    %347 = vmatmul.f32.gmra.mxu0 %v56
    %v348 = vpop.f32.mrf.mxu0
    %v349 = vadd.f32 %v167, %v348
    %350 = vmatmul.f32.gmra.mxu0 %v57
    %v351 = vpop.f32.mrf.mxu0
    %v352 = vadd.f32 %v167, %v351
    %353 = vmatmul.f32.gmra.mxu0 %v58
    %v354 = vpop.f32.mrf.mxu0
    %v355 = vadd.f32 %v167, %v354
    %356 = vmatmul.f32.gmra.mxu0 %v59
    %v357 = vpop.f32.mrf.mxu0
    %v358 = vadd.f32 %v167, %v357
    %359 = vmatmul.f32.gmra.mxu0 %v60
    %v360 = vpop.f32.mrf.mxu0
    %v361 = vadd.f32 %v167, %v360
    %362 = vdwg.mxu0
    %v363 = vperm.slane %v157, 1
    %v364 = vperm.slane %v157, 3
    %v365 = vperm.slane %v157, 5
    %v369 = vperm.slane %v363, 1
    %v370 = vperm.slane %v364, 1
    %v371 = vperm.slane %v365, 1
    %372 = vmatpush.msra.mxu0 %v154
    %373 = vmatpush.msra.mxu0 %v151
    %374 = vmatpush.msra.mxu0 %v148
    %375 = vmatpush.msra.mxu0 %v145
    %376 = vmatpush.msra.mxu0 %v142
    %377 = vmatpush.msra.mxu0 %v139
    %378 = vmatpush.msra.mxu0 %v136
    %379 = vmatpush.msra.mxu0 %v133
    %380 = vmatpush.msra.mxu0 %v130
    %381 = vmatpush.msra.mxu0 %v127
    %382 = vmatpush.msra.mxu0 %v124
    %383 = vmatpush.msra.mxu0 %v121
    %384 = vmatpush.msra.mxu0 %v118
    %385 = vmatpush.msra.mxu0 %v115
    %386 = vmatpush.msra.mxu0 %v112
    %387 = vmatpush.msra.mxu0 %v109
    %388 = vmatmul.f32.gmra.mxu0 0.0
    %v389 = vpop.f32.mrf.mxu0
    %v390 = vadd.f32 %v369, %v389
    %391 = vmatmul.f32.gmra.mxu0 0.0
    %v392 = vpop.f32.mrf.mxu0
    %v393 = vadd.f32 %v369, %v392
    %394 = vdwg.mxu0
    %395 = vmatpush.msra.mxu0 %v155
    %396 = vmatpush.msra.mxu0 %v152
    %397 = vmatpush.msra.mxu0 %v149
    %398 = vmatpush.msra.mxu0 %v146
    %399 = vmatpush.msra.mxu0 %v143
    %400 = vmatpush.msra.mxu0 %v140
    %401 = vmatpush.msra.mxu0 %v137
    %402 = vmatpush.msra.mxu0 %v134
    %403 = vmatpush.msra.mxu0 %v131
    %404 = vmatpush.msra.mxu0 %v128
    %405 = vmatpush.msra.mxu0 %v125
    %406 = vmatpush.msra.mxu0 %v122
    %407 = vmatpush.msra.mxu0 %v119
    %408 = vmatpush.msra.mxu0 %v116
    %409 = vmatpush.msra.mxu0 %v113
    %410 = vmatpush.msra.mxu0 %v110
    %411 = vmatmul.f32.gmra.mxu0 0.0
    %v412 = vpop.f32.mrf.mxu0
    %v413 = vadd.f32 %v370, %v412
    %414 = vmatmul.f32.gmra.mxu0 0.0
    %v415 = vpop.f32.mrf.mxu0
    %v416 = vadd.f32 %v370, %v415
    %417 = vdwg.mxu0
    %418 = vmatpush.msra.mxu0 %v156
    %419 = vmatpush.msra.mxu0 %v153
    %420 = vmatpush.msra.mxu0 %v150
    %421 = vmatpush.msra.mxu0 %v147
    %422 = vmatpush.msra.mxu0 %v144
    %423 = vmatpush.msra.mxu0 %v141
    %424 = vmatpush.msra.mxu0 %v138
    %425 = vmatpush.msra.mxu0 %v135
    %426 = vmatpush.msra.mxu0 %v132
    %427 = vmatpush.msra.mxu0 %v129
    %428 = vmatpush.msra.mxu0 %v126
    %429 = vmatpush.msra.mxu0 %v123
    %430 = vmatpush.msra.mxu0 %v120
    %431 = vmatpush.msra.mxu0 %v117
    %432 = vmatpush.msra.mxu0 %v114
    %433 = vmatpush.msra.mxu0 %v111
    %434 = vmatmul.f32.gmra.mxu0 0.0
    %v435 = vpop.f32.mrf.mxu0
    %v436 = vadd.f32 %v371, %v435
    %437 = vmatmul.f32.gmra.mxu0 0.0
    %v438 = vpop.f32.mrf.mxu0
    %v439 = vadd.f32 %v371, %v438
    %440 = vdwg.mxu0
    %v441 = vadd.f32 %v186, %v390
    %v442 = vadd.f32 %v189, %v393
    %v443 = vxor.u32 %v441, 2147483648
    %v444 = vxor.u32 %v442, 2147483648
    %v445 = vmul.f32 %v443, 1.442695
    %v446 = vpow.pop %v445
    %v447 = vmul.f32 %v444, 1.442695
    %v448 = vpow.pop %v447
    %v449 = vadd.f32 %v446, 1.0
    %v450 = vadd.f32 %v448, 1.0
    %v451 = vrcp.pop %v449
    %v452 = vmul.f32 %v449, %v451
    %v453 = vsub.f32 1.0, %v452
    %v454 = vmul.f32 %v451, %v453
    %v455 = vadd.f32 %v451, %v454
    %vm456 = vweird.f32 %v449
    %vm457 = vweird.f32 %v451
    %vm458 = vmor %vm456, %vm457
    %v459 = vsel %vm458, %v451, %v455
    %v460 = vand.u32 2147483647, %v449
    %vm461 = vcmp.eq.f32.partialorder %v460, 8.507059e+37
    %v462 = vand.u32 %v449, 2147483648
    %v463 = vor.u32 1.1754944e-38, %v462
    %v464 = vsel %vm461, %v463, %v459
    %v465 = vmul.f32 1.0, %v464
    %v466 = vrcp.pop %v450
    %v467 = vmul.f32 %v450, %v466
    %v468 = vsub.f32 1.0, %v467
    %v469 = vmul.f32 %v466, %v468
    %v470 = vadd.f32 %v466, %v469
    %vm471 = vweird.f32 %v450
    %vm472 = vweird.f32 %v466
    %vm473 = vmor %vm471, %vm472
    %v474 = vsel %vm473, %v466, %v470
    %v475 = vand.u32 2147483647, %v450
    %vm476 = vcmp.eq.f32.partialorder %v475, 8.507059e+37
    %v477 = vand.u32 %v450, 2147483648
    %v478 = vor.u32 1.1754944e-38, %v477
    %v479 = vsel %vm476, %v478, %v474
    %v480 = vmul.f32 1.0, %v479
    %v481 = vadd.f32 %v251, %v413
    %v482 = vadd.f32 %v254, %v416
    %v483 = vxor.u32 %v481, 2147483648
    %v484 = vxor.u32 %v482, 2147483648
    %v485 = vmul.f32 %v483, 1.442695
    %v486 = vpow.pop %v485
    %v487 = vmul.f32 %v484, 1.442695
    %v488 = vpow.pop %v487
    %v489 = vadd.f32 %v486, 1.0
    %v490 = vadd.f32 %v488, 1.0
    %v491 = vrcp.pop %v489
    %v492 = vmul.f32 %v489, %v491
    %v493 = vsub.f32 1.0, %v492
    %v494 = vmul.f32 %v491, %v493
    %v495 = vadd.f32 %v491, %v494
    %vm496 = vweird.f32 %v489
    %vm497 = vweird.f32 %v491
    %vm498 = vmor %vm496, %vm497
    %v499 = vsel %vm498, %v491, %v495
    %v500 = vand.u32 2147483647, %v489
    %vm501 = vcmp.eq.f32.partialorder %v500, 8.507059e+37
    %v502 = vand.u32 %v489, 2147483648
    %v503 = vor.u32 1.1754944e-38, %v502
    %v504 = vsel %vm501, %v503, %v499
    %v505 = vmul.f32 1.0, %v504
    %v506 = vrcp.pop %v490
    %v507 = vmul.f32 %v490, %v506
    %v508 = vsub.f32 1.0, %v507
    %v509 = vmul.f32 %v506, %v508
    %v510 = vadd.f32 %v506, %v509
    %vm511 = vweird.f32 %v490
    %vm512 = vweird.f32 %v506
    %vm513 = vmor %vm511, %vm512
    %v514 = vsel %vm513, %v506, %v510
    %v515 = vand.u32 2147483647, %v490
    %vm516 = vcmp.eq.f32.partialorder %v515, 8.507059e+37
    %v517 = vand.u32 %v490, 2147483648
    %v518 = vor.u32 1.1754944e-38, %v517
    %v519 = vsel %vm516, %v518, %v514
    %v520 = vmul.f32 1.0, %v519
    %v521 = vmul.f32 %v465, %v436
    %v522 = vmul.f32 %v480, %v439
    %v523 = vadd.f32 %v316, %v521
    %v524 = vadd.f32 %v319, %v522
    %v525 = vtanh.pop %v523
    %v526 = vtanh.pop %v524
    %v527 = vsub.f32 1.0, %v505
    %v528 = vsub.f32 1.0, %v520
    %v529 = vmul.f32 %v527, %v525
    %v530 = vmul.f32 %v528, %v526
    %v531 = vmul.f32 %v505, 0.0
    %v532 = vmul.f32 %v520, 0.0
    %v533 = vadd.f32 %v529, %v531
    %v534 = vadd.f32 %v530, %v532
    %535 = vst [vmem:[#allocation2] sm:$0xff] %v533
    %536 = vst [vmem:[#allocation2 + $0x8] sm:$0xff] %v534
    %537 = vmatpush.msra.mxu0 %v154
    %538 = vmatpush.msra.mxu0 %v151
    %539 = vmatpush.msra.mxu0 %v148
    %540 = vmatpush.msra.mxu0 %v145
    %541 = vmatpush.msra.mxu0 %v142
    %542 = vmatpush.msra.mxu0 %v139
    %543 = vmatpush.msra.mxu0 %v136
    %544 = vmatpush.msra.mxu0 %v133
    %545 = vmatpush.msra.mxu0 %v130
    %546 = vmatpush.msra.mxu0 %v127
    %547 = vmatpush.msra.mxu0 %v124
    %548 = vmatpush.msra.mxu0 %v121
    %549 = vmatpush.msra.mxu0 %v118
    %550 = vmatpush.msra.mxu0 %v115
    %551 = vmatpush.msra.mxu0 %v112
    %552 = vmatpush.msra.mxu0 %v109
    %553 = vmatmul.f32.gmra.mxu0 %v533
    %v554 = vpop.f32.mrf.mxu0
    %v555 = vadd.f32 %v369, %v554
    %556 = vmatmul.f32.gmra.mxu0 %v534
    %v557 = vpop.f32.mrf.mxu0
    %v558 = vadd.f32 %v369, %v557
    %559 = vdwg.mxu0
    %560 = vmatpush.msra.mxu0 %v155
    %561 = vmatpush.msra.mxu0 %v152
    %562 = vmatpush.msra.mxu0 %v149
    %563 = vmatpush.msra.mxu0 %v146
    %564 = vmatpush.msra.mxu0 %v143
    %565 = vmatpush.msra.mxu0 %v140
    %566 = vmatpush.msra.mxu0 %v137
    %567 = vmatpush.msra.mxu0 %v134
    %568 = vmatpush.msra.mxu0 %v131
    %569 = vmatpush.msra.mxu0 %v128
    %570 = vmatpush.msra.mxu0 %v125
    %571 = vmatpush.msra.mxu0 %v122
    %572 = vmatpush.msra.mxu0 %v119
    %573 = vmatpush.msra.mxu0 %v116
    %574 = vmatpush.msra.mxu0 %v113
    %575 = vmatpush.msra.mxu0 %v110
    %576 = vmatmul.f32.gmra.mxu0 %v533
    %v577 = vpop.f32.mrf.mxu0
    %v578 = vadd.f32 %v370, %v577
    %579 = vmatmul.f32.gmra.mxu0 %v534
    %v580 = vpop.f32.mrf.mxu0
    %v581 = vadd.f32 %v370, %v580
    %582 = vdwg.mxu0
    %583 = vmatpush.msra.mxu0 %v156
    %584 = vmatpush.msra.mxu0 %v153
    %585 = vmatpush.msra.mxu0 %v150
    %586 = vmatpush.msra.mxu0 %v147
    %587 = vmatpush.msra.mxu0 %v144
    %588 = vmatpush.msra.mxu0 %v141
    %589 = vmatpush.msra.mxu0 %v138
    %590 = vmatpush.msra.mxu0 %v135
    %591 = vmatpush.msra.mxu0 %v132
    %592 = vmatpush.msra.mxu0 %v129
    %593 = vmatpush.msra.mxu0 %v126
    %594 = vmatpush.msra.mxu0 %v123
    %595 = vmatpush.msra.mxu0 %v120
    %596 = vmatpush.msra.mxu0 %v117
    %597 = vmatpush.msra.mxu0 %v114
    %598 = vmatpush.msra.mxu0 %v111
    %599 = vmatmul.f32.gmra.mxu0 %v533
    %v600 = vpop.f32.mrf.mxu0
    %v601 = vadd.f32 %v371, %v600
    %602 = vmatmul.f32.gmra.mxu0 %v534
    %v603 = vpop.f32.mrf.mxu0
    %v604 = vadd.f32 %v371, %v603
    %605 = vdwg.mxu0
    %v606 = vadd.f32 %v192, %v555
    %v607 = vadd.f32 %v195, %v558
    %v608 = vxor.u32 %v606, 2147483648
    %v609 = vxor.u32 %v607, 2147483648
    %v610 = vmul.f32 %v608, 1.442695
    %v611 = vpow.pop %v610
    %v612 = vmul.f32 %v609, 1.442695
    %v613 = vpow.pop %v612
    %v614 = vadd.f32 %v611, 1.0
    %v615 = vadd.f32 %v613, 1.0
    %v616 = vrcp.pop %v614
    %v617 = vmul.f32 %v614, %v616
    %v618 = vsub.f32 1.0, %v617
    %v619 = vmul.f32 %v616, %v618
    %v620 = vadd.f32 %v616, %v619
    %vm621 = vweird.f32 %v614
    %vm622 = vweird.f32 %v616
    %vm623 = vmor %vm621, %vm622
    %v624 = vsel %vm623, %v616, %v620
    %v625 = vand.u32 2147483647, %v614
    %vm626 = vcmp.eq.f32.partialorder %v625, 8.507059e+37
    %v627 = vand.u32 %v614, 2147483648
    %v628 = vor.u32 1.1754944e-38, %v627
    %v629 = vsel %vm626, %v628, %v624
    %v630 = vmul.f32 1.0, %v629
    %v631 = vrcp.pop %v615
    %v632 = vmul.f32 %v615, %v631
    %v633 = vsub.f32 1.0, %v632
    %v634 = vmul.f32 %v631, %v633
    %v635 = vadd.f32 %v631, %v634
    %vm636 = vweird.f32 %v615
    %vm637 = vweird.f32 %v631
    %vm638 = vmor %vm636, %vm637
    %v639 = vsel %vm638, %v631, %v635
    %v640 = vand.u32 2147483647, %v615
    %vm641 = vcmp.eq.f32.partialorder %v640, 8.507059e+37
    %v642 = vand.u32 %v615, 2147483648
    %v643 = vor.u32 1.1754944e-38, %v642
    %v644 = vsel %vm641, %v643, %v639
    %v645 = vmul.f32 1.0, %v644
    %v646 = vadd.f32 %v257, %v578
    %v647 = vadd.f32 %v260, %v581
    %v648 = vxor.u32 %v646, 2147483648
    %v649 = vxor.u32 %v647, 2147483648
    %v650 = vmul.f32 %v648, 1.442695
    %v651 = vpow.pop %v650
    %v652 = vmul.f32 %v649, 1.442695
    %v653 = vpow.pop %v652
    %v654 = vadd.f32 %v651, 1.0
    %v655 = vadd.f32 %v653, 1.0
    %v656 = vrcp.pop %v654
    %v657 = vmul.f32 %v654, %v656
    %v658 = vsub.f32 1.0, %v657
    %v659 = vmul.f32 %v656, %v658
    %v660 = vadd.f32 %v656, %v659
    %vm661 = vweird.f32 %v654
    %vm662 = vweird.f32 %v656
    %vm663 = vmor %vm661, %vm662
    %v664 = vsel %vm663, %v656, %v660
    %v665 = vand.u32 2147483647, %v654
    %vm666 = vcmp.eq.f32.partialorder %v665, 8.507059e+37
    %v667 = vand.u32 %v654, 2147483648
    %v668 = vor.u32 1.1754944e-38, %v667
    %v669 = vsel %vm666, %v668, %v664
    %v670 = vmul.f32 1.0, %v669
    %v671 = vrcp.pop %v655
    %v672 = vmul.f32 %v655, %v671
    %v673 = vsub.f32 1.0, %v672
    %v674 = vmul.f32 %v671, %v673
    %v675 = vadd.f32 %v671, %v674
    %vm676 = vweird.f32 %v655
    %vm677 = vweird.f32 %v671
    %vm678 = vmor %vm676, %vm677
    %v679 = vsel %vm678, %v671, %v675
    %v680 = vand.u32 2147483647, %v655
    %vm681 = vcmp.eq.f32.partialorder %v680, 8.507059e+37
    %v682 = vand.u32 %v655, 2147483648
    %v683 = vor.u32 1.1754944e-38, %v682
    %v684 = vsel %vm681, %v683, %v679
    %v685 = vmul.f32 1.0, %v684
    %v686 = vmul.f32 %v630, %v601
    %v687 = vmul.f32 %v645, %v604
    %v688 = vadd.f32 %v322, %v686
    %v689 = vadd.f32 %v325, %v687
    %v690 = vtanh.pop %v688
    %v691 = vtanh.pop %v689
    %v692 = vsub.f32 1.0, %v670
    %v693 = vsub.f32 1.0, %v685
    %v694 = vmul.f32 %v692, %v690
    %v695 = vmul.f32 %v693, %v691
    %v696 = vmul.f32 %v670, %v533
    %v697 = vmul.f32 %v685, %v534
    %v698 = vadd.f32 %v694, %v696
    %v699 = vadd.f32 %v695, %v697
    %700 = vst [vmem:[#allocation2 + $0x10] sm:$0xff] %v698
    %701 = vst [vmem:[#allocation2 + $0x18] sm:$0xff] %v699
    %702 = vmatpush.msra.mxu0 %v154
    %703 = vmatpush.msra.mxu0 %v151
    %704 = vmatpush.msra.mxu0 %v148
    %705 = vmatpush.msra.mxu0 %v145
    %706 = vmatpush.msra.mxu0 %v142
    %707 = vmatpush.msra.mxu0 %v139
    %708 = vmatpush.msra.mxu0 %v136
    %709 = vmatpush.msra.mxu0 %v133
    %710 = vmatpush.msra.mxu0 %v130
    %711 = vmatpush.msra.mxu0 %v127
    %712 = vmatpush.msra.mxu0 %v124
    %713 = vmatpush.msra.mxu0 %v121
    %714 = vmatpush.msra.mxu0 %v118
    %715 = vmatpush.msra.mxu0 %v115
    %716 = vmatpush.msra.mxu0 %v112
    %717 = vmatpush.msra.mxu0 %v109
    %718 = vmatmul.f32.gmra.mxu0 %v698
    %v719 = vpop.f32.mrf.mxu0
    %v720 = vadd.f32 %v369, %v719
    %721 = vmatmul.f32.gmra.mxu0 %v699
    %v722 = vpop.f32.mrf.mxu0
    %v723 = vadd.f32 %v369, %v722
    %724 = vdwg.mxu0
    %725 = vmatpush.msra.mxu0 %v155
    %726 = vmatpush.msra.mxu0 %v152
    %727 = vmatpush.msra.mxu0 %v149
    %728 = vmatpush.msra.mxu0 %v146
    %729 = vmatpush.msra.mxu0 %v143
    %730 = vmatpush.msra.mxu0 %v140
    %731 = vmatpush.msra.mxu0 %v137
    %732 = vmatpush.msra.mxu0 %v134
    %733 = vmatpush.msra.mxu0 %v131
    %734 = vmatpush.msra.mxu0 %v128
    %735 = vmatpush.msra.mxu0 %v125
    %736 = vmatpush.msra.mxu0 %v122
    %737 = vmatpush.msra.mxu0 %v119
    %738 = vmatpush.msra.mxu0 %v116
    %739 = vmatpush.msra.mxu0 %v113
    %740 = vmatpush.msra.mxu0 %v110
    %741 = vmatmul.f32.gmra.mxu0 %v698
    %v742 = vpop.f32.mrf.mxu0
    %v743 = vadd.f32 %v370, %v742
    %744 = vmatmul.f32.gmra.mxu0 %v699
    %v745 = vpop.f32.mrf.mxu0
    %v746 = vadd.f32 %v370, %v745
    %747 = vdwg.mxu0
    %748 = vmatpush.msra.mxu0 %v156
    %749 = vmatpush.msra.mxu0 %v153
    %750 = vmatpush.msra.mxu0 %v150
    %751 = vmatpush.msra.mxu0 %v147
    %752 = vmatpush.msra.mxu0 %v144
    %753 = vmatpush.msra.mxu0 %v141
    %754 = vmatpush.msra.mxu0 %v138
    %755 = vmatpush.msra.mxu0 %v135
    %756 = vmatpush.msra.mxu0 %v132
    %757 = vmatpush.msra.mxu0 %v129
    %758 = vmatpush.msra.mxu0 %v126
    %759 = vmatpush.msra.mxu0 %v123
    %760 = vmatpush.msra.mxu0 %v120
    %761 = vmatpush.msra.mxu0 %v117
    %762 = vmatpush.msra.mxu0 %v114
    %763 = vmatpush.msra.mxu0 %v111
    %764 = vmatmul.f32.gmra.mxu0 %v698
    %v765 = vpop.f32.mrf.mxu0
    %v766 = vadd.f32 %v371, %v765
    %767 = vmatmul.f32.gmra.mxu0 %v699
    %v768 = vpop.f32.mrf.mxu0
    %v769 = vadd.f32 %v371, %v768
    %770 = vdwg.mxu0
    %v771 = vadd.f32 %v198, %v720
    %v772 = vadd.f32 %v201, %v723
    %v773 = vxor.u32 %v771, 2147483648
    %v774 = vxor.u32 %v772, 2147483648
    %v775 = vmul.f32 %v773, 1.442695
    %v776 = vpow.pop %v775
    %v777 = vmul.f32 %v774, 1.442695
    %v778 = vpow.pop %v777
    %v779 = vadd.f32 %v776, 1.0
    %v780 = vadd.f32 %v778, 1.0
    %v781 = vrcp.pop %v779
    %v782 = vmul.f32 %v779, %v781
    %v783 = vsub.f32 1.0, %v782
    %v784 = vmul.f32 %v781, %v783
    %v785 = vadd.f32 %v781, %v784
    %vm786 = vweird.f32 %v779
    %vm787 = vweird.f32 %v781
    %vm788 = vmor %vm786, %vm787
    %v789 = vsel %vm788, %v781, %v785
    %v790 = vand.u32 2147483647, %v779
    %vm791 = vcmp.eq.f32.partialorder %v790, 8.507059e+37
    %v792 = vand.u32 %v779, 2147483648
    %v793 = vor.u32 1.1754944e-38, %v792
    %v794 = vsel %vm791, %v793, %v789
    %v795 = vmul.f32 1.0, %v794
    %v796 = vrcp.pop %v780
    %v797 = vmul.f32 %v780, %v796
    %v798 = vsub.f32 1.0, %v797
    %v799 = vmul.f32 %v796, %v798
    %v800 = vadd.f32 %v796, %v799
    %vm801 = vweird.f32 %v780
    %vm802 = vweird.f32 %v796
    %vm803 = vmor %vm801, %vm802
    %v804 = vsel %vm803, %v796, %v800
    %v805 = vand.u32 2147483647, %v780
    %vm806 = vcmp.eq.f32.partialorder %v805, 8.507059e+37
    %v807 = vand.u32 %v780, 2147483648
    %v808 = vor.u32 1.1754944e-38, %v807
    %v809 = vsel %vm806, %v808, %v804
    %v810 = vmul.f32 1.0, %v809
    %v811 = vadd.f32 %v263, %v743
    %v812 = vadd.f32 %v266, %v746
    %v813 = vxor.u32 %v811, 2147483648
    %v814 = vxor.u32 %v812, 2147483648
    %v815 = vmul.f32 %v813, 1.442695
    %v816 = vpow.pop %v815
    %v817 = vmul.f32 %v814, 1.442695
    %v818 = vpow.pop %v817
    %v819 = vadd.f32 %v816, 1.0
    %v820 = vadd.f32 %v818, 1.0
    %v821 = vrcp.pop %v819
    %v822 = vmul.f32 %v819, %v821
    %v823 = vsub.f32 1.0, %v822
    %v824 = vmul.f32 %v821, %v823
    %v825 = vadd.f32 %v821, %v824
    %vm826 = vweird.f32 %v819
    %vm827 = vweird.f32 %v821
    %vm828 = vmor %vm826, %vm827
    %v829 = vsel %vm828, %v821, %v825
    %v830 = vand.u32 2147483647, %v819
    %vm831 = vcmp.eq.f32.partialorder %v830, 8.507059e+37
    %v832 = vand.u32 %v819, 2147483648
    %v833 = vor.u32 1.1754944e-38, %v832
    %v834 = vsel %vm831, %v833, %v829
    %v835 = vmul.f32 1.0, %v834
    %v836 = vrcp.pop %v820
    %v837 = vmul.f32 %v820, %v836
    %v838 = vsub.f32 1.0, %v837
    %v839 = vmul.f32 %v836, %v838
    %v840 = vadd.f32 %v836, %v839
    %vm841 = vweird.f32 %v820
    %vm842 = vweird.f32 %v836
    %vm843 = vmor %vm841, %vm842
    %v844 = vsel %vm843, %v836, %v840
    %v845 = vand.u32 2147483647, %v820
    %vm846 = vcmp.eq.f32.partialorder %v845, 8.507059e+37
    %v847 = vand.u32 %v820, 2147483648
    %v848 = vor.u32 1.1754944e-38, %v847
    %v849 = vsel %vm846, %v848, %v844
    %v850 = vmul.f32 1.0, %v849
    %v851 = vmul.f32 %v795, %v766
    %v852 = vmul.f32 %v810, %v769
    %v853 = vadd.f32 %v328, %v851
    %v854 = vadd.f32 %v331, %v852
    %v855 = vtanh.pop %v853
    %v856 = vtanh.pop %v854
    %v857 = vsub.f32 1.0, %v835
    %v858 = vsub.f32 1.0, %v850
    %v859 = vmul.f32 %v857, %v855
    %v860 = vmul.f32 %v858, %v856
    %v861 = vmul.f32 %v835, %v698
    %v862 = vmul.f32 %v850, %v699
    %v863 = vadd.f32 %v859, %v861
    %v864 = vadd.f32 %v860, %v862
    %865 = vst [vmem:[#allocation2 + $0x20] sm:$0xff] %v863
    %866 = vst [vmem:[#allocation2 + $0x28] sm:$0xff] %v864
    %867 = vmatpush.msra.mxu0 %v154
    %868 = vmatpush.msra.mxu0 %v151
    %869 = vmatpush.msra.mxu0 %v148
    %870 = vmatpush.msra.mxu0 %v145
    %871 = vmatpush.msra.mxu0 %v142
    %872 = vmatpush.msra.mxu0 %v139
    %873 = vmatpush.msra.mxu0 %v136
    %874 = vmatpush.msra.mxu0 %v133
    %875 = vmatpush.msra.mxu0 %v130
    %876 = vmatpush.msra.mxu0 %v127
    %877 = vmatpush.msra.mxu0 %v124
    %878 = vmatpush.msra.mxu0 %v121
    %879 = vmatpush.msra.mxu0 %v118
    %880 = vmatpush.msra.mxu0 %v115
    %881 = vmatpush.msra.mxu0 %v112
    %882 = vmatpush.msra.mxu0 %v109
    %883 = vmatmul.f32.gmra.mxu0 %v863
    %v884 = vpop.f32.mrf.mxu0
    %v885 = vadd.f32 %v369, %v884
    %886 = vmatmul.f32.gmra.mxu0 %v864
    %v887 = vpop.f32.mrf.mxu0
    %v888 = vadd.f32 %v369, %v887
    %889 = vdwg.mxu0
    %890 = vmatpush.msra.mxu0 %v155
    %891 = vmatpush.msra.mxu0 %v152
    %892 = vmatpush.msra.mxu0 %v149
    %893 = vmatpush.msra.mxu0 %v146
    %894 = vmatpush.msra.mxu0 %v143
    %895 = vmatpush.msra.mxu0 %v140
    %896 = vmatpush.msra.mxu0 %v137
    %897 = vmatpush.msra.mxu0 %v134
    %898 = vmatpush.msra.mxu0 %v131
    %899 = vmatpush.msra.mxu0 %v128
    %900 = vmatpush.msra.mxu0 %v125
    %901 = vmatpush.msra.mxu0 %v122
    %902 = vmatpush.msra.mxu0 %v119
    %903 = vmatpush.msra.mxu0 %v116
    %904 = vmatpush.msra.mxu0 %v113
    %905 = vmatpush.msra.mxu0 %v110
    %906 = vmatmul.f32.gmra.mxu0 %v863
    %v907 = vpop.f32.mrf.mxu0
    %v908 = vadd.f32 %v370, %v907
    %909 = vmatmul.f32.gmra.mxu0 %v864
    %v910 = vpop.f32.mrf.mxu0
    %v911 = vadd.f32 %v370, %v910
    %912 = vdwg.mxu0
    %913 = vmatpush.msra.mxu0 %v156
    %914 = vmatpush.msra.mxu0 %v153
    %915 = vmatpush.msra.mxu0 %v150
    %916 = vmatpush.msra.mxu0 %v147
    %917 = vmatpush.msra.mxu0 %v144
    %918 = vmatpush.msra.mxu0 %v141
    %919 = vmatpush.msra.mxu0 %v138
    %920 = vmatpush.msra.mxu0 %v135
    %921 = vmatpush.msra.mxu0 %v132
    %922 = vmatpush.msra.mxu0 %v129
    %923 = vmatpush.msra.mxu0 %v126
    %924 = vmatpush.msra.mxu0 %v123
    %925 = vmatpush.msra.mxu0 %v120
    %926 = vmatpush.msra.mxu0 %v117
    %927 = vmatpush.msra.mxu0 %v114
    %928 = vmatpush.msra.mxu0 %v111
    %929 = vmatmul.f32.gmra.mxu0 %v863
    %v930 = vpop.f32.mrf.mxu0
    %v931 = vadd.f32 %v371, %v930
    %932 = vmatmul.f32.gmra.mxu0 %v864
    %v933 = vpop.f32.mrf.mxu0
    %v934 = vadd.f32 %v371, %v933
    %935 = vdwg.mxu0
    %v936 = vadd.f32 %v204, %v885
    %v937 = vadd.f32 %v207, %v888
    %v938 = vxor.u32 %v936, 2147483648
    %v939 = vxor.u32 %v937, 2147483648
    %v940 = vmul.f32 %v938, 1.442695
    %v941 = vpow.pop %v940
    %v942 = vmul.f32 %v939, 1.442695
    %v943 = vpow.pop %v942
    %v944 = vadd.f32 %v941, 1.0
    %v945 = vadd.f32 %v943, 1.0
    %v946 = vrcp.pop %v944
    %v947 = vmul.f32 %v944, %v946
    %v948 = vsub.f32 1.0, %v947
    %v949 = vmul.f32 %v946, %v948
    %v950 = vadd.f32 %v946, %v949
    %vm951 = vweird.f32 %v944
    %vm952 = vweird.f32 %v946
    %vm953 = vmor %vm951, %vm952
    %v954 = vsel %vm953, %v946, %v950
    %v955 = vand.u32 2147483647, %v944
    %vm956 = vcmp.eq.f32.partialorder %v955, 8.507059e+37
    %v957 = vand.u32 %v944, 2147483648
    %v958 = vor.u32 1.1754944e-38, %v957
    %v959 = vsel %vm956, %v958, %v954
    %v960 = vmul.f32 1.0, %v959
    %v961 = vrcp.pop %v945
    %v962 = vmul.f32 %v945, %v961
    %v963 = vsub.f32 1.0, %v962
    %v964 = vmul.f32 %v961, %v963
    %v965 = vadd.f32 %v961, %v964
    %vm966 = vweird.f32 %v945
    %vm967 = vweird.f32 %v961
    %vm968 = vmor %vm966, %vm967
    %v969 = vsel %vm968, %v961, %v965
    %v970 = vand.u32 2147483647, %v945
    %vm971 = vcmp.eq.f32.partialorder %v970, 8.507059e+37
    %v972 = vand.u32 %v945, 2147483648
    %v973 = vor.u32 1.1754944e-38, %v972
    %v974 = vsel %vm971, %v973, %v969
    %v975 = vmul.f32 1.0, %v974
    %v976 = vadd.f32 %v269, %v908
    %v977 = vadd.f32 %v272, %v911
    %v978 = vxor.u32 %v976, 2147483648
    %v979 = vxor.u32 %v977, 2147483648
    %v980 = vmul.f32 %v978, 1.442695
    %v981 = vpow.pop %v980
    %v982 = vmul.f32 %v979, 1.442695
    %v983 = vpow.pop %v982
    %v984 = vadd.f32 %v981, 1.0
    %v985 = vadd.f32 %v983, 1.0
    %v986 = vrcp.pop %v984
    %v987 = vmul.f32 %v984, %v986
    %v988 = vsub.f32 1.0, %v987
    %v989 = vmul.f32 %v986, %v988
    %v990 = vadd.f32 %v986, %v989
    %vm991 = vweird.f32 %v984
    %vm992 = vweird.f32 %v986
    %vm993 = vmor %vm991, %vm992
    %v994 = vsel %vm993, %v986, %v990
    %v995 = vand.u32 2147483647, %v984
    %vm996 = vcmp.eq.f32.partialorder %v995, 8.507059e+37
    %v997 = vand.u32 %v984, 2147483648
    %v998 = vor.u32 1.1754944e-38, %v997
    %v999 = vsel %vm996, %v998, %v994
    %v1000 = vmul.f32 1.0, %v999
    %v1001 = vrcp.pop %v985
    %v1002 = vmul.f32 %v985, %v1001
    %v1003 = vsub.f32 1.0, %v1002
    %v1004 = vmul.f32 %v1001, %v1003
    %v1005 = vadd.f32 %v1001, %v1004
    %vm1006 = vweird.f32 %v985
    %vm1007 = vweird.f32 %v1001
    %vm1008 = vmor %vm1006, %vm1007
    %v1009 = vsel %vm1008, %v1001, %v1005
    %v1010 = vand.u32 2147483647, %v985
    %vm1011 = vcmp.eq.f32.partialorder %v1010, 8.507059e+37
    %v1012 = vand.u32 %v985, 2147483648
    %v1013 = vor.u32 1.1754944e-38, %v1012
    %v1014 = vsel %vm1011, %v1013, %v1009
    %v1015 = vmul.f32 1.0, %v1014
    %v1016 = vmul.f32 %v960, %v931
    %v1017 = vmul.f32 %v975, %v934
    %v1018 = vadd.f32 %v334, %v1016
    %v1019 = vadd.f32 %v337, %v1017
    %v1020 = vtanh.pop %v1018
    %v1021 = vtanh.pop %v1019
    %v1022 = vsub.f32 1.0, %v1000
    %v1023 = vsub.f32 1.0, %v1015
    %v1024 = vmul.f32 %v1022, %v1020
    %v1025 = vmul.f32 %v1023, %v1021
    %v1026 = vmul.f32 %v1000, %v863
    %v1027 = vmul.f32 %v1015, %v864
    %v1028 = vadd.f32 %v1024, %v1026
    %v1029 = vadd.f32 %v1025, %v1027
    %1030 = vst [vmem:[#allocation2 + $0x30] sm:$0xff] %v1028
    %1031 = vst [vmem:[#allocation2 + $0x38] sm:$0xff] %v1029
    %1032 = vmatpush.msra.mxu0 %v154
    %1033 = vmatpush.msra.mxu0 %v151
    %1034 = vmatpush.msra.mxu0 %v148
    %1035 = vmatpush.msra.mxu0 %v145
    %1036 = vmatpush.msra.mxu0 %v142
    %1037 = vmatpush.msra.mxu0 %v139
    %1038 = vmatpush.msra.mxu0 %v136
    %1039 = vmatpush.msra.mxu0 %v133
    %1040 = vmatpush.msra.mxu0 %v130
    %1041 = vmatpush.msra.mxu0 %v127
    %1042 = vmatpush.msra.mxu0 %v124
    %1043 = vmatpush.msra.mxu0 %v121
    %1044 = vmatpush.msra.mxu0 %v118
    %1045 = vmatpush.msra.mxu0 %v115
    %1046 = vmatpush.msra.mxu0 %v112
    %1047 = vmatpush.msra.mxu0 %v109
    %1048 = vmatmul.f32.gmra.mxu0 %v1028
    %v1049 = vpop.f32.mrf.mxu0
    %v1050 = vadd.f32 %v369, %v1049
    %1051 = vmatmul.f32.gmra.mxu0 %v1029
    %v1052 = vpop.f32.mrf.mxu0
    %v1053 = vadd.f32 %v369, %v1052
    %1054 = vdwg.mxu0
    %1055 = vmatpush.msra.mxu0 %v155
    %1056 = vmatpush.msra.mxu0 %v152
    %1057 = vmatpush.msra.mxu0 %v149
    %1058 = vmatpush.msra.mxu0 %v146
    %1059 = vmatpush.msra.mxu0 %v143
    %1060 = vmatpush.msra.mxu0 %v140
    %1061 = vmatpush.msra.mxu0 %v137
    %1062 = vmatpush.msra.mxu0 %v134
    %1063 = vmatpush.msra.mxu0 %v131
    %1064 = vmatpush.msra.mxu0 %v128
    %1065 = vmatpush.msra.mxu0 %v125
    %1066 = vmatpush.msra.mxu0 %v122
    %1067 = vmatpush.msra.mxu0 %v119
    %1068 = vmatpush.msra.mxu0 %v116
    %1069 = vmatpush.msra.mxu0 %v113
    %1070 = vmatpush.msra.mxu0 %v110
    %1071 = vmatmul.f32.gmra.mxu0 %v1028
    %v1072 = vpop.f32.mrf.mxu0
    %v1073 = vadd.f32 %v370, %v1072
    %1074 = vmatmul.f32.gmra.mxu0 %v1029
    %v1075 = vpop.f32.mrf.mxu0
    %v1076 = vadd.f32 %v370, %v1075
    %1077 = vdwg.mxu0
    %1078 = vmatpush.msra.mxu0 %v156
    %1079 = vmatpush.msra.mxu0 %v153
    %1080 = vmatpush.msra.mxu0 %v150
    %1081 = vmatpush.msra.mxu0 %v147
    %1082 = vmatpush.msra.mxu0 %v144
    %1083 = vmatpush.msra.mxu0 %v141
    %1084 = vmatpush.msra.mxu0 %v138
    %1085 = vmatpush.msra.mxu0 %v135
    %1086 = vmatpush.msra.mxu0 %v132
    %1087 = vmatpush.msra.mxu0 %v129
    %1088 = vmatpush.msra.mxu0 %v126
    %1089 = vmatpush.msra.mxu0 %v123
    %1090 = vmatpush.msra.mxu0 %v120
    %1091 = vmatpush.msra.mxu0 %v117
    %1092 = vmatpush.msra.mxu0 %v114
    %1093 = vmatpush.msra.mxu0 %v111
    %1094 = vmatmul.f32.gmra.mxu0 %v1028
    %v1095 = vpop.f32.mrf.mxu0
    %v1096 = vadd.f32 %v371, %v1095
    %1097 = vmatmul.f32.gmra.mxu0 %v1029
    %v1098 = vpop.f32.mrf.mxu0
    %v1099 = vadd.f32 %v371, %v1098
    %1100 = vdwg.mxu0
    %v1101 = vadd.f32 %v210, %v1050
    %v1102 = vadd.f32 %v213, %v1053
    %v1103 = vxor.u32 %v1101, 2147483648
    %v1104 = vxor.u32 %v1102, 2147483648
    %v1105 = vmul.f32 %v1103, 1.442695
    %v1106 = vpow.pop %v1105
    %v1107 = vmul.f32 %v1104, 1.442695
    %v1108 = vpow.pop %v1107
    %v1109 = vadd.f32 %v1106, 1.0
    %v1110 = vadd.f32 %v1108, 1.0
    %v1111 = vrcp.pop %v1109
    %v1112 = vmul.f32 %v1109, %v1111
    %v1113 = vsub.f32 1.0, %v1112
    %v1114 = vmul.f32 %v1111, %v1113
    %v1115 = vadd.f32 %v1111, %v1114
    %vm1116 = vweird.f32 %v1109
    %vm1117 = vweird.f32 %v1111
    %vm1118 = vmor %vm1116, %vm1117
    %v1119 = vsel %vm1118, %v1111, %v1115
    %v1120 = vand.u32 2147483647, %v1109
    %vm1121 = vcmp.eq.f32.partialorder %v1120, 8.507059e+37
    %v1122 = vand.u32 %v1109, 2147483648
    %v1123 = vor.u32 1.1754944e-38, %v1122
    %v1124 = vsel %vm1121, %v1123, %v1119
    %v1125 = vmul.f32 1.0, %v1124
    %v1126 = vrcp.pop %v1110
    %v1127 = vmul.f32 %v1110, %v1126
    %v1128 = vsub.f32 1.0, %v1127
    %v1129 = vmul.f32 %v1126, %v1128
    %v1130 = vadd.f32 %v1126, %v1129
    %vm1131 = vweird.f32 %v1110
    %vm1132 = vweird.f32 %v1126
    %vm1133 = vmor %vm1131, %vm1132
    %v1134 = vsel %vm1133, %v1126, %v1130
    %v1135 = vand.u32 2147483647, %v1110
    %vm1136 = vcmp.eq.f32.partialorder %v1135, 8.507059e+37
    %v1137 = vand.u32 %v1110, 2147483648
    %v1138 = vor.u32 1.1754944e-38, %v1137
    %v1139 = vsel %vm1136, %v1138, %v1134
    %v1140 = vmul.f32 1.0, %v1139
    %v1141 = vadd.f32 %v275, %v1073
    %v1142 = vadd.f32 %v278, %v1076
    %v1143 = vxor.u32 %v1141, 2147483648
    %v1144 = vxor.u32 %v1142, 2147483648
    %v1145 = vmul.f32 %v1143, 1.442695
    %v1146 = vpow.pop %v1145
    %v1147 = vmul.f32 %v1144, 1.442695
    %v1148 = vpow.pop %v1147
    %v1149 = vadd.f32 %v1146, 1.0
    %v1150 = vadd.f32 %v1148, 1.0
    %v1151 = vrcp.pop %v1149
    %v1152 = vmul.f32 %v1149, %v1151
    %v1153 = vsub.f32 1.0, %v1152
    %v1154 = vmul.f32 %v1151, %v1153
    %v1155 = vadd.f32 %v1151, %v1154
    %vm1156 = vweird.f32 %v1149
    %vm1157 = vweird.f32 %v1151
    %vm1158 = vmor %vm1156, %vm1157
    %v1159 = vsel %vm1158, %v1151, %v1155
    %v1160 = vand.u32 2147483647, %v1149
    %vm1161 = vcmp.eq.f32.partialorder %v1160, 8.507059e+37
    %v1162 = vand.u32 %v1149, 2147483648
    %v1163 = vor.u32 1.1754944e-38, %v1162
    %v1164 = vsel %vm1161, %v1163, %v1159
    %v1165 = vmul.f32 1.0, %v1164
    %v1166 = vrcp.pop %v1150
    %v1167 = vmul.f32 %v1150, %v1166
    %v1168 = vsub.f32 1.0, %v1167
    %v1169 = vmul.f32 %v1166, %v1168
    %v1170 = vadd.f32 %v1166, %v1169
    %vm1171 = vweird.f32 %v1150
    %vm1172 = vweird.f32 %v1166
    %vm1173 = vmor %vm1171, %vm1172
    %v1174 = vsel %vm1173, %v1166, %v1170
    %v1175 = vand.u32 2147483647, %v1150
    %vm1176 = vcmp.eq.f32.partialorder %v1175, 8.507059e+37
    %v1177 = vand.u32 %v1150, 2147483648
    %v1178 = vor.u32 1.1754944e-38, %v1177
    %v1179 = vsel %vm1176, %v1178, %v1174
    %v1180 = vmul.f32 1.0, %v1179
    %v1181 = vmul.f32 %v1125, %v1096
    %v1182 = vmul.f32 %v1140, %v1099
    %v1183 = vadd.f32 %v340, %v1181
    %v1184 = vadd.f32 %v343, %v1182
    %v1185 = vtanh.pop %v1183
    %v1186 = vtanh.pop %v1184
    %v1187 = vsub.f32 1.0, %v1165
    %v1188 = vsub.f32 1.0, %v1180
    %v1189 = vmul.f32 %v1187, %v1185
    %v1190 = vmul.f32 %v1188, %v1186
    %v1191 = vmul.f32 %v1165, %v1028
    %v1192 = vmul.f32 %v1180, %v1029
    %v1193 = vadd.f32 %v1189, %v1191
    %v1194 = vadd.f32 %v1190, %v1192
    %1195 = vst [vmem:[#allocation2 + $0x40] sm:$0xff] %v1193
    %1196 = vst [vmem:[#allocation2 + $0x48] sm:$0xff] %v1194
    %1197 = vmatpush.msra.mxu0 %v154
    %1198 = vmatpush.msra.mxu0 %v151
    %1199 = vmatpush.msra.mxu0 %v148
    %1200 = vmatpush.msra.mxu0 %v145
    %1201 = vmatpush.msra.mxu0 %v142
    %1202 = vmatpush.msra.mxu0 %v139
    %1203 = vmatpush.msra.mxu0 %v136
    %1204 = vmatpush.msra.mxu0 %v133
    %1205 = vmatpush.msra.mxu0 %v130
    %1206 = vmatpush.msra.mxu0 %v127
    %1207 = vmatpush.msra.mxu0 %v124
    %1208 = vmatpush.msra.mxu0 %v121
    %1209 = vmatpush.msra.mxu0 %v118
    %1210 = vmatpush.msra.mxu0 %v115
    %1211 = vmatpush.msra.mxu0 %v112
    %1212 = vmatpush.msra.mxu0 %v109
    %1213 = vmatmul.f32.gmra.mxu0 %v1193
    %v1214 = vpop.f32.mrf.mxu0
    %v1215 = vadd.f32 %v369, %v1214
    %1216 = vmatmul.f32.gmra.mxu0 %v1194
    %v1217 = vpop.f32.mrf.mxu0
    %v1218 = vadd.f32 %v369, %v1217
    %1219 = vdwg.mxu0
    %1220 = vmatpush.msra.mxu0 %v155
    %1221 = vmatpush.msra.mxu0 %v152
    %1222 = vmatpush.msra.mxu0 %v149
    %1223 = vmatpush.msra.mxu0 %v146
    %1224 = vmatpush.msra.mxu0 %v143
    %1225 = vmatpush.msra.mxu0 %v140
    %1226 = vmatpush.msra.mxu0 %v137
    %1227 = vmatpush.msra.mxu0 %v134
    %1228 = vmatpush.msra.mxu0 %v131
    %1229 = vmatpush.msra.mxu0 %v128
    %1230 = vmatpush.msra.mxu0 %v125
    %1231 = vmatpush.msra.mxu0 %v122
    %1232 = vmatpush.msra.mxu0 %v119
    %1233 = vmatpush.msra.mxu0 %v116
    %1234 = vmatpush.msra.mxu0 %v113
    %1235 = vmatpush.msra.mxu0 %v110
    %1236 = vmatmul.f32.gmra.mxu0 %v1193
    %v1237 = vpop.f32.mrf.mxu0
    %v1238 = vadd.f32 %v370, %v1237
    %1239 = vmatmul.f32.gmra.mxu0 %v1194
    %v1240 = vpop.f32.mrf.mxu0
    %v1241 = vadd.f32 %v370, %v1240
    %1242 = vdwg.mxu0
    %1243 = vmatpush.msra.mxu0 %v156
    %1244 = vmatpush.msra.mxu0 %v153
    %1245 = vmatpush.msra.mxu0 %v150
    %1246 = vmatpush.msra.mxu0 %v147
    %1247 = vmatpush.msra.mxu0 %v144
    %1248 = vmatpush.msra.mxu0 %v141
    %1249 = vmatpush.msra.mxu0 %v138
    %1250 = vmatpush.msra.mxu0 %v135
    %1251 = vmatpush.msra.mxu0 %v132
    %1252 = vmatpush.msra.mxu0 %v129
    %1253 = vmatpush.msra.mxu0 %v126
    %1254 = vmatpush.msra.mxu0 %v123
    %1255 = vmatpush.msra.mxu0 %v120
    %1256 = vmatpush.msra.mxu0 %v117
    %1257 = vmatpush.msra.mxu0 %v114
    %1258 = vmatpush.msra.mxu0 %v111
    %1259 = vmatmul.f32.gmra.mxu0 %v1193
    %v1260 = vpop.f32.mrf.mxu0
    %v1261 = vadd.f32 %v371, %v1260
    %1262 = vmatmul.f32.gmra.mxu0 %v1194
    %v1263 = vpop.f32.mrf.mxu0
    %v1264 = vadd.f32 %v371, %v1263
    %1265 = vdwg.mxu0
    %v1266 = vadd.f32 %v216, %v1215
    %v1267 = vadd.f32 %v219, %v1218
    %v1268 = vxor.u32 %v1266, 2147483648
    %v1269 = vxor.u32 %v1267, 2147483648
    %v1270 = vmul.f32 %v1268, 1.442695
    %v1271 = vpow.pop %v1270
    %v1272 = vmul.f32 %v1269, 1.442695
    %v1273 = vpow.pop %v1272
    %v1274 = vadd.f32 %v1271, 1.0
    %v1275 = vadd.f32 %v1273, 1.0
    %v1276 = vrcp.pop %v1274
    %v1277 = vmul.f32 %v1274, %v1276
    %v1278 = vsub.f32 1.0, %v1277
    %v1279 = vmul.f32 %v1276, %v1278
    %v1280 = vadd.f32 %v1276, %v1279
    %vm1281 = vweird.f32 %v1274
    %vm1282 = vweird.f32 %v1276
    %vm1283 = vmor %vm1281, %vm1282
    %v1284 = vsel %vm1283, %v1276, %v1280
    %v1285 = vand.u32 2147483647, %v1274
    %vm1286 = vcmp.eq.f32.partialorder %v1285, 8.507059e+37
    %v1287 = vand.u32 %v1274, 2147483648
    %v1288 = vor.u32 1.1754944e-38, %v1287
    %v1289 = vsel %vm1286, %v1288, %v1284
    %v1290 = vmul.f32 1.0, %v1289
    %v1291 = vrcp.pop %v1275
    %v1292 = vmul.f32 %v1275, %v1291
    %v1293 = vsub.f32 1.0, %v1292
    %v1294 = vmul.f32 %v1291, %v1293
    %v1295 = vadd.f32 %v1291, %v1294
    %vm1296 = vweird.f32 %v1275
    %vm1297 = vweird.f32 %v1291
    %vm1298 = vmor %vm1296, %vm1297
    %v1299 = vsel %vm1298, %v1291, %v1295
    %v1300 = vand.u32 2147483647, %v1275
    %vm1301 = vcmp.eq.f32.partialorder %v1300, 8.507059e+37
    %v1302 = vand.u32 %v1275, 2147483648
    %v1303 = vor.u32 1.1754944e-38, %v1302
    %v1304 = vsel %vm1301, %v1303, %v1299
    %v1305 = vmul.f32 1.0, %v1304
    %v1306 = vadd.f32 %v281, %v1238
    %v1307 = vadd.f32 %v284, %v1241
    %v1308 = vxor.u32 %v1306, 2147483648
    %v1309 = vxor.u32 %v1307, 2147483648
    %v1310 = vmul.f32 %v1308, 1.442695
    %v1311 = vpow.pop %v1310
    %v1312 = vmul.f32 %v1309, 1.442695
    %v1313 = vpow.pop %v1312
    %v1314 = vadd.f32 %v1311, 1.0
    %v1315 = vadd.f32 %v1313, 1.0
    %v1316 = vrcp.pop %v1314
    %v1317 = vmul.f32 %v1314, %v1316
    %v1318 = vsub.f32 1.0, %v1317
    %v1319 = vmul.f32 %v1316, %v1318
    %v1320 = vadd.f32 %v1316, %v1319
    %vm1321 = vweird.f32 %v1314
    %vm1322 = vweird.f32 %v1316
    %vm1323 = vmor %vm1321, %vm1322
    %v1324 = vsel %vm1323, %v1316, %v1320
    %v1325 = vand.u32 2147483647, %v1314
    %vm1326 = vcmp.eq.f32.partialorder %v1325, 8.507059e+37
    %v1327 = vand.u32 %v1314, 2147483648
    %v1328 = vor.u32 1.1754944e-38, %v1327
    %v1329 = vsel %vm1326, %v1328, %v1324
    %v1330 = vmul.f32 1.0, %v1329
    %v1331 = vrcp.pop %v1315
    %v1332 = vmul.f32 %v1315, %v1331
    %v1333 = vsub.f32 1.0, %v1332
    %v1334 = vmul.f32 %v1331, %v1333
    %v1335 = vadd.f32 %v1331, %v1334
    %vm1336 = vweird.f32 %v1315
    %vm1337 = vweird.f32 %v1331
    %vm1338 = vmor %vm1336, %vm1337
    %v1339 = vsel %vm1338, %v1331, %v1335
    %v1340 = vand.u32 2147483647, %v1315
    %vm1341 = vcmp.eq.f32.partialorder %v1340, 8.507059e+37
    %v1342 = vand.u32 %v1315, 2147483648
    %v1343 = vor.u32 1.1754944e-38, %v1342
    %v1344 = vsel %vm1341, %v1343, %v1339
    %v1345 = vmul.f32 1.0, %v1344
    %v1346 = vmul.f32 %v1290, %v1261
    %v1347 = vmul.f32 %v1305, %v1264
    %v1348 = vadd.f32 %v346, %v1346
    %v1349 = vadd.f32 %v349, %v1347
    %v1350 = vtanh.pop %v1348
    %v1351 = vtanh.pop %v1349
    %v1352 = vsub.f32 1.0, %v1330
    %v1353 = vsub.f32 1.0, %v1345
    %v1354 = vmul.f32 %v1352, %v1350
    %v1355 = vmul.f32 %v1353, %v1351
    %v1356 = vmul.f32 %v1330, %v1193
    %v1357 = vmul.f32 %v1345, %v1194
    %v1358 = vadd.f32 %v1354, %v1356
    %v1359 = vadd.f32 %v1355, %v1357
    %1360 = vst [vmem:[#allocation2 + $0x50] sm:$0xff] %v1358
    %1361 = vst [vmem:[#allocation2 + $0x58] sm:$0xff] %v1359
    %1362 = vmatpush.msra.mxu0 %v154
    %1363 = vmatpush.msra.mxu0 %v151
    %1364 = vmatpush.msra.mxu0 %v148
    %1365 = vmatpush.msra.mxu0 %v145
    %1366 = vmatpush.msra.mxu0 %v142
    %1367 = vmatpush.msra.mxu0 %v139
    %1368 = vmatpush.msra.mxu0 %v136
    %1369 = vmatpush.msra.mxu0 %v133
    %1370 = vmatpush.msra.mxu0 %v130
    %1371 = vmatpush.msra.mxu0 %v127
    %1372 = vmatpush.msra.mxu0 %v124
    %1373 = vmatpush.msra.mxu0 %v121
    %1374 = vmatpush.msra.mxu0 %v118
    %1375 = vmatpush.msra.mxu0 %v115
    %1376 = vmatpush.msra.mxu0 %v112
    %1377 = vmatpush.msra.mxu0 %v109
    %1378 = vmatmul.f32.gmra.mxu0 %v1358
    %v1379 = vpop.f32.mrf.mxu0
    %v1380 = vadd.f32 %v369, %v1379
    %1381 = vmatmul.f32.gmra.mxu0 %v1359
    %v1382 = vpop.f32.mrf.mxu0
    %v1383 = vadd.f32 %v369, %v1382
    %1384 = vdwg.mxu0
    %1385 = vmatpush.msra.mxu0 %v155
    %1386 = vmatpush.msra.mxu0 %v152
    %1387 = vmatpush.msra.mxu0 %v149
    %1388 = vmatpush.msra.mxu0 %v146
    %1389 = vmatpush.msra.mxu0 %v143
    %1390 = vmatpush.msra.mxu0 %v140
    %1391 = vmatpush.msra.mxu0 %v137
    %1392 = vmatpush.msra.mxu0 %v134
    %1393 = vmatpush.msra.mxu0 %v131
    %1394 = vmatpush.msra.mxu0 %v128
    %1395 = vmatpush.msra.mxu0 %v125
    %1396 = vmatpush.msra.mxu0 %v122
    %1397 = vmatpush.msra.mxu0 %v119
    %1398 = vmatpush.msra.mxu0 %v116
    %1399 = vmatpush.msra.mxu0 %v113
    %1400 = vmatpush.msra.mxu0 %v110
    %1401 = vmatmul.f32.gmra.mxu0 %v1358
    %v1402 = vpop.f32.mrf.mxu0
    %v1403 = vadd.f32 %v370, %v1402
    %1404 = vmatmul.f32.gmra.mxu0 %v1359
    %v1405 = vpop.f32.mrf.mxu0
    %v1406 = vadd.f32 %v370, %v1405
    %1407 = vdwg.mxu0
    %1408 = vmatpush.msra.mxu0 %v156
    %1409 = vmatpush.msra.mxu0 %v153
    %1410 = vmatpush.msra.mxu0 %v150
    %1411 = vmatpush.msra.mxu0 %v147
    %1412 = vmatpush.msra.mxu0 %v144
    %1413 = vmatpush.msra.mxu0 %v141
    %1414 = vmatpush.msra.mxu0 %v138
    %1415 = vmatpush.msra.mxu0 %v135
    %1416 = vmatpush.msra.mxu0 %v132
    %1417 = vmatpush.msra.mxu0 %v129
    %1418 = vmatpush.msra.mxu0 %v126
    %1419 = vmatpush.msra.mxu0 %v123
    %1420 = vmatpush.msra.mxu0 %v120
    %1421 = vmatpush.msra.mxu0 %v117
    %1422 = vmatpush.msra.mxu0 %v114
    %1423 = vmatpush.msra.mxu0 %v111
    %1424 = vmatmul.f32.gmra.mxu0 %v1358
    %v1425 = vpop.f32.mrf.mxu0
    %v1426 = vadd.f32 %v371, %v1425
    %1427 = vmatmul.f32.gmra.mxu0 %v1359
    %v1428 = vpop.f32.mrf.mxu0
    %v1429 = vadd.f32 %v371, %v1428
    %1430 = vdwg.mxu0
    %v1431 = vadd.f32 %v222, %v1380
    %v1432 = vadd.f32 %v225, %v1383
    %v1433 = vxor.u32 %v1431, 2147483648
    %v1434 = vxor.u32 %v1432, 2147483648
    %v1435 = vmul.f32 %v1433, 1.442695
    %v1436 = vpow.pop %v1435
    %v1437 = vmul.f32 %v1434, 1.442695
    %v1438 = vpow.pop %v1437
    %v1439 = vadd.f32 %v1436, 1.0
    %v1440 = vadd.f32 %v1438, 1.0
    %v1441 = vrcp.pop %v1439
    %v1442 = vmul.f32 %v1439, %v1441
    %v1443 = vsub.f32 1.0, %v1442
    %v1444 = vmul.f32 %v1441, %v1443
    %v1445 = vadd.f32 %v1441, %v1444
    %vm1446 = vweird.f32 %v1439
    %vm1447 = vweird.f32 %v1441
    %vm1448 = vmor %vm1446, %vm1447
    %v1449 = vsel %vm1448, %v1441, %v1445
    %v1450 = vand.u32 2147483647, %v1439
    %vm1451 = vcmp.eq.f32.partialorder %v1450, 8.507059e+37
    %v1452 = vand.u32 %v1439, 2147483648
    %v1453 = vor.u32 1.1754944e-38, %v1452
    %v1454 = vsel %vm1451, %v1453, %v1449
    %v1455 = vmul.f32 1.0, %v1454
    %v1456 = vrcp.pop %v1440
    %v1457 = vmul.f32 %v1440, %v1456
    %v1458 = vsub.f32 1.0, %v1457
    %v1459 = vmul.f32 %v1456, %v1458
    %v1460 = vadd.f32 %v1456, %v1459
    %vm1461 = vweird.f32 %v1440
    %vm1462 = vweird.f32 %v1456
    %vm1463 = vmor %vm1461, %vm1462
    %v1464 = vsel %vm1463, %v1456, %v1460
    %v1465 = vand.u32 2147483647, %v1440
    %vm1466 = vcmp.eq.f32.partialorder %v1465, 8.507059e+37
    %v1467 = vand.u32 %v1440, 2147483648
    %v1468 = vor.u32 1.1754944e-38, %v1467
    %v1469 = vsel %vm1466, %v1468, %v1464
    %v1470 = vmul.f32 1.0, %v1469
    %v1471 = vadd.f32 %v287, %v1403
    %v1472 = vadd.f32 %v290, %v1406
    %v1473 = vxor.u32 %v1471, 2147483648
    %v1474 = vxor.u32 %v1472, 2147483648
    %v1475 = vmul.f32 %v1473, 1.442695
    %v1476 = vpow.pop %v1475
    %v1477 = vmul.f32 %v1474, 1.442695
    %v1478 = vpow.pop %v1477
    %v1479 = vadd.f32 %v1476, 1.0
    %v1480 = vadd.f32 %v1478, 1.0
    %v1481 = vrcp.pop %v1479
    %v1482 = vmul.f32 %v1479, %v1481
    %v1483 = vsub.f32 1.0, %v1482
    %v1484 = vmul.f32 %v1481, %v1483
    %v1485 = vadd.f32 %v1481, %v1484
    %vm1486 = vweird.f32 %v1479
    %vm1487 = vweird.f32 %v1481
    %vm1488 = vmor %vm1486, %vm1487
    %v1489 = vsel %vm1488, %v1481, %v1485
    %v1490 = vand.u32 2147483647, %v1479
    %vm1491 = vcmp.eq.f32.partialorder %v1490, 8.507059e+37
    %v1492 = vand.u32 %v1479, 2147483648
    %v1493 = vor.u32 1.1754944e-38, %v1492
    %v1494 = vsel %vm1491, %v1493, %v1489
    %v1495 = vmul.f32 1.0, %v1494
    %v1496 = vrcp.pop %v1480
    %v1497 = vmul.f32 %v1480, %v1496
    %v1498 = vsub.f32 1.0, %v1497
    %v1499 = vmul.f32 %v1496, %v1498
    %v1500 = vadd.f32 %v1496, %v1499
    %vm1501 = vweird.f32 %v1480
    %vm1502 = vweird.f32 %v1496
    %vm1503 = vmor %vm1501, %vm1502
    %v1504 = vsel %vm1503, %v1496, %v1500
    %v1505 = vand.u32 2147483647, %v1480
    %vm1506 = vcmp.eq.f32.partialorder %v1505, 8.507059e+37
    %v1507 = vand.u32 %v1480, 2147483648
    %v1508 = vor.u32 1.1754944e-38, %v1507
    %v1509 = vsel %vm1506, %v1508, %v1504
    %v1510 = vmul.f32 1.0, %v1509
    %v1511 = vmul.f32 %v1455, %v1426
    %v1512 = vmul.f32 %v1470, %v1429
    %v1513 = vadd.f32 %v352, %v1511
    %v1514 = vadd.f32 %v355, %v1512
    %v1515 = vtanh.pop %v1513
    %v1516 = vtanh.pop %v1514
    %v1517 = vsub.f32 1.0, %v1495
    %v1518 = vsub.f32 1.0, %v1510
    %v1519 = vmul.f32 %v1517, %v1515
    %v1520 = vmul.f32 %v1518, %v1516
    %v1521 = vmul.f32 %v1495, %v1358
    %v1522 = vmul.f32 %v1510, %v1359
    %v1523 = vadd.f32 %v1519, %v1521
    %v1524 = vadd.f32 %v1520, %v1522
    %1525 = vst [vmem:[#allocation2 + $0x60] sm:$0xff] %v1523
    %1526 = vst [vmem:[#allocation2 + $0x68] sm:$0xff] %v1524
    %1527 = vmatpush.msra.mxu0 %v154
    %1528 = vmatpush.msra.mxu0 %v151
    %1529 = vmatpush.msra.mxu0 %v148
    %1530 = vmatpush.msra.mxu0 %v145
    %1531 = vmatpush.msra.mxu0 %v142
    %1532 = vmatpush.msra.mxu0 %v139
    %1533 = vmatpush.msra.mxu0 %v136
    %1534 = vmatpush.msra.mxu0 %v133
    %1535 = vmatpush.msra.mxu0 %v130
    %1536 = vmatpush.msra.mxu0 %v127
    %1537 = vmatpush.msra.mxu0 %v124
    %1538 = vmatpush.msra.mxu0 %v121
    %1539 = vmatpush.msra.mxu0 %v118
    %1540 = vmatpush.msra.mxu0 %v115
    %1541 = vmatpush.msra.mxu0 %v112
    %1542 = vmatpush.msra.mxu0 %v109
    %1543 = vmatmul.f32.gmra.mxu0 %v1523
    %v1544 = vpop.f32.mrf.mxu0
    %v1545 = vadd.f32 %v369, %v1544
    %1546 = vmatmul.f32.gmra.mxu0 %v1524
    %v1547 = vpop.f32.mrf.mxu0
    %v1548 = vadd.f32 %v369, %v1547
    %1549 = vdwg.mxu0
    %1550 = vmatpush.msra.mxu0 %v155
    %1551 = vmatpush.msra.mxu0 %v152
    %1552 = vmatpush.msra.mxu0 %v149
    %1553 = vmatpush.msra.mxu0 %v146
    %1554 = vmatpush.msra.mxu0 %v143
    %1555 = vmatpush.msra.mxu0 %v140
    %1556 = vmatpush.msra.mxu0 %v137
    %1557 = vmatpush.msra.mxu0 %v134
    %1558 = vmatpush.msra.mxu0 %v131
    %1559 = vmatpush.msra.mxu0 %v128
    %1560 = vmatpush.msra.mxu0 %v125
    %1561 = vmatpush.msra.mxu0 %v122
    %1562 = vmatpush.msra.mxu0 %v119
    %1563 = vmatpush.msra.mxu0 %v116
    %1564 = vmatpush.msra.mxu0 %v113
    %1565 = vmatpush.msra.mxu0 %v110
    %1566 = vmatmul.f32.gmra.mxu0 %v1523
    %v1567 = vpop.f32.mrf.mxu0
    %v1568 = vadd.f32 %v370, %v1567
    %1569 = vmatmul.f32.gmra.mxu0 %v1524
    %v1570 = vpop.f32.mrf.mxu0
    %v1571 = vadd.f32 %v370, %v1570
    %1572 = vdwg.mxu0
    %1573 = vmatpush.msra.mxu0 %v156
    %1574 = vmatpush.msra.mxu0 %v153
    %1575 = vmatpush.msra.mxu0 %v150
    %1576 = vmatpush.msra.mxu0 %v147
    %1577 = vmatpush.msra.mxu0 %v144
    %1578 = vmatpush.msra.mxu0 %v141
    %1579 = vmatpush.msra.mxu0 %v138
    %1580 = vmatpush.msra.mxu0 %v135
    %1581 = vmatpush.msra.mxu0 %v132
    %1582 = vmatpush.msra.mxu0 %v129
    %1583 = vmatpush.msra.mxu0 %v126
    %1584 = vmatpush.msra.mxu0 %v123
    %1585 = vmatpush.msra.mxu0 %v120
    %1586 = vmatpush.msra.mxu0 %v117
    %1587 = vmatpush.msra.mxu0 %v114
    %1588 = vmatpush.msra.mxu0 %v111
    %1589 = vmatmul.f32.gmra.mxu0 %v1523
    %v1590 = vpop.f32.mrf.mxu0
    %v1591 = vadd.f32 %v371, %v1590
    %1592 = vmatmul.f32.gmra.mxu0 %v1524
    %v1593 = vpop.f32.mrf.mxu0
    %v1594 = vadd.f32 %v371, %v1593
    %1595 = vdwg.mxu0
    %v1596 = vadd.f32 %v228, %v1545
    %v1597 = vadd.f32 %v231, %v1548
    %v1598 = vxor.u32 %v1596, 2147483648
    %v1599 = vxor.u32 %v1597, 2147483648
    %v1600 = vmul.f32 %v1598, 1.442695
    %v1601 = vpow.pop %v1600
    %v1602 = vmul.f32 %v1599, 1.442695
    %v1603 = vpow.pop %v1602
    %v1604 = vadd.f32 %v1601, 1.0
    %v1605 = vadd.f32 %v1603, 1.0
    %v1606 = vrcp.pop %v1604
    %v1607 = vmul.f32 %v1604, %v1606
    %v1608 = vsub.f32 1.0, %v1607
    %v1609 = vmul.f32 %v1606, %v1608
    %v1610 = vadd.f32 %v1606, %v1609
    %vm1611 = vweird.f32 %v1604
    %vm1612 = vweird.f32 %v1606
    %vm1613 = vmor %vm1611, %vm1612
    %v1614 = vsel %vm1613, %v1606, %v1610
    %v1615 = vand.u32 2147483647, %v1604
    %vm1616 = vcmp.eq.f32.partialorder %v1615, 8.507059e+37
    %v1617 = vand.u32 %v1604, 2147483648
    %v1618 = vor.u32 1.1754944e-38, %v1617
    %v1619 = vsel %vm1616, %v1618, %v1614
    %v1620 = vmul.f32 1.0, %v1619
    %v1621 = vrcp.pop %v1605
    %v1622 = vmul.f32 %v1605, %v1621
    %v1623 = vsub.f32 1.0, %v1622
    %v1624 = vmul.f32 %v1621, %v1623
    %v1625 = vadd.f32 %v1621, %v1624
    %vm1626 = vweird.f32 %v1605
    %vm1627 = vweird.f32 %v1621
    %vm1628 = vmor %vm1626, %vm1627
    %v1629 = vsel %vm1628, %v1621, %v1625
    %v1630 = vand.u32 2147483647, %v1605
    %vm1631 = vcmp.eq.f32.partialorder %v1630, 8.507059e+37
    %v1632 = vand.u32 %v1605, 2147483648
    %v1633 = vor.u32 1.1754944e-38, %v1632
    %v1634 = vsel %vm1631, %v1633, %v1629
    %v1635 = vmul.f32 1.0, %v1634
    %v1636 = vadd.f32 %v293, %v1568
    %v1637 = vadd.f32 %v296, %v1571
    %v1638 = vxor.u32 %v1636, 2147483648
    %v1639 = vxor.u32 %v1637, 2147483648
    %v1640 = vmul.f32 %v1638, 1.442695
    %v1641 = vpow.pop %v1640
    %v1642 = vmul.f32 %v1639, 1.442695
    %v1643 = vpow.pop %v1642
    %v1644 = vadd.f32 %v1641, 1.0
    %v1645 = vadd.f32 %v1643, 1.0
    %v1646 = vrcp.pop %v1644
    %v1647 = vmul.f32 %v1644, %v1646
    %v1648 = vsub.f32 1.0, %v1647
    %v1649 = vmul.f32 %v1646, %v1648
    %v1650 = vadd.f32 %v1646, %v1649
    %vm1651 = vweird.f32 %v1644
    %vm1652 = vweird.f32 %v1646
    %vm1653 = vmor %vm1651, %vm1652
    %v1654 = vsel %vm1653, %v1646, %v1650
    %v1655 = vand.u32 2147483647, %v1644
    %vm1656 = vcmp.eq.f32.partialorder %v1655, 8.507059e+37
    %v1657 = vand.u32 %v1644, 2147483648
    %v1658 = vor.u32 1.1754944e-38, %v1657
    %v1659 = vsel %vm1656, %v1658, %v1654
    %v1660 = vmul.f32 1.0, %v1659
    %v1661 = vrcp.pop %v1645
    %v1662 = vmul.f32 %v1645, %v1661
    %v1663 = vsub.f32 1.0, %v1662
    %v1664 = vmul.f32 %v1661, %v1663
    %v1665 = vadd.f32 %v1661, %v1664
    %vm1666 = vweird.f32 %v1645
    %vm1667 = vweird.f32 %v1661
    %vm1668 = vmor %vm1666, %vm1667
    %v1669 = vsel %vm1668, %v1661, %v1665
    %v1670 = vand.u32 2147483647, %v1645
    %vm1671 = vcmp.eq.f32.partialorder %v1670, 8.507059e+37
    %v1672 = vand.u32 %v1645, 2147483648
    %v1673 = vor.u32 1.1754944e-38, %v1672
    %v1674 = vsel %vm1671, %v1673, %v1669
    %v1675 = vmul.f32 1.0, %v1674
    %v1676 = vmul.f32 %v1620, %v1591
    %v1677 = vmul.f32 %v1635, %v1594
    %v1678 = vadd.f32 %v358, %v1676
    %v1679 = vadd.f32 %v361, %v1677
    %v1680 = vtanh.pop %v1678
    %v1681 = vtanh.pop %v1679
    %v1682 = vsub.f32 1.0, %v1660
    %v1683 = vsub.f32 1.0, %v1675
    %v1684 = vmul.f32 %v1682, %v1680
    %v1685 = vmul.f32 %v1683, %v1681
    %v1686 = vmul.f32 %v1660, %v1523
    %v1687 = vmul.f32 %v1675, %v1524
    %v1688 = vadd.f32 %v1684, %v1686
    %v1689 = vadd.f32 %v1685, %v1687
    %1690 = vst [vmem:[#allocation2 + $0x70] sm:$0xff] %v1688
    %1691 = vst [vmem:[#allocation2 + $0x78] sm:$0xff] %v1689
    %1692 = vst [vmem:[%s8] sm:$0xff] %v1688
    %1693 = vst [vmem:[%s8 + $0x8] sm:$0xff] %v1689
    %v1694 = vld [vmem:[#allocation2] sm:$0xff]
    %v1695 = vld [vmem:[#allocation2 + $0x8] sm:$0xff]
    %v1696 = vld [vmem:[#allocation2 + $0x10] sm:$0xff]
    %v1697 = vld [vmem:[#allocation2 + $0x18] sm:$0xff]
    %v1698 = vld [vmem:[#allocation2 + $0x20] sm:$0xff]
    %v1699 = vld [vmem:[#allocation2 + $0x28] sm:$0xff]
    %v1700 = vld [vmem:[#allocation2 + $0x30] sm:$0xff]
    %v1701 = vld [vmem:[#allocation2 + $0x38] sm:$0xff]
    %v1702 = vld [vmem:[#allocation2 + $0x40] sm:$0xff]
    %v1703 = vld [vmem:[#allocation2 + $0x48] sm:$0xff]
    %v1704 = vld [vmem:[#allocation2 + $0x50] sm:$0xff]
    %v1705 = vld [vmem:[#allocation2 + $0x58] sm:$0xff]
    %v1706 = vld [vmem:[#allocation2 + $0x60] sm:$0xff]
    %v1707 = vld [vmem:[#allocation2 + $0x68] sm:$0xff]
    %v1708 = vld [vmem:[#allocation2 + $0x70] sm:$0xff]
    %v1709 = vld [vmem:[#allocation2 + $0x78] sm:$0xff]
    %s1710 = scalar_lea.vmem %s1, 384
    %v1711 = vld [vmem:[%s1710] sm:$0xff]
    %v1712 = vld [vmem:[%s1710 + $0x8] sm:$0xff]
    %v1713 = vld [vmem:[%s1710 + $0x10] sm:$0xff]
    %v1714 = vld [vmem:[%s1710 + $0x18] sm:$0xff]
    %v1715 = vld [vmem:[%s1710 + $0x20] sm:$0xff]
    %v1716 = vld [vmem:[%s1710 + $0x28] sm:$0xff]
    %v1717 = vld [vmem:[%s1710 + $0x30] sm:$0xff]
    %v1718 = vld [vmem:[%s1710 + $0x38] sm:$0xff]
    %v1719 = vld [vmem:[%s1710 + $0x40] sm:$0xff]
    %v1720 = vld [vmem:[%s1710 + $0x48] sm:$0xff]
    %v1721 = vld [vmem:[%s1710 + $0x50] sm:$0xff]
    %v1722 = vld [vmem:[%s1710 + $0x58] sm:$0xff]
    %v1723 = vld [vmem:[%s1710 + $0x60] sm:$0xff]
    %v1724 = vld [vmem:[%s1710 + $0x68] sm:$0xff]
    %v1725 = vld [vmem:[%s1710 + $0x70] sm:$0xff]
    %v1726 = vld [vmem:[%s1710 + $0x78] sm:$0xff]
    %v1727 = vld [vmem:[%s1710 + $0x80] sm:$0xff]
    %v1728 = vld [vmem:[%s1710 + $0x88] sm:$0xff]
    %v1729 = vld [vmem:[%s1710 + $0x90] sm:$0xff]
    %v1730 = vld [vmem:[%s1710 + $0x98] sm:$0xff]
    %v1731 = vld [vmem:[%s1710 + $0xa0] sm:$0xff]
    %v1732 = vld [vmem:[%s1710 + $0xa8] sm:$0xff]
    %v1733 = vld [vmem:[%s1710 + $0xb0] sm:$0xff]
    %v1734 = vld [vmem:[%s1710 + $0xb8] sm:$0xff]
    %v1735 = vld [vmem:[%s1710 + $0xc0] sm:$0xff]
    %v1736 = vld [vmem:[%s1710 + $0xc8] sm:$0xff]
    %v1737 = vld [vmem:[%s1710 + $0xd0] sm:$0xff]
    %v1738 = vld [vmem:[%s1710 + $0xd8] sm:$0xff]
    %v1739 = vld [vmem:[%s1710 + $0xe0] sm:$0xff]
    %v1740 = vld [vmem:[%s1710 + $0xe8] sm:$0xff]
    %v1741 = vld [vmem:[%s1710 + $0xf0] sm:$0xff]
    %v1742 = vld [vmem:[%s1710 + $0xf8] sm:$0xff]
    %v1743 = vld [vmem:[%s1710 + $0x100] sm:$0xff]
    %v1744 = vld [vmem:[%s1710 + $0x108] sm:$0xff]
    %v1745 = vld [vmem:[%s1710 + $0x110] sm:$0xff]
    %v1746 = vld [vmem:[%s1710 + $0x118] sm:$0xff]
    %v1747 = vld [vmem:[%s1710 + $0x120] sm:$0xff]
    %v1748 = vld [vmem:[%s1710 + $0x128] sm:$0xff]
    %v1749 = vld [vmem:[%s1710 + $0x130] sm:$0xff]
    %v1750 = vld [vmem:[%s1710 + $0x138] sm:$0xff]
    %v1751 = vld [vmem:[%s1710 + $0x140] sm:$0xff]
    %v1752 = vld [vmem:[%s1710 + $0x148] sm:$0xff]
    %v1753 = vld [vmem:[%s1710 + $0x150] sm:$0xff]
    %v1754 = vld [vmem:[%s1710 + $0x158] sm:$0xff]
    %v1755 = vld [vmem:[%s1710 + $0x160] sm:$0xff]
    %v1756 = vld [vmem:[%s1710 + $0x168] sm:$0xff]
    %v1757 = vld [vmem:[%s1710 + $0x170] sm:$0xff]
    %v1758 = vld [vmem:[%s1710 + $0x178] sm:$0xff]
    %s1759 = scalar_lea.vmem [#allocation3], 384
    %v1760 = vld [vmem:[%s1759] sm:$0xff]
    %v1761 = vld [vmem:[%s1759 + $0x8] sm:$0xff]
    %v1762 = vld [vmem:[%s1759 + $0x10] sm:$0xff]
    %v1763 = vld [vmem:[%s1759 + $0x18] sm:$0xff]
    %v1764 = vld [vmem:[%s1759 + $0x20] sm:$0xff]
    %v1765 = vld [vmem:[%s1759 + $0x28] sm:$0xff]
    %v1766 = vld [vmem:[%s1759 + $0x30] sm:$0xff]
    %v1767 = vld [vmem:[%s1759 + $0x38] sm:$0xff]
    %v1768 = vld [vmem:[%s1759 + $0x40] sm:$0xff]
    %v1769 = vld [vmem:[%s1759 + $0x48] sm:$0xff]
    %v1770 = vld [vmem:[%s1759 + $0x50] sm:$0xff]
    %v1771 = vld [vmem:[%s1759 + $0x58] sm:$0xff]
    %v1772 = vld [vmem:[%s1759 + $0x60] sm:$0xff]
    %v1773 = vld [vmem:[%s1759 + $0x68] sm:$0xff]
    %v1774 = vld [vmem:[%s1759 + $0x70] sm:$0xff]
    %v1775 = vld [vmem:[%s1759 + $0x78] sm:$0xff]
    %v1776 = vld [vmem:[%s1759 + $0x80] sm:$0xff]
    %v1777 = vld [vmem:[%s1759 + $0x88] sm:$0xff]
    %v1778 = vld [vmem:[%s1759 + $0x90] sm:$0xff]
    %v1779 = vld [vmem:[%s1759 + $0x98] sm:$0xff]
    %v1780 = vld [vmem:[%s1759 + $0xa0] sm:$0xff]
    %v1781 = vld [vmem:[%s1759 + $0xa8] sm:$0xff]
    %v1782 = vld [vmem:[%s1759 + $0xb0] sm:$0xff]
    %v1783 = vld [vmem:[%s1759 + $0xb8] sm:$0xff]
    %v1784 = vld [vmem:[%s1759 + $0xc0] sm:$0xff]
    %v1785 = vld [vmem:[%s1759 + $0xc8] sm:$0xff]
    %v1786 = vld [vmem:[%s1759 + $0xd0] sm:$0xff]
    %v1787 = vld [vmem:[%s1759 + $0xd8] sm:$0xff]
    %v1788 = vld [vmem:[%s1759 + $0xe0] sm:$0xff]
    %v1789 = vld [vmem:[%s1759 + $0xe8] sm:$0xff]
    %v1790 = vld [vmem:[%s1759 + $0xf0] sm:$0xff]
    %v1791 = vld [vmem:[%s1759 + $0xf8] sm:$0xff]
    %v1792 = vld [vmem:[%s1759 + $0x100] sm:$0xff]
    %v1793 = vld [vmem:[%s1759 + $0x108] sm:$0xff]
    %v1794 = vld [vmem:[%s1759 + $0x110] sm:$0xff]
    %v1795 = vld [vmem:[%s1759 + $0x118] sm:$0xff]
    %v1796 = vld [vmem:[%s1759 + $0x120] sm:$0xff]
    %v1797 = vld [vmem:[%s1759 + $0x128] sm:$0xff]
    %v1798 = vld [vmem:[%s1759 + $0x130] sm:$0xff]
    %v1799 = vld [vmem:[%s1759 + $0x138] sm:$0xff]
    %v1800 = vld [vmem:[%s1759 + $0x140] sm:$0xff]
    %v1801 = vld [vmem:[%s1759 + $0x148] sm:$0xff]
    %v1802 = vld [vmem:[%s1759 + $0x150] sm:$0xff]
    %v1803 = vld [vmem:[%s1759 + $0x158] sm:$0xff]
    %v1804 = vld [vmem:[%s1759 + $0x160] sm:$0xff]
    %v1805 = vld [vmem:[%s1759 + $0x168] sm:$0xff]
    %v1806 = vld [vmem:[%s1759 + $0x170] sm:$0xff]
    %v1807 = vld [vmem:[%s1759 + $0x178] sm:$0xff]
    %s1808 = scalar_lea.vmem %s3, 6
    %v1809 = vld [vmem:[%s1808] sm:$0x3f]
    %v1811 = vperm.slane %v1809, 0
    %v1812 = vperm.slane %v1809, 2
    %v1813 = vperm.slane %v1809, 4
    %v1817 = vperm.slane %v1811, 0
    %v1818 = vperm.slane %v1812, 0
    %v1819 = vperm.slane %v1813, 0
    %1820 = vmatpush.msra.mxu0 %v1756
    %1821 = vmatpush.msra.mxu0 %v1753
    %1822 = vmatpush.msra.mxu0 %v1750
    %1823 = vmatpush.msra.mxu0 %v1747
    %1824 = vmatpush.msra.mxu0 %v1744
    %1825 = vmatpush.msra.mxu0 %v1741
    %1826 = vmatpush.msra.mxu0 %v1738
    %1827 = vmatpush.msra.mxu0 %v1735
    %1828 = vmatpush.msra.mxu0 %v1732
    %1829 = vmatpush.msra.mxu0 %v1729
    %1830 = vmatpush.msra.mxu0 %v1726
    %1831 = vmatpush.msra.mxu0 %v1723
    %1832 = vmatpush.msra.mxu0 %v1720
    %1833 = vmatpush.msra.mxu0 %v1717
    %1834 = vmatpush.msra.mxu0 %v1714
    %1835 = vmatpush.msra.mxu0 %v1711
    %1836 = vmatmul.f32.gmra.mxu0 %v1694
    %v1837 = vpop.f32.mrf.mxu0
    %v1838 = vadd.f32 %v1817, %v1837
    %1839 = vmatmul.f32.gmra.mxu0 %v1695
    %v1840 = vpop.f32.mrf.mxu0
    %v1841 = vadd.f32 %v1817, %v1840
    %1842 = vmatmul.f32.gmra.mxu0 %v1696
    %v1843 = vpop.f32.mrf.mxu0
    %v1844 = vadd.f32 %v1817, %v1843
    %1845 = vmatmul.f32.gmra.mxu0 %v1697
    %v1846 = vpop.f32.mrf.mxu0
    %v1847 = vadd.f32 %v1817, %v1846
    %1848 = vmatmul.f32.gmra.mxu0 %v1698
    %v1849 = vpop.f32.mrf.mxu0
    %v1850 = vadd.f32 %v1817, %v1849
    %1851 = vmatmul.f32.gmra.mxu0 %v1699
    %v1852 = vpop.f32.mrf.mxu0
    %v1853 = vadd.f32 %v1817, %v1852
    %1854 = vmatmul.f32.gmra.mxu0 %v1700
    %v1855 = vpop.f32.mrf.mxu0
    %v1856 = vadd.f32 %v1817, %v1855
    %1857 = vmatmul.f32.gmra.mxu0 %v1701
    %v1858 = vpop.f32.mrf.mxu0
    %v1859 = vadd.f32 %v1817, %v1858
    %1860 = vmatmul.f32.gmra.mxu0 %v1702
    %v1861 = vpop.f32.mrf.mxu0
    %v1862 = vadd.f32 %v1817, %v1861
    %1863 = vmatmul.f32.gmra.mxu0 %v1703
    %v1864 = vpop.f32.mrf.mxu0
    %v1865 = vadd.f32 %v1817, %v1864
    %1866 = vmatmul.f32.gmra.mxu0 %v1704
    %v1867 = vpop.f32.mrf.mxu0
    %v1868 = vadd.f32 %v1817, %v1867
    %1869 = vmatmul.f32.gmra.mxu0 %v1705
    %v1870 = vpop.f32.mrf.mxu0
    %v1871 = vadd.f32 %v1817, %v1870
    %1872 = vmatmul.f32.gmra.mxu0 %v1706
    %v1873 = vpop.f32.mrf.mxu0
    %v1874 = vadd.f32 %v1817, %v1873
    %1875 = vmatmul.f32.gmra.mxu0 %v1707
    %v1876 = vpop.f32.mrf.mxu0
    %v1877 = vadd.f32 %v1817, %v1876
    %1878 = vmatmul.f32.gmra.mxu0 %v1708
    %v1879 = vpop.f32.mrf.mxu0
    %v1880 = vadd.f32 %v1817, %v1879
    %1881 = vmatmul.f32.gmra.mxu0 %v1709
    %v1882 = vpop.f32.mrf.mxu0
    %v1883 = vadd.f32 %v1817, %v1882
    %1884 = vdwg.mxu0
    %1885 = vmatpush.msra.mxu0 %v1757
    %1886 = vmatpush.msra.mxu0 %v1754
    %1887 = vmatpush.msra.mxu0 %v1751
    %1888 = vmatpush.msra.mxu0 %v1748
    %1889 = vmatpush.msra.mxu0 %v1745
    %1890 = vmatpush.msra.mxu0 %v1742
    %1891 = vmatpush.msra.mxu0 %v1739
    %1892 = vmatpush.msra.mxu0 %v1736
    %1893 = vmatpush.msra.mxu0 %v1733
    %1894 = vmatpush.msra.mxu0 %v1730
    %1895 = vmatpush.msra.mxu0 %v1727
    %1896 = vmatpush.msra.mxu0 %v1724
    %1897 = vmatpush.msra.mxu0 %v1721
    %1898 = vmatpush.msra.mxu0 %v1718
    %1899 = vmatpush.msra.mxu0 %v1715
    %1900 = vmatpush.msra.mxu0 %v1712
    %1901 = vmatmul.f32.gmra.mxu0 %v1694
    %v1902 = vpop.f32.mrf.mxu0
    %v1903 = vadd.f32 %v1818, %v1902
    %1904 = vmatmul.f32.gmra.mxu0 %v1695
    %v1905 = vpop.f32.mrf.mxu0
    %v1906 = vadd.f32 %v1818, %v1905
    %1907 = vmatmul.f32.gmra.mxu0 %v1696
    %v1908 = vpop.f32.mrf.mxu0
    %v1909 = vadd.f32 %v1818, %v1908
    %1910 = vmatmul.f32.gmra.mxu0 %v1697
    %v1911 = vpop.f32.mrf.mxu0
    %v1912 = vadd.f32 %v1818, %v1911
    %1913 = vmatmul.f32.gmra.mxu0 %v1698
    %v1914 = vpop.f32.mrf.mxu0
    %v1915 = vadd.f32 %v1818, %v1914
    %1916 = vmatmul.f32.gmra.mxu0 %v1699
    %v1917 = vpop.f32.mrf.mxu0
    %v1918 = vadd.f32 %v1818, %v1917
    %1919 = vmatmul.f32.gmra.mxu0 %v1700
    %v1920 = vpop.f32.mrf.mxu0
    %v1921 = vadd.f32 %v1818, %v1920
    %1922 = vmatmul.f32.gmra.mxu0 %v1701
    %v1923 = vpop.f32.mrf.mxu0
    %v1924 = vadd.f32 %v1818, %v1923
    %1925 = vmatmul.f32.gmra.mxu0 %v1702
    %v1926 = vpop.f32.mrf.mxu0
    %v1927 = vadd.f32 %v1818, %v1926
    %1928 = vmatmul.f32.gmra.mxu0 %v1703
    %v1929 = vpop.f32.mrf.mxu0
    %v1930 = vadd.f32 %v1818, %v1929
    %1931 = vmatmul.f32.gmra.mxu0 %v1704
    %v1932 = vpop.f32.mrf.mxu0
    %v1933 = vadd.f32 %v1818, %v1932
    %1934 = vmatmul.f32.gmra.mxu0 %v1705
    %v1935 = vpop.f32.mrf.mxu0
    %v1936 = vadd.f32 %v1818, %v1935
    %1937 = vmatmul.f32.gmra.mxu0 %v1706
    %v1938 = vpop.f32.mrf.mxu0
    %v1939 = vadd.f32 %v1818, %v1938
    %1940 = vmatmul.f32.gmra.mxu0 %v1707
    %v1941 = vpop.f32.mrf.mxu0
    %v1942 = vadd.f32 %v1818, %v1941
    %1943 = vmatmul.f32.gmra.mxu0 %v1708
    %v1944 = vpop.f32.mrf.mxu0
    %v1945 = vadd.f32 %v1818, %v1944
    %1946 = vmatmul.f32.gmra.mxu0 %v1709
    %v1947 = vpop.f32.mrf.mxu0
    %v1948 = vadd.f32 %v1818, %v1947
    %1949 = vdwg.mxu0
    %1950 = vmatpush.msra.mxu0 %v1758
    %1951 = vmatpush.msra.mxu0 %v1755
    %1952 = vmatpush.msra.mxu0 %v1752
    %1953 = vmatpush.msra.mxu0 %v1749
    %1954 = vmatpush.msra.mxu0 %v1746
    %1955 = vmatpush.msra.mxu0 %v1743
    %1956 = vmatpush.msra.mxu0 %v1740
    %1957 = vmatpush.msra.mxu0 %v1737
    %1958 = vmatpush.msra.mxu0 %v1734
    %1959 = vmatpush.msra.mxu0 %v1731
    %1960 = vmatpush.msra.mxu0 %v1728
    %1961 = vmatpush.msra.mxu0 %v1725
    %1962 = vmatpush.msra.mxu0 %v1722
    %1963 = vmatpush.msra.mxu0 %v1719
    %1964 = vmatpush.msra.mxu0 %v1716
    %1965 = vmatpush.msra.mxu0 %v1713
    %1966 = vmatmul.f32.gmra.mxu0 %v1694
    %v1967 = vpop.f32.mrf.mxu0
    %v1968 = vadd.f32 %v1819, %v1967
    %1969 = vmatmul.f32.gmra.mxu0 %v1695
    %v1970 = vpop.f32.mrf.mxu0
    %v1971 = vadd.f32 %v1819, %v1970
    %1972 = vmatmul.f32.gmra.mxu0 %v1696
    %v1973 = vpop.f32.mrf.mxu0
    %v1974 = vadd.f32 %v1819, %v1973
    %1975 = vmatmul.f32.gmra.mxu0 %v1697
    %v1976 = vpop.f32.mrf.mxu0
    %v1977 = vadd.f32 %v1819, %v1976
    %1978 = vmatmul.f32.gmra.mxu0 %v1698
    %v1979 = vpop.f32.mrf.mxu0
    %v1980 = vadd.f32 %v1819, %v1979
    %1981 = vmatmul.f32.gmra.mxu0 %v1699
    %v1982 = vpop.f32.mrf.mxu0
    %v1983 = vadd.f32 %v1819, %v1982
    %1984 = vmatmul.f32.gmra.mxu0 %v1700
    %v1985 = vpop.f32.mrf.mxu0
    %v1986 = vadd.f32 %v1819, %v1985
    %1987 = vmatmul.f32.gmra.mxu0 %v1701
    %v1988 = vpop.f32.mrf.mxu0
    %v1989 = vadd.f32 %v1819, %v1988
    %1990 = vmatmul.f32.gmra.mxu0 %v1702
    %v1991 = vpop.f32.mrf.mxu0
    %v1992 = vadd.f32 %v1819, %v1991
    %1993 = vmatmul.f32.gmra.mxu0 %v1703
    %v1994 = vpop.f32.mrf.mxu0
    %v1995 = vadd.f32 %v1819, %v1994
    %1996 = vmatmul.f32.gmra.mxu0 %v1704
    %v1997 = vpop.f32.mrf.mxu0
    %v1998 = vadd.f32 %v1819, %v1997
    %1999 = vmatmul.f32.gmra.mxu0 %v1705
    %v2000 = vpop.f32.mrf.mxu0
    %v2001 = vadd.f32 %v1819, %v2000
    %2002 = vmatmul.f32.gmra.mxu0 %v1706
    %v2003 = vpop.f32.mrf.mxu0
    %v2004 = vadd.f32 %v1819, %v2003
    %2005 = vmatmul.f32.gmra.mxu0 %v1707
    %v2006 = vpop.f32.mrf.mxu0
    %v2007 = vadd.f32 %v1819, %v2006
    %2008 = vmatmul.f32.gmra.mxu0 %v1708
    %v2009 = vpop.f32.mrf.mxu0
    %v2010 = vadd.f32 %v1819, %v2009
    %2011 = vmatmul.f32.gmra.mxu0 %v1709
    %v2012 = vpop.f32.mrf.mxu0
    %v2013 = vadd.f32 %v1819, %v2012
    %2014 = vdwg.mxu0
    %v2015 = vperm.slane %v1809, 1
    %v2016 = vperm.slane %v1809, 3
    %v2017 = vperm.slane %v1809, 5
    %v2021 = vperm.slane %v2015, 1
    %v2022 = vperm.slane %v2016, 1
    %v2023 = vperm.slane %v2017, 1
    %2024 = vmatpush.msra.mxu0 %v1805
    %2025 = vmatpush.msra.mxu0 %v1802
    %2026 = vmatpush.msra.mxu0 %v1799
    %2027 = vmatpush.msra.mxu0 %v1796
    %2028 = vmatpush.msra.mxu0 %v1793
    %2029 = vmatpush.msra.mxu0 %v1790
    %2030 = vmatpush.msra.mxu0 %v1787
    %2031 = vmatpush.msra.mxu0 %v1784
    %2032 = vmatpush.msra.mxu0 %v1781
    %2033 = vmatpush.msra.mxu0 %v1778
    %2034 = vmatpush.msra.mxu0 %v1775
    %2035 = vmatpush.msra.mxu0 %v1772
    %2036 = vmatpush.msra.mxu0 %v1769
    %2037 = vmatpush.msra.mxu0 %v1766
    %2038 = vmatpush.msra.mxu0 %v1763
    %2039 = vmatpush.msra.mxu0 %v1760
    %2040 = vmatmul.f32.gmra.mxu0 0.0
    %v2041 = vpop.f32.mrf.mxu0
    %v2042 = vadd.f32 %v2021, %v2041
    %2043 = vmatmul.f32.gmra.mxu0 0.0
    %v2044 = vpop.f32.mrf.mxu0
    %v2045 = vadd.f32 %v2021, %v2044
    %2046 = vdwg.mxu0
    %2047 = vmatpush.msra.mxu0 %v1806
    %2048 = vmatpush.msra.mxu0 %v1803
    %2049 = vmatpush.msra.mxu0 %v1800
    %2050 = vmatpush.msra.mxu0 %v1797
    %2051 = vmatpush.msra.mxu0 %v1794
    %2052 = vmatpush.msra.mxu0 %v1791
    %2053 = vmatpush.msra.mxu0 %v1788
    %2054 = vmatpush.msra.mxu0 %v1785
    %2055 = vmatpush.msra.mxu0 %v1782
    %2056 = vmatpush.msra.mxu0 %v1779
    %2057 = vmatpush.msra.mxu0 %v1776
    %2058 = vmatpush.msra.mxu0 %v1773
    %2059 = vmatpush.msra.mxu0 %v1770
    %2060 = vmatpush.msra.mxu0 %v1767
    %2061 = vmatpush.msra.mxu0 %v1764
    %2062 = vmatpush.msra.mxu0 %v1761
    %2063 = vmatmul.f32.gmra.mxu0 0.0
    %v2064 = vpop.f32.mrf.mxu0
    %v2065 = vadd.f32 %v2022, %v2064
    %2066 = vmatmul.f32.gmra.mxu0 0.0
    %v2067 = vpop.f32.mrf.mxu0
    %v2068 = vadd.f32 %v2022, %v2067
    %2069 = vdwg.mxu0
    %2070 = vmatpush.msra.mxu0 %v1807
    %2071 = vmatpush.msra.mxu0 %v1804
    %2072 = vmatpush.msra.mxu0 %v1801
    %2073 = vmatpush.msra.mxu0 %v1798
    %2074 = vmatpush.msra.mxu0 %v1795
    %2075 = vmatpush.msra.mxu0 %v1792
    %2076 = vmatpush.msra.mxu0 %v1789
    %2077 = vmatpush.msra.mxu0 %v1786
    %2078 = vmatpush.msra.mxu0 %v1783
    %2079 = vmatpush.msra.mxu0 %v1780
    %2080 = vmatpush.msra.mxu0 %v1777
    %2081 = vmatpush.msra.mxu0 %v1774
    %2082 = vmatpush.msra.mxu0 %v1771
    %2083 = vmatpush.msra.mxu0 %v1768
    %2084 = vmatpush.msra.mxu0 %v1765
    %2085 = vmatpush.msra.mxu0 %v1762
    %2086 = vmatmul.f32.gmra.mxu0 0.0
    %v2087 = vpop.f32.mrf.mxu0
    %v2088 = vadd.f32 %v2023, %v2087
    %2089 = vmatmul.f32.gmra.mxu0 0.0
    %v2090 = vpop.f32.mrf.mxu0
    %v2091 = vadd.f32 %v2023, %v2090
    %2092 = vdwg.mxu0
    %v2093 = vadd.f32 %v1838, %v2042
    %v2094 = vadd.f32 %v1841, %v2045
    %v2095 = vxor.u32 %v2093, 2147483648
    %v2096 = vxor.u32 %v2094, 2147483648
    %v2097 = vmul.f32 %v2095, 1.442695
    %v2098 = vpow.pop %v2097
    %v2099 = vmul.f32 %v2096, 1.442695
    %v2100 = vpow.pop %v2099
    %v2101 = vadd.f32 %v2098, 1.0
    %v2102 = vadd.f32 %v2100, 1.0
    %v2103 = vrcp.pop %v2101
    %v2104 = vmul.f32 %v2101, %v2103
    %v2105 = vsub.f32 1.0, %v2104
    %v2106 = vmul.f32 %v2103, %v2105
    %v2107 = vadd.f32 %v2103, %v2106
    %vm2108 = vweird.f32 %v2101
    %vm2109 = vweird.f32 %v2103
    %vm2110 = vmor %vm2108, %vm2109
    %v2111 = vsel %vm2110, %v2103, %v2107
    %v2112 = vand.u32 2147483647, %v2101
    %vm2113 = vcmp.eq.f32.partialorder %v2112, 8.507059e+37
    %v2114 = vand.u32 %v2101, 2147483648
    %v2115 = vor.u32 1.1754944e-38, %v2114
    %v2116 = vsel %vm2113, %v2115, %v2111
    %v2117 = vmul.f32 1.0, %v2116
    %v2118 = vrcp.pop %v2102
    %v2119 = vmul.f32 %v2102, %v2118
    %v2120 = vsub.f32 1.0, %v2119
    %v2121 = vmul.f32 %v2118, %v2120
    %v2122 = vadd.f32 %v2118, %v2121
    %vm2123 = vweird.f32 %v2102
    %vm2124 = vweird.f32 %v2118
    %vm2125 = vmor %vm2123, %vm2124
    %v2126 = vsel %vm2125, %v2118, %v2122
    %v2127 = vand.u32 2147483647, %v2102
    %vm2128 = vcmp.eq.f32.partialorder %v2127, 8.507059e+37
    %v2129 = vand.u32 %v2102, 2147483648
    %v2130 = vor.u32 1.1754944e-38, %v2129
    %v2131 = vsel %vm2128, %v2130, %v2126
    %v2132 = vmul.f32 1.0, %v2131
    %v2133 = vadd.f32 %v1903, %v2065
    %v2134 = vadd.f32 %v1906, %v2068
    %v2135 = vxor.u32 %v2133, 2147483648
    %v2136 = vxor.u32 %v2134, 2147483648
    %v2137 = vmul.f32 %v2135, 1.442695
    %v2138 = vpow.pop %v2137
    %v2139 = vmul.f32 %v2136, 1.442695
    %v2140 = vpow.pop %v2139
    %v2141 = vadd.f32 %v2138, 1.0
    %v2142 = vadd.f32 %v2140, 1.0
    %v2143 = vrcp.pop %v2141
    %v2144 = vmul.f32 %v2141, %v2143
    %v2145 = vsub.f32 1.0, %v2144
    %v2146 = vmul.f32 %v2143, %v2145
    %v2147 = vadd.f32 %v2143, %v2146
    %vm2148 = vweird.f32 %v2141
    %vm2149 = vweird.f32 %v2143
    %vm2150 = vmor %vm2148, %vm2149
    %v2151 = vsel %vm2150, %v2143, %v2147
    %v2152 = vand.u32 2147483647, %v2141
    %vm2153 = vcmp.eq.f32.partialorder %v2152, 8.507059e+37
    %v2154 = vand.u32 %v2141, 2147483648
    %v2155 = vor.u32 1.1754944e-38, %v2154
    %v2156 = vsel %vm2153, %v2155, %v2151
    %v2157 = vmul.f32 1.0, %v2156
    %v2158 = vrcp.pop %v2142
    %v2159 = vmul.f32 %v2142, %v2158
    %v2160 = vsub.f32 1.0, %v2159
    %v2161 = vmul.f32 %v2158, %v2160
    %v2162 = vadd.f32 %v2158, %v2161
    %vm2163 = vweird.f32 %v2142
    %vm2164 = vweird.f32 %v2158
    %vm2165 = vmor %vm2163, %vm2164
    %v2166 = vsel %vm2165, %v2158, %v2162
    %v2167 = vand.u32 2147483647, %v2142
    %vm2168 = vcmp.eq.f32.partialorder %v2167, 8.507059e+37
    %v2169 = vand.u32 %v2142, 2147483648
    %v2170 = vor.u32 1.1754944e-38, %v2169
    %v2171 = vsel %vm2168, %v2170, %v2166
    %v2172 = vmul.f32 1.0, %v2171
    %v2173 = vmul.f32 %v2117, %v2088
    %v2174 = vmul.f32 %v2132, %v2091
    %v2175 = vadd.f32 %v1968, %v2173
    %v2176 = vadd.f32 %v1971, %v2174
    %v2177 = vtanh.pop %v2175
    %v2178 = vtanh.pop %v2176
    %v2179 = vsub.f32 1.0, %v2157
    %v2180 = vsub.f32 1.0, %v2172
    %v2181 = vmul.f32 %v2179, %v2177
    %v2182 = vmul.f32 %v2180, %v2178
    %v2183 = vmul.f32 %v2157, 0.0
    %v2184 = vmul.f32 %v2172, 0.0
    %v2185 = vadd.f32 %v2181, %v2183
    %v2186 = vadd.f32 %v2182, %v2184
    %2187 = vst [vmem:[#allocation2] sm:$0xff] %v2185
    %2188 = vst [vmem:[#allocation2 + $0x8] sm:$0xff] %v2186
    %2189 = vmatpush.msra.mxu0 %v1805
    %2190 = vmatpush.msra.mxu0 %v1802
    %2191 = vmatpush.msra.mxu0 %v1799
    %2192 = vmatpush.msra.mxu0 %v1796
    %2193 = vmatpush.msra.mxu0 %v1793
    %2194 = vmatpush.msra.mxu0 %v1790
    %2195 = vmatpush.msra.mxu0 %v1787
    %2196 = vmatpush.msra.mxu0 %v1784
    %2197 = vmatpush.msra.mxu0 %v1781
    %2198 = vmatpush.msra.mxu0 %v1778
    %2199 = vmatpush.msra.mxu0 %v1775
    %2200 = vmatpush.msra.mxu0 %v1772
    %2201 = vmatpush.msra.mxu0 %v1769
    %2202 = vmatpush.msra.mxu0 %v1766
    %2203 = vmatpush.msra.mxu0 %v1763
    %2204 = vmatpush.msra.mxu0 %v1760
    %2205 = vmatmul.f32.gmra.mxu0 %v2185
    %v2206 = vpop.f32.mrf.mxu0
    %v2207 = vadd.f32 %v2021, %v2206
    %2208 = vmatmul.f32.gmra.mxu0 %v2186
    %v2209 = vpop.f32.mrf.mxu0
    %v2210 = vadd.f32 %v2021, %v2209
    %2211 = vdwg.mxu0
    %2212 = vmatpush.msra.mxu0 %v1806
    %2213 = vmatpush.msra.mxu0 %v1803
    %2214 = vmatpush.msra.mxu0 %v1800
    %2215 = vmatpush.msra.mxu0 %v1797
    %2216 = vmatpush.msra.mxu0 %v1794
    %2217 = vmatpush.msra.mxu0 %v1791
    %2218 = vmatpush.msra.mxu0 %v1788
    %2219 = vmatpush.msra.mxu0 %v1785
    %2220 = vmatpush.msra.mxu0 %v1782
    %2221 = vmatpush.msra.mxu0 %v1779
    %2222 = vmatpush.msra.mxu0 %v1776
    %2223 = vmatpush.msra.mxu0 %v1773
    %2224 = vmatpush.msra.mxu0 %v1770
    %2225 = vmatpush.msra.mxu0 %v1767
    %2226 = vmatpush.msra.mxu0 %v1764
    %2227 = vmatpush.msra.mxu0 %v1761
    %2228 = vmatmul.f32.gmra.mxu0 %v2185
    %v2229 = vpop.f32.mrf.mxu0
    %v2230 = vadd.f32 %v2022, %v2229
    %2231 = vmatmul.f32.gmra.mxu0 %v2186
    %v2232 = vpop.f32.mrf.mxu0
    %v2233 = vadd.f32 %v2022, %v2232
    %2234 = vdwg.mxu0
    %2235 = vmatpush.msra.mxu0 %v1807
    %2236 = vmatpush.msra.mxu0 %v1804
    %2237 = vmatpush.msra.mxu0 %v1801
    %2238 = vmatpush.msra.mxu0 %v1798
    %2239 = vmatpush.msra.mxu0 %v1795
    %2240 = vmatpush.msra.mxu0 %v1792
    %2241 = vmatpush.msra.mxu0 %v1789
    %2242 = vmatpush.msra.mxu0 %v1786
    %2243 = vmatpush.msra.mxu0 %v1783
    %2244 = vmatpush.msra.mxu0 %v1780
    %2245 = vmatpush.msra.mxu0 %v1777
    %2246 = vmatpush.msra.mxu0 %v1774
    %2247 = vmatpush.msra.mxu0 %v1771
    %2248 = vmatpush.msra.mxu0 %v1768
    %2249 = vmatpush.msra.mxu0 %v1765
    %2250 = vmatpush.msra.mxu0 %v1762
    %2251 = vmatmul.f32.gmra.mxu0 %v2185
    %v2252 = vpop.f32.mrf.mxu0
    %v2253 = vadd.f32 %v2023, %v2252
    %2254 = vmatmul.f32.gmra.mxu0 %v2186
    %v2255 = vpop.f32.mrf.mxu0
    %v2256 = vadd.f32 %v2023, %v2255
    %2257 = vdwg.mxu0
    %v2258 = vadd.f32 %v1844, %v2207
    %v2259 = vadd.f32 %v1847, %v2210
    %v2260 = vxor.u32 %v2258, 2147483648
    %v2261 = vxor.u32 %v2259, 2147483648
    %v2262 = vmul.f32 %v2260, 1.442695
    %v2263 = vpow.pop %v2262
    %v2264 = vmul.f32 %v2261, 1.442695
    %v2265 = vpow.pop %v2264
    %v2266 = vadd.f32 %v2263, 1.0
    %v2267 = vadd.f32 %v2265, 1.0
    %v2268 = vrcp.pop %v2266
    %v2269 = vmul.f32 %v2266, %v2268
    %v2270 = vsub.f32 1.0, %v2269
    %v2271 = vmul.f32 %v2268, %v2270
    %v2272 = vadd.f32 %v2268, %v2271
    %vm2273 = vweird.f32 %v2266
    %vm2274 = vweird.f32 %v2268
    %vm2275 = vmor %vm2273, %vm2274
    %v2276 = vsel %vm2275, %v2268, %v2272
    %v2277 = vand.u32 2147483647, %v2266
    %vm2278 = vcmp.eq.f32.partialorder %v2277, 8.507059e+37
    %v2279 = vand.u32 %v2266, 2147483648
    %v2280 = vor.u32 1.1754944e-38, %v2279
    %v2281 = vsel %vm2278, %v2280, %v2276
    %v2282 = vmul.f32 1.0, %v2281
    %v2283 = vrcp.pop %v2267
    %v2284 = vmul.f32 %v2267, %v2283
    %v2285 = vsub.f32 1.0, %v2284
    %v2286 = vmul.f32 %v2283, %v2285
    %v2287 = vadd.f32 %v2283, %v2286
    %vm2288 = vweird.f32 %v2267
    %vm2289 = vweird.f32 %v2283
    %vm2290 = vmor %vm2288, %vm2289
    %v2291 = vsel %vm2290, %v2283, %v2287
    %v2292 = vand.u32 2147483647, %v2267
    %vm2293 = vcmp.eq.f32.partialorder %v2292, 8.507059e+37
    %v2294 = vand.u32 %v2267, 2147483648
    %v2295 = vor.u32 1.1754944e-38, %v2294
    %v2296 = vsel %vm2293, %v2295, %v2291
    %v2297 = vmul.f32 1.0, %v2296
    %v2298 = vadd.f32 %v1909, %v2230
    %v2299 = vadd.f32 %v1912, %v2233
    %v2300 = vxor.u32 %v2298, 2147483648
    %v2301 = vxor.u32 %v2299, 2147483648
    %v2302 = vmul.f32 %v2300, 1.442695
    %v2303 = vpow.pop %v2302
    %v2304 = vmul.f32 %v2301, 1.442695
    %v2305 = vpow.pop %v2304
    %v2306 = vadd.f32 %v2303, 1.0
    %v2307 = vadd.f32 %v2305, 1.0
    %v2308 = vrcp.pop %v2306
    %v2309 = vmul.f32 %v2306, %v2308
    %v2310 = vsub.f32 1.0, %v2309
    %v2311 = vmul.f32 %v2308, %v2310
    %v2312 = vadd.f32 %v2308, %v2311
    %vm2313 = vweird.f32 %v2306
    %vm2314 = vweird.f32 %v2308
    %vm2315 = vmor %vm2313, %vm2314
    %v2316 = vsel %vm2315, %v2308, %v2312
    %v2317 = vand.u32 2147483647, %v2306
    %vm2318 = vcmp.eq.f32.partialorder %v2317, 8.507059e+37
    %v2319 = vand.u32 %v2306, 2147483648
    %v2320 = vor.u32 1.1754944e-38, %v2319
    %v2321 = vsel %vm2318, %v2320, %v2316
    %v2322 = vmul.f32 1.0, %v2321
    %v2323 = vrcp.pop %v2307
    %v2324 = vmul.f32 %v2307, %v2323
    %v2325 = vsub.f32 1.0, %v2324
    %v2326 = vmul.f32 %v2323, %v2325
    %v2327 = vadd.f32 %v2323, %v2326
    %vm2328 = vweird.f32 %v2307
    %vm2329 = vweird.f32 %v2323
    %vm2330 = vmor %vm2328, %vm2329
    %v2331 = vsel %vm2330, %v2323, %v2327
    %v2332 = vand.u32 2147483647, %v2307
    %vm2333 = vcmp.eq.f32.partialorder %v2332, 8.507059e+37
    %v2334 = vand.u32 %v2307, 2147483648
    %v2335 = vor.u32 1.1754944e-38, %v2334
    %v2336 = vsel %vm2333, %v2335, %v2331
    %v2337 = vmul.f32 1.0, %v2336
    %v2338 = vmul.f32 %v2282, %v2253
    %v2339 = vmul.f32 %v2297, %v2256
    %v2340 = vadd.f32 %v1974, %v2338
    %v2341 = vadd.f32 %v1977, %v2339
    %v2342 = vtanh.pop %v2340
    %v2343 = vtanh.pop %v2341
    %v2344 = vsub.f32 1.0, %v2322
    %v2345 = vsub.f32 1.0, %v2337
    %v2346 = vmul.f32 %v2344, %v2342
    %v2347 = vmul.f32 %v2345, %v2343
    %v2348 = vmul.f32 %v2322, %v2185
    %v2349 = vmul.f32 %v2337, %v2186
    %v2350 = vadd.f32 %v2346, %v2348
    %v2351 = vadd.f32 %v2347, %v2349
    %2352 = vst [vmem:[#allocation2 + $0x10] sm:$0xff] %v2350
    %2353 = vst [vmem:[#allocation2 + $0x18] sm:$0xff] %v2351
    %2354 = vmatpush.msra.mxu0 %v1805
    %2355 = vmatpush.msra.mxu0 %v1802
    %2356 = vmatpush.msra.mxu0 %v1799
    %2357 = vmatpush.msra.mxu0 %v1796
    %2358 = vmatpush.msra.mxu0 %v1793
    %2359 = vmatpush.msra.mxu0 %v1790
    %2360 = vmatpush.msra.mxu0 %v1787
    %2361 = vmatpush.msra.mxu0 %v1784
    %2362 = vmatpush.msra.mxu0 %v1781
    %2363 = vmatpush.msra.mxu0 %v1778
    %2364 = vmatpush.msra.mxu0 %v1775
    %2365 = vmatpush.msra.mxu0 %v1772
    %2366 = vmatpush.msra.mxu0 %v1769
    %2367 = vmatpush.msra.mxu0 %v1766
    %2368 = vmatpush.msra.mxu0 %v1763
    %2369 = vmatpush.msra.mxu0 %v1760
    %2370 = vmatmul.f32.gmra.mxu0 %v2350
    %v2371 = vpop.f32.mrf.mxu0
    %v2372 = vadd.f32 %v2021, %v2371
    %2373 = vmatmul.f32.gmra.mxu0 %v2351
    %v2374 = vpop.f32.mrf.mxu0
    %v2375 = vadd.f32 %v2021, %v2374
    %2376 = vdwg.mxu0
    %2377 = vmatpush.msra.mxu0 %v1806
    %2378 = vmatpush.msra.mxu0 %v1803
    %2379 = vmatpush.msra.mxu0 %v1800
    %2380 = vmatpush.msra.mxu0 %v1797
    %2381 = vmatpush.msra.mxu0 %v1794
    %2382 = vmatpush.msra.mxu0 %v1791
    %2383 = vmatpush.msra.mxu0 %v1788
    %2384 = vmatpush.msra.mxu0 %v1785
    %2385 = vmatpush.msra.mxu0 %v1782
    %2386 = vmatpush.msra.mxu0 %v1779
    %2387 = vmatpush.msra.mxu0 %v1776
    %2388 = vmatpush.msra.mxu0 %v1773
    %2389 = vmatpush.msra.mxu0 %v1770
    %2390 = vmatpush.msra.mxu0 %v1767
    %2391 = vmatpush.msra.mxu0 %v1764
    %2392 = vmatpush.msra.mxu0 %v1761
    %2393 = vmatmul.f32.gmra.mxu0 %v2350
    %v2394 = vpop.f32.mrf.mxu0
    %v2395 = vadd.f32 %v2022, %v2394
    %2396 = vmatmul.f32.gmra.mxu0 %v2351
    %v2397 = vpop.f32.mrf.mxu0
    %v2398 = vadd.f32 %v2022, %v2397
    %2399 = vdwg.mxu0
    %2400 = vmatpush.msra.mxu0 %v1807
    %2401 = vmatpush.msra.mxu0 %v1804
    %2402 = vmatpush.msra.mxu0 %v1801
    %2403 = vmatpush.msra.mxu0 %v1798
    %2404 = vmatpush.msra.mxu0 %v1795
    %2405 = vmatpush.msra.mxu0 %v1792
    %2406 = vmatpush.msra.mxu0 %v1789
    %2407 = vmatpush.msra.mxu0 %v1786
    %2408 = vmatpush.msra.mxu0 %v1783
    %2409 = vmatpush.msra.mxu0 %v1780
    %2410 = vmatpush.msra.mxu0 %v1777
    %2411 = vmatpush.msra.mxu0 %v1774
    %2412 = vmatpush.msra.mxu0 %v1771
    %2413 = vmatpush.msra.mxu0 %v1768
    %2414 = vmatpush.msra.mxu0 %v1765
    %2415 = vmatpush.msra.mxu0 %v1762
    %2416 = vmatmul.f32.gmra.mxu0 %v2350
    %v2417 = vpop.f32.mrf.mxu0
    %v2418 = vadd.f32 %v2023, %v2417
    %2419 = vmatmul.f32.gmra.mxu0 %v2351
    %v2420 = vpop.f32.mrf.mxu0
    %v2421 = vadd.f32 %v2023, %v2420
    %2422 = vdwg.mxu0
    %v2423 = vadd.f32 %v1850, %v2372
    %v2424 = vadd.f32 %v1853, %v2375
    %v2425 = vxor.u32 %v2423, 2147483648
    %v2426 = vxor.u32 %v2424, 2147483648
    %v2427 = vmul.f32 %v2425, 1.442695
    %v2428 = vpow.pop %v2427
    %v2429 = vmul.f32 %v2426, 1.442695
    %v2430 = vpow.pop %v2429
    %v2431 = vadd.f32 %v2428, 1.0
    %v2432 = vadd.f32 %v2430, 1.0
    %v2433 = vrcp.pop %v2431
    %v2434 = vmul.f32 %v2431, %v2433
    %v2435 = vsub.f32 1.0, %v2434
    %v2436 = vmul.f32 %v2433, %v2435
    %v2437 = vadd.f32 %v2433, %v2436
    %vm2438 = vweird.f32 %v2431
    %vm2439 = vweird.f32 %v2433
    %vm2440 = vmor %vm2438, %vm2439
    %v2441 = vsel %vm2440, %v2433, %v2437
    %v2442 = vand.u32 2147483647, %v2431
    %vm2443 = vcmp.eq.f32.partialorder %v2442, 8.507059e+37
    %v2444 = vand.u32 %v2431, 2147483648
    %v2445 = vor.u32 1.1754944e-38, %v2444
    %v2446 = vsel %vm2443, %v2445, %v2441
    %v2447 = vmul.f32 1.0, %v2446
    %v2448 = vrcp.pop %v2432
    %v2449 = vmul.f32 %v2432, %v2448
    %v2450 = vsub.f32 1.0, %v2449
    %v2451 = vmul.f32 %v2448, %v2450
    %v2452 = vadd.f32 %v2448, %v2451
    %vm2453 = vweird.f32 %v2432
    %vm2454 = vweird.f32 %v2448
    %vm2455 = vmor %vm2453, %vm2454
    %v2456 = vsel %vm2455, %v2448, %v2452
    %v2457 = vand.u32 2147483647, %v2432
    %vm2458 = vcmp.eq.f32.partialorder %v2457, 8.507059e+37
    %v2459 = vand.u32 %v2432, 2147483648
    %v2460 = vor.u32 1.1754944e-38, %v2459
    %v2461 = vsel %vm2458, %v2460, %v2456
    %v2462 = vmul.f32 1.0, %v2461
    %v2463 = vadd.f32 %v1915, %v2395
    %v2464 = vadd.f32 %v1918, %v2398
    %v2465 = vxor.u32 %v2463, 2147483648
    %v2466 = vxor.u32 %v2464, 2147483648
    %v2467 = vmul.f32 %v2465, 1.442695
    %v2468 = vpow.pop %v2467
    %v2469 = vmul.f32 %v2466, 1.442695
    %v2470 = vpow.pop %v2469
    %v2471 = vadd.f32 %v2468, 1.0
    %v2472 = vadd.f32 %v2470, 1.0
    %v2473 = vrcp.pop %v2471
    %v2474 = vmul.f32 %v2471, %v2473
    %v2475 = vsub.f32 1.0, %v2474
    %v2476 = vmul.f32 %v2473, %v2475
    %v2477 = vadd.f32 %v2473, %v2476
    %vm2478 = vweird.f32 %v2471
    %vm2479 = vweird.f32 %v2473
    %vm2480 = vmor %vm2478, %vm2479
    %v2481 = vsel %vm2480, %v2473, %v2477
    %v2482 = vand.u32 2147483647, %v2471
    %vm2483 = vcmp.eq.f32.partialorder %v2482, 8.507059e+37
    %v2484 = vand.u32 %v2471, 2147483648
    %v2485 = vor.u32 1.1754944e-38, %v2484
    %v2486 = vsel %vm2483, %v2485, %v2481
    %v2487 = vmul.f32 1.0, %v2486
    %v2488 = vrcp.pop %v2472
    %v2489 = vmul.f32 %v2472, %v2488
    %v2490 = vsub.f32 1.0, %v2489
    %v2491 = vmul.f32 %v2488, %v2490
    %v2492 = vadd.f32 %v2488, %v2491
    %vm2493 = vweird.f32 %v2472
    %vm2494 = vweird.f32 %v2488
    %vm2495 = vmor %vm2493, %vm2494
    %v2496 = vsel %vm2495, %v2488, %v2492
    %v2497 = vand.u32 2147483647, %v2472
    %vm2498 = vcmp.eq.f32.partialorder %v2497, 8.507059e+37
    %v2499 = vand.u32 %v2472, 2147483648
    %v2500 = vor.u32 1.1754944e-38, %v2499
    %v2501 = vsel %vm2498, %v2500, %v2496
    %v2502 = vmul.f32 1.0, %v2501
    %v2503 = vmul.f32 %v2447, %v2418
    %v2504 = vmul.f32 %v2462, %v2421
    %v2505 = vadd.f32 %v1980, %v2503
    %v2506 = vadd.f32 %v1983, %v2504
    %v2507 = vtanh.pop %v2505
    %v2508 = vtanh.pop %v2506
    %v2509 = vsub.f32 1.0, %v2487
    %v2510 = vsub.f32 1.0, %v2502
    %v2511 = vmul.f32 %v2509, %v2507
    %v2512 = vmul.f32 %v2510, %v2508
    %v2513 = vmul.f32 %v2487, %v2350
    %v2514 = vmul.f32 %v2502, %v2351
    %v2515 = vadd.f32 %v2511, %v2513
    %v2516 = vadd.f32 %v2512, %v2514
    %2517 = vst [vmem:[#allocation2 + $0x20] sm:$0xff] %v2515
    %2518 = vst [vmem:[#allocation2 + $0x28] sm:$0xff] %v2516
    %2519 = vmatpush.msra.mxu0 %v1805
    %2520 = vmatpush.msra.mxu0 %v1802
    %2521 = vmatpush.msra.mxu0 %v1799
    %2522 = vmatpush.msra.mxu0 %v1796
    %2523 = vmatpush.msra.mxu0 %v1793
    %2524 = vmatpush.msra.mxu0 %v1790
    %2525 = vmatpush.msra.mxu0 %v1787
    %2526 = vmatpush.msra.mxu0 %v1784
    %2527 = vmatpush.msra.mxu0 %v1781
    %2528 = vmatpush.msra.mxu0 %v1778
    %2529 = vmatpush.msra.mxu0 %v1775
    %2530 = vmatpush.msra.mxu0 %v1772
    %2531 = vmatpush.msra.mxu0 %v1769
    %2532 = vmatpush.msra.mxu0 %v1766
    %2533 = vmatpush.msra.mxu0 %v1763
    %2534 = vmatpush.msra.mxu0 %v1760
    %2535 = vmatmul.f32.gmra.mxu0 %v2515
    %v2536 = vpop.f32.mrf.mxu0
    %v2537 = vadd.f32 %v2021, %v2536
    %2538 = vmatmul.f32.gmra.mxu0 %v2516
    %v2539 = vpop.f32.mrf.mxu0
    %v2540 = vadd.f32 %v2021, %v2539
    %2541 = vdwg.mxu0
    %2542 = vmatpush.msra.mxu0 %v1806
    %2543 = vmatpush.msra.mxu0 %v1803
    %2544 = vmatpush.msra.mxu0 %v1800
    %2545 = vmatpush.msra.mxu0 %v1797
    %2546 = vmatpush.msra.mxu0 %v1794
    %2547 = vmatpush.msra.mxu0 %v1791
    %2548 = vmatpush.msra.mxu0 %v1788
    %2549 = vmatpush.msra.mxu0 %v1785
    %2550 = vmatpush.msra.mxu0 %v1782
    %2551 = vmatpush.msra.mxu0 %v1779
    %2552 = vmatpush.msra.mxu0 %v1776
    %2553 = vmatpush.msra.mxu0 %v1773
    %2554 = vmatpush.msra.mxu0 %v1770
    %2555 = vmatpush.msra.mxu0 %v1767
    %2556 = vmatpush.msra.mxu0 %v1764
    %2557 = vmatpush.msra.mxu0 %v1761
    %2558 = vmatmul.f32.gmra.mxu0 %v2515
    %v2559 = vpop.f32.mrf.mxu0
    %v2560 = vadd.f32 %v2022, %v2559
    %2561 = vmatmul.f32.gmra.mxu0 %v2516
    %v2562 = vpop.f32.mrf.mxu0
    %v2563 = vadd.f32 %v2022, %v2562
    %2564 = vdwg.mxu0
    %2565 = vmatpush.msra.mxu0 %v1807
    %2566 = vmatpush.msra.mxu0 %v1804
    %2567 = vmatpush.msra.mxu0 %v1801
    %2568 = vmatpush.msra.mxu0 %v1798
    %2569 = vmatpush.msra.mxu0 %v1795
    %2570 = vmatpush.msra.mxu0 %v1792
    %2571 = vmatpush.msra.mxu0 %v1789
    %2572 = vmatpush.msra.mxu0 %v1786
    %2573 = vmatpush.msra.mxu0 %v1783
    %2574 = vmatpush.msra.mxu0 %v1780
    %2575 = vmatpush.msra.mxu0 %v1777
    %2576 = vmatpush.msra.mxu0 %v1774
    %2577 = vmatpush.msra.mxu0 %v1771
    %2578 = vmatpush.msra.mxu0 %v1768
    %2579 = vmatpush.msra.mxu0 %v1765
    %2580 = vmatpush.msra.mxu0 %v1762
    %2581 = vmatmul.f32.gmra.mxu0 %v2515
    %v2582 = vpop.f32.mrf.mxu0
    %v2583 = vadd.f32 %v2023, %v2582
    %2584 = vmatmul.f32.gmra.mxu0 %v2516
    %v2585 = vpop.f32.mrf.mxu0
    %v2586 = vadd.f32 %v2023, %v2585
    %2587 = vdwg.mxu0
    %v2588 = vadd.f32 %v1856, %v2537
    %v2589 = vadd.f32 %v1859, %v2540
    %v2590 = vxor.u32 %v2588, 2147483648
    %v2591 = vxor.u32 %v2589, 2147483648
    %v2592 = vmul.f32 %v2590, 1.442695
    %v2593 = vpow.pop %v2592
    %v2594 = vmul.f32 %v2591, 1.442695
    %v2595 = vpow.pop %v2594
    %v2596 = vadd.f32 %v2593, 1.0
    %v2597 = vadd.f32 %v2595, 1.0
    %v2598 = vrcp.pop %v2596
    %v2599 = vmul.f32 %v2596, %v2598
    %v2600 = vsub.f32 1.0, %v2599
    %v2601 = vmul.f32 %v2598, %v2600
    %v2602 = vadd.f32 %v2598, %v2601
    %vm2603 = vweird.f32 %v2596
    %vm2604 = vweird.f32 %v2598
    %vm2605 = vmor %vm2603, %vm2604
    %v2606 = vsel %vm2605, %v2598, %v2602
    %v2607 = vand.u32 2147483647, %v2596
    %vm2608 = vcmp.eq.f32.partialorder %v2607, 8.507059e+37
    %v2609 = vand.u32 %v2596, 2147483648
    %v2610 = vor.u32 1.1754944e-38, %v2609
    %v2611 = vsel %vm2608, %v2610, %v2606
    %v2612 = vmul.f32 1.0, %v2611
    %v2613 = vrcp.pop %v2597
    %v2614 = vmul.f32 %v2597, %v2613
    %v2615 = vsub.f32 1.0, %v2614
    %v2616 = vmul.f32 %v2613, %v2615
    %v2617 = vadd.f32 %v2613, %v2616
    %vm2618 = vweird.f32 %v2597
    %vm2619 = vweird.f32 %v2613
    %vm2620 = vmor %vm2618, %vm2619
    %v2621 = vsel %vm2620, %v2613, %v2617
    %v2622 = vand.u32 2147483647, %v2597
    %vm2623 = vcmp.eq.f32.partialorder %v2622, 8.507059e+37
    %v2624 = vand.u32 %v2597, 2147483648
    %v2625 = vor.u32 1.1754944e-38, %v2624
    %v2626 = vsel %vm2623, %v2625, %v2621
    %v2627 = vmul.f32 1.0, %v2626
    %v2628 = vadd.f32 %v1921, %v2560
    %v2629 = vadd.f32 %v1924, %v2563
    %v2630 = vxor.u32 %v2628, 2147483648
    %v2631 = vxor.u32 %v2629, 2147483648
    %v2632 = vmul.f32 %v2630, 1.442695
    %v2633 = vpow.pop %v2632
    %v2634 = vmul.f32 %v2631, 1.442695
    %v2635 = vpow.pop %v2634
    %v2636 = vadd.f32 %v2633, 1.0
    %v2637 = vadd.f32 %v2635, 1.0
    %v2638 = vrcp.pop %v2636
    %v2639 = vmul.f32 %v2636, %v2638
    %v2640 = vsub.f32 1.0, %v2639
    %v2641 = vmul.f32 %v2638, %v2640
    %v2642 = vadd.f32 %v2638, %v2641
    %vm2643 = vweird.f32 %v2636
    %vm2644 = vweird.f32 %v2638
    %vm2645 = vmor %vm2643, %vm2644
    %v2646 = vsel %vm2645, %v2638, %v2642
    %v2647 = vand.u32 2147483647, %v2636
    %vm2648 = vcmp.eq.f32.partialorder %v2647, 8.507059e+37
    %v2649 = vand.u32 %v2636, 2147483648
    %v2650 = vor.u32 1.1754944e-38, %v2649
    %v2651 = vsel %vm2648, %v2650, %v2646
    %v2652 = vmul.f32 1.0, %v2651
    %v2653 = vrcp.pop %v2637
    %v2654 = vmul.f32 %v2637, %v2653
    %v2655 = vsub.f32 1.0, %v2654
    %v2656 = vmul.f32 %v2653, %v2655
    %v2657 = vadd.f32 %v2653, %v2656
    %vm2658 = vweird.f32 %v2637
    %vm2659 = vweird.f32 %v2653
    %vm2660 = vmor %vm2658, %vm2659
    %v2661 = vsel %vm2660, %v2653, %v2657
    %v2662 = vand.u32 2147483647, %v2637
    %vm2663 = vcmp.eq.f32.partialorder %v2662, 8.507059e+37
    %v2664 = vand.u32 %v2637, 2147483648
    %v2665 = vor.u32 1.1754944e-38, %v2664
    %v2666 = vsel %vm2663, %v2665, %v2661
    %v2667 = vmul.f32 1.0, %v2666
    %v2668 = vmul.f32 %v2612, %v2583
    %v2669 = vmul.f32 %v2627, %v2586
    %v2670 = vadd.f32 %v1986, %v2668
    %v2671 = vadd.f32 %v1989, %v2669
    %v2672 = vtanh.pop %v2670
    %v2673 = vtanh.pop %v2671
    %v2674 = vsub.f32 1.0, %v2652
    %v2675 = vsub.f32 1.0, %v2667
    %v2676 = vmul.f32 %v2674, %v2672
    %v2677 = vmul.f32 %v2675, %v2673
    %v2678 = vmul.f32 %v2652, %v2515
    %v2679 = vmul.f32 %v2667, %v2516
    %v2680 = vadd.f32 %v2676, %v2678
    %v2681 = vadd.f32 %v2677, %v2679
    %2682 = vst [vmem:[#allocation2 + $0x30] sm:$0xff] %v2680
    %2683 = vst [vmem:[#allocation2 + $0x38] sm:$0xff] %v2681
    %2684 = vmatpush.msra.mxu0 %v1805
    %2685 = vmatpush.msra.mxu0 %v1802
    %2686 = vmatpush.msra.mxu0 %v1799
    %2687 = vmatpush.msra.mxu0 %v1796
    %2688 = vmatpush.msra.mxu0 %v1793
    %2689 = vmatpush.msra.mxu0 %v1790
    %2690 = vmatpush.msra.mxu0 %v1787
    %2691 = vmatpush.msra.mxu0 %v1784
    %2692 = vmatpush.msra.mxu0 %v1781
    %2693 = vmatpush.msra.mxu0 %v1778
    %2694 = vmatpush.msra.mxu0 %v1775
    %2695 = vmatpush.msra.mxu0 %v1772
    %2696 = vmatpush.msra.mxu0 %v1769
    %2697 = vmatpush.msra.mxu0 %v1766
    %2698 = vmatpush.msra.mxu0 %v1763
    %2699 = vmatpush.msra.mxu0 %v1760
    %2700 = vmatmul.f32.gmra.mxu0 %v2680
    %v2701 = vpop.f32.mrf.mxu0
    %v2702 = vadd.f32 %v2021, %v2701
    %2703 = vmatmul.f32.gmra.mxu0 %v2681
    %v2704 = vpop.f32.mrf.mxu0
    %v2705 = vadd.f32 %v2021, %v2704
    %2706 = vdwg.mxu0
    %2707 = vmatpush.msra.mxu0 %v1806
    %2708 = vmatpush.msra.mxu0 %v1803
    %2709 = vmatpush.msra.mxu0 %v1800
    %2710 = vmatpush.msra.mxu0 %v1797
    %2711 = vmatpush.msra.mxu0 %v1794
    %2712 = vmatpush.msra.mxu0 %v1791
    %2713 = vmatpush.msra.mxu0 %v1788
    %2714 = vmatpush.msra.mxu0 %v1785
    %2715 = vmatpush.msra.mxu0 %v1782
    %2716 = vmatpush.msra.mxu0 %v1779
    %2717 = vmatpush.msra.mxu0 %v1776
    %2718 = vmatpush.msra.mxu0 %v1773
    %2719 = vmatpush.msra.mxu0 %v1770
    %2720 = vmatpush.msra.mxu0 %v1767
    %2721 = vmatpush.msra.mxu0 %v1764
    %2722 = vmatpush.msra.mxu0 %v1761
    %2723 = vmatmul.f32.gmra.mxu0 %v2680
    %v2724 = vpop.f32.mrf.mxu0
    %v2725 = vadd.f32 %v2022, %v2724
    %2726 = vmatmul.f32.gmra.mxu0 %v2681
    %v2727 = vpop.f32.mrf.mxu0
    %v2728 = vadd.f32 %v2022, %v2727
    %2729 = vdwg.mxu0
    %2730 = vmatpush.msra.mxu0 %v1807
    %2731 = vmatpush.msra.mxu0 %v1804
    %2732 = vmatpush.msra.mxu0 %v1801
    %2733 = vmatpush.msra.mxu0 %v1798
    %2734 = vmatpush.msra.mxu0 %v1795
    %2735 = vmatpush.msra.mxu0 %v1792
    %2736 = vmatpush.msra.mxu0 %v1789
    %2737 = vmatpush.msra.mxu0 %v1786
    %2738 = vmatpush.msra.mxu0 %v1783
    %2739 = vmatpush.msra.mxu0 %v1780
    %2740 = vmatpush.msra.mxu0 %v1777
    %2741 = vmatpush.msra.mxu0 %v1774
    %2742 = vmatpush.msra.mxu0 %v1771
    %2743 = vmatpush.msra.mxu0 %v1768
    %2744 = vmatpush.msra.mxu0 %v1765
    %2745 = vmatpush.msra.mxu0 %v1762
    %2746 = vmatmul.f32.gmra.mxu0 %v2680
    %v2747 = vpop.f32.mrf.mxu0
    %v2748 = vadd.f32 %v2023, %v2747
    %2749 = vmatmul.f32.gmra.mxu0 %v2681
    %v2750 = vpop.f32.mrf.mxu0
    %v2751 = vadd.f32 %v2023, %v2750
    %2752 = vdwg.mxu0
    %v2753 = vadd.f32 %v1862, %v2702
    %v2754 = vadd.f32 %v1865, %v2705
    %v2755 = vxor.u32 %v2753, 2147483648
    %v2756 = vxor.u32 %v2754, 2147483648
    %v2757 = vmul.f32 %v2755, 1.442695
    %v2758 = vpow.pop %v2757
    %v2759 = vmul.f32 %v2756, 1.442695
    %v2760 = vpow.pop %v2759
    %v2761 = vadd.f32 %v2758, 1.0
    %v2762 = vadd.f32 %v2760, 1.0
    %v2763 = vrcp.pop %v2761
    %v2764 = vmul.f32 %v2761, %v2763
    %v2765 = vsub.f32 1.0, %v2764
    %v2766 = vmul.f32 %v2763, %v2765
    %v2767 = vadd.f32 %v2763, %v2766
    %vm2768 = vweird.f32 %v2761
    %vm2769 = vweird.f32 %v2763
    %vm2770 = vmor %vm2768, %vm2769
    %v2771 = vsel %vm2770, %v2763, %v2767
    %v2772 = vand.u32 2147483647, %v2761
    %vm2773 = vcmp.eq.f32.partialorder %v2772, 8.507059e+37
    %v2774 = vand.u32 %v2761, 2147483648
    %v2775 = vor.u32 1.1754944e-38, %v2774
    %v2776 = vsel %vm2773, %v2775, %v2771
    %v2777 = vmul.f32 1.0, %v2776
    %v2778 = vrcp.pop %v2762
    %v2779 = vmul.f32 %v2762, %v2778
    %v2780 = vsub.f32 1.0, %v2779
    %v2781 = vmul.f32 %v2778, %v2780
    %v2782 = vadd.f32 %v2778, %v2781
    %vm2783 = vweird.f32 %v2762
    %vm2784 = vweird.f32 %v2778
    %vm2785 = vmor %vm2783, %vm2784
    %v2786 = vsel %vm2785, %v2778, %v2782
    %v2787 = vand.u32 2147483647, %v2762
    %vm2788 = vcmp.eq.f32.partialorder %v2787, 8.507059e+37
    %v2789 = vand.u32 %v2762, 2147483648
    %v2790 = vor.u32 1.1754944e-38, %v2789
    %v2791 = vsel %vm2788, %v2790, %v2786
    %v2792 = vmul.f32 1.0, %v2791
    %v2793 = vadd.f32 %v1927, %v2725
    %v2794 = vadd.f32 %v1930, %v2728
    %v2795 = vxor.u32 %v2793, 2147483648
    %v2796 = vxor.u32 %v2794, 2147483648
    %v2797 = vmul.f32 %v2795, 1.442695
    %v2798 = vpow.pop %v2797
    %v2799 = vmul.f32 %v2796, 1.442695
    %v2800 = vpow.pop %v2799
    %v2801 = vadd.f32 %v2798, 1.0
    %v2802 = vadd.f32 %v2800, 1.0
    %v2803 = vrcp.pop %v2801
    %v2804 = vmul.f32 %v2801, %v2803
    %v2805 = vsub.f32 1.0, %v2804
    %v2806 = vmul.f32 %v2803, %v2805
    %v2807 = vadd.f32 %v2803, %v2806
    %vm2808 = vweird.f32 %v2801
    %vm2809 = vweird.f32 %v2803
    %vm2810 = vmor %vm2808, %vm2809
    %v2811 = vsel %vm2810, %v2803, %v2807
    %v2812 = vand.u32 2147483647, %v2801
    %vm2813 = vcmp.eq.f32.partialorder %v2812, 8.507059e+37
    %v2814 = vand.u32 %v2801, 2147483648
    %v2815 = vor.u32 1.1754944e-38, %v2814
    %v2816 = vsel %vm2813, %v2815, %v2811
    %v2817 = vmul.f32 1.0, %v2816
    %v2818 = vrcp.pop %v2802
    %v2819 = vmul.f32 %v2802, %v2818
    %v2820 = vsub.f32 1.0, %v2819
    %v2821 = vmul.f32 %v2818, %v2820
    %v2822 = vadd.f32 %v2818, %v2821
    %vm2823 = vweird.f32 %v2802
    %vm2824 = vweird.f32 %v2818
    %vm2825 = vmor %vm2823, %vm2824
    %v2826 = vsel %vm2825, %v2818, %v2822
    %v2827 = vand.u32 2147483647, %v2802
    %vm2828 = vcmp.eq.f32.partialorder %v2827, 8.507059e+37
    %v2829 = vand.u32 %v2802, 2147483648
    %v2830 = vor.u32 1.1754944e-38, %v2829
    %v2831 = vsel %vm2828, %v2830, %v2826
    %v2832 = vmul.f32 1.0, %v2831
    %v2833 = vmul.f32 %v2777, %v2748
    %v2834 = vmul.f32 %v2792, %v2751
    %v2835 = vadd.f32 %v1992, %v2833
    %v2836 = vadd.f32 %v1995, %v2834
    %v2837 = vtanh.pop %v2835
    %v2838 = vtanh.pop %v2836
    %v2839 = vsub.f32 1.0, %v2817
    %v2840 = vsub.f32 1.0, %v2832
    %v2841 = vmul.f32 %v2839, %v2837
    %v2842 = vmul.f32 %v2840, %v2838
    %v2843 = vmul.f32 %v2817, %v2680
    %v2844 = vmul.f32 %v2832, %v2681
    %v2845 = vadd.f32 %v2841, %v2843
    %v2846 = vadd.f32 %v2842, %v2844
    %2847 = vst [vmem:[#allocation2 + $0x40] sm:$0xff] %v2845
    %2848 = vst [vmem:[#allocation2 + $0x48] sm:$0xff] %v2846
    %2849 = vmatpush.msra.mxu0 %v1805
    %2850 = vmatpush.msra.mxu0 %v1802
    %2851 = vmatpush.msra.mxu0 %v1799
    %2852 = vmatpush.msra.mxu0 %v1796
    %2853 = vmatpush.msra.mxu0 %v1793
    %2854 = vmatpush.msra.mxu0 %v1790
    %2855 = vmatpush.msra.mxu0 %v1787
    %2856 = vmatpush.msra.mxu0 %v1784
    %2857 = vmatpush.msra.mxu0 %v1781
    %2858 = vmatpush.msra.mxu0 %v1778
    %2859 = vmatpush.msra.mxu0 %v1775
    %2860 = vmatpush.msra.mxu0 %v1772
    %2861 = vmatpush.msra.mxu0 %v1769
    %2862 = vmatpush.msra.mxu0 %v1766
    %2863 = vmatpush.msra.mxu0 %v1763
    %2864 = vmatpush.msra.mxu0 %v1760
    %2865 = vmatmul.f32.gmra.mxu0 %v2845
    %v2866 = vpop.f32.mrf.mxu0
    %v2867 = vadd.f32 %v2021, %v2866
    %2868 = vmatmul.f32.gmra.mxu0 %v2846
    %v2869 = vpop.f32.mrf.mxu0
    %v2870 = vadd.f32 %v2021, %v2869
    %2871 = vdwg.mxu0
    %2872 = vmatpush.msra.mxu0 %v1806
    %2873 = vmatpush.msra.mxu0 %v1803
    %2874 = vmatpush.msra.mxu0 %v1800
    %2875 = vmatpush.msra.mxu0 %v1797
    %2876 = vmatpush.msra.mxu0 %v1794
    %2877 = vmatpush.msra.mxu0 %v1791
    %2878 = vmatpush.msra.mxu0 %v1788
    %2879 = vmatpush.msra.mxu0 %v1785
    %2880 = vmatpush.msra.mxu0 %v1782
    %2881 = vmatpush.msra.mxu0 %v1779
    %2882 = vmatpush.msra.mxu0 %v1776
    %2883 = vmatpush.msra.mxu0 %v1773
    %2884 = vmatpush.msra.mxu0 %v1770
    %2885 = vmatpush.msra.mxu0 %v1767
    %2886 = vmatpush.msra.mxu0 %v1764
    %2887 = vmatpush.msra.mxu0 %v1761
    %2888 = vmatmul.f32.gmra.mxu0 %v2845
    %v2889 = vpop.f32.mrf.mxu0
    %v2890 = vadd.f32 %v2022, %v2889
    %2891 = vmatmul.f32.gmra.mxu0 %v2846
    %v2892 = vpop.f32.mrf.mxu0
    %v2893 = vadd.f32 %v2022, %v2892
    %2894 = vdwg.mxu0
    %2895 = vmatpush.msra.mxu0 %v1807
    %2896 = vmatpush.msra.mxu0 %v1804
    %2897 = vmatpush.msra.mxu0 %v1801
    %2898 = vmatpush.msra.mxu0 %v1798
    %2899 = vmatpush.msra.mxu0 %v1795
    %2900 = vmatpush.msra.mxu0 %v1792
    %2901 = vmatpush.msra.mxu0 %v1789
    %2902 = vmatpush.msra.mxu0 %v1786
    %2903 = vmatpush.msra.mxu0 %v1783
    %2904 = vmatpush.msra.mxu0 %v1780
    %2905 = vmatpush.msra.mxu0 %v1777
    %2906 = vmatpush.msra.mxu0 %v1774
    %2907 = vmatpush.msra.mxu0 %v1771
    %2908 = vmatpush.msra.mxu0 %v1768
    %2909 = vmatpush.msra.mxu0 %v1765
    %2910 = vmatpush.msra.mxu0 %v1762
    %2911 = vmatmul.f32.gmra.mxu0 %v2845
    %v2912 = vpop.f32.mrf.mxu0
    %v2913 = vadd.f32 %v2023, %v2912
    %2914 = vmatmul.f32.gmra.mxu0 %v2846
    %v2915 = vpop.f32.mrf.mxu0
    %v2916 = vadd.f32 %v2023, %v2915
    %2917 = vdwg.mxu0
    %v2918 = vadd.f32 %v1868, %v2867
    %v2919 = vadd.f32 %v1871, %v2870
    %v2920 = vxor.u32 %v2918, 2147483648
    %v2921 = vxor.u32 %v2919, 2147483648
    %v2922 = vmul.f32 %v2920, 1.442695
    %v2923 = vpow.pop %v2922
    %v2924 = vmul.f32 %v2921, 1.442695
    %v2925 = vpow.pop %v2924
    %v2926 = vadd.f32 %v2923, 1.0
    %v2927 = vadd.f32 %v2925, 1.0
    %v2928 = vrcp.pop %v2926
    %v2929 = vmul.f32 %v2926, %v2928
    %v2930 = vsub.f32 1.0, %v2929
    %v2931 = vmul.f32 %v2928, %v2930
    %v2932 = vadd.f32 %v2928, %v2931
    %vm2933 = vweird.f32 %v2926
    %vm2934 = vweird.f32 %v2928
    %vm2935 = vmor %vm2933, %vm2934
    %v2936 = vsel %vm2935, %v2928, %v2932
    %v2937 = vand.u32 2147483647, %v2926
    %vm2938 = vcmp.eq.f32.partialorder %v2937, 8.507059e+37
    %v2939 = vand.u32 %v2926, 2147483648
    %v2940 = vor.u32 1.1754944e-38, %v2939
    %v2941 = vsel %vm2938, %v2940, %v2936
    %v2942 = vmul.f32 1.0, %v2941
    %v2943 = vrcp.pop %v2927
    %v2944 = vmul.f32 %v2927, %v2943
    %v2945 = vsub.f32 1.0, %v2944
    %v2946 = vmul.f32 %v2943, %v2945
    %v2947 = vadd.f32 %v2943, %v2946
    %vm2948 = vweird.f32 %v2927
    %vm2949 = vweird.f32 %v2943
    %vm2950 = vmor %vm2948, %vm2949
    %v2951 = vsel %vm2950, %v2943, %v2947
    %v2952 = vand.u32 2147483647, %v2927
    %vm2953 = vcmp.eq.f32.partialorder %v2952, 8.507059e+37
    %v2954 = vand.u32 %v2927, 2147483648
    %v2955 = vor.u32 1.1754944e-38, %v2954
    %v2956 = vsel %vm2953, %v2955, %v2951
    %v2957 = vmul.f32 1.0, %v2956
    %v2958 = vadd.f32 %v1933, %v2890
    %v2959 = vadd.f32 %v1936, %v2893
    %v2960 = vxor.u32 %v2958, 2147483648
    %v2961 = vxor.u32 %v2959, 2147483648
    %v2962 = vmul.f32 %v2960, 1.442695
    %v2963 = vpow.pop %v2962
    %v2964 = vmul.f32 %v2961, 1.442695
    %v2965 = vpow.pop %v2964
    %v2966 = vadd.f32 %v2963, 1.0
    %v2967 = vadd.f32 %v2965, 1.0
    %v2968 = vrcp.pop %v2966
    %v2969 = vmul.f32 %v2966, %v2968
    %v2970 = vsub.f32 1.0, %v2969
    %v2971 = vmul.f32 %v2968, %v2970
    %v2972 = vadd.f32 %v2968, %v2971
    %vm2973 = vweird.f32 %v2966
    %vm2974 = vweird.f32 %v2968
    %vm2975 = vmor %vm2973, %vm2974
    %v2976 = vsel %vm2975, %v2968, %v2972
    %v2977 = vand.u32 2147483647, %v2966
    %vm2978 = vcmp.eq.f32.partialorder %v2977, 8.507059e+37
    %v2979 = vand.u32 %v2966, 2147483648
    %v2980 = vor.u32 1.1754944e-38, %v2979
    %v2981 = vsel %vm2978, %v2980, %v2976
    %v2982 = vmul.f32 1.0, %v2981
    %v2983 = vrcp.pop %v2967
    %v2984 = vmul.f32 %v2967, %v2983
    %v2985 = vsub.f32 1.0, %v2984
    %v2986 = vmul.f32 %v2983, %v2985
    %v2987 = vadd.f32 %v2983, %v2986
    %vm2988 = vweird.f32 %v2967
    %vm2989 = vweird.f32 %v2983
    %vm2990 = vmor %vm2988, %vm2989
    %v2991 = vsel %vm2990, %v2983, %v2987
    %v2992 = vand.u32 2147483647, %v2967
    %vm2993 = vcmp.eq.f32.partialorder %v2992, 8.507059e+37
    %v2994 = vand.u32 %v2967, 2147483648
    %v2995 = vor.u32 1.1754944e-38, %v2994
    %v2996 = vsel %vm2993, %v2995, %v2991
    %v2997 = vmul.f32 1.0, %v2996
    %v2998 = vmul.f32 %v2942, %v2913
    %v2999 = vmul.f32 %v2957, %v2916
    %v3000 = vadd.f32 %v1998, %v2998
    %v3001 = vadd.f32 %v2001, %v2999
    %v3002 = vtanh.pop %v3000
    %v3003 = vtanh.pop %v3001
    %v3004 = vsub.f32 1.0, %v2982
    %v3005 = vsub.f32 1.0, %v2997
    %v3006 = vmul.f32 %v3004, %v3002
    %v3007 = vmul.f32 %v3005, %v3003
    %v3008 = vmul.f32 %v2982, %v2845
    %v3009 = vmul.f32 %v2997, %v2846
    %v3010 = vadd.f32 %v3006, %v3008
    %v3011 = vadd.f32 %v3007, %v3009
    %3012 = vst [vmem:[#allocation2 + $0x50] sm:$0xff] %v3010
    %3013 = vst [vmem:[#allocation2 + $0x58] sm:$0xff] %v3011
    %3014 = vmatpush.msra.mxu0 %v1805
    %3015 = vmatpush.msra.mxu0 %v1802
    %3016 = vmatpush.msra.mxu0 %v1799
    %3017 = vmatpush.msra.mxu0 %v1796
    %3018 = vmatpush.msra.mxu0 %v1793
    %3019 = vmatpush.msra.mxu0 %v1790
    %3020 = vmatpush.msra.mxu0 %v1787
    %3021 = vmatpush.msra.mxu0 %v1784
    %3022 = vmatpush.msra.mxu0 %v1781
    %3023 = vmatpush.msra.mxu0 %v1778
    %3024 = vmatpush.msra.mxu0 %v1775
    %3025 = vmatpush.msra.mxu0 %v1772
    %3026 = vmatpush.msra.mxu0 %v1769
    %3027 = vmatpush.msra.mxu0 %v1766
    %3028 = vmatpush.msra.mxu0 %v1763
    %3029 = vmatpush.msra.mxu0 %v1760
    %3030 = vmatmul.f32.gmra.mxu0 %v3010
    %v3031 = vpop.f32.mrf.mxu0
    %v3032 = vadd.f32 %v2021, %v3031
    %3033 = vmatmul.f32.gmra.mxu0 %v3011
    %v3034 = vpop.f32.mrf.mxu0
    %v3035 = vadd.f32 %v2021, %v3034
    %3036 = vdwg.mxu0
    %3037 = vmatpush.msra.mxu0 %v1806
    %3038 = vmatpush.msra.mxu0 %v1803
    %3039 = vmatpush.msra.mxu0 %v1800
    %3040 = vmatpush.msra.mxu0 %v1797
    %3041 = vmatpush.msra.mxu0 %v1794
    %3042 = vmatpush.msra.mxu0 %v1791
    %3043 = vmatpush.msra.mxu0 %v1788
    %3044 = vmatpush.msra.mxu0 %v1785
    %3045 = vmatpush.msra.mxu0 %v1782
    %3046 = vmatpush.msra.mxu0 %v1779
    %3047 = vmatpush.msra.mxu0 %v1776
    %3048 = vmatpush.msra.mxu0 %v1773
    %3049 = vmatpush.msra.mxu0 %v1770
    %3050 = vmatpush.msra.mxu0 %v1767
    %3051 = vmatpush.msra.mxu0 %v1764
    %3052 = vmatpush.msra.mxu0 %v1761
    %3053 = vmatmul.f32.gmra.mxu0 %v3010
    %v3054 = vpop.f32.mrf.mxu0
    %v3055 = vadd.f32 %v2022, %v3054
    %3056 = vmatmul.f32.gmra.mxu0 %v3011
    %v3057 = vpop.f32.mrf.mxu0
    %v3058 = vadd.f32 %v2022, %v3057
    %3059 = vdwg.mxu0
    %3060 = vmatpush.msra.mxu0 %v1807
    %3061 = vmatpush.msra.mxu0 %v1804
    %3062 = vmatpush.msra.mxu0 %v1801
    %3063 = vmatpush.msra.mxu0 %v1798
    %3064 = vmatpush.msra.mxu0 %v1795
    %3065 = vmatpush.msra.mxu0 %v1792
    %3066 = vmatpush.msra.mxu0 %v1789
    %3067 = vmatpush.msra.mxu0 %v1786
    %3068 = vmatpush.msra.mxu0 %v1783
    %3069 = vmatpush.msra.mxu0 %v1780
    %3070 = vmatpush.msra.mxu0 %v1777
    %3071 = vmatpush.msra.mxu0 %v1774
    %3072 = vmatpush.msra.mxu0 %v1771
    %3073 = vmatpush.msra.mxu0 %v1768
    %3074 = vmatpush.msra.mxu0 %v1765
    %3075 = vmatpush.msra.mxu0 %v1762
    %3076 = vmatmul.f32.gmra.mxu0 %v3010
    %v3077 = vpop.f32.mrf.mxu0
    %v3078 = vadd.f32 %v2023, %v3077
    %3079 = vmatmul.f32.gmra.mxu0 %v3011
    %v3080 = vpop.f32.mrf.mxu0
    %v3081 = vadd.f32 %v2023, %v3080
    %3082 = vdwg.mxu0
    %v3083 = vadd.f32 %v1874, %v3032
    %v3084 = vadd.f32 %v1877, %v3035
    %v3085 = vxor.u32 %v3083, 2147483648
    %v3086 = vxor.u32 %v3084, 2147483648
    %v3087 = vmul.f32 %v3085, 1.442695
    %v3088 = vpow.pop %v3087
    %v3089 = vmul.f32 %v3086, 1.442695
    %v3090 = vpow.pop %v3089
    %v3091 = vadd.f32 %v3088, 1.0
    %v3092 = vadd.f32 %v3090, 1.0
    %v3093 = vrcp.pop %v3091
    %v3094 = vmul.f32 %v3091, %v3093
    %v3095 = vsub.f32 1.0, %v3094
    %v3096 = vmul.f32 %v3093, %v3095
    %v3097 = vadd.f32 %v3093, %v3096
    %vm3098 = vweird.f32 %v3091
    %vm3099 = vweird.f32 %v3093
    %vm3100 = vmor %vm3098, %vm3099
    %v3101 = vsel %vm3100, %v3093, %v3097
    %v3102 = vand.u32 2147483647, %v3091
    %vm3103 = vcmp.eq.f32.partialorder %v3102, 8.507059e+37
    %v3104 = vand.u32 %v3091, 2147483648
    %v3105 = vor.u32 1.1754944e-38, %v3104
    %v3106 = vsel %vm3103, %v3105, %v3101
    %v3107 = vmul.f32 1.0, %v3106
    %v3108 = vrcp.pop %v3092
    %v3109 = vmul.f32 %v3092, %v3108
    %v3110 = vsub.f32 1.0, %v3109
    %v3111 = vmul.f32 %v3108, %v3110
    %v3112 = vadd.f32 %v3108, %v3111
    %vm3113 = vweird.f32 %v3092
    %vm3114 = vweird.f32 %v3108
    %vm3115 = vmor %vm3113, %vm3114
    %v3116 = vsel %vm3115, %v3108, %v3112
    %v3117 = vand.u32 2147483647, %v3092
    %vm3118 = vcmp.eq.f32.partialorder %v3117, 8.507059e+37
    %v3119 = vand.u32 %v3092, 2147483648
    %v3120 = vor.u32 1.1754944e-38, %v3119
    %v3121 = vsel %vm3118, %v3120, %v3116
    %v3122 = vmul.f32 1.0, %v3121
    %v3123 = vadd.f32 %v1939, %v3055
    %v3124 = vadd.f32 %v1942, %v3058
    %v3125 = vxor.u32 %v3123, 2147483648
    %v3126 = vxor.u32 %v3124, 2147483648
    %v3127 = vmul.f32 %v3125, 1.442695
    %v3128 = vpow.pop %v3127
    %v3129 = vmul.f32 %v3126, 1.442695
    %v3130 = vpow.pop %v3129
    %v3131 = vadd.f32 %v3128, 1.0
    %v3132 = vadd.f32 %v3130, 1.0
    %v3133 = vrcp.pop %v3131
    %v3134 = vmul.f32 %v3131, %v3133
    %v3135 = vsub.f32 1.0, %v3134
    %v3136 = vmul.f32 %v3133, %v3135
    %v3137 = vadd.f32 %v3133, %v3136
    %vm3138 = vweird.f32 %v3131
    %vm3139 = vweird.f32 %v3133
    %vm3140 = vmor %vm3138, %vm3139
    %v3141 = vsel %vm3140, %v3133, %v3137
    %v3142 = vand.u32 2147483647, %v3131
    %vm3143 = vcmp.eq.f32.partialorder %v3142, 8.507059e+37
    %v3144 = vand.u32 %v3131, 2147483648
    %v3145 = vor.u32 1.1754944e-38, %v3144
    %v3146 = vsel %vm3143, %v3145, %v3141
    %v3147 = vmul.f32 1.0, %v3146
    %v3148 = vrcp.pop %v3132
    %v3149 = vmul.f32 %v3132, %v3148
    %v3150 = vsub.f32 1.0, %v3149
    %v3151 = vmul.f32 %v3148, %v3150
    %v3152 = vadd.f32 %v3148, %v3151
    %vm3153 = vweird.f32 %v3132
    %vm3154 = vweird.f32 %v3148
    %vm3155 = vmor %vm3153, %vm3154
    %v3156 = vsel %vm3155, %v3148, %v3152
    %v3157 = vand.u32 2147483647, %v3132
    %vm3158 = vcmp.eq.f32.partialorder %v3157, 8.507059e+37
    %v3159 = vand.u32 %v3132, 2147483648
    %v3160 = vor.u32 1.1754944e-38, %v3159
    %v3161 = vsel %vm3158, %v3160, %v3156
    %v3162 = vmul.f32 1.0, %v3161
    %v3163 = vmul.f32 %v3107, %v3078
    %v3164 = vmul.f32 %v3122, %v3081
    %v3165 = vadd.f32 %v2004, %v3163
    %v3166 = vadd.f32 %v2007, %v3164
    %v3167 = vtanh.pop %v3165
    %v3168 = vtanh.pop %v3166
    %v3169 = vsub.f32 1.0, %v3147
    %v3170 = vsub.f32 1.0, %v3162
    %v3171 = vmul.f32 %v3169, %v3167
    %v3172 = vmul.f32 %v3170, %v3168
    %v3173 = vmul.f32 %v3147, %v3010
    %v3174 = vmul.f32 %v3162, %v3011
    %v3175 = vadd.f32 %v3171, %v3173
    %v3176 = vadd.f32 %v3172, %v3174
    %3177 = vst [vmem:[#allocation2 + $0x60] sm:$0xff] %v3175
    %3178 = vst [vmem:[#allocation2 + $0x68] sm:$0xff] %v3176
    %3179 = vmatpush.msra.mxu0 %v1805
    %3180 = vmatpush.msra.mxu0 %v1802
    %3181 = vmatpush.msra.mxu0 %v1799
    %3182 = vmatpush.msra.mxu0 %v1796
    %3183 = vmatpush.msra.mxu0 %v1793
    %3184 = vmatpush.msra.mxu0 %v1790
    %3185 = vmatpush.msra.mxu0 %v1787
    %3186 = vmatpush.msra.mxu0 %v1784
    %3187 = vmatpush.msra.mxu0 %v1781
    %3188 = vmatpush.msra.mxu0 %v1778
    %3189 = vmatpush.msra.mxu0 %v1775
    %3190 = vmatpush.msra.mxu0 %v1772
    %3191 = vmatpush.msra.mxu0 %v1769
    %3192 = vmatpush.msra.mxu0 %v1766
    %3193 = vmatpush.msra.mxu0 %v1763
    %3194 = vmatpush.msra.mxu0 %v1760
    %3195 = vmatmul.f32.gmra.mxu0 %v3175
    %v3196 = vpop.f32.mrf.mxu0
    %v3197 = vadd.f32 %v2021, %v3196
    %3198 = vmatmul.f32.gmra.mxu0 %v3176
    %v3199 = vpop.f32.mrf.mxu0
    %v3200 = vadd.f32 %v2021, %v3199
    %3201 = vdwg.mxu0
    %3202 = vmatpush.msra.mxu0 %v1806
    %3203 = vmatpush.msra.mxu0 %v1803
    %3204 = vmatpush.msra.mxu0 %v1800
    %3205 = vmatpush.msra.mxu0 %v1797
    %3206 = vmatpush.msra.mxu0 %v1794
    %3207 = vmatpush.msra.mxu0 %v1791
    %3208 = vmatpush.msra.mxu0 %v1788
    %3209 = vmatpush.msra.mxu0 %v1785
    %3210 = vmatpush.msra.mxu0 %v1782
    %3211 = vmatpush.msra.mxu0 %v1779
    %3212 = vmatpush.msra.mxu0 %v1776
    %3213 = vmatpush.msra.mxu0 %v1773
    %3214 = vmatpush.msra.mxu0 %v1770
    %3215 = vmatpush.msra.mxu0 %v1767
    %3216 = vmatpush.msra.mxu0 %v1764
    %3217 = vmatpush.msra.mxu0 %v1761
    %3218 = vmatmul.f32.gmra.mxu0 %v3175
    %v3219 = vpop.f32.mrf.mxu0
    %v3220 = vadd.f32 %v2022, %v3219
    %3221 = vmatmul.f32.gmra.mxu0 %v3176
    %v3222 = vpop.f32.mrf.mxu0
    %v3223 = vadd.f32 %v2022, %v3222
    %3224 = vdwg.mxu0
    %3225 = vmatpush.msra.mxu0 %v1807
    %3226 = vmatpush.msra.mxu0 %v1804
    %3227 = vmatpush.msra.mxu0 %v1801
    %3228 = vmatpush.msra.mxu0 %v1798
    %3229 = vmatpush.msra.mxu0 %v1795
    %3230 = vmatpush.msra.mxu0 %v1792
    %3231 = vmatpush.msra.mxu0 %v1789
    %3232 = vmatpush.msra.mxu0 %v1786
    %3233 = vmatpush.msra.mxu0 %v1783
    %3234 = vmatpush.msra.mxu0 %v1780
    %3235 = vmatpush.msra.mxu0 %v1777
    %3236 = vmatpush.msra.mxu0 %v1774
    %3237 = vmatpush.msra.mxu0 %v1771
    %3238 = vmatpush.msra.mxu0 %v1768
    %3239 = vmatpush.msra.mxu0 %v1765
    %3240 = vmatpush.msra.mxu0 %v1762
    %3241 = vmatmul.f32.gmra.mxu0 %v3175
    %v3242 = vpop.f32.mrf.mxu0
    %v3243 = vadd.f32 %v2023, %v3242
    %3244 = vmatmul.f32.gmra.mxu0 %v3176
    %v3245 = vpop.f32.mrf.mxu0
    %v3246 = vadd.f32 %v2023, %v3245
    %3247 = vdwg.mxu0
    %v3248 = vadd.f32 %v1880, %v3197
    %v3249 = vadd.f32 %v1883, %v3200
    %v3250 = vxor.u32 %v3248, 2147483648
    %v3251 = vxor.u32 %v3249, 2147483648
    %v3252 = vmul.f32 %v3250, 1.442695
    %v3253 = vpow.pop %v3252
    %v3254 = vmul.f32 %v3251, 1.442695
    %v3255 = vpow.pop %v3254
    %v3256 = vadd.f32 %v3253, 1.0
    %v3257 = vadd.f32 %v3255, 1.0
    %v3258 = vrcp.pop %v3256
    %v3259 = vmul.f32 %v3256, %v3258
    %v3260 = vsub.f32 1.0, %v3259
    %v3261 = vmul.f32 %v3258, %v3260
    %v3262 = vadd.f32 %v3258, %v3261
    %vm3263 = vweird.f32 %v3256
    %vm3264 = vweird.f32 %v3258
    %vm3265 = vmor %vm3263, %vm3264
    %v3266 = vsel %vm3265, %v3258, %v3262
    %v3267 = vand.u32 2147483647, %v3256
    %vm3268 = vcmp.eq.f32.partialorder %v3267, 8.507059e+37
    %v3269 = vand.u32 %v3256, 2147483648
    %v3270 = vor.u32 1.1754944e-38, %v3269
    %v3271 = vsel %vm3268, %v3270, %v3266
    %v3272 = vmul.f32 1.0, %v3271
    %v3273 = vrcp.pop %v3257
    %v3274 = vmul.f32 %v3257, %v3273
    %v3275 = vsub.f32 1.0, %v3274
    %v3276 = vmul.f32 %v3273, %v3275
    %v3277 = vadd.f32 %v3273, %v3276
    %vm3278 = vweird.f32 %v3257
    %vm3279 = vweird.f32 %v3273
    %vm3280 = vmor %vm3278, %vm3279
    %v3281 = vsel %vm3280, %v3273, %v3277
    %v3282 = vand.u32 2147483647, %v3257
    %vm3283 = vcmp.eq.f32.partialorder %v3282, 8.507059e+37
    %v3284 = vand.u32 %v3257, 2147483648
    %v3285 = vor.u32 1.1754944e-38, %v3284
    %v3286 = vsel %vm3283, %v3285, %v3281
    %v3287 = vmul.f32 1.0, %v3286
    %v3288 = vadd.f32 %v1945, %v3220
    %v3289 = vadd.f32 %v1948, %v3223
    %v3290 = vxor.u32 %v3288, 2147483648
    %v3291 = vxor.u32 %v3289, 2147483648
    %v3292 = vmul.f32 %v3290, 1.442695
    %v3293 = vpow.pop %v3292
    %v3294 = vmul.f32 %v3291, 1.442695
    %v3295 = vpow.pop %v3294
    %v3296 = vadd.f32 %v3293, 1.0
    %v3297 = vadd.f32 %v3295, 1.0
    %v3298 = vrcp.pop %v3296
    %v3299 = vmul.f32 %v3296, %v3298
    %v3300 = vsub.f32 1.0, %v3299
    %v3301 = vmul.f32 %v3298, %v3300
    %v3302 = vadd.f32 %v3298, %v3301
    %vm3303 = vweird.f32 %v3296
    %vm3304 = vweird.f32 %v3298
    %vm3305 = vmor %vm3303, %vm3304
    %v3306 = vsel %vm3305, %v3298, %v3302
    %v3307 = vand.u32 2147483647, %v3296
    %vm3308 = vcmp.eq.f32.partialorder %v3307, 8.507059e+37
    %v3309 = vand.u32 %v3296, 2147483648
    %v3310 = vor.u32 1.1754944e-38, %v3309
    %v3311 = vsel %vm3308, %v3310, %v3306
    %v3312 = vmul.f32 1.0, %v3311
    %v3313 = vrcp.pop %v3297
    %v3314 = vmul.f32 %v3297, %v3313
    %v3315 = vsub.f32 1.0, %v3314
    %v3316 = vmul.f32 %v3313, %v3315
    %v3317 = vadd.f32 %v3313, %v3316
    %vm3318 = vweird.f32 %v3297
    %vm3319 = vweird.f32 %v3313
    %vm3320 = vmor %vm3318, %vm3319
    %v3321 = vsel %vm3320, %v3313, %v3317
    %v3322 = vand.u32 2147483647, %v3297
    %vm3323 = vcmp.eq.f32.partialorder %v3322, 8.507059e+37
    %v3324 = vand.u32 %v3297, 2147483648
    %v3325 = vor.u32 1.1754944e-38, %v3324
    %v3326 = vsel %vm3323, %v3325, %v3321
    %v3327 = vmul.f32 1.0, %v3326
    %v3328 = vmul.f32 %v3272, %v3243
    %v3329 = vmul.f32 %v3287, %v3246
    %v3330 = vadd.f32 %v2010, %v3328
    %v3331 = vadd.f32 %v2013, %v3329
    %v3332 = vtanh.pop %v3330
    %v3333 = vtanh.pop %v3331
    %v3334 = vsub.f32 1.0, %v3312
    %v3335 = vsub.f32 1.0, %v3327
    %v3336 = vmul.f32 %v3334, %v3332
    %v3337 = vmul.f32 %v3335, %v3333
    %v3338 = vmul.f32 %v3312, %v3175
    %v3339 = vmul.f32 %v3327, %v3176
    %v3340 = vadd.f32 %v3336, %v3338
    %v3341 = vadd.f32 %v3337, %v3339
    %3342 = vst [vmem:[#allocation2 + $0x70] sm:$0xff] %v3340
    %3343 = vst [vmem:[#allocation2 + $0x78] sm:$0xff] %v3341
    %s3344 = scalar_lea.vmem %s8, 16
    %3345 = vst [vmem:[%s3344] sm:$0xff] %v3340
    %3346 = vst [vmem:[%s3344 + $0x8] sm:$0xff] %v3341
    %v3347 = vld [vmem:[#allocation2] sm:$0xff]
    %v3348 = vld [vmem:[#allocation2 + $0x8] sm:$0xff]
    %v3349 = vld [vmem:[#allocation2 + $0x10] sm:$0xff]
    %v3350 = vld [vmem:[#allocation2 + $0x18] sm:$0xff]
    %v3351 = vld [vmem:[#allocation2 + $0x20] sm:$0xff]
    %v3352 = vld [vmem:[#allocation2 + $0x28] sm:$0xff]
    %v3353 = vld [vmem:[#allocation2 + $0x30] sm:$0xff]
    %v3354 = vld [vmem:[#allocation2 + $0x38] sm:$0xff]
    %v3355 = vld [vmem:[#allocation2 + $0x40] sm:$0xff]
    %v3356 = vld [vmem:[#allocation2 + $0x48] sm:$0xff]
    %v3357 = vld [vmem:[#allocation2 + $0x50] sm:$0xff]
    %v3358 = vld [vmem:[#allocation2 + $0x58] sm:$0xff]
    %v3359 = vld [vmem:[#allocation2 + $0x60] sm:$0xff]
    %v3360 = vld [vmem:[#allocation2 + $0x68] sm:$0xff]
    %v3361 = vld [vmem:[#allocation2 + $0x70] sm:$0xff]
    %v3362 = vld [vmem:[#allocation2 + $0x78] sm:$0xff]
    %s3363 = scalar_lea.vmem %s1, 768
    %v3364 = vld [vmem:[%s3363] sm:$0xff]
    %v3365 = vld [vmem:[%s3363 + $0x8] sm:$0xff]
    %v3366 = vld [vmem:[%s3363 + $0x10] sm:$0xff]
    %v3367 = vld [vmem:[%s3363 + $0x18] sm:$0xff]
    %v3368 = vld [vmem:[%s3363 + $0x20] sm:$0xff]
    %v3369 = vld [vmem:[%s3363 + $0x28] sm:$0xff]
    %v3370 = vld [vmem:[%s3363 + $0x30] sm:$0xff]
    %v3371 = vld [vmem:[%s3363 + $0x38] sm:$0xff]
    %v3372 = vld [vmem:[%s3363 + $0x40] sm:$0xff]
    %v3373 = vld [vmem:[%s3363 + $0x48] sm:$0xff]
    %v3374 = vld [vmem:[%s3363 + $0x50] sm:$0xff]
    %v3375 = vld [vmem:[%s3363 + $0x58] sm:$0xff]
    %v3376 = vld [vmem:[%s3363 + $0x60] sm:$0xff]
    %v3377 = vld [vmem:[%s3363 + $0x68] sm:$0xff]
    %v3378 = vld [vmem:[%s3363 + $0x70] sm:$0xff]
    %v3379 = vld [vmem:[%s3363 + $0x78] sm:$0xff]
    %v3380 = vld [vmem:[%s3363 + $0x80] sm:$0xff]
    %v3381 = vld [vmem:[%s3363 + $0x88] sm:$0xff]
    %v3382 = vld [vmem:[%s3363 + $0x90] sm:$0xff]
    %v3383 = vld [vmem:[%s3363 + $0x98] sm:$0xff]
    %v3384 = vld [vmem:[%s3363 + $0xa0] sm:$0xff]
    %v3385 = vld [vmem:[%s3363 + $0xa8] sm:$0xff]
    %v3386 = vld [vmem:[%s3363 + $0xb0] sm:$0xff]
    %v3387 = vld [vmem:[%s3363 + $0xb8] sm:$0xff]
    %v3388 = vld [vmem:[%s3363 + $0xc0] sm:$0xff]
    %v3389 = vld [vmem:[%s3363 + $0xc8] sm:$0xff]
    %v3390 = vld [vmem:[%s3363 + $0xd0] sm:$0xff]
    %v3391 = vld [vmem:[%s3363 + $0xd8] sm:$0xff]
    %v3392 = vld [vmem:[%s3363 + $0xe0] sm:$0xff]
    %v3393 = vld [vmem:[%s3363 + $0xe8] sm:$0xff]
    %v3394 = vld [vmem:[%s3363 + $0xf0] sm:$0xff]
    %v3395 = vld [vmem:[%s3363 + $0xf8] sm:$0xff]
    %v3396 = vld [vmem:[%s3363 + $0x100] sm:$0xff]
    %v3397 = vld [vmem:[%s3363 + $0x108] sm:$0xff]
    %v3398 = vld [vmem:[%s3363 + $0x110] sm:$0xff]
    %v3399 = vld [vmem:[%s3363 + $0x118] sm:$0xff]
    %v3400 = vld [vmem:[%s3363 + $0x120] sm:$0xff]
    %v3401 = vld [vmem:[%s3363 + $0x128] sm:$0xff]
    %v3402 = vld [vmem:[%s3363 + $0x130] sm:$0xff]
    %v3403 = vld [vmem:[%s3363 + $0x138] sm:$0xff]
    %v3404 = vld [vmem:[%s3363 + $0x140] sm:$0xff]
    %v3405 = vld [vmem:[%s3363 + $0x148] sm:$0xff]
    %v3406 = vld [vmem:[%s3363 + $0x150] sm:$0xff]
    %v3407 = vld [vmem:[%s3363 + $0x158] sm:$0xff]
    %v3408 = vld [vmem:[%s3363 + $0x160] sm:$0xff]
    %v3409 = vld [vmem:[%s3363 + $0x168] sm:$0xff]
    %v3410 = vld [vmem:[%s3363 + $0x170] sm:$0xff]
    %v3411 = vld [vmem:[%s3363 + $0x178] sm:$0xff]
    %s3412 = scalar_lea.vmem [#allocation3], 768
    %v3413 = vld [vmem:[%s3412] sm:$0xff]
    %v3414 = vld [vmem:[%s3412 + $0x8] sm:$0xff]
    %v3415 = vld [vmem:[%s3412 + $0x10] sm:$0xff]
    %v3416 = vld [vmem:[%s3412 + $0x18] sm:$0xff]
    %v3417 = vld [vmem:[%s3412 + $0x20] sm:$0xff]
    %v3418 = vld [vmem:[%s3412 + $0x28] sm:$0xff]
    %v3419 = vld [vmem:[%s3412 + $0x30] sm:$0xff]
    %v3420 = vld [vmem:[%s3412 + $0x38] sm:$0xff]
    %v3421 = vld [vmem:[%s3412 + $0x40] sm:$0xff]
    %v3422 = vld [vmem:[%s3412 + $0x48] sm:$0xff]
    %v3423 = vld [vmem:[%s3412 + $0x50] sm:$0xff]
    %v3424 = vld [vmem:[%s3412 + $0x58] sm:$0xff]
    %v3425 = vld [vmem:[%s3412 + $0x60] sm:$0xff]
    %v3426 = vld [vmem:[%s3412 + $0x68] sm:$0xff]
    %v3427 = vld [vmem:[%s3412 + $0x70] sm:$0xff]
    %v3428 = vld [vmem:[%s3412 + $0x78] sm:$0xff]
    %v3429 = vld [vmem:[%s3412 + $0x80] sm:$0xff]
    %v3430 = vld [vmem:[%s3412 + $0x88] sm:$0xff]
    %v3431 = vld [vmem:[%s3412 + $0x90] sm:$0xff]
    %v3432 = vld [vmem:[%s3412 + $0x98] sm:$0xff]
    %v3433 = vld [vmem:[%s3412 + $0xa0] sm:$0xff]
    %v3434 = vld [vmem:[%s3412 + $0xa8] sm:$0xff]
    %v3435 = vld [vmem:[%s3412 + $0xb0] sm:$0xff]
    %v3436 = vld [vmem:[%s3412 + $0xb8] sm:$0xff]
    %v3437 = vld [vmem:[%s3412 + $0xc0] sm:$0xff]
    %v3438 = vld [vmem:[%s3412 + $0xc8] sm:$0xff]
    %v3439 = vld [vmem:[%s3412 + $0xd0] sm:$0xff]
    %v3440 = vld [vmem:[%s3412 + $0xd8] sm:$0xff]
    %v3441 = vld [vmem:[%s3412 + $0xe0] sm:$0xff]
    %v3442 = vld [vmem:[%s3412 + $0xe8] sm:$0xff]
    %v3443 = vld [vmem:[%s3412 + $0xf0] sm:$0xff]
    %v3444 = vld [vmem:[%s3412 + $0xf8] sm:$0xff]
    %v3445 = vld [vmem:[%s3412 + $0x100] sm:$0xff]
    %v3446 = vld [vmem:[%s3412 + $0x108] sm:$0xff]
    %v3447 = vld [vmem:[%s3412 + $0x110] sm:$0xff]
    %v3448 = vld [vmem:[%s3412 + $0x118] sm:$0xff]
    %v3449 = vld [vmem:[%s3412 + $0x120] sm:$0xff]
    %v3450 = vld [vmem:[%s3412 + $0x128] sm:$0xff]
    %v3451 = vld [vmem:[%s3412 + $0x130] sm:$0xff]
    %v3452 = vld [vmem:[%s3412 + $0x138] sm:$0xff]
    %v3453 = vld [vmem:[%s3412 + $0x140] sm:$0xff]
    %v3454 = vld [vmem:[%s3412 + $0x148] sm:$0xff]
    %v3455 = vld [vmem:[%s3412 + $0x150] sm:$0xff]
    %v3456 = vld [vmem:[%s3412 + $0x158] sm:$0xff]
    %v3457 = vld [vmem:[%s3412 + $0x160] sm:$0xff]
    %v3458 = vld [vmem:[%s3412 + $0x168] sm:$0xff]
    %v3459 = vld [vmem:[%s3412 + $0x170] sm:$0xff]
    %v3460 = vld [vmem:[%s3412 + $0x178] sm:$0xff]
    %s3461 = scalar_lea.vmem %s3, 12
    %v3462 = vld [vmem:[%s3461] sm:$0x3f]
    %v3464 = vperm.slane %v3462, 0
    %v3465 = vperm.slane %v3462, 2
    %v3466 = vperm.slane %v3462, 4
    %v3470 = vperm.slane %v3464, 0
    %v3471 = vperm.slane %v3465, 0
    %v3472 = vperm.slane %v3466, 0
    %3473 = vmatpush.msra.mxu0 %v3409
    %3474 = vmatpush.msra.mxu0 %v3406
    %3475 = vmatpush.msra.mxu0 %v3403
    %3476 = vmatpush.msra.mxu0 %v3400
    %3477 = vmatpush.msra.mxu0 %v3397
    %3478 = vmatpush.msra.mxu0 %v3394
    %3479 = vmatpush.msra.mxu0 %v3391
    %3480 = vmatpush.msra.mxu0 %v3388
    %3481 = vmatpush.msra.mxu0 %v3385
    %3482 = vmatpush.msra.mxu0 %v3382
    %3483 = vmatpush.msra.mxu0 %v3379
    %3484 = vmatpush.msra.mxu0 %v3376
    %3485 = vmatpush.msra.mxu0 %v3373
    %3486 = vmatpush.msra.mxu0 %v3370
    %3487 = vmatpush.msra.mxu0 %v3367
    %3488 = vmatpush.msra.mxu0 %v3364
    %3489 = vmatmul.f32.gmra.mxu0 %v3347
    %v3490 = vpop.f32.mrf.mxu0
    %v3491 = vadd.f32 %v3470, %v3490
    %3492 = vmatmul.f32.gmra.mxu0 %v3348
    %v3493 = vpop.f32.mrf.mxu0
    %v3494 = vadd.f32 %v3470, %v3493
    %3495 = vmatmul.f32.gmra.mxu0 %v3349
    %v3496 = vpop.f32.mrf.mxu0
    %v3497 = vadd.f32 %v3470, %v3496
    %3498 = vmatmul.f32.gmra.mxu0 %v3350
    %v3499 = vpop.f32.mrf.mxu0
    %v3500 = vadd.f32 %v3470, %v3499
    %3501 = vmatmul.f32.gmra.mxu0 %v3351
    %v3502 = vpop.f32.mrf.mxu0
    %v3503 = vadd.f32 %v3470, %v3502
    %3504 = vmatmul.f32.gmra.mxu0 %v3352
    %v3505 = vpop.f32.mrf.mxu0
    %v3506 = vadd.f32 %v3470, %v3505
    %3507 = vmatmul.f32.gmra.mxu0 %v3353
    %v3508 = vpop.f32.mrf.mxu0
    %v3509 = vadd.f32 %v3470, %v3508
    %3510 = vmatmul.f32.gmra.mxu0 %v3354
    %v3511 = vpop.f32.mrf.mxu0
    %v3512 = vadd.f32 %v3470, %v3511
    %3513 = vmatmul.f32.gmra.mxu0 %v3355
    %v3514 = vpop.f32.mrf.mxu0
    %v3515 = vadd.f32 %v3470, %v3514
    %3516 = vmatmul.f32.gmra.mxu0 %v3356
    %v3517 = vpop.f32.mrf.mxu0
    %v3518 = vadd.f32 %v3470, %v3517
    %3519 = vmatmul.f32.gmra.mxu0 %v3357
    %v3520 = vpop.f32.mrf.mxu0
    %v3521 = vadd.f32 %v3470, %v3520
    %3522 = vmatmul.f32.gmra.mxu0 %v3358
    %v3523 = vpop.f32.mrf.mxu0
    %v3524 = vadd.f32 %v3470, %v3523
    %3525 = vmatmul.f32.gmra.mxu0 %v3359
    %v3526 = vpop.f32.mrf.mxu0
    %v3527 = vadd.f32 %v3470, %v3526
    %3528 = vmatmul.f32.gmra.mxu0 %v3360
    %v3529 = vpop.f32.mrf.mxu0
    %v3530 = vadd.f32 %v3470, %v3529
    %3531 = vmatmul.f32.gmra.mxu0 %v3361
    %v3532 = vpop.f32.mrf.mxu0
    %v3533 = vadd.f32 %v3470, %v3532
    %3534 = vmatmul.f32.gmra.mxu0 %v3362
    %v3535 = vpop.f32.mrf.mxu0
    %v3536 = vadd.f32 %v3470, %v3535
    %3537 = vdwg.mxu0
    %3538 = vmatpush.msra.mxu0 %v3410
    %3539 = vmatpush.msra.mxu0 %v3407
    %3540 = vmatpush.msra.mxu0 %v3404
    %3541 = vmatpush.msra.mxu0 %v3401
    %3542 = vmatpush.msra.mxu0 %v3398
    %3543 = vmatpush.msra.mxu0 %v3395
    %3544 = vmatpush.msra.mxu0 %v3392
    %3545 = vmatpush.msra.mxu0 %v3389
    %3546 = vmatpush.msra.mxu0 %v3386
    %3547 = vmatpush.msra.mxu0 %v3383
    %3548 = vmatpush.msra.mxu0 %v3380
    %3549 = vmatpush.msra.mxu0 %v3377
    %3550 = vmatpush.msra.mxu0 %v3374
    %3551 = vmatpush.msra.mxu0 %v3371
    %3552 = vmatpush.msra.mxu0 %v3368
    %3553 = vmatpush.msra.mxu0 %v3365
    %3554 = vmatmul.f32.gmra.mxu0 %v3347
    %v3555 = vpop.f32.mrf.mxu0
    %v3556 = vadd.f32 %v3471, %v3555
    %3557 = vmatmul.f32.gmra.mxu0 %v3348
    %v3558 = vpop.f32.mrf.mxu0
    %v3559 = vadd.f32 %v3471, %v3558
    %3560 = vmatmul.f32.gmra.mxu0 %v3349
    %v3561 = vpop.f32.mrf.mxu0
    %v3562 = vadd.f32 %v3471, %v3561
    %3563 = vmatmul.f32.gmra.mxu0 %v3350
    %v3564 = vpop.f32.mrf.mxu0
    %v3565 = vadd.f32 %v3471, %v3564
    %3566 = vmatmul.f32.gmra.mxu0 %v3351
    %v3567 = vpop.f32.mrf.mxu0
    %v3568 = vadd.f32 %v3471, %v3567
    %3569 = vmatmul.f32.gmra.mxu0 %v3352
    %v3570 = vpop.f32.mrf.mxu0
    %v3571 = vadd.f32 %v3471, %v3570
    %3572 = vmatmul.f32.gmra.mxu0 %v3353
    %v3573 = vpop.f32.mrf.mxu0
    %v3574 = vadd.f32 %v3471, %v3573
    %3575 = vmatmul.f32.gmra.mxu0 %v3354
    %v3576 = vpop.f32.mrf.mxu0
    %v3577 = vadd.f32 %v3471, %v3576
    %3578 = vmatmul.f32.gmra.mxu0 %v3355
    %v3579 = vpop.f32.mrf.mxu0
    %v3580 = vadd.f32 %v3471, %v3579
    %3581 = vmatmul.f32.gmra.mxu0 %v3356
    %v3582 = vpop.f32.mrf.mxu0
    %v3583 = vadd.f32 %v3471, %v3582
    %3584 = vmatmul.f32.gmra.mxu0 %v3357
    %v3585 = vpop.f32.mrf.mxu0
    %v3586 = vadd.f32 %v3471, %v3585
    %3587 = vmatmul.f32.gmra.mxu0 %v3358
    %v3588 = vpop.f32.mrf.mxu0
    %v3589 = vadd.f32 %v3471, %v3588
    %3590 = vmatmul.f32.gmra.mxu0 %v3359
    %v3591 = vpop.f32.mrf.mxu0
    %v3592 = vadd.f32 %v3471, %v3591
    %3593 = vmatmul.f32.gmra.mxu0 %v3360
    %v3594 = vpop.f32.mrf.mxu0
    %v3595 = vadd.f32 %v3471, %v3594
    %3596 = vmatmul.f32.gmra.mxu0 %v3361
    %v3597 = vpop.f32.mrf.mxu0
    %v3598 = vadd.f32 %v3471, %v3597
    %3599 = vmatmul.f32.gmra.mxu0 %v3362
    %v3600 = vpop.f32.mrf.mxu0
    %v3601 = vadd.f32 %v3471, %v3600
    %3602 = vdwg.mxu0
    %3603 = vmatpush.msra.mxu0 %v3411
    %3604 = vmatpush.msra.mxu0 %v3408
    %3605 = vmatpush.msra.mxu0 %v3405
    %3606 = vmatpush.msra.mxu0 %v3402
    %3607 = vmatpush.msra.mxu0 %v3399
    %3608 = vmatpush.msra.mxu0 %v3396
    %3609 = vmatpush.msra.mxu0 %v3393
    %3610 = vmatpush.msra.mxu0 %v3390
    %3611 = vmatpush.msra.mxu0 %v3387
    %3612 = vmatpush.msra.mxu0 %v3384
    %3613 = vmatpush.msra.mxu0 %v3381
    %3614 = vmatpush.msra.mxu0 %v3378
    %3615 = vmatpush.msra.mxu0 %v3375
    %3616 = vmatpush.msra.mxu0 %v3372
    %3617 = vmatpush.msra.mxu0 %v3369
    %3618 = vmatpush.msra.mxu0 %v3366
    %3619 = vmatmul.f32.gmra.mxu0 %v3347
    %v3620 = vpop.f32.mrf.mxu0
    %v3621 = vadd.f32 %v3472, %v3620
    %3622 = vmatmul.f32.gmra.mxu0 %v3348
    %v3623 = vpop.f32.mrf.mxu0
    %v3624 = vadd.f32 %v3472, %v3623
    %3625 = vmatmul.f32.gmra.mxu0 %v3349
    %v3626 = vpop.f32.mrf.mxu0
    %v3627 = vadd.f32 %v3472, %v3626
    %3628 = vmatmul.f32.gmra.mxu0 %v3350
    %v3629 = vpop.f32.mrf.mxu0
    %v3630 = vadd.f32 %v3472, %v3629
    %3631 = vmatmul.f32.gmra.mxu0 %v3351
    %v3632 = vpop.f32.mrf.mxu0
    %v3633 = vadd.f32 %v3472, %v3632
    %3634 = vmatmul.f32.gmra.mxu0 %v3352
    %v3635 = vpop.f32.mrf.mxu0
    %v3636 = vadd.f32 %v3472, %v3635
    %3637 = vmatmul.f32.gmra.mxu0 %v3353
    %v3638 = vpop.f32.mrf.mxu0
    %v3639 = vadd.f32 %v3472, %v3638
    %3640 = vmatmul.f32.gmra.mxu0 %v3354
    %v3641 = vpop.f32.mrf.mxu0
    %v3642 = vadd.f32 %v3472, %v3641
    %3643 = vmatmul.f32.gmra.mxu0 %v3355
    %v3644 = vpop.f32.mrf.mxu0
    %v3645 = vadd.f32 %v3472, %v3644
    %3646 = vmatmul.f32.gmra.mxu0 %v3356
    %v3647 = vpop.f32.mrf.mxu0
    %v3648 = vadd.f32 %v3472, %v3647
    %3649 = vmatmul.f32.gmra.mxu0 %v3357
    %v3650 = vpop.f32.mrf.mxu0
    %v3651 = vadd.f32 %v3472, %v3650
    %3652 = vmatmul.f32.gmra.mxu0 %v3358
    %v3653 = vpop.f32.mrf.mxu0
    %v3654 = vadd.f32 %v3472, %v3653
    %3655 = vmatmul.f32.gmra.mxu0 %v3359
    %v3656 = vpop.f32.mrf.mxu0
    %v3657 = vadd.f32 %v3472, %v3656
    %3658 = vmatmul.f32.gmra.mxu0 %v3360
    %v3659 = vpop.f32.mrf.mxu0
    %v3660 = vadd.f32 %v3472, %v3659
    %3661 = vmatmul.f32.gmra.mxu0 %v3361
    %v3662 = vpop.f32.mrf.mxu0
    %v3663 = vadd.f32 %v3472, %v3662
    %3664 = vmatmul.f32.gmra.mxu0 %v3362
    %v3665 = vpop.f32.mrf.mxu0
    %v3666 = vadd.f32 %v3472, %v3665
    %3667 = vdwg.mxu0
    %v3668 = vperm.slane %v3462, 1
    %v3669 = vperm.slane %v3462, 3
    %v3670 = vperm.slane %v3462, 5
    %v3674 = vperm.slane %v3668, 1
    %v3675 = vperm.slane %v3669, 1
    %v3676 = vperm.slane %v3670, 1
    %3677 = vmatpush.msra.mxu0 %v3458
    %3678 = vmatpush.msra.mxu0 %v3455
    %3679 = vmatpush.msra.mxu0 %v3452
    %3680 = vmatpush.msra.mxu0 %v3449
    %3681 = vmatpush.msra.mxu0 %v3446
    %3682 = vmatpush.msra.mxu0 %v3443
    %3683 = vmatpush.msra.mxu0 %v3440
    %3684 = vmatpush.msra.mxu0 %v3437
    %3685 = vmatpush.msra.mxu0 %v3434
    %3686 = vmatpush.msra.mxu0 %v3431
    %3687 = vmatpush.msra.mxu0 %v3428
    %3688 = vmatpush.msra.mxu0 %v3425
    %3689 = vmatpush.msra.mxu0 %v3422
    %3690 = vmatpush.msra.mxu0 %v3419
    %3691 = vmatpush.msra.mxu0 %v3416
    %3692 = vmatpush.msra.mxu0 %v3413
    %3693 = vmatmul.f32.gmra.mxu0 0.0
    %v3694 = vpop.f32.mrf.mxu0
    %v3695 = vadd.f32 %v3674, %v3694
    %3696 = vmatmul.f32.gmra.mxu0 0.0
    %v3697 = vpop.f32.mrf.mxu0
    %v3698 = vadd.f32 %v3674, %v3697
    %3699 = vdwg.mxu0
    %3700 = vmatpush.msra.mxu0 %v3459
    %3701 = vmatpush.msra.mxu0 %v3456
    %3702 = vmatpush.msra.mxu0 %v3453
    %3703 = vmatpush.msra.mxu0 %v3450
    %3704 = vmatpush.msra.mxu0 %v3447
    %3705 = vmatpush.msra.mxu0 %v3444
    %3706 = vmatpush.msra.mxu0 %v3441
    %3707 = vmatpush.msra.mxu0 %v3438
    %3708 = vmatpush.msra.mxu0 %v3435
    %3709 = vmatpush.msra.mxu0 %v3432
    %3710 = vmatpush.msra.mxu0 %v3429
    %3711 = vmatpush.msra.mxu0 %v3426
    %3712 = vmatpush.msra.mxu0 %v3423
    %3713 = vmatpush.msra.mxu0 %v3420
    %3714 = vmatpush.msra.mxu0 %v3417
    %3715 = vmatpush.msra.mxu0 %v3414
    %3716 = vmatmul.f32.gmra.mxu0 0.0
    %v3717 = vpop.f32.mrf.mxu0
    %v3718 = vadd.f32 %v3675, %v3717
    %3719 = vmatmul.f32.gmra.mxu0 0.0
    %v3720 = vpop.f32.mrf.mxu0
    %v3721 = vadd.f32 %v3675, %v3720
    %3722 = vdwg.mxu0
    %3723 = vmatpush.msra.mxu0 %v3460
    %3724 = vmatpush.msra.mxu0 %v3457
    %3725 = vmatpush.msra.mxu0 %v3454
    %3726 = vmatpush.msra.mxu0 %v3451
    %3727 = vmatpush.msra.mxu0 %v3448
    %3728 = vmatpush.msra.mxu0 %v3445
    %3729 = vmatpush.msra.mxu0 %v3442
    %3730 = vmatpush.msra.mxu0 %v3439
    %3731 = vmatpush.msra.mxu0 %v3436
    %3732 = vmatpush.msra.mxu0 %v3433
    %3733 = vmatpush.msra.mxu0 %v3430
    %3734 = vmatpush.msra.mxu0 %v3427
    %3735 = vmatpush.msra.mxu0 %v3424
    %3736 = vmatpush.msra.mxu0 %v3421
    %3737 = vmatpush.msra.mxu0 %v3418
    %3738 = vmatpush.msra.mxu0 %v3415
    %3739 = vmatmul.f32.gmra.mxu0 0.0
    %v3740 = vpop.f32.mrf.mxu0
    %v3741 = vadd.f32 %v3676, %v3740
    %3742 = vmatmul.f32.gmra.mxu0 0.0
    %v3743 = vpop.f32.mrf.mxu0
    %v3744 = vadd.f32 %v3676, %v3743
    %3745 = vdwg.mxu0
    %v3746 = vadd.f32 %v3491, %v3695
    %v3747 = vadd.f32 %v3494, %v3698
    %v3748 = vxor.u32 %v3746, 2147483648
    %v3749 = vxor.u32 %v3747, 2147483648
    %v3750 = vmul.f32 %v3748, 1.442695
    %v3751 = vpow.pop %v3750
    %v3752 = vmul.f32 %v3749, 1.442695
    %v3753 = vpow.pop %v3752
    %v3754 = vadd.f32 %v3751, 1.0
    %v3755 = vadd.f32 %v3753, 1.0
    %v3756 = vrcp.pop %v3754
    %v3757 = vmul.f32 %v3754, %v3756
    %v3758 = vsub.f32 1.0, %v3757
    %v3759 = vmul.f32 %v3756, %v3758
    %v3760 = vadd.f32 %v3756, %v3759
    %vm3761 = vweird.f32 %v3754
    %vm3762 = vweird.f32 %v3756
    %vm3763 = vmor %vm3761, %vm3762
    %v3764 = vsel %vm3763, %v3756, %v3760
    %v3765 = vand.u32 2147483647, %v3754
    %vm3766 = vcmp.eq.f32.partialorder %v3765, 8.507059e+37
    %v3767 = vand.u32 %v3754, 2147483648
    %v3768 = vor.u32 1.1754944e-38, %v3767
    %v3769 = vsel %vm3766, %v3768, %v3764
    %v3770 = vmul.f32 1.0, %v3769
    %v3771 = vrcp.pop %v3755
    %v3772 = vmul.f32 %v3755, %v3771
    %v3773 = vsub.f32 1.0, %v3772
    %v3774 = vmul.f32 %v3771, %v3773
    %v3775 = vadd.f32 %v3771, %v3774
    %vm3776 = vweird.f32 %v3755
    %vm3777 = vweird.f32 %v3771
    %vm3778 = vmor %vm3776, %vm3777
    %v3779 = vsel %vm3778, %v3771, %v3775
    %v3780 = vand.u32 2147483647, %v3755
    %vm3781 = vcmp.eq.f32.partialorder %v3780, 8.507059e+37
    %v3782 = vand.u32 %v3755, 2147483648
    %v3783 = vor.u32 1.1754944e-38, %v3782
    %v3784 = vsel %vm3781, %v3783, %v3779
    %v3785 = vmul.f32 1.0, %v3784
    %v3786 = vadd.f32 %v3556, %v3718
    %v3787 = vadd.f32 %v3559, %v3721
    %v3788 = vxor.u32 %v3786, 2147483648
    %v3789 = vxor.u32 %v3787, 2147483648
    %v3790 = vmul.f32 %v3788, 1.442695
    %v3791 = vpow.pop %v3790
    %v3792 = vmul.f32 %v3789, 1.442695
    %v3793 = vpow.pop %v3792
    %v3794 = vadd.f32 %v3791, 1.0
    %v3795 = vadd.f32 %v3793, 1.0
    %v3796 = vrcp.pop %v3794
    %v3797 = vmul.f32 %v3794, %v3796
    %v3798 = vsub.f32 1.0, %v3797
    %v3799 = vmul.f32 %v3796, %v3798
    %v3800 = vadd.f32 %v3796, %v3799
    %vm3801 = vweird.f32 %v3794
    %vm3802 = vweird.f32 %v3796
    %vm3803 = vmor %vm3801, %vm3802
    %v3804 = vsel %vm3803, %v3796, %v3800
    %v3805 = vand.u32 2147483647, %v3794
    %vm3806 = vcmp.eq.f32.partialorder %v3805, 8.507059e+37
    %v3807 = vand.u32 %v3794, 2147483648
    %v3808 = vor.u32 1.1754944e-38, %v3807
    %v3809 = vsel %vm3806, %v3808, %v3804
    %v3810 = vmul.f32 1.0, %v3809
    %v3811 = vrcp.pop %v3795
    %v3812 = vmul.f32 %v3795, %v3811
    %v3813 = vsub.f32 1.0, %v3812
    %v3814 = vmul.f32 %v3811, %v3813
    %v3815 = vadd.f32 %v3811, %v3814
    %vm3816 = vweird.f32 %v3795
    %vm3817 = vweird.f32 %v3811
    %vm3818 = vmor %vm3816, %vm3817
    %v3819 = vsel %vm3818, %v3811, %v3815
    %v3820 = vand.u32 2147483647, %v3795
    %vm3821 = vcmp.eq.f32.partialorder %v3820, 8.507059e+37
    %v3822 = vand.u32 %v3795, 2147483648
    %v3823 = vor.u32 1.1754944e-38, %v3822
    %v3824 = vsel %vm3821, %v3823, %v3819
    %v3825 = vmul.f32 1.0, %v3824
    %v3826 = vmul.f32 %v3770, %v3741
    %v3827 = vmul.f32 %v3785, %v3744
    %v3828 = vadd.f32 %v3621, %v3826
    %v3829 = vadd.f32 %v3624, %v3827
    %v3830 = vtanh.pop %v3828
    %v3831 = vtanh.pop %v3829
    %v3832 = vsub.f32 1.0, %v3810
    %v3833 = vsub.f32 1.0, %v3825
    %v3834 = vmul.f32 %v3832, %v3830
    %v3835 = vmul.f32 %v3833, %v3831
    %v3836 = vmul.f32 %v3810, 0.0
    %v3837 = vmul.f32 %v3825, 0.0
    %v3838 = vadd.f32 %v3834, %v3836
    %v3839 = vadd.f32 %v3835, %v3837
    %3840 = vst [vmem:[#allocation2] sm:$0xff] %v3838
    %3841 = vst [vmem:[#allocation2 + $0x8] sm:$0xff] %v3839
    %3842 = vmatpush.msra.mxu0 %v3458
    %3843 = vmatpush.msra.mxu0 %v3455
    %3844 = vmatpush.msra.mxu0 %v3452
    %3845 = vmatpush.msra.mxu0 %v3449
    %3846 = vmatpush.msra.mxu0 %v3446
    %3847 = vmatpush.msra.mxu0 %v3443
    %3848 = vmatpush.msra.mxu0 %v3440
    %3849 = vmatpush.msra.mxu0 %v3437
    %3850 = vmatpush.msra.mxu0 %v3434
    %3851 = vmatpush.msra.mxu0 %v3431
    %3852 = vmatpush.msra.mxu0 %v3428
    %3853 = vmatpush.msra.mxu0 %v3425
    %3854 = vmatpush.msra.mxu0 %v3422
    %3855 = vmatpush.msra.mxu0 %v3419
    %3856 = vmatpush.msra.mxu0 %v3416
    %3857 = vmatpush.msra.mxu0 %v3413
    %3858 = vmatmul.f32.gmra.mxu0 %v3838
    %v3859 = vpop.f32.mrf.mxu0
    %v3860 = vadd.f32 %v3674, %v3859
    %3861 = vmatmul.f32.gmra.mxu0 %v3839
    %v3862 = vpop.f32.mrf.mxu0
    %v3863 = vadd.f32 %v3674, %v3862
    %3864 = vdwg.mxu0
    %3865 = vmatpush.msra.mxu0 %v3459
    %3866 = vmatpush.msra.mxu0 %v3456
    %3867 = vmatpush.msra.mxu0 %v3453
    %3868 = vmatpush.msra.mxu0 %v3450
    %3869 = vmatpush.msra.mxu0 %v3447
    %3870 = vmatpush.msra.mxu0 %v3444
    %3871 = vmatpush.msra.mxu0 %v3441
    %3872 = vmatpush.msra.mxu0 %v3438
    %3873 = vmatpush.msra.mxu0 %v3435
    %3874 = vmatpush.msra.mxu0 %v3432
    %3875 = vmatpush.msra.mxu0 %v3429
    %3876 = vmatpush.msra.mxu0 %v3426
    %3877 = vmatpush.msra.mxu0 %v3423
    %3878 = vmatpush.msra.mxu0 %v3420
    %3879 = vmatpush.msra.mxu0 %v3417
    %3880 = vmatpush.msra.mxu0 %v3414
    %3881 = vmatmul.f32.gmra.mxu0 %v3838
    %v3882 = vpop.f32.mrf.mxu0
    %v3883 = vadd.f32 %v3675, %v3882
    %3884 = vmatmul.f32.gmra.mxu0 %v3839
    %v3885 = vpop.f32.mrf.mxu0
    %v3886 = vadd.f32 %v3675, %v3885
    %3887 = vdwg.mxu0
    %3888 = vmatpush.msra.mxu0 %v3460
    %3889 = vmatpush.msra.mxu0 %v3457
    %3890 = vmatpush.msra.mxu0 %v3454
    %3891 = vmatpush.msra.mxu0 %v3451
    %3892 = vmatpush.msra.mxu0 %v3448
    %3893 = vmatpush.msra.mxu0 %v3445
    %3894 = vmatpush.msra.mxu0 %v3442
    %3895 = vmatpush.msra.mxu0 %v3439
    %3896 = vmatpush.msra.mxu0 %v3436
    %3897 = vmatpush.msra.mxu0 %v3433
    %3898 = vmatpush.msra.mxu0 %v3430
    %3899 = vmatpush.msra.mxu0 %v3427
    %3900 = vmatpush.msra.mxu0 %v3424
    %3901 = vmatpush.msra.mxu0 %v3421
    %3902 = vmatpush.msra.mxu0 %v3418
    %3903 = vmatpush.msra.mxu0 %v3415
    %3904 = vmatmul.f32.gmra.mxu0 %v3838
    %v3905 = vpop.f32.mrf.mxu0
    %v3906 = vadd.f32 %v3676, %v3905
    %3907 = vmatmul.f32.gmra.mxu0 %v3839
    %v3908 = vpop.f32.mrf.mxu0
    %v3909 = vadd.f32 %v3676, %v3908
    %3910 = vdwg.mxu0
    %v3911 = vadd.f32 %v3497, %v3860
    %v3912 = vadd.f32 %v3500, %v3863
    %v3913 = vxor.u32 %v3911, 2147483648
    %v3914 = vxor.u32 %v3912, 2147483648
    %v3915 = vmul.f32 %v3913, 1.442695
    %v3916 = vpow.pop %v3915
    %v3917 = vmul.f32 %v3914, 1.442695
    %v3918 = vpow.pop %v3917
    %v3919 = vadd.f32 %v3916, 1.0
    %v3920 = vadd.f32 %v3918, 1.0
    %v3921 = vrcp.pop %v3919
    %v3922 = vmul.f32 %v3919, %v3921
    %v3923 = vsub.f32 1.0, %v3922
    %v3924 = vmul.f32 %v3921, %v3923
    %v3925 = vadd.f32 %v3921, %v3924
    %vm3926 = vweird.f32 %v3919
    %vm3927 = vweird.f32 %v3921
    %vm3928 = vmor %vm3926, %vm3927
    %v3929 = vsel %vm3928, %v3921, %v3925
    %v3930 = vand.u32 2147483647, %v3919
    %vm3931 = vcmp.eq.f32.partialorder %v3930, 8.507059e+37
    %v3932 = vand.u32 %v3919, 2147483648
    %v3933 = vor.u32 1.1754944e-38, %v3932
    %v3934 = vsel %vm3931, %v3933, %v3929
    %v3935 = vmul.f32 1.0, %v3934
    %v3936 = vrcp.pop %v3920
    %v3937 = vmul.f32 %v3920, %v3936
    %v3938 = vsub.f32 1.0, %v3937
    %v3939 = vmul.f32 %v3936, %v3938
    %v3940 = vadd.f32 %v3936, %v3939
    %vm3941 = vweird.f32 %v3920
    %vm3942 = vweird.f32 %v3936
    %vm3943 = vmor %vm3941, %vm3942
    %v3944 = vsel %vm3943, %v3936, %v3940
    %v3945 = vand.u32 2147483647, %v3920
    %vm3946 = vcmp.eq.f32.partialorder %v3945, 8.507059e+37
    %v3947 = vand.u32 %v3920, 2147483648
    %v3948 = vor.u32 1.1754944e-38, %v3947
    %v3949 = vsel %vm3946, %v3948, %v3944
    %v3950 = vmul.f32 1.0, %v3949
    %v3951 = vadd.f32 %v3562, %v3883
    %v3952 = vadd.f32 %v3565, %v3886
    %v3953 = vxor.u32 %v3951, 2147483648
    %v3954 = vxor.u32 %v3952, 2147483648
    %v3955 = vmul.f32 %v3953, 1.442695
    %v3956 = vpow.pop %v3955
    %v3957 = vmul.f32 %v3954, 1.442695
    %v3958 = vpow.pop %v3957
    %v3959 = vadd.f32 %v3956, 1.0
    %v3960 = vadd.f32 %v3958, 1.0
    %v3961 = vrcp.pop %v3959
    %v3962 = vmul.f32 %v3959, %v3961
    %v3963 = vsub.f32 1.0, %v3962
    %v3964 = vmul.f32 %v3961, %v3963
    %v3965 = vadd.f32 %v3961, %v3964
    %vm3966 = vweird.f32 %v3959
    %vm3967 = vweird.f32 %v3961
    %vm3968 = vmor %vm3966, %vm3967
    %v3969 = vsel %vm3968, %v3961, %v3965
    %v3970 = vand.u32 2147483647, %v3959
    %vm3971 = vcmp.eq.f32.partialorder %v3970, 8.507059e+37
    %v3972 = vand.u32 %v3959, 2147483648
    %v3973 = vor.u32 1.1754944e-38, %v3972
    %v3974 = vsel %vm3971, %v3973, %v3969
    %v3975 = vmul.f32 1.0, %v3974
    %v3976 = vrcp.pop %v3960
    %v3977 = vmul.f32 %v3960, %v3976
    %v3978 = vsub.f32 1.0, %v3977
    %v3979 = vmul.f32 %v3976, %v3978
    %v3980 = vadd.f32 %v3976, %v3979
    %vm3981 = vweird.f32 %v3960
    %vm3982 = vweird.f32 %v3976
    %vm3983 = vmor %vm3981, %vm3982
    %v3984 = vsel %vm3983, %v3976, %v3980
    %v3985 = vand.u32 2147483647, %v3960
    %vm3986 = vcmp.eq.f32.partialorder %v3985, 8.507059e+37
    %v3987 = vand.u32 %v3960, 2147483648
    %v3988 = vor.u32 1.1754944e-38, %v3987
    %v3989 = vsel %vm3986, %v3988, %v3984
    %v3990 = vmul.f32 1.0, %v3989
    %v3991 = vmul.f32 %v3935, %v3906
    %v3992 = vmul.f32 %v3950, %v3909
    %v3993 = vadd.f32 %v3627, %v3991
    %v3994 = vadd.f32 %v3630, %v3992
    %v3995 = vtanh.pop %v3993
    %v3996 = vtanh.pop %v3994
    %v3997 = vsub.f32 1.0, %v3975
    %v3998 = vsub.f32 1.0, %v3990
    %v3999 = vmul.f32 %v3997, %v3995
    %v4000 = vmul.f32 %v3998, %v3996
    %v4001 = vmul.f32 %v3975, %v3838
    %v4002 = vmul.f32 %v3990, %v3839
    %v4003 = vadd.f32 %v3999, %v4001
    %v4004 = vadd.f32 %v4000, %v4002
    %4005 = vst [vmem:[#allocation2 + $0x10] sm:$0xff] %v4003
    %4006 = vst [vmem:[#allocation2 + $0x18] sm:$0xff] %v4004
    %4007 = vmatpush.msra.mxu0 %v3458
    %4008 = vmatpush.msra.mxu0 %v3455
    %4009 = vmatpush.msra.mxu0 %v3452
    %4010 = vmatpush.msra.mxu0 %v3449
    %4011 = vmatpush.msra.mxu0 %v3446
    %4012 = vmatpush.msra.mxu0 %v3443
    %4013 = vmatpush.msra.mxu0 %v3440
    %4014 = vmatpush.msra.mxu0 %v3437
    %4015 = vmatpush.msra.mxu0 %v3434
    %4016 = vmatpush.msra.mxu0 %v3431
    %4017 = vmatpush.msra.mxu0 %v3428
    %4018 = vmatpush.msra.mxu0 %v3425
    %4019 = vmatpush.msra.mxu0 %v3422
    %4020 = vmatpush.msra.mxu0 %v3419
    %4021 = vmatpush.msra.mxu0 %v3416
    %4022 = vmatpush.msra.mxu0 %v3413
    %4023 = vmatmul.f32.gmra.mxu0 %v4003
    %v4024 = vpop.f32.mrf.mxu0
    %v4025 = vadd.f32 %v3674, %v4024
    %4026 = vmatmul.f32.gmra.mxu0 %v4004
    %v4027 = vpop.f32.mrf.mxu0
    %v4028 = vadd.f32 %v3674, %v4027
    %4029 = vdwg.mxu0
    %4030 = vmatpush.msra.mxu0 %v3459
    %4031 = vmatpush.msra.mxu0 %v3456
    %4032 = vmatpush.msra.mxu0 %v3453
    %4033 = vmatpush.msra.mxu0 %v3450
    %4034 = vmatpush.msra.mxu0 %v3447
    %4035 = vmatpush.msra.mxu0 %v3444
    %4036 = vmatpush.msra.mxu0 %v3441
    %4037 = vmatpush.msra.mxu0 %v3438
    %4038 = vmatpush.msra.mxu0 %v3435
    %4039 = vmatpush.msra.mxu0 %v3432
    %4040 = vmatpush.msra.mxu0 %v3429
    %4041 = vmatpush.msra.mxu0 %v3426
    %4042 = vmatpush.msra.mxu0 %v3423
    %4043 = vmatpush.msra.mxu0 %v3420
    %4044 = vmatpush.msra.mxu0 %v3417
    %4045 = vmatpush.msra.mxu0 %v3414
    %4046 = vmatmul.f32.gmra.mxu0 %v4003
    %v4047 = vpop.f32.mrf.mxu0
    %v4048 = vadd.f32 %v3675, %v4047
    %4049 = vmatmul.f32.gmra.mxu0 %v4004
    %v4050 = vpop.f32.mrf.mxu0
    %v4051 = vadd.f32 %v3675, %v4050
    %4052 = vdwg.mxu0
    %4053 = vmatpush.msra.mxu0 %v3460
    %4054 = vmatpush.msra.mxu0 %v3457
    %4055 = vmatpush.msra.mxu0 %v3454
    %4056 = vmatpush.msra.mxu0 %v3451
    %4057 = vmatpush.msra.mxu0 %v3448
    %4058 = vmatpush.msra.mxu0 %v3445
    %4059 = vmatpush.msra.mxu0 %v3442
    %4060 = vmatpush.msra.mxu0 %v3439
    %4061 = vmatpush.msra.mxu0 %v3436
    %4062 = vmatpush.msra.mxu0 %v3433
    %4063 = vmatpush.msra.mxu0 %v3430
    %4064 = vmatpush.msra.mxu0 %v3427
    %4065 = vmatpush.msra.mxu0 %v3424
    %4066 = vmatpush.msra.mxu0 %v3421
    %4067 = vmatpush.msra.mxu0 %v3418
    %4068 = vmatpush.msra.mxu0 %v3415
    %4069 = vmatmul.f32.gmra.mxu0 %v4003
    %v4070 = vpop.f32.mrf.mxu0
    %v4071 = vadd.f32 %v3676, %v4070
    %4072 = vmatmul.f32.gmra.mxu0 %v4004
    %v4073 = vpop.f32.mrf.mxu0
    %v4074 = vadd.f32 %v3676, %v4073
    %4075 = vdwg.mxu0
    %v4076 = vadd.f32 %v3503, %v4025
    %v4077 = vadd.f32 %v3506, %v4028
    %v4078 = vxor.u32 %v4076, 2147483648
    %v4079 = vxor.u32 %v4077, 2147483648
    %v4080 = vmul.f32 %v4078, 1.442695
    %v4081 = vpow.pop %v4080
    %v4082 = vmul.f32 %v4079, 1.442695
    %v4083 = vpow.pop %v4082
    %v4084 = vadd.f32 %v4081, 1.0
    %v4085 = vadd.f32 %v4083, 1.0
    %v4086 = vrcp.pop %v4084
    %v4087 = vmul.f32 %v4084, %v4086
    %v4088 = vsub.f32 1.0, %v4087
    %v4089 = vmul.f32 %v4086, %v4088
    %v4090 = vadd.f32 %v4086, %v4089
    %vm4091 = vweird.f32 %v4084
    %vm4092 = vweird.f32 %v4086
    %vm4093 = vmor %vm4091, %vm4092
    %v4094 = vsel %vm4093, %v4086, %v4090
    %v4095 = vand.u32 2147483647, %v4084
    %vm4096 = vcmp.eq.f32.partialorder %v4095, 8.507059e+37
    %v4097 = vand.u32 %v4084, 2147483648
    %v4098 = vor.u32 1.1754944e-38, %v4097
    %v4099 = vsel %vm4096, %v4098, %v4094
    %v4100 = vmul.f32 1.0, %v4099
    %v4101 = vrcp.pop %v4085
    %v4102 = vmul.f32 %v4085, %v4101
    %v4103 = vsub.f32 1.0, %v4102
    %v4104 = vmul.f32 %v4101, %v4103
    %v4105 = vadd.f32 %v4101, %v4104
    %vm4106 = vweird.f32 %v4085
    %vm4107 = vweird.f32 %v4101
    %vm4108 = vmor %vm4106, %vm4107
    %v4109 = vsel %vm4108, %v4101, %v4105
    %v4110 = vand.u32 2147483647, %v4085
    %vm4111 = vcmp.eq.f32.partialorder %v4110, 8.507059e+37
    %v4112 = vand.u32 %v4085, 2147483648
    %v4113 = vor.u32 1.1754944e-38, %v4112
    %v4114 = vsel %vm4111, %v4113, %v4109
    %v4115 = vmul.f32 1.0, %v4114
    %v4116 = vadd.f32 %v3568, %v4048
    %v4117 = vadd.f32 %v3571, %v4051
    %v4118 = vxor.u32 %v4116, 2147483648
    %v4119 = vxor.u32 %v4117, 2147483648
    %v4120 = vmul.f32 %v4118, 1.442695
    %v4121 = vpow.pop %v4120
    %v4122 = vmul.f32 %v4119, 1.442695
    %v4123 = vpow.pop %v4122
    %v4124 = vadd.f32 %v4121, 1.0
    %v4125 = vadd.f32 %v4123, 1.0
    %v4126 = vrcp.pop %v4124
    %v4127 = vmul.f32 %v4124, %v4126
    %v4128 = vsub.f32 1.0, %v4127
    %v4129 = vmul.f32 %v4126, %v4128
    %v4130 = vadd.f32 %v4126, %v4129
    %vm4131 = vweird.f32 %v4124
    %vm4132 = vweird.f32 %v4126
    %vm4133 = vmor %vm4131, %vm4132
    %v4134 = vsel %vm4133, %v4126, %v4130
    %v4135 = vand.u32 2147483647, %v4124
    %vm4136 = vcmp.eq.f32.partialorder %v4135, 8.507059e+37
    %v4137 = vand.u32 %v4124, 2147483648
    %v4138 = vor.u32 1.1754944e-38, %v4137
    %v4139 = vsel %vm4136, %v4138, %v4134
    %v4140 = vmul.f32 1.0, %v4139
    %v4141 = vrcp.pop %v4125
    %v4142 = vmul.f32 %v4125, %v4141
    %v4143 = vsub.f32 1.0, %v4142
    %v4144 = vmul.f32 %v4141, %v4143
    %v4145 = vadd.f32 %v4141, %v4144
    %vm4146 = vweird.f32 %v4125
    %vm4147 = vweird.f32 %v4141
    %vm4148 = vmor %vm4146, %vm4147
    %v4149 = vsel %vm4148, %v4141, %v4145
    %v4150 = vand.u32 2147483647, %v4125
    %vm4151 = vcmp.eq.f32.partialorder %v4150, 8.507059e+37
    %v4152 = vand.u32 %v4125, 2147483648
    %v4153 = vor.u32 1.1754944e-38, %v4152
    %v4154 = vsel %vm4151, %v4153, %v4149
    %v4155 = vmul.f32 1.0, %v4154
    %v4156 = vmul.f32 %v4100, %v4071
    %v4157 = vmul.f32 %v4115, %v4074
    %v4158 = vadd.f32 %v3633, %v4156
    %v4159 = vadd.f32 %v3636, %v4157
    %v4160 = vtanh.pop %v4158
    %v4161 = vtanh.pop %v4159
    %v4162 = vsub.f32 1.0, %v4140
    %v4163 = vsub.f32 1.0, %v4155
    %v4164 = vmul.f32 %v4162, %v4160
    %v4165 = vmul.f32 %v4163, %v4161
    %v4166 = vmul.f32 %v4140, %v4003
    %v4167 = vmul.f32 %v4155, %v4004
    %v4168 = vadd.f32 %v4164, %v4166
    %v4169 = vadd.f32 %v4165, %v4167
    %4170 = vst [vmem:[#allocation2 + $0x20] sm:$0xff] %v4168
    %4171 = vst [vmem:[#allocation2 + $0x28] sm:$0xff] %v4169
    %4172 = vmatpush.msra.mxu0 %v3458
    %4173 = vmatpush.msra.mxu0 %v3455
    %4174 = vmatpush.msra.mxu0 %v3452
    %4175 = vmatpush.msra.mxu0 %v3449
    %4176 = vmatpush.msra.mxu0 %v3446
    %4177 = vmatpush.msra.mxu0 %v3443
    %4178 = vmatpush.msra.mxu0 %v3440
    %4179 = vmatpush.msra.mxu0 %v3437
    %4180 = vmatpush.msra.mxu0 %v3434
    %4181 = vmatpush.msra.mxu0 %v3431
    %4182 = vmatpush.msra.mxu0 %v3428
    %4183 = vmatpush.msra.mxu0 %v3425
    %4184 = vmatpush.msra.mxu0 %v3422
    %4185 = vmatpush.msra.mxu0 %v3419
    %4186 = vmatpush.msra.mxu0 %v3416
    %4187 = vmatpush.msra.mxu0 %v3413
    %4188 = vmatmul.f32.gmra.mxu0 %v4168
    %v4189 = vpop.f32.mrf.mxu0
    %v4190 = vadd.f32 %v3674, %v4189
    %4191 = vmatmul.f32.gmra.mxu0 %v4169
    %v4192 = vpop.f32.mrf.mxu0
    %v4193 = vadd.f32 %v3674, %v4192
    %4194 = vdwg.mxu0
    %4195 = vmatpush.msra.mxu0 %v3459
    %4196 = vmatpush.msra.mxu0 %v3456
    %4197 = vmatpush.msra.mxu0 %v3453
    %4198 = vmatpush.msra.mxu0 %v3450
    %4199 = vmatpush.msra.mxu0 %v3447
    %4200 = vmatpush.msra.mxu0 %v3444
    %4201 = vmatpush.msra.mxu0 %v3441
    %4202 = vmatpush.msra.mxu0 %v3438
    %4203 = vmatpush.msra.mxu0 %v3435
    %4204 = vmatpush.msra.mxu0 %v3432
    %4205 = vmatpush.msra.mxu0 %v3429
    %4206 = vmatpush.msra.mxu0 %v3426
    %4207 = vmatpush.msra.mxu0 %v3423
    %4208 = vmatpush.msra.mxu0 %v3420
    %4209 = vmatpush.msra.mxu0 %v3417
    %4210 = vmatpush.msra.mxu0 %v3414
    %4211 = vmatmul.f32.gmra.mxu0 %v4168
    %v4212 = vpop.f32.mrf.mxu0
    %v4213 = vadd.f32 %v3675, %v4212
    %4214 = vmatmul.f32.gmra.mxu0 %v4169
    %v4215 = vpop.f32.mrf.mxu0
    %v4216 = vadd.f32 %v3675, %v4215
    %4217 = vdwg.mxu0
    %4218 = vmatpush.msra.mxu0 %v3460
    %4219 = vmatpush.msra.mxu0 %v3457
    %4220 = vmatpush.msra.mxu0 %v3454
    %4221 = vmatpush.msra.mxu0 %v3451
    %4222 = vmatpush.msra.mxu0 %v3448
    %4223 = vmatpush.msra.mxu0 %v3445
    %4224 = vmatpush.msra.mxu0 %v3442
    %4225 = vmatpush.msra.mxu0 %v3439
    %4226 = vmatpush.msra.mxu0 %v3436
    %4227 = vmatpush.msra.mxu0 %v3433
    %4228 = vmatpush.msra.mxu0 %v3430
    %4229 = vmatpush.msra.mxu0 %v3427
    %4230 = vmatpush.msra.mxu0 %v3424
    %4231 = vmatpush.msra.mxu0 %v3421
    %4232 = vmatpush.msra.mxu0 %v3418
    %4233 = vmatpush.msra.mxu0 %v3415
    %4234 = vmatmul.f32.gmra.mxu0 %v4168
    %v4235 = vpop.f32.mrf.mxu0
    %v4236 = vadd.f32 %v3676, %v4235
    %4237 = vmatmul.f32.gmra.mxu0 %v4169
    %v4238 = vpop.f32.mrf.mxu0
    %v4239 = vadd.f32 %v3676, %v4238
    %4240 = vdwg.mxu0
    %v4241 = vadd.f32 %v3509, %v4190
    %v4242 = vadd.f32 %v3512, %v4193
    %v4243 = vxor.u32 %v4241, 2147483648
    %v4244 = vxor.u32 %v4242, 2147483648
    %v4245 = vmul.f32 %v4243, 1.442695
    %v4246 = vpow.pop %v4245
    %v4247 = vmul.f32 %v4244, 1.442695
    %v4248 = vpow.pop %v4247
    %v4249 = vadd.f32 %v4246, 1.0
    %v4250 = vadd.f32 %v4248, 1.0
    %v4251 = vrcp.pop %v4249
    %v4252 = vmul.f32 %v4249, %v4251
    %v4253 = vsub.f32 1.0, %v4252
    %v4254 = vmul.f32 %v4251, %v4253
    %v4255 = vadd.f32 %v4251, %v4254
    %vm4256 = vweird.f32 %v4249
    %vm4257 = vweird.f32 %v4251
    %vm4258 = vmor %vm4256, %vm4257
    %v4259 = vsel %vm4258, %v4251, %v4255
    %v4260 = vand.u32 2147483647, %v4249
    %vm4261 = vcmp.eq.f32.partialorder %v4260, 8.507059e+37
    %v4262 = vand.u32 %v4249, 2147483648
    %v4263 = vor.u32 1.1754944e-38, %v4262
    %v4264 = vsel %vm4261, %v4263, %v4259
    %v4265 = vmul.f32 1.0, %v4264
    %v4266 = vrcp.pop %v4250
    %v4267 = vmul.f32 %v4250, %v4266
    %v4268 = vsub.f32 1.0, %v4267
    %v4269 = vmul.f32 %v4266, %v4268
    %v4270 = vadd.f32 %v4266, %v4269
    %vm4271 = vweird.f32 %v4250
    %vm4272 = vweird.f32 %v4266
    %vm4273 = vmor %vm4271, %vm4272
    %v4274 = vsel %vm4273, %v4266, %v4270
    %v4275 = vand.u32 2147483647, %v4250
    %vm4276 = vcmp.eq.f32.partialorder %v4275, 8.507059e+37
    %v4277 = vand.u32 %v4250, 2147483648
    %v4278 = vor.u32 1.1754944e-38, %v4277
    %v4279 = vsel %vm4276, %v4278, %v4274
    %v4280 = vmul.f32 1.0, %v4279
    %v4281 = vadd.f32 %v3574, %v4213
    %v4282 = vadd.f32 %v3577, %v4216
    %v4283 = vxor.u32 %v4281, 2147483648
    %v4284 = vxor.u32 %v4282, 2147483648
    %v4285 = vmul.f32 %v4283, 1.442695
    %v4286 = vpow.pop %v4285
    %v4287 = vmul.f32 %v4284, 1.442695
    %v4288 = vpow.pop %v4287
    %v4289 = vadd.f32 %v4286, 1.0
    %v4290 = vadd.f32 %v4288, 1.0
    %v4291 = vrcp.pop %v4289
    %v4292 = vmul.f32 %v4289, %v4291
    %v4293 = vsub.f32 1.0, %v4292
    %v4294 = vmul.f32 %v4291, %v4293
    %v4295 = vadd.f32 %v4291, %v4294
    %vm4296 = vweird.f32 %v4289
    %vm4297 = vweird.f32 %v4291
    %vm4298 = vmor %vm4296, %vm4297
    %v4299 = vsel %vm4298, %v4291, %v4295
    %v4300 = vand.u32 2147483647, %v4289
    %vm4301 = vcmp.eq.f32.partialorder %v4300, 8.507059e+37
    %v4302 = vand.u32 %v4289, 2147483648
    %v4303 = vor.u32 1.1754944e-38, %v4302
    %v4304 = vsel %vm4301, %v4303, %v4299
    %v4305 = vmul.f32 1.0, %v4304
    %v4306 = vrcp.pop %v4290
    %v4307 = vmul.f32 %v4290, %v4306
    %v4308 = vsub.f32 1.0, %v4307
    %v4309 = vmul.f32 %v4306, %v4308
    %v4310 = vadd.f32 %v4306, %v4309
    %vm4311 = vweird.f32 %v4290
    %vm4312 = vweird.f32 %v4306
    %vm4313 = vmor %vm4311, %vm4312
    %v4314 = vsel %vm4313, %v4306, %v4310
    %v4315 = vand.u32 2147483647, %v4290
    %vm4316 = vcmp.eq.f32.partialorder %v4315, 8.507059e+37
    %v4317 = vand.u32 %v4290, 2147483648
    %v4318 = vor.u32 1.1754944e-38, %v4317
    %v4319 = vsel %vm4316, %v4318, %v4314
    %v4320 = vmul.f32 1.0, %v4319
    %v4321 = vmul.f32 %v4265, %v4236
    %v4322 = vmul.f32 %v4280, %v4239
    %v4323 = vadd.f32 %v3639, %v4321
    %v4324 = vadd.f32 %v3642, %v4322
    %v4325 = vtanh.pop %v4323
    %v4326 = vtanh.pop %v4324
    %v4327 = vsub.f32 1.0, %v4305
    %v4328 = vsub.f32 1.0, %v4320
    %v4329 = vmul.f32 %v4327, %v4325
    %v4330 = vmul.f32 %v4328, %v4326
    %v4331 = vmul.f32 %v4305, %v4168
    %v4332 = vmul.f32 %v4320, %v4169
    %v4333 = vadd.f32 %v4329, %v4331
    %v4334 = vadd.f32 %v4330, %v4332
    %4335 = vst [vmem:[#allocation2 + $0x30] sm:$0xff] %v4333
    %4336 = vst [vmem:[#allocation2 + $0x38] sm:$0xff] %v4334
    %4337 = vmatpush.msra.mxu0 %v3458
    %4338 = vmatpush.msra.mxu0 %v3455
    %4339 = vmatpush.msra.mxu0 %v3452
    %4340 = vmatpush.msra.mxu0 %v3449
    %4341 = vmatpush.msra.mxu0 %v3446
    %4342 = vmatpush.msra.mxu0 %v3443
    %4343 = vmatpush.msra.mxu0 %v3440
    %4344 = vmatpush.msra.mxu0 %v3437
    %4345 = vmatpush.msra.mxu0 %v3434
    %4346 = vmatpush.msra.mxu0 %v3431
    %4347 = vmatpush.msra.mxu0 %v3428
    %4348 = vmatpush.msra.mxu0 %v3425
    %4349 = vmatpush.msra.mxu0 %v3422
    %4350 = vmatpush.msra.mxu0 %v3419
    %4351 = vmatpush.msra.mxu0 %v3416
    %4352 = vmatpush.msra.mxu0 %v3413
    %4353 = vmatmul.f32.gmra.mxu0 %v4333
    %v4354 = vpop.f32.mrf.mxu0
    %v4355 = vadd.f32 %v3674, %v4354
    %4356 = vmatmul.f32.gmra.mxu0 %v4334
    %v4357 = vpop.f32.mrf.mxu0
    %v4358 = vadd.f32 %v3674, %v4357
    %4359 = vdwg.mxu0
    %4360 = vmatpush.msra.mxu0 %v3459
    %4361 = vmatpush.msra.mxu0 %v3456
    %4362 = vmatpush.msra.mxu0 %v3453
    %4363 = vmatpush.msra.mxu0 %v3450
    %4364 = vmatpush.msra.mxu0 %v3447
    %4365 = vmatpush.msra.mxu0 %v3444
    %4366 = vmatpush.msra.mxu0 %v3441
    %4367 = vmatpush.msra.mxu0 %v3438
    %4368 = vmatpush.msra.mxu0 %v3435
    %4369 = vmatpush.msra.mxu0 %v3432
    %4370 = vmatpush.msra.mxu0 %v3429
    %4371 = vmatpush.msra.mxu0 %v3426
    %4372 = vmatpush.msra.mxu0 %v3423
    %4373 = vmatpush.msra.mxu0 %v3420
    %4374 = vmatpush.msra.mxu0 %v3417
    %4375 = vmatpush.msra.mxu0 %v3414
    %4376 = vmatmul.f32.gmra.mxu0 %v4333
    %v4377 = vpop.f32.mrf.mxu0
    %v4378 = vadd.f32 %v3675, %v4377
    %4379 = vmatmul.f32.gmra.mxu0 %v4334
    %v4380 = vpop.f32.mrf.mxu0
    %v4381 = vadd.f32 %v3675, %v4380
    %4382 = vdwg.mxu0
    %4383 = vmatpush.msra.mxu0 %v3460
    %4384 = vmatpush.msra.mxu0 %v3457
    %4385 = vmatpush.msra.mxu0 %v3454
    %4386 = vmatpush.msra.mxu0 %v3451
    %4387 = vmatpush.msra.mxu0 %v3448
    %4388 = vmatpush.msra.mxu0 %v3445
    %4389 = vmatpush.msra.mxu0 %v3442
    %4390 = vmatpush.msra.mxu0 %v3439
    %4391 = vmatpush.msra.mxu0 %v3436
    %4392 = vmatpush.msra.mxu0 %v3433
    %4393 = vmatpush.msra.mxu0 %v3430
    %4394 = vmatpush.msra.mxu0 %v3427
    %4395 = vmatpush.msra.mxu0 %v3424
    %4396 = vmatpush.msra.mxu0 %v3421
    %4397 = vmatpush.msra.mxu0 %v3418
    %4398 = vmatpush.msra.mxu0 %v3415
    %4399 = vmatmul.f32.gmra.mxu0 %v4333
    %v4400 = vpop.f32.mrf.mxu0
    %v4401 = vadd.f32 %v3676, %v4400
    %4402 = vmatmul.f32.gmra.mxu0 %v4334
    %v4403 = vpop.f32.mrf.mxu0
    %v4404 = vadd.f32 %v3676, %v4403
    %4405 = vdwg.mxu0
    %v4406 = vadd.f32 %v3515, %v4355
    %v4407 = vadd.f32 %v3518, %v4358
    %v4408 = vxor.u32 %v4406, 2147483648
    %v4409 = vxor.u32 %v4407, 2147483648
    %v4410 = vmul.f32 %v4408, 1.442695
    %v4411 = vpow.pop %v4410
    %v4412 = vmul.f32 %v4409, 1.442695
    %v4413 = vpow.pop %v4412
    %v4414 = vadd.f32 %v4411, 1.0
    %v4415 = vadd.f32 %v4413, 1.0
    %v4416 = vrcp.pop %v4414
    %v4417 = vmul.f32 %v4414, %v4416
    %v4418 = vsub.f32 1.0, %v4417
    %v4419 = vmul.f32 %v4416, %v4418
    %v4420 = vadd.f32 %v4416, %v4419
    %vm4421 = vweird.f32 %v4414
    %vm4422 = vweird.f32 %v4416
    %vm4423 = vmor %vm4421, %vm4422
    %v4424 = vsel %vm4423, %v4416, %v4420
    %v4425 = vand.u32 2147483647, %v4414
    %vm4426 = vcmp.eq.f32.partialorder %v4425, 8.507059e+37
    %v4427 = vand.u32 %v4414, 2147483648
    %v4428 = vor.u32 1.1754944e-38, %v4427
    %v4429 = vsel %vm4426, %v4428, %v4424
    %v4430 = vmul.f32 1.0, %v4429
    %v4431 = vrcp.pop %v4415
    %v4432 = vmul.f32 %v4415, %v4431
    %v4433 = vsub.f32 1.0, %v4432
    %v4434 = vmul.f32 %v4431, %v4433
    %v4435 = vadd.f32 %v4431, %v4434
    %vm4436 = vweird.f32 %v4415
    %vm4437 = vweird.f32 %v4431
    %vm4438 = vmor %vm4436, %vm4437
    %v4439 = vsel %vm4438, %v4431, %v4435
    %v4440 = vand.u32 2147483647, %v4415
    %vm4441 = vcmp.eq.f32.partialorder %v4440, 8.507059e+37
    %v4442 = vand.u32 %v4415, 2147483648
    %v4443 = vor.u32 1.1754944e-38, %v4442
    %v4444 = vsel %vm4441, %v4443, %v4439
    %v4445 = vmul.f32 1.0, %v4444
    %v4446 = vadd.f32 %v3580, %v4378
    %v4447 = vadd.f32 %v3583, %v4381
    %v4448 = vxor.u32 %v4446, 2147483648
    %v4449 = vxor.u32 %v4447, 2147483648
    %v4450 = vmul.f32 %v4448, 1.442695
    %v4451 = vpow.pop %v4450
    %v4452 = vmul.f32 %v4449, 1.442695
    %v4453 = vpow.pop %v4452
    %v4454 = vadd.f32 %v4451, 1.0
    %v4455 = vadd.f32 %v4453, 1.0
    %v4456 = vrcp.pop %v4454
    %v4457 = vmul.f32 %v4454, %v4456
    %v4458 = vsub.f32 1.0, %v4457
    %v4459 = vmul.f32 %v4456, %v4458
    %v4460 = vadd.f32 %v4456, %v4459
    %vm4461 = vweird.f32 %v4454
    %vm4462 = vweird.f32 %v4456
    %vm4463 = vmor %vm4461, %vm4462
    %v4464 = vsel %vm4463, %v4456, %v4460
    %v4465 = vand.u32 2147483647, %v4454
    %vm4466 = vcmp.eq.f32.partialorder %v4465, 8.507059e+37
    %v4467 = vand.u32 %v4454, 2147483648
    %v4468 = vor.u32 1.1754944e-38, %v4467
    %v4469 = vsel %vm4466, %v4468, %v4464
    %v4470 = vmul.f32 1.0, %v4469
    %v4471 = vrcp.pop %v4455
    %v4472 = vmul.f32 %v4455, %v4471
    %v4473 = vsub.f32 1.0, %v4472
    %v4474 = vmul.f32 %v4471, %v4473
    %v4475 = vadd.f32 %v4471, %v4474
    %vm4476 = vweird.f32 %v4455
    %vm4477 = vweird.f32 %v4471
    %vm4478 = vmor %vm4476, %vm4477
    %v4479 = vsel %vm4478, %v4471, %v4475
    %v4480 = vand.u32 2147483647, %v4455
    %vm4481 = vcmp.eq.f32.partialorder %v4480, 8.507059e+37
    %v4482 = vand.u32 %v4455, 2147483648
    %v4483 = vor.u32 1.1754944e-38, %v4482
    %v4484 = vsel %vm4481, %v4483, %v4479
    %v4485 = vmul.f32 1.0, %v4484
    %v4486 = vmul.f32 %v4430, %v4401
    %v4487 = vmul.f32 %v4445, %v4404
    %v4488 = vadd.f32 %v3645, %v4486
    %v4489 = vadd.f32 %v3648, %v4487
    %v4490 = vtanh.pop %v4488
    %v4491 = vtanh.pop %v4489
    %v4492 = vsub.f32 1.0, %v4470
    %v4493 = vsub.f32 1.0, %v4485
    %v4494 = vmul.f32 %v4492, %v4490
    %v4495 = vmul.f32 %v4493, %v4491
    %v4496 = vmul.f32 %v4470, %v4333
    %v4497 = vmul.f32 %v4485, %v4334
    %v4498 = vadd.f32 %v4494, %v4496
    %v4499 = vadd.f32 %v4495, %v4497
    %4500 = vst [vmem:[#allocation2 + $0x40] sm:$0xff] %v4498
    %4501 = vst [vmem:[#allocation2 + $0x48] sm:$0xff] %v4499
    %4502 = vmatpush.msra.mxu0 %v3458
    %4503 = vmatpush.msra.mxu0 %v3455
    %4504 = vmatpush.msra.mxu0 %v3452
    %4505 = vmatpush.msra.mxu0 %v3449
    %4506 = vmatpush.msra.mxu0 %v3446
    %4507 = vmatpush.msra.mxu0 %v3443
    %4508 = vmatpush.msra.mxu0 %v3440
    %4509 = vmatpush.msra.mxu0 %v3437
    %4510 = vmatpush.msra.mxu0 %v3434
    %4511 = vmatpush.msra.mxu0 %v3431
    %4512 = vmatpush.msra.mxu0 %v3428
    %4513 = vmatpush.msra.mxu0 %v3425
    %4514 = vmatpush.msra.mxu0 %v3422
    %4515 = vmatpush.msra.mxu0 %v3419
    %4516 = vmatpush.msra.mxu0 %v3416
    %4517 = vmatpush.msra.mxu0 %v3413
    %4518 = vmatmul.f32.gmra.mxu0 %v4498
    %v4519 = vpop.f32.mrf.mxu0
    %v4520 = vadd.f32 %v3674, %v4519
    %4521 = vmatmul.f32.gmra.mxu0 %v4499
    %v4522 = vpop.f32.mrf.mxu0
    %v4523 = vadd.f32 %v3674, %v4522
    %4524 = vdwg.mxu0
    %4525 = vmatpush.msra.mxu0 %v3459
    %4526 = vmatpush.msra.mxu0 %v3456
    %4527 = vmatpush.msra.mxu0 %v3453
    %4528 = vmatpush.msra.mxu0 %v3450
    %4529 = vmatpush.msra.mxu0 %v3447
    %4530 = vmatpush.msra.mxu0 %v3444
    %4531 = vmatpush.msra.mxu0 %v3441
    %4532 = vmatpush.msra.mxu0 %v3438
    %4533 = vmatpush.msra.mxu0 %v3435
    %4534 = vmatpush.msra.mxu0 %v3432
    %4535 = vmatpush.msra.mxu0 %v3429
    %4536 = vmatpush.msra.mxu0 %v3426
    %4537 = vmatpush.msra.mxu0 %v3423
    %4538 = vmatpush.msra.mxu0 %v3420
    %4539 = vmatpush.msra.mxu0 %v3417
    %4540 = vmatpush.msra.mxu0 %v3414
    %4541 = vmatmul.f32.gmra.mxu0 %v4498
    %v4542 = vpop.f32.mrf.mxu0
    %v4543 = vadd.f32 %v3675, %v4542
    %4544 = vmatmul.f32.gmra.mxu0 %v4499
    %v4545 = vpop.f32.mrf.mxu0
    %v4546 = vadd.f32 %v3675, %v4545
    %4547 = vdwg.mxu0
    %4548 = vmatpush.msra.mxu0 %v3460
    %4549 = vmatpush.msra.mxu0 %v3457
    %4550 = vmatpush.msra.mxu0 %v3454
    %4551 = vmatpush.msra.mxu0 %v3451
    %4552 = vmatpush.msra.mxu0 %v3448
    %4553 = vmatpush.msra.mxu0 %v3445
    %4554 = vmatpush.msra.mxu0 %v3442
    %4555 = vmatpush.msra.mxu0 %v3439
    %4556 = vmatpush.msra.mxu0 %v3436
    %4557 = vmatpush.msra.mxu0 %v3433
    %4558 = vmatpush.msra.mxu0 %v3430
    %4559 = vmatpush.msra.mxu0 %v3427
    %4560 = vmatpush.msra.mxu0 %v3424
    %4561 = vmatpush.msra.mxu0 %v3421
    %4562 = vmatpush.msra.mxu0 %v3418
    %4563 = vmatpush.msra.mxu0 %v3415
    %4564 = vmatmul.f32.gmra.mxu0 %v4498
    %v4565 = vpop.f32.mrf.mxu0
    %v4566 = vadd.f32 %v3676, %v4565
    %4567 = vmatmul.f32.gmra.mxu0 %v4499
    %v4568 = vpop.f32.mrf.mxu0
    %v4569 = vadd.f32 %v3676, %v4568
    %4570 = vdwg.mxu0
    %v4571 = vadd.f32 %v3521, %v4520
    %v4572 = vadd.f32 %v3524, %v4523
    %v4573 = vxor.u32 %v4571, 2147483648
    %v4574 = vxor.u32 %v4572, 2147483648
    %v4575 = vmul.f32 %v4573, 1.442695
    %v4576 = vpow.pop %v4575
    %v4577 = vmul.f32 %v4574, 1.442695
    %v4578 = vpow.pop %v4577
    %v4579 = vadd.f32 %v4576, 1.0
    %v4580 = vadd.f32 %v4578, 1.0
    %v4581 = vrcp.pop %v4579
    %v4582 = vmul.f32 %v4579, %v4581
    %v4583 = vsub.f32 1.0, %v4582
    %v4584 = vmul.f32 %v4581, %v4583
    %v4585 = vadd.f32 %v4581, %v4584
    %vm4586 = vweird.f32 %v4579
    %vm4587 = vweird.f32 %v4581
    %vm4588 = vmor %vm4586, %vm4587
    %v4589 = vsel %vm4588, %v4581, %v4585
    %v4590 = vand.u32 2147483647, %v4579
    %vm4591 = vcmp.eq.f32.partialorder %v4590, 8.507059e+37
    %v4592 = vand.u32 %v4579, 2147483648
    %v4593 = vor.u32 1.1754944e-38, %v4592
    %v4594 = vsel %vm4591, %v4593, %v4589
    %v4595 = vmul.f32 1.0, %v4594
    %v4596 = vrcp.pop %v4580
    %v4597 = vmul.f32 %v4580, %v4596
    %v4598 = vsub.f32 1.0, %v4597
    %v4599 = vmul.f32 %v4596, %v4598
    %v4600 = vadd.f32 %v4596, %v4599
    %vm4601 = vweird.f32 %v4580
    %vm4602 = vweird.f32 %v4596
    %vm4603 = vmor %vm4601, %vm4602
    %v4604 = vsel %vm4603, %v4596, %v4600
    %v4605 = vand.u32 2147483647, %v4580
    %vm4606 = vcmp.eq.f32.partialorder %v4605, 8.507059e+37
    %v4607 = vand.u32 %v4580, 2147483648
    %v4608 = vor.u32 1.1754944e-38, %v4607
    %v4609 = vsel %vm4606, %v4608, %v4604
    %v4610 = vmul.f32 1.0, %v4609
    %v4611 = vadd.f32 %v3586, %v4543
    %v4612 = vadd.f32 %v3589, %v4546
    %v4613 = vxor.u32 %v4611, 2147483648
    %v4614 = vxor.u32 %v4612, 2147483648
    %v4615 = vmul.f32 %v4613, 1.442695
    %v4616 = vpow.pop %v4615
    %v4617 = vmul.f32 %v4614, 1.442695
    %v4618 = vpow.pop %v4617
    %v4619 = vadd.f32 %v4616, 1.0
    %v4620 = vadd.f32 %v4618, 1.0
    %v4621 = vrcp.pop %v4619
    %v4622 = vmul.f32 %v4619, %v4621
    %v4623 = vsub.f32 1.0, %v4622
    %v4624 = vmul.f32 %v4621, %v4623
    %v4625 = vadd.f32 %v4621, %v4624
    %vm4626 = vweird.f32 %v4619
    %vm4627 = vweird.f32 %v4621
    %vm4628 = vmor %vm4626, %vm4627
    %v4629 = vsel %vm4628, %v4621, %v4625
    %v4630 = vand.u32 2147483647, %v4619
    %vm4631 = vcmp.eq.f32.partialorder %v4630, 8.507059e+37
    %v4632 = vand.u32 %v4619, 2147483648
    %v4633 = vor.u32 1.1754944e-38, %v4632
    %v4634 = vsel %vm4631, %v4633, %v4629
    %v4635 = vmul.f32 1.0, %v4634
    %v4636 = vrcp.pop %v4620
    %v4637 = vmul.f32 %v4620, %v4636
    %v4638 = vsub.f32 1.0, %v4637
    %v4639 = vmul.f32 %v4636, %v4638
    %v4640 = vadd.f32 %v4636, %v4639
    %vm4641 = vweird.f32 %v4620
    %vm4642 = vweird.f32 %v4636
    %vm4643 = vmor %vm4641, %vm4642
    %v4644 = vsel %vm4643, %v4636, %v4640
    %v4645 = vand.u32 2147483647, %v4620
    %vm4646 = vcmp.eq.f32.partialorder %v4645, 8.507059e+37
    %v4647 = vand.u32 %v4620, 2147483648
    %v4648 = vor.u32 1.1754944e-38, %v4647
    %v4649 = vsel %vm4646, %v4648, %v4644
    %v4650 = vmul.f32 1.0, %v4649
    %v4651 = vmul.f32 %v4595, %v4566
    %v4652 = vmul.f32 %v4610, %v4569
    %v4653 = vadd.f32 %v3651, %v4651
    %v4654 = vadd.f32 %v3654, %v4652
    %v4655 = vtanh.pop %v4653
    %v4656 = vtanh.pop %v4654
    %v4657 = vsub.f32 1.0, %v4635
    %v4658 = vsub.f32 1.0, %v4650
    %v4659 = vmul.f32 %v4657, %v4655
    %v4660 = vmul.f32 %v4658, %v4656
    %v4661 = vmul.f32 %v4635, %v4498
    %v4662 = vmul.f32 %v4650, %v4499
    %v4663 = vadd.f32 %v4659, %v4661
    %v4664 = vadd.f32 %v4660, %v4662
    %4665 = vst [vmem:[#allocation2 + $0x50] sm:$0xff] %v4663
    %4666 = vst [vmem:[#allocation2 + $0x58] sm:$0xff] %v4664
    %4667 = vmatpush.msra.mxu0 %v3458
    %4668 = vmatpush.msra.mxu0 %v3455
    %4669 = vmatpush.msra.mxu0 %v3452
    %4670 = vmatpush.msra.mxu0 %v3449
    %4671 = vmatpush.msra.mxu0 %v3446
    %4672 = vmatpush.msra.mxu0 %v3443
    %4673 = vmatpush.msra.mxu0 %v3440
    %4674 = vmatpush.msra.mxu0 %v3437
    %4675 = vmatpush.msra.mxu0 %v3434
    %4676 = vmatpush.msra.mxu0 %v3431
    %4677 = vmatpush.msra.mxu0 %v3428
    %4678 = vmatpush.msra.mxu0 %v3425
    %4679 = vmatpush.msra.mxu0 %v3422
    %4680 = vmatpush.msra.mxu0 %v3419
    %4681 = vmatpush.msra.mxu0 %v3416
    %4682 = vmatpush.msra.mxu0 %v3413
    %4683 = vmatmul.f32.gmra.mxu0 %v4663
    %v4684 = vpop.f32.mrf.mxu0
    %v4685 = vadd.f32 %v3674, %v4684
    %4686 = vmatmul.f32.gmra.mxu0 %v4664
    %v4687 = vpop.f32.mrf.mxu0
    %v4688 = vadd.f32 %v3674, %v4687
    %4689 = vdwg.mxu0
    %4690 = vmatpush.msra.mxu0 %v3459
    %4691 = vmatpush.msra.mxu0 %v3456
    %4692 = vmatpush.msra.mxu0 %v3453
    %4693 = vmatpush.msra.mxu0 %v3450
    %4694 = vmatpush.msra.mxu0 %v3447
    %4695 = vmatpush.msra.mxu0 %v3444
    %4696 = vmatpush.msra.mxu0 %v3441
    %4697 = vmatpush.msra.mxu0 %v3438
    %4698 = vmatpush.msra.mxu0 %v3435
    %4699 = vmatpush.msra.mxu0 %v3432
    %4700 = vmatpush.msra.mxu0 %v3429
    %4701 = vmatpush.msra.mxu0 %v3426
    %4702 = vmatpush.msra.mxu0 %v3423
    %4703 = vmatpush.msra.mxu0 %v3420
    %4704 = vmatpush.msra.mxu0 %v3417
    %4705 = vmatpush.msra.mxu0 %v3414
    %4706 = vmatmul.f32.gmra.mxu0 %v4663
    %v4707 = vpop.f32.mrf.mxu0
    %v4708 = vadd.f32 %v3675, %v4707
    %4709 = vmatmul.f32.gmra.mxu0 %v4664
    %v4710 = vpop.f32.mrf.mxu0
    %v4711 = vadd.f32 %v3675, %v4710
    %4712 = vdwg.mxu0
    %4713 = vmatpush.msra.mxu0 %v3460
    %4714 = vmatpush.msra.mxu0 %v3457
    %4715 = vmatpush.msra.mxu0 %v3454
    %4716 = vmatpush.msra.mxu0 %v3451
    %4717 = vmatpush.msra.mxu0 %v3448
    %4718 = vmatpush.msra.mxu0 %v3445
    %4719 = vmatpush.msra.mxu0 %v3442
    %4720 = vmatpush.msra.mxu0 %v3439
    %4721 = vmatpush.msra.mxu0 %v3436
    %4722 = vmatpush.msra.mxu0 %v3433
    %4723 = vmatpush.msra.mxu0 %v3430
    %4724 = vmatpush.msra.mxu0 %v3427
    %4725 = vmatpush.msra.mxu0 %v3424
    %4726 = vmatpush.msra.mxu0 %v3421
    %4727 = vmatpush.msra.mxu0 %v3418
    %4728 = vmatpush.msra.mxu0 %v3415
    %4729 = vmatmul.f32.gmra.mxu0 %v4663
    %v4730 = vpop.f32.mrf.mxu0
    %v4731 = vadd.f32 %v3676, %v4730
    %4732 = vmatmul.f32.gmra.mxu0 %v4664
    %v4733 = vpop.f32.mrf.mxu0
    %v4734 = vadd.f32 %v3676, %v4733
    %4735 = vdwg.mxu0
    %v4736 = vadd.f32 %v3527, %v4685
    %v4737 = vadd.f32 %v3530, %v4688
    %v4738 = vxor.u32 %v4736, 2147483648
    %v4739 = vxor.u32 %v4737, 2147483648
    %v4740 = vmul.f32 %v4738, 1.442695
    %v4741 = vpow.pop %v4740
    %v4742 = vmul.f32 %v4739, 1.442695
    %v4743 = vpow.pop %v4742
    %v4744 = vadd.f32 %v4741, 1.0
    %v4745 = vadd.f32 %v4743, 1.0
    %v4746 = vrcp.pop %v4744
    %v4747 = vmul.f32 %v4744, %v4746
    %v4748 = vsub.f32 1.0, %v4747
    %v4749 = vmul.f32 %v4746, %v4748
    %v4750 = vadd.f32 %v4746, %v4749
    %vm4751 = vweird.f32 %v4744
    %vm4752 = vweird.f32 %v4746
    %vm4753 = vmor %vm4751, %vm4752
    %v4754 = vsel %vm4753, %v4746, %v4750
    %v4755 = vand.u32 2147483647, %v4744
    %vm4756 = vcmp.eq.f32.partialorder %v4755, 8.507059e+37
    %v4757 = vand.u32 %v4744, 2147483648
    %v4758 = vor.u32 1.1754944e-38, %v4757
    %v4759 = vsel %vm4756, %v4758, %v4754
    %v4760 = vmul.f32 1.0, %v4759
    %v4761 = vrcp.pop %v4745
    %v4762 = vmul.f32 %v4745, %v4761
    %v4763 = vsub.f32 1.0, %v4762
    %v4764 = vmul.f32 %v4761, %v4763
    %v4765 = vadd.f32 %v4761, %v4764
    %vm4766 = vweird.f32 %v4745
    %vm4767 = vweird.f32 %v4761
    %vm4768 = vmor %vm4766, %vm4767
    %v4769 = vsel %vm4768, %v4761, %v4765
    %v4770 = vand.u32 2147483647, %v4745
    %vm4771 = vcmp.eq.f32.partialorder %v4770, 8.507059e+37
    %v4772 = vand.u32 %v4745, 2147483648
    %v4773 = vor.u32 1.1754944e-38, %v4772
    %v4774 = vsel %vm4771, %v4773, %v4769
    %v4775 = vmul.f32 1.0, %v4774
    %v4776 = vadd.f32 %v3592, %v4708
    %v4777 = vadd.f32 %v3595, %v4711
    %v4778 = vxor.u32 %v4776, 2147483648
    %v4779 = vxor.u32 %v4777, 2147483648
    %v4780 = vmul.f32 %v4778, 1.442695
    %v4781 = vpow.pop %v4780
    %v4782 = vmul.f32 %v4779, 1.442695
    %v4783 = vpow.pop %v4782
    %v4784 = vadd.f32 %v4781, 1.0
    %v4785 = vadd.f32 %v4783, 1.0
    %v4786 = vrcp.pop %v4784
    %v4787 = vmul.f32 %v4784, %v4786
    %v4788 = vsub.f32 1.0, %v4787
    %v4789 = vmul.f32 %v4786, %v4788
    %v4790 = vadd.f32 %v4786, %v4789
    %vm4791 = vweird.f32 %v4784
    %vm4792 = vweird.f32 %v4786
    %vm4793 = vmor %vm4791, %vm4792
    %v4794 = vsel %vm4793, %v4786, %v4790
    %v4795 = vand.u32 2147483647, %v4784
    %vm4796 = vcmp.eq.f32.partialorder %v4795, 8.507059e+37
    %v4797 = vand.u32 %v4784, 2147483648
    %v4798 = vor.u32 1.1754944e-38, %v4797
    %v4799 = vsel %vm4796, %v4798, %v4794
    %v4800 = vmul.f32 1.0, %v4799
    %v4801 = vrcp.pop %v4785
    %v4802 = vmul.f32 %v4785, %v4801
    %v4803 = vsub.f32 1.0, %v4802
    %v4804 = vmul.f32 %v4801, %v4803
    %v4805 = vadd.f32 %v4801, %v4804
    %vm4806 = vweird.f32 %v4785
    %vm4807 = vweird.f32 %v4801
    %vm4808 = vmor %vm4806, %vm4807
    %v4809 = vsel %vm4808, %v4801, %v4805
    %v4810 = vand.u32 2147483647, %v4785
    %vm4811 = vcmp.eq.f32.partialorder %v4810, 8.507059e+37
    %v4812 = vand.u32 %v4785, 2147483648
    %v4813 = vor.u32 1.1754944e-38, %v4812
    %v4814 = vsel %vm4811, %v4813, %v4809
    %v4815 = vmul.f32 1.0, %v4814
    %v4816 = vmul.f32 %v4760, %v4731
    %v4817 = vmul.f32 %v4775, %v4734
    %v4818 = vadd.f32 %v3657, %v4816
    %v4819 = vadd.f32 %v3660, %v4817
    %v4820 = vtanh.pop %v4818
    %v4821 = vtanh.pop %v4819
    %v4822 = vsub.f32 1.0, %v4800
    %v4823 = vsub.f32 1.0, %v4815
    %v4824 = vmul.f32 %v4822, %v4820
    %v4825 = vmul.f32 %v4823, %v4821
    %v4826 = vmul.f32 %v4800, %v4663
    %v4827 = vmul.f32 %v4815, %v4664
    %v4828 = vadd.f32 %v4824, %v4826
    %v4829 = vadd.f32 %v4825, %v4827
    %4830 = vst [vmem:[#allocation2 + $0x60] sm:$0xff] %v4828
    %4831 = vst [vmem:[#allocation2 + $0x68] sm:$0xff] %v4829
    %4832 = vmatpush.msra.mxu0 %v3458
    %4833 = vmatpush.msra.mxu0 %v3455
    %4834 = vmatpush.msra.mxu0 %v3452
    %4835 = vmatpush.msra.mxu0 %v3449
    %4836 = vmatpush.msra.mxu0 %v3446
    %4837 = vmatpush.msra.mxu0 %v3443
    %4838 = vmatpush.msra.mxu0 %v3440
    %4839 = vmatpush.msra.mxu0 %v3437
    %4840 = vmatpush.msra.mxu0 %v3434
    %4841 = vmatpush.msra.mxu0 %v3431
    %4842 = vmatpush.msra.mxu0 %v3428
    %4843 = vmatpush.msra.mxu0 %v3425
    %4844 = vmatpush.msra.mxu0 %v3422
    %4845 = vmatpush.msra.mxu0 %v3419
    %4846 = vmatpush.msra.mxu0 %v3416
    %4847 = vmatpush.msra.mxu0 %v3413
    %4848 = vmatmul.f32.gmra.mxu0 %v4828
    %v4849 = vpop.f32.mrf.mxu0
    %v4850 = vadd.f32 %v3674, %v4849
    %4851 = vmatmul.f32.gmra.mxu0 %v4829
    %v4852 = vpop.f32.mrf.mxu0
    %v4853 = vadd.f32 %v3674, %v4852
    %4854 = vdwg.mxu0
    %4855 = vmatpush.msra.mxu0 %v3459
    %4856 = vmatpush.msra.mxu0 %v3456
    %4857 = vmatpush.msra.mxu0 %v3453
    %4858 = vmatpush.msra.mxu0 %v3450
    %4859 = vmatpush.msra.mxu0 %v3447
    %4860 = vmatpush.msra.mxu0 %v3444
    %4861 = vmatpush.msra.mxu0 %v3441
    %4862 = vmatpush.msra.mxu0 %v3438
    %4863 = vmatpush.msra.mxu0 %v3435
    %4864 = vmatpush.msra.mxu0 %v3432
    %4865 = vmatpush.msra.mxu0 %v3429
    %4866 = vmatpush.msra.mxu0 %v3426
    %4867 = vmatpush.msra.mxu0 %v3423
    %4868 = vmatpush.msra.mxu0 %v3420
    %4869 = vmatpush.msra.mxu0 %v3417
    %4870 = vmatpush.msra.mxu0 %v3414
    %4871 = vmatmul.f32.gmra.mxu0 %v4828
    %v4872 = vpop.f32.mrf.mxu0
    %v4873 = vadd.f32 %v3675, %v4872
    %4874 = vmatmul.f32.gmra.mxu0 %v4829
    %v4875 = vpop.f32.mrf.mxu0
    %v4876 = vadd.f32 %v3675, %v4875
    %4877 = vdwg.mxu0
    %4878 = vmatpush.msra.mxu0 %v3460
    %4879 = vmatpush.msra.mxu0 %v3457
    %4880 = vmatpush.msra.mxu0 %v3454
    %4881 = vmatpush.msra.mxu0 %v3451
    %4882 = vmatpush.msra.mxu0 %v3448
    %4883 = vmatpush.msra.mxu0 %v3445
    %4884 = vmatpush.msra.mxu0 %v3442
    %4885 = vmatpush.msra.mxu0 %v3439
    %4886 = vmatpush.msra.mxu0 %v3436
    %4887 = vmatpush.msra.mxu0 %v3433
    %4888 = vmatpush.msra.mxu0 %v3430
    %4889 = vmatpush.msra.mxu0 %v3427
    %4890 = vmatpush.msra.mxu0 %v3424
    %4891 = vmatpush.msra.mxu0 %v3421
    %4892 = vmatpush.msra.mxu0 %v3418
    %4893 = vmatpush.msra.mxu0 %v3415
    %4894 = vmatmul.f32.gmra.mxu0 %v4828
    %v4895 = vpop.f32.mrf.mxu0
    %v4896 = vadd.f32 %v3676, %v4895
    %4897 = vmatmul.f32.gmra.mxu0 %v4829
    %v4898 = vpop.f32.mrf.mxu0
    %v4899 = vadd.f32 %v3676, %v4898
    %4900 = vdwg.mxu0
    %v4901 = vadd.f32 %v3533, %v4850
    %v4902 = vadd.f32 %v3536, %v4853
    %v4903 = vxor.u32 %v4901, 2147483648
    %v4904 = vxor.u32 %v4902, 2147483648
    %v4905 = vmul.f32 %v4903, 1.442695
    %v4906 = vpow.pop %v4905
    %v4907 = vmul.f32 %v4904, 1.442695
    %v4908 = vpow.pop %v4907
    %v4909 = vadd.f32 %v4906, 1.0
    %v4910 = vadd.f32 %v4908, 1.0
    %v4911 = vrcp.pop %v4909
    %v4912 = vmul.f32 %v4909, %v4911
    %v4913 = vsub.f32 1.0, %v4912
    %v4914 = vmul.f32 %v4911, %v4913
    %v4915 = vadd.f32 %v4911, %v4914
    %vm4916 = vweird.f32 %v4909
    %vm4917 = vweird.f32 %v4911
    %vm4918 = vmor %vm4916, %vm4917
    %v4919 = vsel %vm4918, %v4911, %v4915
    %v4920 = vand.u32 2147483647, %v4909
    %vm4921 = vcmp.eq.f32.partialorder %v4920, 8.507059e+37
    %v4922 = vand.u32 %v4909, 2147483648
    %v4923 = vor.u32 1.1754944e-38, %v4922
    %v4924 = vsel %vm4921, %v4923, %v4919
    %v4925 = vmul.f32 1.0, %v4924
    %v4926 = vrcp.pop %v4910
    %v4927 = vmul.f32 %v4910, %v4926
    %v4928 = vsub.f32 1.0, %v4927
    %v4929 = vmul.f32 %v4926, %v4928
    %v4930 = vadd.f32 %v4926, %v4929
    %vm4931 = vweird.f32 %v4910
    %vm4932 = vweird.f32 %v4926
    %vm4933 = vmor %vm4931, %vm4932
    %v4934 = vsel %vm4933, %v4926, %v4930
    %v4935 = vand.u32 2147483647, %v4910
    %vm4936 = vcmp.eq.f32.partialorder %v4935, 8.507059e+37
    %v4937 = vand.u32 %v4910, 2147483648
    %v4938 = vor.u32 1.1754944e-38, %v4937
    %v4939 = vsel %vm4936, %v4938, %v4934
    %v4940 = vmul.f32 1.0, %v4939
    %v4941 = vadd.f32 %v3598, %v4873
    %v4942 = vadd.f32 %v3601, %v4876
    %v4943 = vxor.u32 %v4941, 2147483648
    %v4944 = vxor.u32 %v4942, 2147483648
    %v4945 = vmul.f32 %v4943, 1.442695
    %v4946 = vpow.pop %v4945
    %v4947 = vmul.f32 %v4944, 1.442695
    %v4948 = vpow.pop %v4947
    %v4949 = vadd.f32 %v4946, 1.0
    %v4950 = vadd.f32 %v4948, 1.0
    %v4951 = vrcp.pop %v4949
    %v4952 = vmul.f32 %v4949, %v4951
    %v4953 = vsub.f32 1.0, %v4952
    %v4954 = vmul.f32 %v4951, %v4953
    %v4955 = vadd.f32 %v4951, %v4954
    %vm4956 = vweird.f32 %v4949
    %vm4957 = vweird.f32 %v4951
    %vm4958 = vmor %vm4956, %vm4957
    %v4959 = vsel %vm4958, %v4951, %v4955
    %v4960 = vand.u32 2147483647, %v4949
    %vm4961 = vcmp.eq.f32.partialorder %v4960, 8.507059e+37
    %v4962 = vand.u32 %v4949, 2147483648
    %v4963 = vor.u32 1.1754944e-38, %v4962
    %v4964 = vsel %vm4961, %v4963, %v4959
    %v4965 = vmul.f32 1.0, %v4964
    %v4966 = vrcp.pop %v4950
    %v4967 = vmul.f32 %v4950, %v4966
    %v4968 = vsub.f32 1.0, %v4967
    %v4969 = vmul.f32 %v4966, %v4968
    %v4970 = vadd.f32 %v4966, %v4969
    %vm4971 = vweird.f32 %v4950
    %vm4972 = vweird.f32 %v4966
    %vm4973 = vmor %vm4971, %vm4972
    %v4974 = vsel %vm4973, %v4966, %v4970
    %v4975 = vand.u32 2147483647, %v4950
    %vm4976 = vcmp.eq.f32.partialorder %v4975, 8.507059e+37
    %v4977 = vand.u32 %v4950, 2147483648
    %v4978 = vor.u32 1.1754944e-38, %v4977
    %v4979 = vsel %vm4976, %v4978, %v4974
    %v4980 = vmul.f32 1.0, %v4979
    %v4981 = vmul.f32 %v4925, %v4896
    %v4982 = vmul.f32 %v4940, %v4899
    %v4983 = vadd.f32 %v3663, %v4981
    %v4984 = vadd.f32 %v3666, %v4982
    %v4985 = vtanh.pop %v4983
    %v4986 = vtanh.pop %v4984
    %v4987 = vsub.f32 1.0, %v4965
    %v4988 = vsub.f32 1.0, %v4980
    %v4989 = vmul.f32 %v4987, %v4985
    %v4990 = vmul.f32 %v4988, %v4986
    %v4991 = vmul.f32 %v4965, %v4828
    %v4992 = vmul.f32 %v4980, %v4829
    %v4993 = vadd.f32 %v4989, %v4991
    %v4994 = vadd.f32 %v4990, %v4992
    %4995 = vst [vmem:[#allocation2 + $0x70] sm:$0xff] %v4993
    %4996 = vst [vmem:[#allocation2 + $0x78] sm:$0xff] %v4994
    %s4997 = scalar_lea.vmem %s8, 32
    %4998 = vst [vmem:[%s4997] sm:$0xff] %v4993
    %4999 = vst [vmem:[%s4997 + $0x8] sm:$0xff] %v4994
    %v5000 = vld [vmem:[#allocation2] sm:$0xff]
    %v5001 = vld [vmem:[#allocation2 + $0x8] sm:$0xff]
    %v5002 = vld [vmem:[#allocation2 + $0x10] sm:$0xff]
    %v5003 = vld [vmem:[#allocation2 + $0x18] sm:$0xff]
    %v5004 = vld [vmem:[#allocation2 + $0x20] sm:$0xff]
    %v5005 = vld [vmem:[#allocation2 + $0x28] sm:$0xff]
    %v5006 = vld [vmem:[#allocation2 + $0x30] sm:$0xff]
    %v5007 = vld [vmem:[#allocation2 + $0x38] sm:$0xff]
    %v5008 = vld [vmem:[#allocation2 + $0x40] sm:$0xff]
    %v5009 = vld [vmem:[#allocation2 + $0x48] sm:$0xff]
    %v5010 = vld [vmem:[#allocation2 + $0x50] sm:$0xff]
    %v5011 = vld [vmem:[#allocation2 + $0x58] sm:$0xff]
    %v5012 = vld [vmem:[#allocation2 + $0x60] sm:$0xff]
    %v5013 = vld [vmem:[#allocation2 + $0x68] sm:$0xff]
    %v5014 = vld [vmem:[#allocation2 + $0x70] sm:$0xff]
    %v5015 = vld [vmem:[#allocation2 + $0x78] sm:$0xff]
    %s5016 = scalar_lea.vmem %s1, 1152
    %v5017 = vld [vmem:[%s5016] sm:$0xff]
    %v5018 = vld [vmem:[%s5016 + $0x8] sm:$0xff]
    %v5019 = vld [vmem:[%s5016 + $0x10] sm:$0xff]
    %v5020 = vld [vmem:[%s5016 + $0x18] sm:$0xff]
    %v5021 = vld [vmem:[%s5016 + $0x20] sm:$0xff]
    %v5022 = vld [vmem:[%s5016 + $0x28] sm:$0xff]
    %v5023 = vld [vmem:[%s5016 + $0x30] sm:$0xff]
    %v5024 = vld [vmem:[%s5016 + $0x38] sm:$0xff]
    %v5025 = vld [vmem:[%s5016 + $0x40] sm:$0xff]
    %v5026 = vld [vmem:[%s5016 + $0x48] sm:$0xff]
    %v5027 = vld [vmem:[%s5016 + $0x50] sm:$0xff]
    %v5028 = vld [vmem:[%s5016 + $0x58] sm:$0xff]
    %v5029 = vld [vmem:[%s5016 + $0x60] sm:$0xff]
    %v5030 = vld [vmem:[%s5016 + $0x68] sm:$0xff]
    %v5031 = vld [vmem:[%s5016 + $0x70] sm:$0xff]
    %v5032 = vld [vmem:[%s5016 + $0x78] sm:$0xff]
    %v5033 = vld [vmem:[%s5016 + $0x80] sm:$0xff]
    %v5034 = vld [vmem:[%s5016 + $0x88] sm:$0xff]
    %v5035 = vld [vmem:[%s5016 + $0x90] sm:$0xff]
    %v5036 = vld [vmem:[%s5016 + $0x98] sm:$0xff]
    %v5037 = vld [vmem:[%s5016 + $0xa0] sm:$0xff]
    %v5038 = vld [vmem:[%s5016 + $0xa8] sm:$0xff]
    %v5039 = vld [vmem:[%s5016 + $0xb0] sm:$0xff]
    %v5040 = vld [vmem:[%s5016 + $0xb8] sm:$0xff]
    %v5041 = vld [vmem:[%s5016 + $0xc0] sm:$0xff]
    %v5042 = vld [vmem:[%s5016 + $0xc8] sm:$0xff]
    %v5043 = vld [vmem:[%s5016 + $0xd0] sm:$0xff]
    %v5044 = vld [vmem:[%s5016 + $0xd8] sm:$0xff]
    %v5045 = vld [vmem:[%s5016 + $0xe0] sm:$0xff]
    %v5046 = vld [vmem:[%s5016 + $0xe8] sm:$0xff]
    %v5047 = vld [vmem:[%s5016 + $0xf0] sm:$0xff]
    %v5048 = vld [vmem:[%s5016 + $0xf8] sm:$0xff]
    %v5049 = vld [vmem:[%s5016 + $0x100] sm:$0xff]
    %v5050 = vld [vmem:[%s5016 + $0x108] sm:$0xff]
    %v5051 = vld [vmem:[%s5016 + $0x110] sm:$0xff]
    %v5052 = vld [vmem:[%s5016 + $0x118] sm:$0xff]
    %v5053 = vld [vmem:[%s5016 + $0x120] sm:$0xff]
    %v5054 = vld [vmem:[%s5016 + $0x128] sm:$0xff]
    %v5055 = vld [vmem:[%s5016 + $0x130] sm:$0xff]
    %v5056 = vld [vmem:[%s5016 + $0x138] sm:$0xff]
    %v5057 = vld [vmem:[%s5016 + $0x140] sm:$0xff]
    %v5058 = vld [vmem:[%s5016 + $0x148] sm:$0xff]
    %v5059 = vld [vmem:[%s5016 + $0x150] sm:$0xff]
    %v5060 = vld [vmem:[%s5016 + $0x158] sm:$0xff]
    %v5061 = vld [vmem:[%s5016 + $0x160] sm:$0xff]
    %v5062 = vld [vmem:[%s5016 + $0x168] sm:$0xff]
    %v5063 = vld [vmem:[%s5016 + $0x170] sm:$0xff]
    %v5064 = vld [vmem:[%s5016 + $0x178] sm:$0xff]
    %s5065 = scalar_lea.vmem [#allocation3], 1152
    %v5066 = vld [vmem:[%s5065] sm:$0xff]
    %v5067 = vld [vmem:[%s5065 + $0x8] sm:$0xff]
    %v5068 = vld [vmem:[%s5065 + $0x10] sm:$0xff]
    %v5069 = vld [vmem:[%s5065 + $0x18] sm:$0xff]
    %v5070 = vld [vmem:[%s5065 + $0x20] sm:$0xff]
    %v5071 = vld [vmem:[%s5065 + $0x28] sm:$0xff]
    %v5072 = vld [vmem:[%s5065 + $0x30] sm:$0xff]
    %v5073 = vld [vmem:[%s5065 + $0x38] sm:$0xff]
    %v5074 = vld [vmem:[%s5065 + $0x40] sm:$0xff]
    %v5075 = vld [vmem:[%s5065 + $0x48] sm:$0xff]
    %v5076 = vld [vmem:[%s5065 + $0x50] sm:$0xff]
    %v5077 = vld [vmem:[%s5065 + $0x58] sm:$0xff]
    %v5078 = vld [vmem:[%s5065 + $0x60] sm:$0xff]
    %v5079 = vld [vmem:[%s5065 + $0x68] sm:$0xff]
    %v5080 = vld [vmem:[%s5065 + $0x70] sm:$0xff]
    %v5081 = vld [vmem:[%s5065 + $0x78] sm:$0xff]
    %v5082 = vld [vmem:[%s5065 + $0x80] sm:$0xff]
    %v5083 = vld [vmem:[%s5065 + $0x88] sm:$0xff]
    %v5084 = vld [vmem:[%s5065 + $0x90] sm:$0xff]
    %v5085 = vld [vmem:[%s5065 + $0x98] sm:$0xff]
    %v5086 = vld [vmem:[%s5065 + $0xa0] sm:$0xff]
    %v5087 = vld [vmem:[%s5065 + $0xa8] sm:$0xff]
    %v5088 = vld [vmem:[%s5065 + $0xb0] sm:$0xff]
    %v5089 = vld [vmem:[%s5065 + $0xb8] sm:$0xff]
    %v5090 = vld [vmem:[%s5065 + $0xc0] sm:$0xff]
    %v5091 = vld [vmem:[%s5065 + $0xc8] sm:$0xff]
    %v5092 = vld [vmem:[%s5065 + $0xd0] sm:$0xff]
    %v5093 = vld [vmem:[%s5065 + $0xd8] sm:$0xff]
    %v5094 = vld [vmem:[%s5065 + $0xe0] sm:$0xff]
    %v5095 = vld [vmem:[%s5065 + $0xe8] sm:$0xff]
    %v5096 = vld [vmem:[%s5065 + $0xf0] sm:$0xff]
    %v5097 = vld [vmem:[%s5065 + $0xf8] sm:$0xff]
    %v5098 = vld [vmem:[%s5065 + $0x100] sm:$0xff]
    %v5099 = vld [vmem:[%s5065 + $0x108] sm:$0xff]
    %v5100 = vld [vmem:[%s5065 + $0x110] sm:$0xff]
    %v5101 = vld [vmem:[%s5065 + $0x118] sm:$0xff]
    %v5102 = vld [vmem:[%s5065 + $0x120] sm:$0xff]
    %v5103 = vld [vmem:[%s5065 + $0x128] sm:$0xff]
    %v5104 = vld [vmem:[%s5065 + $0x130] sm:$0xff]
    %v5105 = vld [vmem:[%s5065 + $0x138] sm:$0xff]
    %v5106 = vld [vmem:[%s5065 + $0x140] sm:$0xff]
    %v5107 = vld [vmem:[%s5065 + $0x148] sm:$0xff]
    %v5108 = vld [vmem:[%s5065 + $0x150] sm:$0xff]
    %v5109 = vld [vmem:[%s5065 + $0x158] sm:$0xff]
    %v5110 = vld [vmem:[%s5065 + $0x160] sm:$0xff]
    %v5111 = vld [vmem:[%s5065 + $0x168] sm:$0xff]
    %v5112 = vld [vmem:[%s5065 + $0x170] sm:$0xff]
    %v5113 = vld [vmem:[%s5065 + $0x178] sm:$0xff]
    %s5114 = scalar_lea.vmem %s3, 18
    %v5115 = vld [vmem:[%s5114] sm:$0x3f]
    %v5117 = vperm.slane %v5115, 0
    %v5118 = vperm.slane %v5115, 2
    %v5119 = vperm.slane %v5115, 4
    %v5123 = vperm.slane %v5117, 0
    %v5124 = vperm.slane %v5118, 0
    %v5125 = vperm.slane %v5119, 0
    %5126 = vmatpush.msra.mxu0 %v5062
    %5127 = vmatpush.msra.mxu0 %v5059
    %5128 = vmatpush.msra.mxu0 %v5056
    %5129 = vmatpush.msra.mxu0 %v5053
    %5130 = vmatpush.msra.mxu0 %v5050
    %5131 = vmatpush.msra.mxu0 %v5047
    %5132 = vmatpush.msra.mxu0 %v5044
    %5133 = vmatpush.msra.mxu0 %v5041
    %5134 = vmatpush.msra.mxu0 %v5038
    %5135 = vmatpush.msra.mxu0 %v5035
    %5136 = vmatpush.msra.mxu0 %v5032
    %5137 = vmatpush.msra.mxu0 %v5029
    %5138 = vmatpush.msra.mxu0 %v5026
    %5139 = vmatpush.msra.mxu0 %v5023
    %5140 = vmatpush.msra.mxu0 %v5020
    %5141 = vmatpush.msra.mxu0 %v5017
    %5142 = vmatmul.f32.gmra.mxu0 %v5000
    %v5143 = vpop.f32.mrf.mxu0
    %v5144 = vadd.f32 %v5123, %v5143
    %5145 = vmatmul.f32.gmra.mxu0 %v5001
    %v5146 = vpop.f32.mrf.mxu0
    %v5147 = vadd.f32 %v5123, %v5146
    %5148 = vmatmul.f32.gmra.mxu0 %v5002
    %v5149 = vpop.f32.mrf.mxu0
    %v5150 = vadd.f32 %v5123, %v5149
    %5151 = vmatmul.f32.gmra.mxu0 %v5003
    %v5152 = vpop.f32.mrf.mxu0
    %v5153 = vadd.f32 %v5123, %v5152
    %5154 = vmatmul.f32.gmra.mxu0 %v5004
    %v5155 = vpop.f32.mrf.mxu0
    %v5156 = vadd.f32 %v5123, %v5155
    %5157 = vmatmul.f32.gmra.mxu0 %v5005
    %v5158 = vpop.f32.mrf.mxu0
    %v5159 = vadd.f32 %v5123, %v5158
    %5160 = vmatmul.f32.gmra.mxu0 %v5006
    %v5161 = vpop.f32.mrf.mxu0
    %v5162 = vadd.f32 %v5123, %v5161
    %5163 = vmatmul.f32.gmra.mxu0 %v5007
    %v5164 = vpop.f32.mrf.mxu0
    %v5165 = vadd.f32 %v5123, %v5164
    %5166 = vmatmul.f32.gmra.mxu0 %v5008
    %v5167 = vpop.f32.mrf.mxu0
    %v5168 = vadd.f32 %v5123, %v5167
    %5169 = vmatmul.f32.gmra.mxu0 %v5009
    %v5170 = vpop.f32.mrf.mxu0
    %v5171 = vadd.f32 %v5123, %v5170
    %5172 = vmatmul.f32.gmra.mxu0 %v5010
    %v5173 = vpop.f32.mrf.mxu0
    %v5174 = vadd.f32 %v5123, %v5173
    %5175 = vmatmul.f32.gmra.mxu0 %v5011
    %v5176 = vpop.f32.mrf.mxu0
    %v5177 = vadd.f32 %v5123, %v5176
    %5178 = vmatmul.f32.gmra.mxu0 %v5012
    %v5179 = vpop.f32.mrf.mxu0
    %v5180 = vadd.f32 %v5123, %v5179
    %5181 = vmatmul.f32.gmra.mxu0 %v5013
    %v5182 = vpop.f32.mrf.mxu0
    %v5183 = vadd.f32 %v5123, %v5182
    %5184 = vmatmul.f32.gmra.mxu0 %v5014
    %v5185 = vpop.f32.mrf.mxu0
    %v5186 = vadd.f32 %v5123, %v5185
    %5187 = vmatmul.f32.gmra.mxu0 %v5015
    %v5188 = vpop.f32.mrf.mxu0
    %v5189 = vadd.f32 %v5123, %v5188
    %5190 = vdwg.mxu0
    %5191 = vmatpush.msra.mxu0 %v5063
    %5192 = vmatpush.msra.mxu0 %v5060
    %5193 = vmatpush.msra.mxu0 %v5057
    %5194 = vmatpush.msra.mxu0 %v5054
    %5195 = vmatpush.msra.mxu0 %v5051
    %5196 = vmatpush.msra.mxu0 %v5048
    %5197 = vmatpush.msra.mxu0 %v5045
    %5198 = vmatpush.msra.mxu0 %v5042
    %5199 = vmatpush.msra.mxu0 %v5039
    %5200 = vmatpush.msra.mxu0 %v5036
    %5201 = vmatpush.msra.mxu0 %v5033
    %5202 = vmatpush.msra.mxu0 %v5030
    %5203 = vmatpush.msra.mxu0 %v5027
    %5204 = vmatpush.msra.mxu0 %v5024
    %5205 = vmatpush.msra.mxu0 %v5021
    %5206 = vmatpush.msra.mxu0 %v5018
    %5207 = vmatmul.f32.gmra.mxu0 %v5000
    %v5208 = vpop.f32.mrf.mxu0
    %v5209 = vadd.f32 %v5124, %v5208
    %5210 = vmatmul.f32.gmra.mxu0 %v5001
    %v5211 = vpop.f32.mrf.mxu0
    %v5212 = vadd.f32 %v5124, %v5211
    %5213 = vmatmul.f32.gmra.mxu0 %v5002
    %v5214 = vpop.f32.mrf.mxu0
    %v5215 = vadd.f32 %v5124, %v5214
    %5216 = vmatmul.f32.gmra.mxu0 %v5003
    %v5217 = vpop.f32.mrf.mxu0
    %v5218 = vadd.f32 %v5124, %v5217
    %5219 = vmatmul.f32.gmra.mxu0 %v5004
    %v5220 = vpop.f32.mrf.mxu0
    %v5221 = vadd.f32 %v5124, %v5220
    %5222 = vmatmul.f32.gmra.mxu0 %v5005
    %v5223 = vpop.f32.mrf.mxu0
    %v5224 = vadd.f32 %v5124, %v5223
    %5225 = vmatmul.f32.gmra.mxu0 %v5006
    %v5226 = vpop.f32.mrf.mxu0
    %v5227 = vadd.f32 %v5124, %v5226
    %5228 = vmatmul.f32.gmra.mxu0 %v5007
    %v5229 = vpop.f32.mrf.mxu0
    %v5230 = vadd.f32 %v5124, %v5229
    %5231 = vmatmul.f32.gmra.mxu0 %v5008
    %v5232 = vpop.f32.mrf.mxu0
    %v5233 = vadd.f32 %v5124, %v5232
    %5234 = vmatmul.f32.gmra.mxu0 %v5009
    %v5235 = vpop.f32.mrf.mxu0
    %v5236 = vadd.f32 %v5124, %v5235
    %5237 = vmatmul.f32.gmra.mxu0 %v5010
    %v5238 = vpop.f32.mrf.mxu0
    %v5239 = vadd.f32 %v5124, %v5238
    %5240 = vmatmul.f32.gmra.mxu0 %v5011
    %v5241 = vpop.f32.mrf.mxu0
    %v5242 = vadd.f32 %v5124, %v5241
    %5243 = vmatmul.f32.gmra.mxu0 %v5012
    %v5244 = vpop.f32.mrf.mxu0
    %v5245 = vadd.f32 %v5124, %v5244
    %5246 = vmatmul.f32.gmra.mxu0 %v5013
    %v5247 = vpop.f32.mrf.mxu0
    %v5248 = vadd.f32 %v5124, %v5247
    %5249 = vmatmul.f32.gmra.mxu0 %v5014
    %v5250 = vpop.f32.mrf.mxu0
    %v5251 = vadd.f32 %v5124, %v5250
    %5252 = vmatmul.f32.gmra.mxu0 %v5015
    %v5253 = vpop.f32.mrf.mxu0
    %v5254 = vadd.f32 %v5124, %v5253
    %5255 = vdwg.mxu0
    %5256 = vmatpush.msra.mxu0 %v5064
    %5257 = vmatpush.msra.mxu0 %v5061
    %5258 = vmatpush.msra.mxu0 %v5058
    %5259 = vmatpush.msra.mxu0 %v5055
    %5260 = vmatpush.msra.mxu0 %v5052
    %5261 = vmatpush.msra.mxu0 %v5049
    %5262 = vmatpush.msra.mxu0 %v5046
    %5263 = vmatpush.msra.mxu0 %v5043
    %5264 = vmatpush.msra.mxu0 %v5040
    %5265 = vmatpush.msra.mxu0 %v5037
    %5266 = vmatpush.msra.mxu0 %v5034
    %5267 = vmatpush.msra.mxu0 %v5031
    %5268 = vmatpush.msra.mxu0 %v5028
    %5269 = vmatpush.msra.mxu0 %v5025
    %5270 = vmatpush.msra.mxu0 %v5022
    %5271 = vmatpush.msra.mxu0 %v5019
    %5272 = vmatmul.f32.gmra.mxu0 %v5000
    %v5273 = vpop.f32.mrf.mxu0
    %v5274 = vadd.f32 %v5125, %v5273
    %5275 = vmatmul.f32.gmra.mxu0 %v5001
    %v5276 = vpop.f32.mrf.mxu0
    %v5277 = vadd.f32 %v5125, %v5276
    %5278 = vmatmul.f32.gmra.mxu0 %v5002
    %v5279 = vpop.f32.mrf.mxu0
    %v5280 = vadd.f32 %v5125, %v5279
    %5281 = vmatmul.f32.gmra.mxu0 %v5003
    %v5282 = vpop.f32.mrf.mxu0
    %v5283 = vadd.f32 %v5125, %v5282
    %5284 = vmatmul.f32.gmra.mxu0 %v5004
    %v5285 = vpop.f32.mrf.mxu0
    %v5286 = vadd.f32 %v5125, %v5285
    %5287 = vmatmul.f32.gmra.mxu0 %v5005
    %v5288 = vpop.f32.mrf.mxu0
    %v5289 = vadd.f32 %v5125, %v5288
    %5290 = vmatmul.f32.gmra.mxu0 %v5006
    %v5291 = vpop.f32.mrf.mxu0
    %v5292 = vadd.f32 %v5125, %v5291
    %5293 = vmatmul.f32.gmra.mxu0 %v5007
    %v5294 = vpop.f32.mrf.mxu0
    %v5295 = vadd.f32 %v5125, %v5294
    %5296 = vmatmul.f32.gmra.mxu0 %v5008
    %v5297 = vpop.f32.mrf.mxu0
    %v5298 = vadd.f32 %v5125, %v5297
    %5299 = vmatmul.f32.gmra.mxu0 %v5009
    %v5300 = vpop.f32.mrf.mxu0
    %v5301 = vadd.f32 %v5125, %v5300
    %5302 = vmatmul.f32.gmra.mxu0 %v5010
    %v5303 = vpop.f32.mrf.mxu0
    %v5304 = vadd.f32 %v5125, %v5303
    %5305 = vmatmul.f32.gmra.mxu0 %v5011
    %v5306 = vpop.f32.mrf.mxu0
    %v5307 = vadd.f32 %v5125, %v5306
    %5308 = vmatmul.f32.gmra.mxu0 %v5012
    %v5309 = vpop.f32.mrf.mxu0
    %v5310 = vadd.f32 %v5125, %v5309
    %5311 = vmatmul.f32.gmra.mxu0 %v5013
    %v5312 = vpop.f32.mrf.mxu0
    %v5313 = vadd.f32 %v5125, %v5312
    %5314 = vmatmul.f32.gmra.mxu0 %v5014
    %v5315 = vpop.f32.mrf.mxu0
    %v5316 = vadd.f32 %v5125, %v5315
    %5317 = vmatmul.f32.gmra.mxu0 %v5015
    %v5318 = vpop.f32.mrf.mxu0
    %v5319 = vadd.f32 %v5125, %v5318
    %5320 = vdwg.mxu0
    %v5321 = vperm.slane %v5115, 1
    %v5322 = vperm.slane %v5115, 3
    %v5323 = vperm.slane %v5115, 5
    %v5327 = vperm.slane %v5321, 1
    %v5328 = vperm.slane %v5322, 1
    %v5329 = vperm.slane %v5323, 1
    %5330 = vmatpush.msra.mxu0 %v5111
    %5331 = vmatpush.msra.mxu0 %v5108
    %5332 = vmatpush.msra.mxu0 %v5105
    %5333 = vmatpush.msra.mxu0 %v5102
    %5334 = vmatpush.msra.mxu0 %v5099
    %5335 = vmatpush.msra.mxu0 %v5096
    %5336 = vmatpush.msra.mxu0 %v5093
    %5337 = vmatpush.msra.mxu0 %v5090
    %5338 = vmatpush.msra.mxu0 %v5087
    %5339 = vmatpush.msra.mxu0 %v5084
    %5340 = vmatpush.msra.mxu0 %v5081
    %5341 = vmatpush.msra.mxu0 %v5078
    %5342 = vmatpush.msra.mxu0 %v5075
    %5343 = vmatpush.msra.mxu0 %v5072
    %5344 = vmatpush.msra.mxu0 %v5069
    %5345 = vmatpush.msra.mxu0 %v5066
    %5346 = vmatmul.f32.gmra.mxu0 0.0
    %v5347 = vpop.f32.mrf.mxu0
    %v5348 = vadd.f32 %v5327, %v5347
    %5349 = vmatmul.f32.gmra.mxu0 0.0
    %v5350 = vpop.f32.mrf.mxu0
    %v5351 = vadd.f32 %v5327, %v5350
    %5352 = vdwg.mxu0
    %5353 = vmatpush.msra.mxu0 %v5112
    %5354 = vmatpush.msra.mxu0 %v5109
    %5355 = vmatpush.msra.mxu0 %v5106
    %5356 = vmatpush.msra.mxu0 %v5103
    %5357 = vmatpush.msra.mxu0 %v5100
    %5358 = vmatpush.msra.mxu0 %v5097
    %5359 = vmatpush.msra.mxu0 %v5094
    %5360 = vmatpush.msra.mxu0 %v5091
    %5361 = vmatpush.msra.mxu0 %v5088
    %5362 = vmatpush.msra.mxu0 %v5085
    %5363 = vmatpush.msra.mxu0 %v5082
    %5364 = vmatpush.msra.mxu0 %v5079
    %5365 = vmatpush.msra.mxu0 %v5076
    %5366 = vmatpush.msra.mxu0 %v5073
    %5367 = vmatpush.msra.mxu0 %v5070
    %5368 = vmatpush.msra.mxu0 %v5067
    %5369 = vmatmul.f32.gmra.mxu0 0.0
    %v5370 = vpop.f32.mrf.mxu0
    %v5371 = vadd.f32 %v5328, %v5370
    %5372 = vmatmul.f32.gmra.mxu0 0.0
    %v5373 = vpop.f32.mrf.mxu0
    %v5374 = vadd.f32 %v5328, %v5373
    %5375 = vdwg.mxu0
    %5376 = vmatpush.msra.mxu0 %v5113
    %5377 = vmatpush.msra.mxu0 %v5110
    %5378 = vmatpush.msra.mxu0 %v5107
    %5379 = vmatpush.msra.mxu0 %v5104
    %5380 = vmatpush.msra.mxu0 %v5101
    %5381 = vmatpush.msra.mxu0 %v5098
    %5382 = vmatpush.msra.mxu0 %v5095
    %5383 = vmatpush.msra.mxu0 %v5092
    %5384 = vmatpush.msra.mxu0 %v5089
    %5385 = vmatpush.msra.mxu0 %v5086
    %5386 = vmatpush.msra.mxu0 %v5083
    %5387 = vmatpush.msra.mxu0 %v5080
    %5388 = vmatpush.msra.mxu0 %v5077
    %5389 = vmatpush.msra.mxu0 %v5074
    %5390 = vmatpush.msra.mxu0 %v5071
    %5391 = vmatpush.msra.mxu0 %v5068
    %5392 = vmatmul.f32.gmra.mxu0 0.0
    %v5393 = vpop.f32.mrf.mxu0
    %v5394 = vadd.f32 %v5329, %v5393
    %5395 = vmatmul.f32.gmra.mxu0 0.0
    %v5396 = vpop.f32.mrf.mxu0
    %v5397 = vadd.f32 %v5329, %v5396
    %5398 = vdwg.mxu0
    %v5399 = vadd.f32 %v5144, %v5348
    %v5400 = vadd.f32 %v5147, %v5351
    %v5401 = vxor.u32 %v5399, 2147483648
    %v5402 = vxor.u32 %v5400, 2147483648
    %v5403 = vmul.f32 %v5401, 1.442695
    %v5404 = vpow.pop %v5403
    %v5405 = vmul.f32 %v5402, 1.442695
    %v5406 = vpow.pop %v5405
    %v5407 = vadd.f32 %v5404, 1.0
    %v5408 = vadd.f32 %v5406, 1.0
    %v5409 = vrcp.pop %v5407
    %v5410 = vmul.f32 %v5407, %v5409
    %v5411 = vsub.f32 1.0, %v5410
    %v5412 = vmul.f32 %v5409, %v5411
    %v5413 = vadd.f32 %v5409, %v5412
    %vm5414 = vweird.f32 %v5407
    %vm5415 = vweird.f32 %v5409
    %vm5416 = vmor %vm5414, %vm5415
    %v5417 = vsel %vm5416, %v5409, %v5413
    %v5418 = vand.u32 2147483647, %v5407
    %vm5419 = vcmp.eq.f32.partialorder %v5418, 8.507059e+37
    %v5420 = vand.u32 %v5407, 2147483648
    %v5421 = vor.u32 1.1754944e-38, %v5420
    %v5422 = vsel %vm5419, %v5421, %v5417
    %v5423 = vmul.f32 1.0, %v5422
    %v5424 = vrcp.pop %v5408
    %v5425 = vmul.f32 %v5408, %v5424
    %v5426 = vsub.f32 1.0, %v5425
    %v5427 = vmul.f32 %v5424, %v5426
    %v5428 = vadd.f32 %v5424, %v5427
    %vm5429 = vweird.f32 %v5408
    %vm5430 = vweird.f32 %v5424
    %vm5431 = vmor %vm5429, %vm5430
    %v5432 = vsel %vm5431, %v5424, %v5428
    %v5433 = vand.u32 2147483647, %v5408
    %vm5434 = vcmp.eq.f32.partialorder %v5433, 8.507059e+37
    %v5435 = vand.u32 %v5408, 2147483648
    %v5436 = vor.u32 1.1754944e-38, %v5435
    %v5437 = vsel %vm5434, %v5436, %v5432
    %v5438 = vmul.f32 1.0, %v5437
    %v5439 = vadd.f32 %v5209, %v5371
    %v5440 = vadd.f32 %v5212, %v5374
    %v5441 = vxor.u32 %v5439, 2147483648
    %v5442 = vxor.u32 %v5440, 2147483648
    %v5443 = vmul.f32 %v5441, 1.442695
    %v5444 = vpow.pop %v5443
    %v5445 = vmul.f32 %v5442, 1.442695
    %v5446 = vpow.pop %v5445
    %v5447 = vadd.f32 %v5444, 1.0
    %v5448 = vadd.f32 %v5446, 1.0
    %v5449 = vrcp.pop %v5447
    %v5450 = vmul.f32 %v5447, %v5449
    %v5451 = vsub.f32 1.0, %v5450
    %v5452 = vmul.f32 %v5449, %v5451
    %v5453 = vadd.f32 %v5449, %v5452
    %vm5454 = vweird.f32 %v5447
    %vm5455 = vweird.f32 %v5449
    %vm5456 = vmor %vm5454, %vm5455
    %v5457 = vsel %vm5456, %v5449, %v5453
    %v5458 = vand.u32 2147483647, %v5447
    %vm5459 = vcmp.eq.f32.partialorder %v5458, 8.507059e+37
    %v5460 = vand.u32 %v5447, 2147483648
    %v5461 = vor.u32 1.1754944e-38, %v5460
    %v5462 = vsel %vm5459, %v5461, %v5457
    %v5463 = vmul.f32 1.0, %v5462
    %v5464 = vrcp.pop %v5448
    %v5465 = vmul.f32 %v5448, %v5464
    %v5466 = vsub.f32 1.0, %v5465
    %v5467 = vmul.f32 %v5464, %v5466
    %v5468 = vadd.f32 %v5464, %v5467
    %vm5469 = vweird.f32 %v5448
    %vm5470 = vweird.f32 %v5464
    %vm5471 = vmor %vm5469, %vm5470
    %v5472 = vsel %vm5471, %v5464, %v5468
    %v5473 = vand.u32 2147483647, %v5448
    %vm5474 = vcmp.eq.f32.partialorder %v5473, 8.507059e+37
    %v5475 = vand.u32 %v5448, 2147483648
    %v5476 = vor.u32 1.1754944e-38, %v5475
    %v5477 = vsel %vm5474, %v5476, %v5472
    %v5478 = vmul.f32 1.0, %v5477
    %v5479 = vmul.f32 %v5423, %v5394
    %v5480 = vmul.f32 %v5438, %v5397
    %v5481 = vadd.f32 %v5274, %v5479
    %v5482 = vadd.f32 %v5277, %v5480
    %v5483 = vtanh.pop %v5481
    %v5484 = vtanh.pop %v5482
    %v5485 = vsub.f32 1.0, %v5463
    %v5486 = vsub.f32 1.0, %v5478
    %v5487 = vmul.f32 %v5485, %v5483
    %v5488 = vmul.f32 %v5486, %v5484
    %v5489 = vmul.f32 %v5463, 0.0
    %v5490 = vmul.f32 %v5478, 0.0
    %v5491 = vadd.f32 %v5487, %v5489
    %v5492 = vadd.f32 %v5488, %v5490
    %5493 = vst [vmem:[%s7] sm:$0xff] %v5491
    %5494 = vst [vmem:[%s7 + $0x8] sm:$0xff] %v5492
    %5495 = vmatpush.msra.mxu0 %v5111
    %5496 = vmatpush.msra.mxu0 %v5108
    %5497 = vmatpush.msra.mxu0 %v5105
    %5498 = vmatpush.msra.mxu0 %v5102
    %5499 = vmatpush.msra.mxu0 %v5099
    %5500 = vmatpush.msra.mxu0 %v5096
    %5501 = vmatpush.msra.mxu0 %v5093
    %5502 = vmatpush.msra.mxu0 %v5090
    %5503 = vmatpush.msra.mxu0 %v5087
    %5504 = vmatpush.msra.mxu0 %v5084
    %5505 = vmatpush.msra.mxu0 %v5081
    %5506 = vmatpush.msra.mxu0 %v5078
    %5507 = vmatpush.msra.mxu0 %v5075
    %5508 = vmatpush.msra.mxu0 %v5072
    %5509 = vmatpush.msra.mxu0 %v5069
    %5510 = vmatpush.msra.mxu0 %v5066
    %5511 = vmatmul.f32.gmra.mxu0 %v5491
    %v5512 = vpop.f32.mrf.mxu0
    %v5513 = vadd.f32 %v5327, %v5512
    %5514 = vmatmul.f32.gmra.mxu0 %v5492
    %v5515 = vpop.f32.mrf.mxu0
    %v5516 = vadd.f32 %v5327, %v5515
    %5517 = vdwg.mxu0
    %5518 = vmatpush.msra.mxu0 %v5112
    %5519 = vmatpush.msra.mxu0 %v5109
    %5520 = vmatpush.msra.mxu0 %v5106
    %5521 = vmatpush.msra.mxu0 %v5103
    %5522 = vmatpush.msra.mxu0 %v5100
    %5523 = vmatpush.msra.mxu0 %v5097
    %5524 = vmatpush.msra.mxu0 %v5094
    %5525 = vmatpush.msra.mxu0 %v5091
    %5526 = vmatpush.msra.mxu0 %v5088
    %5527 = vmatpush.msra.mxu0 %v5085
    %5528 = vmatpush.msra.mxu0 %v5082
    %5529 = vmatpush.msra.mxu0 %v5079
    %5530 = vmatpush.msra.mxu0 %v5076
    %5531 = vmatpush.msra.mxu0 %v5073
    %5532 = vmatpush.msra.mxu0 %v5070
    %5533 = vmatpush.msra.mxu0 %v5067
    %5534 = vmatmul.f32.gmra.mxu0 %v5491
    %v5535 = vpop.f32.mrf.mxu0
    %v5536 = vadd.f32 %v5328, %v5535
    %5537 = vmatmul.f32.gmra.mxu0 %v5492
    %v5538 = vpop.f32.mrf.mxu0
    %v5539 = vadd.f32 %v5328, %v5538
    %5540 = vdwg.mxu0
    %5541 = vmatpush.msra.mxu0 %v5113
    %5542 = vmatpush.msra.mxu0 %v5110
    %5543 = vmatpush.msra.mxu0 %v5107
    %5544 = vmatpush.msra.mxu0 %v5104
    %5545 = vmatpush.msra.mxu0 %v5101
    %5546 = vmatpush.msra.mxu0 %v5098
    %5547 = vmatpush.msra.mxu0 %v5095
    %5548 = vmatpush.msra.mxu0 %v5092
    %5549 = vmatpush.msra.mxu0 %v5089
    %5550 = vmatpush.msra.mxu0 %v5086
    %5551 = vmatpush.msra.mxu0 %v5083
    %5552 = vmatpush.msra.mxu0 %v5080
    %5553 = vmatpush.msra.mxu0 %v5077
    %5554 = vmatpush.msra.mxu0 %v5074
    %5555 = vmatpush.msra.mxu0 %v5071
    %5556 = vmatpush.msra.mxu0 %v5068
    %5557 = vmatmul.f32.gmra.mxu0 %v5491
    %v5558 = vpop.f32.mrf.mxu0
    %v5559 = vadd.f32 %v5329, %v5558
    %5560 = vmatmul.f32.gmra.mxu0 %v5492
    %v5561 = vpop.f32.mrf.mxu0
    %v5562 = vadd.f32 %v5329, %v5561
    %5563 = vdwg.mxu0
    %v5564 = vadd.f32 %v5150, %v5513
    %v5565 = vadd.f32 %v5153, %v5516
    %v5566 = vxor.u32 %v5564, 2147483648
    %v5567 = vxor.u32 %v5565, 2147483648
    %v5568 = vmul.f32 %v5566, 1.442695
    %v5569 = vpow.pop %v5568
    %v5570 = vmul.f32 %v5567, 1.442695
    %v5571 = vpow.pop %v5570
    %v5572 = vadd.f32 %v5569, 1.0
    %v5573 = vadd.f32 %v5571, 1.0
    %v5574 = vrcp.pop %v5572
    %v5575 = vmul.f32 %v5572, %v5574
    %v5576 = vsub.f32 1.0, %v5575
    %v5577 = vmul.f32 %v5574, %v5576
    %v5578 = vadd.f32 %v5574, %v5577
    %vm5579 = vweird.f32 %v5572
    %vm5580 = vweird.f32 %v5574
    %vm5581 = vmor %vm5579, %vm5580
    %v5582 = vsel %vm5581, %v5574, %v5578
    %v5583 = vand.u32 2147483647, %v5572
    %vm5584 = vcmp.eq.f32.partialorder %v5583, 8.507059e+37
    %v5585 = vand.u32 %v5572, 2147483648
    %v5586 = vor.u32 1.1754944e-38, %v5585
    %v5587 = vsel %vm5584, %v5586, %v5582
    %v5588 = vmul.f32 1.0, %v5587
    %v5589 = vrcp.pop %v5573
    %v5590 = vmul.f32 %v5573, %v5589
    %v5591 = vsub.f32 1.0, %v5590
    %v5592 = vmul.f32 %v5589, %v5591
    %v5593 = vadd.f32 %v5589, %v5592
    %vm5594 = vweird.f32 %v5573
    %vm5595 = vweird.f32 %v5589
    %vm5596 = vmor %vm5594, %vm5595
    %v5597 = vsel %vm5596, %v5589, %v5593
    %v5598 = vand.u32 2147483647, %v5573
    %vm5599 = vcmp.eq.f32.partialorder %v5598, 8.507059e+37
    %v5600 = vand.u32 %v5573, 2147483648
    %v5601 = vor.u32 1.1754944e-38, %v5600
    %v5602 = vsel %vm5599, %v5601, %v5597
    %v5603 = vmul.f32 1.0, %v5602
    %v5604 = vadd.f32 %v5215, %v5536
    %v5605 = vadd.f32 %v5218, %v5539
    %v5606 = vxor.u32 %v5604, 2147483648
    %v5607 = vxor.u32 %v5605, 2147483648
    %v5608 = vmul.f32 %v5606, 1.442695
    %v5609 = vpow.pop %v5608
    %v5610 = vmul.f32 %v5607, 1.442695
    %v5611 = vpow.pop %v5610
    %v5612 = vadd.f32 %v5609, 1.0
    %v5613 = vadd.f32 %v5611, 1.0
    %v5614 = vrcp.pop %v5612
    %v5615 = vmul.f32 %v5612, %v5614
    %v5616 = vsub.f32 1.0, %v5615
    %v5617 = vmul.f32 %v5614, %v5616
    %v5618 = vadd.f32 %v5614, %v5617
    %vm5619 = vweird.f32 %v5612
    %vm5620 = vweird.f32 %v5614
    %vm5621 = vmor %vm5619, %vm5620
    %v5622 = vsel %vm5621, %v5614, %v5618
    %v5623 = vand.u32 2147483647, %v5612
    %vm5624 = vcmp.eq.f32.partialorder %v5623, 8.507059e+37
    %v5625 = vand.u32 %v5612, 2147483648
    %v5626 = vor.u32 1.1754944e-38, %v5625
    %v5627 = vsel %vm5624, %v5626, %v5622
    %v5628 = vmul.f32 1.0, %v5627
    %v5629 = vrcp.pop %v5613
    %v5630 = vmul.f32 %v5613, %v5629
    %v5631 = vsub.f32 1.0, %v5630
    %v5632 = vmul.f32 %v5629, %v5631
    %v5633 = vadd.f32 %v5629, %v5632
    %vm5634 = vweird.f32 %v5613
    %vm5635 = vweird.f32 %v5629
    %vm5636 = vmor %vm5634, %vm5635
    %v5637 = vsel %vm5636, %v5629, %v5633
    %v5638 = vand.u32 2147483647, %v5613
    %vm5639 = vcmp.eq.f32.partialorder %v5638, 8.507059e+37
    %v5640 = vand.u32 %v5613, 2147483648
    %v5641 = vor.u32 1.1754944e-38, %v5640
    %v5642 = vsel %vm5639, %v5641, %v5637
    %v5643 = vmul.f32 1.0, %v5642
    %v5644 = vmul.f32 %v5588, %v5559
    %v5645 = vmul.f32 %v5603, %v5562
    %v5646 = vadd.f32 %v5280, %v5644
    %v5647 = vadd.f32 %v5283, %v5645
    %v5648 = vtanh.pop %v5646
    %v5649 = vtanh.pop %v5647
    %v5650 = vsub.f32 1.0, %v5628
    %v5651 = vsub.f32 1.0, %v5643
    %v5652 = vmul.f32 %v5650, %v5648
    %v5653 = vmul.f32 %v5651, %v5649
    %v5654 = vmul.f32 %v5628, %v5491
    %v5655 = vmul.f32 %v5643, %v5492
    %v5656 = vadd.f32 %v5652, %v5654
    %v5657 = vadd.f32 %v5653, %v5655
    %5658 = vst [vmem:[%s7 + $0x10] sm:$0xff] %v5656
    %5659 = vst [vmem:[%s7 + $0x18] sm:$0xff] %v5657
    %5660 = vmatpush.msra.mxu0 %v5111
    %5661 = vmatpush.msra.mxu0 %v5108
    %5662 = vmatpush.msra.mxu0 %v5105
    %5663 = vmatpush.msra.mxu0 %v5102
    %5664 = vmatpush.msra.mxu0 %v5099
    %5665 = vmatpush.msra.mxu0 %v5096
    %5666 = vmatpush.msra.mxu0 %v5093
    %5667 = vmatpush.msra.mxu0 %v5090
    %5668 = vmatpush.msra.mxu0 %v5087
    %5669 = vmatpush.msra.mxu0 %v5084
    %5670 = vmatpush.msra.mxu0 %v5081
    %5671 = vmatpush.msra.mxu0 %v5078
    %5672 = vmatpush.msra.mxu0 %v5075
    %5673 = vmatpush.msra.mxu0 %v5072
    %5674 = vmatpush.msra.mxu0 %v5069
    %5675 = vmatpush.msra.mxu0 %v5066
    %5676 = vmatmul.f32.gmra.mxu0 %v5656
    %v5677 = vpop.f32.mrf.mxu0
    %v5678 = vadd.f32 %v5327, %v5677
    %5679 = vmatmul.f32.gmra.mxu0 %v5657
    %v5680 = vpop.f32.mrf.mxu0
    %v5681 = vadd.f32 %v5327, %v5680
    %5682 = vdwg.mxu0
    %5683 = vmatpush.msra.mxu0 %v5112
    %5684 = vmatpush.msra.mxu0 %v5109
    %5685 = vmatpush.msra.mxu0 %v5106
    %5686 = vmatpush.msra.mxu0 %v5103
    %5687 = vmatpush.msra.mxu0 %v5100
    %5688 = vmatpush.msra.mxu0 %v5097
    %5689 = vmatpush.msra.mxu0 %v5094
    %5690 = vmatpush.msra.mxu0 %v5091
    %5691 = vmatpush.msra.mxu0 %v5088
    %5692 = vmatpush.msra.mxu0 %v5085
    %5693 = vmatpush.msra.mxu0 %v5082
    %5694 = vmatpush.msra.mxu0 %v5079
    %5695 = vmatpush.msra.mxu0 %v5076
    %5696 = vmatpush.msra.mxu0 %v5073
    %5697 = vmatpush.msra.mxu0 %v5070
    %5698 = vmatpush.msra.mxu0 %v5067
    %5699 = vmatmul.f32.gmra.mxu0 %v5656
    %v5700 = vpop.f32.mrf.mxu0
    %v5701 = vadd.f32 %v5328, %v5700
    %5702 = vmatmul.f32.gmra.mxu0 %v5657
    %v5703 = vpop.f32.mrf.mxu0
    %v5704 = vadd.f32 %v5328, %v5703
    %5705 = vdwg.mxu0
    %5706 = vmatpush.msra.mxu0 %v5113
    %5707 = vmatpush.msra.mxu0 %v5110
    %5708 = vmatpush.msra.mxu0 %v5107
    %5709 = vmatpush.msra.mxu0 %v5104
    %5710 = vmatpush.msra.mxu0 %v5101
    %5711 = vmatpush.msra.mxu0 %v5098
    %5712 = vmatpush.msra.mxu0 %v5095
    %5713 = vmatpush.msra.mxu0 %v5092
    %5714 = vmatpush.msra.mxu0 %v5089
    %5715 = vmatpush.msra.mxu0 %v5086
    %5716 = vmatpush.msra.mxu0 %v5083
    %5717 = vmatpush.msra.mxu0 %v5080
    %5718 = vmatpush.msra.mxu0 %v5077
    %5719 = vmatpush.msra.mxu0 %v5074
    %5720 = vmatpush.msra.mxu0 %v5071
    %5721 = vmatpush.msra.mxu0 %v5068
    %5722 = vmatmul.f32.gmra.mxu0 %v5656
    %v5723 = vpop.f32.mrf.mxu0
    %v5724 = vadd.f32 %v5329, %v5723
    %5725 = vmatmul.f32.gmra.mxu0 %v5657
    %v5726 = vpop.f32.mrf.mxu0
    %v5727 = vadd.f32 %v5329, %v5726
    %5728 = vdwg.mxu0
    %v5729 = vadd.f32 %v5156, %v5678
    %v5730 = vadd.f32 %v5159, %v5681
    %v5731 = vxor.u32 %v5729, 2147483648
    %v5732 = vxor.u32 %v5730, 2147483648
    %v5733 = vmul.f32 %v5731, 1.442695
    %v5734 = vpow.pop %v5733
    %v5735 = vmul.f32 %v5732, 1.442695
    %v5736 = vpow.pop %v5735
    %v5737 = vadd.f32 %v5734, 1.0
    %v5738 = vadd.f32 %v5736, 1.0
    %v5739 = vrcp.pop %v5737
    %v5740 = vmul.f32 %v5737, %v5739
    %v5741 = vsub.f32 1.0, %v5740
    %v5742 = vmul.f32 %v5739, %v5741
    %v5743 = vadd.f32 %v5739, %v5742
    %vm5744 = vweird.f32 %v5737
    %vm5745 = vweird.f32 %v5739
    %vm5746 = vmor %vm5744, %vm5745
    %v5747 = vsel %vm5746, %v5739, %v5743
    %v5748 = vand.u32 2147483647, %v5737
    %vm5749 = vcmp.eq.f32.partialorder %v5748, 8.507059e+37
    %v5750 = vand.u32 %v5737, 2147483648
    %v5751 = vor.u32 1.1754944e-38, %v5750
    %v5752 = vsel %vm5749, %v5751, %v5747
    %v5753 = vmul.f32 1.0, %v5752
    %v5754 = vrcp.pop %v5738
    %v5755 = vmul.f32 %v5738, %v5754
    %v5756 = vsub.f32 1.0, %v5755
    %v5757 = vmul.f32 %v5754, %v5756
    %v5758 = vadd.f32 %v5754, %v5757
    %vm5759 = vweird.f32 %v5738
    %vm5760 = vweird.f32 %v5754
    %vm5761 = vmor %vm5759, %vm5760
    %v5762 = vsel %vm5761, %v5754, %v5758
    %v5763 = vand.u32 2147483647, %v5738
    %vm5764 = vcmp.eq.f32.partialorder %v5763, 8.507059e+37
    %v5765 = vand.u32 %v5738, 2147483648
    %v5766 = vor.u32 1.1754944e-38, %v5765
    %v5767 = vsel %vm5764, %v5766, %v5762
    %v5768 = vmul.f32 1.0, %v5767
    %v5769 = vadd.f32 %v5221, %v5701
    %v5770 = vadd.f32 %v5224, %v5704
    %v5771 = vxor.u32 %v5769, 2147483648
    %v5772 = vxor.u32 %v5770, 2147483648
    %v5773 = vmul.f32 %v5771, 1.442695
    %v5774 = vpow.pop %v5773
    %v5775 = vmul.f32 %v5772, 1.442695
    %v5776 = vpow.pop %v5775
    %v5777 = vadd.f32 %v5774, 1.0
    %v5778 = vadd.f32 %v5776, 1.0
    %v5779 = vrcp.pop %v5777
    %v5780 = vmul.f32 %v5777, %v5779
    %v5781 = vsub.f32 1.0, %v5780
    %v5782 = vmul.f32 %v5779, %v5781
    %v5783 = vadd.f32 %v5779, %v5782
    %vm5784 = vweird.f32 %v5777
    %vm5785 = vweird.f32 %v5779
    %vm5786 = vmor %vm5784, %vm5785
    %v5787 = vsel %vm5786, %v5779, %v5783
    %v5788 = vand.u32 2147483647, %v5777
    %vm5789 = vcmp.eq.f32.partialorder %v5788, 8.507059e+37
    %v5790 = vand.u32 %v5777, 2147483648
    %v5791 = vor.u32 1.1754944e-38, %v5790
    %v5792 = vsel %vm5789, %v5791, %v5787
    %v5793 = vmul.f32 1.0, %v5792
    %v5794 = vrcp.pop %v5778
    %v5795 = vmul.f32 %v5778, %v5794
    %v5796 = vsub.f32 1.0, %v5795
    %v5797 = vmul.f32 %v5794, %v5796
    %v5798 = vadd.f32 %v5794, %v5797
    %vm5799 = vweird.f32 %v5778
    %vm5800 = vweird.f32 %v5794
    %vm5801 = vmor %vm5799, %vm5800
    %v5802 = vsel %vm5801, %v5794, %v5798
    %v5803 = vand.u32 2147483647, %v5778
    %vm5804 = vcmp.eq.f32.partialorder %v5803, 8.507059e+37
    %v5805 = vand.u32 %v5778, 2147483648
    %v5806 = vor.u32 1.1754944e-38, %v5805
    %v5807 = vsel %vm5804, %v5806, %v5802
    %v5808 = vmul.f32 1.0, %v5807
    %v5809 = vmul.f32 %v5753, %v5724
    %v5810 = vmul.f32 %v5768, %v5727
    %v5811 = vadd.f32 %v5286, %v5809
    %v5812 = vadd.f32 %v5289, %v5810
    %v5813 = vtanh.pop %v5811
    %v5814 = vtanh.pop %v5812
    %v5815 = vsub.f32 1.0, %v5793
    %v5816 = vsub.f32 1.0, %v5808
    %v5817 = vmul.f32 %v5815, %v5813
    %v5818 = vmul.f32 %v5816, %v5814
    %v5819 = vmul.f32 %v5793, %v5656
    %v5820 = vmul.f32 %v5808, %v5657
    %v5821 = vadd.f32 %v5817, %v5819
    %v5822 = vadd.f32 %v5818, %v5820
    %5823 = vst [vmem:[%s7 + $0x20] sm:$0xff] %v5821
    %5824 = vst [vmem:[%s7 + $0x28] sm:$0xff] %v5822
    %5825 = vmatpush.msra.mxu0 %v5111
    %5826 = vmatpush.msra.mxu0 %v5108
    %5827 = vmatpush.msra.mxu0 %v5105
    %5828 = vmatpush.msra.mxu0 %v5102
    %5829 = vmatpush.msra.mxu0 %v5099
    %5830 = vmatpush.msra.mxu0 %v5096
    %5831 = vmatpush.msra.mxu0 %v5093
    %5832 = vmatpush.msra.mxu0 %v5090
    %5833 = vmatpush.msra.mxu0 %v5087
    %5834 = vmatpush.msra.mxu0 %v5084
    %5835 = vmatpush.msra.mxu0 %v5081
    %5836 = vmatpush.msra.mxu0 %v5078
    %5837 = vmatpush.msra.mxu0 %v5075
    %5838 = vmatpush.msra.mxu0 %v5072
    %5839 = vmatpush.msra.mxu0 %v5069
    %5840 = vmatpush.msra.mxu0 %v5066
    %5841 = vmatmul.f32.gmra.mxu0 %v5821
    %v5842 = vpop.f32.mrf.mxu0
    %v5843 = vadd.f32 %v5327, %v5842
    %5844 = vmatmul.f32.gmra.mxu0 %v5822
    %v5845 = vpop.f32.mrf.mxu0
    %v5846 = vadd.f32 %v5327, %v5845
    %5847 = vdwg.mxu0
    %5848 = vmatpush.msra.mxu0 %v5112
    %5849 = vmatpush.msra.mxu0 %v5109
    %5850 = vmatpush.msra.mxu0 %v5106
    %5851 = vmatpush.msra.mxu0 %v5103
    %5852 = vmatpush.msra.mxu0 %v5100
    %5853 = vmatpush.msra.mxu0 %v5097
    %5854 = vmatpush.msra.mxu0 %v5094
    %5855 = vmatpush.msra.mxu0 %v5091
    %5856 = vmatpush.msra.mxu0 %v5088
    %5857 = vmatpush.msra.mxu0 %v5085
    %5858 = vmatpush.msra.mxu0 %v5082
    %5859 = vmatpush.msra.mxu0 %v5079
    %5860 = vmatpush.msra.mxu0 %v5076
    %5861 = vmatpush.msra.mxu0 %v5073
    %5862 = vmatpush.msra.mxu0 %v5070
    %5863 = vmatpush.msra.mxu0 %v5067
    %5864 = vmatmul.f32.gmra.mxu0 %v5821
    %v5865 = vpop.f32.mrf.mxu0
    %v5866 = vadd.f32 %v5328, %v5865
    %5867 = vmatmul.f32.gmra.mxu0 %v5822
    %v5868 = vpop.f32.mrf.mxu0
    %v5869 = vadd.f32 %v5328, %v5868
    %5870 = vdwg.mxu0
    %5871 = vmatpush.msra.mxu0 %v5113
    %5872 = vmatpush.msra.mxu0 %v5110
    %5873 = vmatpush.msra.mxu0 %v5107
    %5874 = vmatpush.msra.mxu0 %v5104
    %5875 = vmatpush.msra.mxu0 %v5101
    %5876 = vmatpush.msra.mxu0 %v5098
    %5877 = vmatpush.msra.mxu0 %v5095
    %5878 = vmatpush.msra.mxu0 %v5092
    %5879 = vmatpush.msra.mxu0 %v5089
    %5880 = vmatpush.msra.mxu0 %v5086
    %5881 = vmatpush.msra.mxu0 %v5083
    %5882 = vmatpush.msra.mxu0 %v5080
    %5883 = vmatpush.msra.mxu0 %v5077
    %5884 = vmatpush.msra.mxu0 %v5074
    %5885 = vmatpush.msra.mxu0 %v5071
    %5886 = vmatpush.msra.mxu0 %v5068
    %5887 = vmatmul.f32.gmra.mxu0 %v5821
    %v5888 = vpop.f32.mrf.mxu0
    %v5889 = vadd.f32 %v5329, %v5888
    %5890 = vmatmul.f32.gmra.mxu0 %v5822
    %v5891 = vpop.f32.mrf.mxu0
    %v5892 = vadd.f32 %v5329, %v5891
    %5893 = vdwg.mxu0
    %v5894 = vadd.f32 %v5162, %v5843
    %v5895 = vadd.f32 %v5165, %v5846
    %v5896 = vxor.u32 %v5894, 2147483648
    %v5897 = vxor.u32 %v5895, 2147483648
    %v5898 = vmul.f32 %v5896, 1.442695
    %v5899 = vpow.pop %v5898
    %v5900 = vmul.f32 %v5897, 1.442695
    %v5901 = vpow.pop %v5900
    %v5902 = vadd.f32 %v5899, 1.0
    %v5903 = vadd.f32 %v5901, 1.0
    %v5904 = vrcp.pop %v5902
    %v5905 = vmul.f32 %v5902, %v5904
    %v5906 = vsub.f32 1.0, %v5905
    %v5907 = vmul.f32 %v5904, %v5906
    %v5908 = vadd.f32 %v5904, %v5907
    %vm5909 = vweird.f32 %v5902
    %vm5910 = vweird.f32 %v5904
    %vm5911 = vmor %vm5909, %vm5910
    %v5912 = vsel %vm5911, %v5904, %v5908
    %v5913 = vand.u32 2147483647, %v5902
    %vm5914 = vcmp.eq.f32.partialorder %v5913, 8.507059e+37
    %v5915 = vand.u32 %v5902, 2147483648
    %v5916 = vor.u32 1.1754944e-38, %v5915
    %v5917 = vsel %vm5914, %v5916, %v5912
    %v5918 = vmul.f32 1.0, %v5917
    %v5919 = vrcp.pop %v5903
    %v5920 = vmul.f32 %v5903, %v5919
    %v5921 = vsub.f32 1.0, %v5920
    %v5922 = vmul.f32 %v5919, %v5921
    %v5923 = vadd.f32 %v5919, %v5922
    %vm5924 = vweird.f32 %v5903
    %vm5925 = vweird.f32 %v5919
    %vm5926 = vmor %vm5924, %vm5925
    %v5927 = vsel %vm5926, %v5919, %v5923
    %v5928 = vand.u32 2147483647, %v5903
    %vm5929 = vcmp.eq.f32.partialorder %v5928, 8.507059e+37
    %v5930 = vand.u32 %v5903, 2147483648
    %v5931 = vor.u32 1.1754944e-38, %v5930
    %v5932 = vsel %vm5929, %v5931, %v5927
    %v5933 = vmul.f32 1.0, %v5932
    %v5934 = vadd.f32 %v5227, %v5866
    %v5935 = vadd.f32 %v5230, %v5869
    %v5936 = vxor.u32 %v5934, 2147483648
    %v5937 = vxor.u32 %v5935, 2147483648
    %v5938 = vmul.f32 %v5936, 1.442695
    %v5939 = vpow.pop %v5938
    %v5940 = vmul.f32 %v5937, 1.442695
    %v5941 = vpow.pop %v5940
    %v5942 = vadd.f32 %v5939, 1.0
    %v5943 = vadd.f32 %v5941, 1.0
    %v5944 = vrcp.pop %v5942
    %v5945 = vmul.f32 %v5942, %v5944
    %v5946 = vsub.f32 1.0, %v5945
    %v5947 = vmul.f32 %v5944, %v5946
    %v5948 = vadd.f32 %v5944, %v5947
    %vm5949 = vweird.f32 %v5942
    %vm5950 = vweird.f32 %v5944
    %vm5951 = vmor %vm5949, %vm5950
    %v5952 = vsel %vm5951, %v5944, %v5948
    %v5953 = vand.u32 2147483647, %v5942
    %vm5954 = vcmp.eq.f32.partialorder %v5953, 8.507059e+37
    %v5955 = vand.u32 %v5942, 2147483648
    %v5956 = vor.u32 1.1754944e-38, %v5955
    %v5957 = vsel %vm5954, %v5956, %v5952
    %v5958 = vmul.f32 1.0, %v5957
    %v5959 = vrcp.pop %v5943
    %v5960 = vmul.f32 %v5943, %v5959
    %v5961 = vsub.f32 1.0, %v5960
    %v5962 = vmul.f32 %v5959, %v5961
    %v5963 = vadd.f32 %v5959, %v5962
    %vm5964 = vweird.f32 %v5943
    %vm5965 = vweird.f32 %v5959
    %vm5966 = vmor %vm5964, %vm5965
    %v5967 = vsel %vm5966, %v5959, %v5963
    %v5968 = vand.u32 2147483647, %v5943
    %vm5969 = vcmp.eq.f32.partialorder %v5968, 8.507059e+37
    %v5970 = vand.u32 %v5943, 2147483648
    %v5971 = vor.u32 1.1754944e-38, %v5970
    %v5972 = vsel %vm5969, %v5971, %v5967
    %v5973 = vmul.f32 1.0, %v5972
    %v5974 = vmul.f32 %v5918, %v5889
    %v5975 = vmul.f32 %v5933, %v5892
    %v5976 = vadd.f32 %v5292, %v5974
    %v5977 = vadd.f32 %v5295, %v5975
    %v5978 = vtanh.pop %v5976
    %v5979 = vtanh.pop %v5977
    %v5980 = vsub.f32 1.0, %v5958
    %v5981 = vsub.f32 1.0, %v5973
    %v5982 = vmul.f32 %v5980, %v5978
    %v5983 = vmul.f32 %v5981, %v5979
    %v5984 = vmul.f32 %v5958, %v5821
    %v5985 = vmul.f32 %v5973, %v5822
    %v5986 = vadd.f32 %v5982, %v5984
    %v5987 = vadd.f32 %v5983, %v5985
    %5988 = vst [vmem:[%s7 + $0x30] sm:$0xff] %v5986
    %5989 = vst [vmem:[%s7 + $0x38] sm:$0xff] %v5987
    %5990 = vmatpush.msra.mxu0 %v5111
    %5991 = vmatpush.msra.mxu0 %v5108
    %5992 = vmatpush.msra.mxu0 %v5105
    %5993 = vmatpush.msra.mxu0 %v5102
    %5994 = vmatpush.msra.mxu0 %v5099
    %5995 = vmatpush.msra.mxu0 %v5096
    %5996 = vmatpush.msra.mxu0 %v5093
    %5997 = vmatpush.msra.mxu0 %v5090
    %5998 = vmatpush.msra.mxu0 %v5087
    %5999 = vmatpush.msra.mxu0 %v5084
    %6000 = vmatpush.msra.mxu0 %v5081
    %6001 = vmatpush.msra.mxu0 %v5078
    %6002 = vmatpush.msra.mxu0 %v5075
    %6003 = vmatpush.msra.mxu0 %v5072
    %6004 = vmatpush.msra.mxu0 %v5069
    %6005 = vmatpush.msra.mxu0 %v5066
    %6006 = vmatmul.f32.gmra.mxu0 %v5986
    %v6007 = vpop.f32.mrf.mxu0
    %v6008 = vadd.f32 %v5327, %v6007
    %6009 = vmatmul.f32.gmra.mxu0 %v5987
    %v6010 = vpop.f32.mrf.mxu0
    %v6011 = vadd.f32 %v5327, %v6010
    %6012 = vdwg.mxu0
    %6013 = vmatpush.msra.mxu0 %v5112
    %6014 = vmatpush.msra.mxu0 %v5109
    %6015 = vmatpush.msra.mxu0 %v5106
    %6016 = vmatpush.msra.mxu0 %v5103
    %6017 = vmatpush.msra.mxu0 %v5100
    %6018 = vmatpush.msra.mxu0 %v5097
    %6019 = vmatpush.msra.mxu0 %v5094
    %6020 = vmatpush.msra.mxu0 %v5091
    %6021 = vmatpush.msra.mxu0 %v5088
    %6022 = vmatpush.msra.mxu0 %v5085
    %6023 = vmatpush.msra.mxu0 %v5082
    %6024 = vmatpush.msra.mxu0 %v5079
    %6025 = vmatpush.msra.mxu0 %v5076
    %6026 = vmatpush.msra.mxu0 %v5073
    %6027 = vmatpush.msra.mxu0 %v5070
    %6028 = vmatpush.msra.mxu0 %v5067
    %6029 = vmatmul.f32.gmra.mxu0 %v5986
    %v6030 = vpop.f32.mrf.mxu0
    %v6031 = vadd.f32 %v5328, %v6030
    %6032 = vmatmul.f32.gmra.mxu0 %v5987
    %v6033 = vpop.f32.mrf.mxu0
    %v6034 = vadd.f32 %v5328, %v6033
    %6035 = vdwg.mxu0
    %6036 = vmatpush.msra.mxu0 %v5113
    %6037 = vmatpush.msra.mxu0 %v5110
    %6038 = vmatpush.msra.mxu0 %v5107
    %6039 = vmatpush.msra.mxu0 %v5104
    %6040 = vmatpush.msra.mxu0 %v5101
    %6041 = vmatpush.msra.mxu0 %v5098
    %6042 = vmatpush.msra.mxu0 %v5095
    %6043 = vmatpush.msra.mxu0 %v5092
    %6044 = vmatpush.msra.mxu0 %v5089
    %6045 = vmatpush.msra.mxu0 %v5086
    %6046 = vmatpush.msra.mxu0 %v5083
    %6047 = vmatpush.msra.mxu0 %v5080
    %6048 = vmatpush.msra.mxu0 %v5077
    %6049 = vmatpush.msra.mxu0 %v5074
    %6050 = vmatpush.msra.mxu0 %v5071
    %6051 = vmatpush.msra.mxu0 %v5068
    %6052 = vmatmul.f32.gmra.mxu0 %v5986
    %v6053 = vpop.f32.mrf.mxu0
    %v6054 = vadd.f32 %v5329, %v6053
    %6055 = vmatmul.f32.gmra.mxu0 %v5987
    %v6056 = vpop.f32.mrf.mxu0
    %v6057 = vadd.f32 %v5329, %v6056
    %6058 = vdwg.mxu0
    %v6059 = vadd.f32 %v5168, %v6008
    %v6060 = vadd.f32 %v5171, %v6011
    %v6061 = vxor.u32 %v6059, 2147483648
    %v6062 = vxor.u32 %v6060, 2147483648
    %v6063 = vmul.f32 %v6061, 1.442695
    %v6064 = vpow.pop %v6063
    %v6065 = vmul.f32 %v6062, 1.442695
    %v6066 = vpow.pop %v6065
    %v6067 = vadd.f32 %v6064, 1.0
    %v6068 = vadd.f32 %v6066, 1.0
    %v6069 = vrcp.pop %v6067
    %v6070 = vmul.f32 %v6067, %v6069
    %v6071 = vsub.f32 1.0, %v6070
    %v6072 = vmul.f32 %v6069, %v6071
    %v6073 = vadd.f32 %v6069, %v6072
    %vm6074 = vweird.f32 %v6067
    %vm6075 = vweird.f32 %v6069
    %vm6076 = vmor %vm6074, %vm6075
    %v6077 = vsel %vm6076, %v6069, %v6073
    %v6078 = vand.u32 2147483647, %v6067
    %vm6079 = vcmp.eq.f32.partialorder %v6078, 8.507059e+37
    %v6080 = vand.u32 %v6067, 2147483648
    %v6081 = vor.u32 1.1754944e-38, %v6080
    %v6082 = vsel %vm6079, %v6081, %v6077
    %v6083 = vmul.f32 1.0, %v6082
    %v6084 = vrcp.pop %v6068
    %v6085 = vmul.f32 %v6068, %v6084
    %v6086 = vsub.f32 1.0, %v6085
    %v6087 = vmul.f32 %v6084, %v6086
    %v6088 = vadd.f32 %v6084, %v6087
    %vm6089 = vweird.f32 %v6068
    %vm6090 = vweird.f32 %v6084
    %vm6091 = vmor %vm6089, %vm6090
    %v6092 = vsel %vm6091, %v6084, %v6088
    %v6093 = vand.u32 2147483647, %v6068
    %vm6094 = vcmp.eq.f32.partialorder %v6093, 8.507059e+37
    %v6095 = vand.u32 %v6068, 2147483648
    %v6096 = vor.u32 1.1754944e-38, %v6095
    %v6097 = vsel %vm6094, %v6096, %v6092
    %v6098 = vmul.f32 1.0, %v6097
    %v6099 = vadd.f32 %v5233, %v6031
    %v6100 = vadd.f32 %v5236, %v6034
    %v6101 = vxor.u32 %v6099, 2147483648
    %v6102 = vxor.u32 %v6100, 2147483648
    %v6103 = vmul.f32 %v6101, 1.442695
    %v6104 = vpow.pop %v6103
    %v6105 = vmul.f32 %v6102, 1.442695
    %v6106 = vpow.pop %v6105
    %v6107 = vadd.f32 %v6104, 1.0
    %v6108 = vadd.f32 %v6106, 1.0
    %v6109 = vrcp.pop %v6107
    %v6110 = vmul.f32 %v6107, %v6109
    %v6111 = vsub.f32 1.0, %v6110
    %v6112 = vmul.f32 %v6109, %v6111
    %v6113 = vadd.f32 %v6109, %v6112
    %vm6114 = vweird.f32 %v6107
    %vm6115 = vweird.f32 %v6109
    %vm6116 = vmor %vm6114, %vm6115
    %v6117 = vsel %vm6116, %v6109, %v6113
    %v6118 = vand.u32 2147483647, %v6107
    %vm6119 = vcmp.eq.f32.partialorder %v6118, 8.507059e+37
    %v6120 = vand.u32 %v6107, 2147483648
    %v6121 = vor.u32 1.1754944e-38, %v6120
    %v6122 = vsel %vm6119, %v6121, %v6117
    %v6123 = vmul.f32 1.0, %v6122
    %v6124 = vrcp.pop %v6108
    %v6125 = vmul.f32 %v6108, %v6124
    %v6126 = vsub.f32 1.0, %v6125
    %v6127 = vmul.f32 %v6124, %v6126
    %v6128 = vadd.f32 %v6124, %v6127
    %vm6129 = vweird.f32 %v6108
    %vm6130 = vweird.f32 %v6124
    %vm6131 = vmor %vm6129, %vm6130
    %v6132 = vsel %vm6131, %v6124, %v6128
    %v6133 = vand.u32 2147483647, %v6108
    %vm6134 = vcmp.eq.f32.partialorder %v6133, 8.507059e+37
    %v6135 = vand.u32 %v6108, 2147483648
    %v6136 = vor.u32 1.1754944e-38, %v6135
    %v6137 = vsel %vm6134, %v6136, %v6132
    %v6138 = vmul.f32 1.0, %v6137
    %v6139 = vmul.f32 %v6083, %v6054
    %v6140 = vmul.f32 %v6098, %v6057
    %v6141 = vadd.f32 %v5298, %v6139
    %v6142 = vadd.f32 %v5301, %v6140
    %v6143 = vtanh.pop %v6141
    %v6144 = vtanh.pop %v6142
    %v6145 = vsub.f32 1.0, %v6123
    %v6146 = vsub.f32 1.0, %v6138
    %v6147 = vmul.f32 %v6145, %v6143
    %v6148 = vmul.f32 %v6146, %v6144
    %v6149 = vmul.f32 %v6123, %v5986
    %v6150 = vmul.f32 %v6138, %v5987
    %v6151 = vadd.f32 %v6147, %v6149
    %v6152 = vadd.f32 %v6148, %v6150
    %6153 = vst [vmem:[%s7 + $0x40] sm:$0xff] %v6151
    %6154 = vst [vmem:[%s7 + $0x48] sm:$0xff] %v6152
    %6155 = vmatpush.msra.mxu0 %v5111
    %6156 = vmatpush.msra.mxu0 %v5108
    %6157 = vmatpush.msra.mxu0 %v5105
    %6158 = vmatpush.msra.mxu0 %v5102
    %6159 = vmatpush.msra.mxu0 %v5099
    %6160 = vmatpush.msra.mxu0 %v5096
    %6161 = vmatpush.msra.mxu0 %v5093
    %6162 = vmatpush.msra.mxu0 %v5090
    %6163 = vmatpush.msra.mxu0 %v5087
    %6164 = vmatpush.msra.mxu0 %v5084
    %6165 = vmatpush.msra.mxu0 %v5081
    %6166 = vmatpush.msra.mxu0 %v5078
    %6167 = vmatpush.msra.mxu0 %v5075
    %6168 = vmatpush.msra.mxu0 %v5072
    %6169 = vmatpush.msra.mxu0 %v5069
    %6170 = vmatpush.msra.mxu0 %v5066
    %6171 = vmatmul.f32.gmra.mxu0 %v6151
    %v6172 = vpop.f32.mrf.mxu0
    %v6173 = vadd.f32 %v5327, %v6172
    %6174 = vmatmul.f32.gmra.mxu0 %v6152
    %v6175 = vpop.f32.mrf.mxu0
    %v6176 = vadd.f32 %v5327, %v6175
    %6177 = vdwg.mxu0
    %6178 = vmatpush.msra.mxu0 %v5112
    %6179 = vmatpush.msra.mxu0 %v5109
    %6180 = vmatpush.msra.mxu0 %v5106
    %6181 = vmatpush.msra.mxu0 %v5103
    %6182 = vmatpush.msra.mxu0 %v5100
    %6183 = vmatpush.msra.mxu0 %v5097
    %6184 = vmatpush.msra.mxu0 %v5094
    %6185 = vmatpush.msra.mxu0 %v5091
    %6186 = vmatpush.msra.mxu0 %v5088
    %6187 = vmatpush.msra.mxu0 %v5085
    %6188 = vmatpush.msra.mxu0 %v5082
    %6189 = vmatpush.msra.mxu0 %v5079
    %6190 = vmatpush.msra.mxu0 %v5076
    %6191 = vmatpush.msra.mxu0 %v5073
    %6192 = vmatpush.msra.mxu0 %v5070
    %6193 = vmatpush.msra.mxu0 %v5067
    %6194 = vmatmul.f32.gmra.mxu0 %v6151
    %v6195 = vpop.f32.mrf.mxu0
    %v6196 = vadd.f32 %v5328, %v6195
    %6197 = vmatmul.f32.gmra.mxu0 %v6152
    %v6198 = vpop.f32.mrf.mxu0
    %v6199 = vadd.f32 %v5328, %v6198
    %6200 = vdwg.mxu0
    %6201 = vmatpush.msra.mxu0 %v5113
    %6202 = vmatpush.msra.mxu0 %v5110
    %6203 = vmatpush.msra.mxu0 %v5107
    %6204 = vmatpush.msra.mxu0 %v5104
    %6205 = vmatpush.msra.mxu0 %v5101
    %6206 = vmatpush.msra.mxu0 %v5098
    %6207 = vmatpush.msra.mxu0 %v5095
    %6208 = vmatpush.msra.mxu0 %v5092
    %6209 = vmatpush.msra.mxu0 %v5089
    %6210 = vmatpush.msra.mxu0 %v5086
    %6211 = vmatpush.msra.mxu0 %v5083
    %6212 = vmatpush.msra.mxu0 %v5080
    %6213 = vmatpush.msra.mxu0 %v5077
    %6214 = vmatpush.msra.mxu0 %v5074
    %6215 = vmatpush.msra.mxu0 %v5071
    %6216 = vmatpush.msra.mxu0 %v5068
    %6217 = vmatmul.f32.gmra.mxu0 %v6151
    %v6218 = vpop.f32.mrf.mxu0
    %v6219 = vadd.f32 %v5329, %v6218
    %6220 = vmatmul.f32.gmra.mxu0 %v6152
    %v6221 = vpop.f32.mrf.mxu0
    %v6222 = vadd.f32 %v5329, %v6221
    %6223 = vdwg.mxu0
    %v6224 = vadd.f32 %v5174, %v6173
    %v6225 = vadd.f32 %v5177, %v6176
    %v6226 = vxor.u32 %v6224, 2147483648
    %v6227 = vxor.u32 %v6225, 2147483648
    %v6228 = vmul.f32 %v6226, 1.442695
    %v6229 = vpow.pop %v6228
    %v6230 = vmul.f32 %v6227, 1.442695
    %v6231 = vpow.pop %v6230
    %v6232 = vadd.f32 %v6229, 1.0
    %v6233 = vadd.f32 %v6231, 1.0
    %v6234 = vrcp.pop %v6232
    %v6235 = vmul.f32 %v6232, %v6234
    %v6236 = vsub.f32 1.0, %v6235
    %v6237 = vmul.f32 %v6234, %v6236
    %v6238 = vadd.f32 %v6234, %v6237
    %vm6239 = vweird.f32 %v6232
    %vm6240 = vweird.f32 %v6234
    %vm6241 = vmor %vm6239, %vm6240
    %v6242 = vsel %vm6241, %v6234, %v6238
    %v6243 = vand.u32 2147483647, %v6232
    %vm6244 = vcmp.eq.f32.partialorder %v6243, 8.507059e+37
    %v6245 = vand.u32 %v6232, 2147483648
    %v6246 = vor.u32 1.1754944e-38, %v6245
    %v6247 = vsel %vm6244, %v6246, %v6242
    %v6248 = vmul.f32 1.0, %v6247
    %v6249 = vrcp.pop %v6233
    %v6250 = vmul.f32 %v6233, %v6249
    %v6251 = vsub.f32 1.0, %v6250
    %v6252 = vmul.f32 %v6249, %v6251
    %v6253 = vadd.f32 %v6249, %v6252
    %vm6254 = vweird.f32 %v6233
    %vm6255 = vweird.f32 %v6249
    %vm6256 = vmor %vm6254, %vm6255
    %v6257 = vsel %vm6256, %v6249, %v6253
    %v6258 = vand.u32 2147483647, %v6233
    %vm6259 = vcmp.eq.f32.partialorder %v6258, 8.507059e+37
    %v6260 = vand.u32 %v6233, 2147483648
    %v6261 = vor.u32 1.1754944e-38, %v6260
    %v6262 = vsel %vm6259, %v6261, %v6257
    %v6263 = vmul.f32 1.0, %v6262
    %v6264 = vadd.f32 %v5239, %v6196
    %v6265 = vadd.f32 %v5242, %v6199
    %v6266 = vxor.u32 %v6264, 2147483648
    %v6267 = vxor.u32 %v6265, 2147483648
    %v6268 = vmul.f32 %v6266, 1.442695
    %v6269 = vpow.pop %v6268
    %v6270 = vmul.f32 %v6267, 1.442695
    %v6271 = vpow.pop %v6270
    %v6272 = vadd.f32 %v6269, 1.0
    %v6273 = vadd.f32 %v6271, 1.0
    %v6274 = vrcp.pop %v6272
    %v6275 = vmul.f32 %v6272, %v6274
    %v6276 = vsub.f32 1.0, %v6275
    %v6277 = vmul.f32 %v6274, %v6276
    %v6278 = vadd.f32 %v6274, %v6277
    %vm6279 = vweird.f32 %v6272
    %vm6280 = vweird.f32 %v6274
    %vm6281 = vmor %vm6279, %vm6280
    %v6282 = vsel %vm6281, %v6274, %v6278
    %v6283 = vand.u32 2147483647, %v6272
    %vm6284 = vcmp.eq.f32.partialorder %v6283, 8.507059e+37
    %v6285 = vand.u32 %v6272, 2147483648
    %v6286 = vor.u32 1.1754944e-38, %v6285
    %v6287 = vsel %vm6284, %v6286, %v6282
    %v6288 = vmul.f32 1.0, %v6287
    %v6289 = vrcp.pop %v6273
    %v6290 = vmul.f32 %v6273, %v6289
    %v6291 = vsub.f32 1.0, %v6290
    %v6292 = vmul.f32 %v6289, %v6291
    %v6293 = vadd.f32 %v6289, %v6292
    %vm6294 = vweird.f32 %v6273
    %vm6295 = vweird.f32 %v6289
    %vm6296 = vmor %vm6294, %vm6295
    %v6297 = vsel %vm6296, %v6289, %v6293
    %v6298 = vand.u32 2147483647, %v6273
    %vm6299 = vcmp.eq.f32.partialorder %v6298, 8.507059e+37
    %v6300 = vand.u32 %v6273, 2147483648
    %v6301 = vor.u32 1.1754944e-38, %v6300
    %v6302 = vsel %vm6299, %v6301, %v6297
    %v6303 = vmul.f32 1.0, %v6302
    %v6304 = vmul.f32 %v6248, %v6219
    %v6305 = vmul.f32 %v6263, %v6222
    %v6306 = vadd.f32 %v5304, %v6304
    %v6307 = vadd.f32 %v5307, %v6305
    %v6308 = vtanh.pop %v6306
    %v6309 = vtanh.pop %v6307
    %v6310 = vsub.f32 1.0, %v6288
    %v6311 = vsub.f32 1.0, %v6303
    %v6312 = vmul.f32 %v6310, %v6308
    %v6313 = vmul.f32 %v6311, %v6309
    %v6314 = vmul.f32 %v6288, %v6151
    %v6315 = vmul.f32 %v6303, %v6152
    %v6316 = vadd.f32 %v6312, %v6314
    %v6317 = vadd.f32 %v6313, %v6315
    %6318 = vst [vmem:[%s7 + $0x50] sm:$0xff] %v6316
    %6319 = vst [vmem:[%s7 + $0x58] sm:$0xff] %v6317
    %6320 = vmatpush.msra.mxu0 %v5111
    %6321 = vmatpush.msra.mxu0 %v5108
    %6322 = vmatpush.msra.mxu0 %v5105
    %6323 = vmatpush.msra.mxu0 %v5102
    %6324 = vmatpush.msra.mxu0 %v5099
    %6325 = vmatpush.msra.mxu0 %v5096
    %6326 = vmatpush.msra.mxu0 %v5093
    %6327 = vmatpush.msra.mxu0 %v5090
    %6328 = vmatpush.msra.mxu0 %v5087
    %6329 = vmatpush.msra.mxu0 %v5084
    %6330 = vmatpush.msra.mxu0 %v5081
    %6331 = vmatpush.msra.mxu0 %v5078
    %6332 = vmatpush.msra.mxu0 %v5075
    %6333 = vmatpush.msra.mxu0 %v5072
    %6334 = vmatpush.msra.mxu0 %v5069
    %6335 = vmatpush.msra.mxu0 %v5066
    %6336 = vmatmul.f32.gmra.mxu0 %v6316
    %v6337 = vpop.f32.mrf.mxu0
    %v6338 = vadd.f32 %v5327, %v6337
    %6339 = vmatmul.f32.gmra.mxu0 %v6317
    %v6340 = vpop.f32.mrf.mxu0
    %v6341 = vadd.f32 %v5327, %v6340
    %6342 = vdwg.mxu0
    %6343 = vmatpush.msra.mxu0 %v5112
    %6344 = vmatpush.msra.mxu0 %v5109
    %6345 = vmatpush.msra.mxu0 %v5106
    %6346 = vmatpush.msra.mxu0 %v5103
    %6347 = vmatpush.msra.mxu0 %v5100
    %6348 = vmatpush.msra.mxu0 %v5097
    %6349 = vmatpush.msra.mxu0 %v5094
    %6350 = vmatpush.msra.mxu0 %v5091
    %6351 = vmatpush.msra.mxu0 %v5088
    %6352 = vmatpush.msra.mxu0 %v5085
    %6353 = vmatpush.msra.mxu0 %v5082
    %6354 = vmatpush.msra.mxu0 %v5079
    %6355 = vmatpush.msra.mxu0 %v5076
    %6356 = vmatpush.msra.mxu0 %v5073
    %6357 = vmatpush.msra.mxu0 %v5070
    %6358 = vmatpush.msra.mxu0 %v5067
    %6359 = vmatmul.f32.gmra.mxu0 %v6316
    %v6360 = vpop.f32.mrf.mxu0
    %v6361 = vadd.f32 %v5328, %v6360
    %6362 = vmatmul.f32.gmra.mxu0 %v6317
    %v6363 = vpop.f32.mrf.mxu0
    %v6364 = vadd.f32 %v5328, %v6363
    %6365 = vdwg.mxu0
    %6366 = vmatpush.msra.mxu0 %v5113
    %6367 = vmatpush.msra.mxu0 %v5110
    %6368 = vmatpush.msra.mxu0 %v5107
    %6369 = vmatpush.msra.mxu0 %v5104
    %6370 = vmatpush.msra.mxu0 %v5101
    %6371 = vmatpush.msra.mxu0 %v5098
    %6372 = vmatpush.msra.mxu0 %v5095
    %6373 = vmatpush.msra.mxu0 %v5092
    %6374 = vmatpush.msra.mxu0 %v5089
    %6375 = vmatpush.msra.mxu0 %v5086
    %6376 = vmatpush.msra.mxu0 %v5083
    %6377 = vmatpush.msra.mxu0 %v5080
    %6378 = vmatpush.msra.mxu0 %v5077
    %6379 = vmatpush.msra.mxu0 %v5074
    %6380 = vmatpush.msra.mxu0 %v5071
    %6381 = vmatpush.msra.mxu0 %v5068
    %6382 = vmatmul.f32.gmra.mxu0 %v6316
    %v6383 = vpop.f32.mrf.mxu0
    %v6384 = vadd.f32 %v5329, %v6383
    %6385 = vmatmul.f32.gmra.mxu0 %v6317
    %v6386 = vpop.f32.mrf.mxu0
    %v6387 = vadd.f32 %v5329, %v6386
    %6388 = vdwg.mxu0
    %v6389 = vadd.f32 %v5180, %v6338
    %v6390 = vadd.f32 %v5183, %v6341
    %v6391 = vxor.u32 %v6389, 2147483648
    %v6392 = vxor.u32 %v6390, 2147483648
    %v6393 = vmul.f32 %v6391, 1.442695
    %v6394 = vpow.pop %v6393
    %v6395 = vmul.f32 %v6392, 1.442695
    %v6396 = vpow.pop %v6395
    %v6397 = vadd.f32 %v6394, 1.0
    %v6398 = vadd.f32 %v6396, 1.0
    %v6399 = vrcp.pop %v6397
    %v6400 = vmul.f32 %v6397, %v6399
    %v6401 = vsub.f32 1.0, %v6400
    %v6402 = vmul.f32 %v6399, %v6401
    %v6403 = vadd.f32 %v6399, %v6402
    %vm6404 = vweird.f32 %v6397
    %vm6405 = vweird.f32 %v6399
    %vm6406 = vmor %vm6404, %vm6405
    %v6407 = vsel %vm6406, %v6399, %v6403
    %v6408 = vand.u32 2147483647, %v6397
    %vm6409 = vcmp.eq.f32.partialorder %v6408, 8.507059e+37
    %v6410 = vand.u32 %v6397, 2147483648
    %v6411 = vor.u32 1.1754944e-38, %v6410
    %v6412 = vsel %vm6409, %v6411, %v6407
    %v6413 = vmul.f32 1.0, %v6412
    %v6414 = vrcp.pop %v6398
    %v6415 = vmul.f32 %v6398, %v6414
    %v6416 = vsub.f32 1.0, %v6415
    %v6417 = vmul.f32 %v6414, %v6416
    %v6418 = vadd.f32 %v6414, %v6417
    %vm6419 = vweird.f32 %v6398
    %vm6420 = vweird.f32 %v6414
    %vm6421 = vmor %vm6419, %vm6420
    %v6422 = vsel %vm6421, %v6414, %v6418
    %v6423 = vand.u32 2147483647, %v6398
    %vm6424 = vcmp.eq.f32.partialorder %v6423, 8.507059e+37
    %v6425 = vand.u32 %v6398, 2147483648
    %v6426 = vor.u32 1.1754944e-38, %v6425
    %v6427 = vsel %vm6424, %v6426, %v6422
    %v6428 = vmul.f32 1.0, %v6427
    %v6429 = vadd.f32 %v5245, %v6361
    %v6430 = vadd.f32 %v5248, %v6364
    %v6431 = vxor.u32 %v6429, 2147483648
    %v6432 = vxor.u32 %v6430, 2147483648
    %v6433 = vmul.f32 %v6431, 1.442695
    %v6434 = vpow.pop %v6433
    %v6435 = vmul.f32 %v6432, 1.442695
    %v6436 = vpow.pop %v6435
    %v6437 = vadd.f32 %v6434, 1.0
    %v6438 = vadd.f32 %v6436, 1.0
    %v6439 = vrcp.pop %v6437
    %v6440 = vmul.f32 %v6437, %v6439
    %v6441 = vsub.f32 1.0, %v6440
    %v6442 = vmul.f32 %v6439, %v6441
    %v6443 = vadd.f32 %v6439, %v6442
    %vm6444 = vweird.f32 %v6437
    %vm6445 = vweird.f32 %v6439
    %vm6446 = vmor %vm6444, %vm6445
    %v6447 = vsel %vm6446, %v6439, %v6443
    %v6448 = vand.u32 2147483647, %v6437
    %vm6449 = vcmp.eq.f32.partialorder %v6448, 8.507059e+37
    %v6450 = vand.u32 %v6437, 2147483648
    %v6451 = vor.u32 1.1754944e-38, %v6450
    %v6452 = vsel %vm6449, %v6451, %v6447
    %v6453 = vmul.f32 1.0, %v6452
    %v6454 = vrcp.pop %v6438
    %v6455 = vmul.f32 %v6438, %v6454
    %v6456 = vsub.f32 1.0, %v6455
    %v6457 = vmul.f32 %v6454, %v6456
    %v6458 = vadd.f32 %v6454, %v6457
    %vm6459 = vweird.f32 %v6438
    %vm6460 = vweird.f32 %v6454
    %vm6461 = vmor %vm6459, %vm6460
    %v6462 = vsel %vm6461, %v6454, %v6458
    %v6463 = vand.u32 2147483647, %v6438
    %vm6464 = vcmp.eq.f32.partialorder %v6463, 8.507059e+37
    %v6465 = vand.u32 %v6438, 2147483648
    %v6466 = vor.u32 1.1754944e-38, %v6465
    %v6467 = vsel %vm6464, %v6466, %v6462
    %v6468 = vmul.f32 1.0, %v6467
    %v6469 = vmul.f32 %v6413, %v6384
    %v6470 = vmul.f32 %v6428, %v6387
    %v6471 = vadd.f32 %v5310, %v6469
    %v6472 = vadd.f32 %v5313, %v6470
    %v6473 = vtanh.pop %v6471
    %v6474 = vtanh.pop %v6472
    %v6475 = vsub.f32 1.0, %v6453
    %v6476 = vsub.f32 1.0, %v6468
    %v6477 = vmul.f32 %v6475, %v6473
    %v6478 = vmul.f32 %v6476, %v6474
    %v6479 = vmul.f32 %v6453, %v6316
    %v6480 = vmul.f32 %v6468, %v6317
    %v6481 = vadd.f32 %v6477, %v6479
    %v6482 = vadd.f32 %v6478, %v6480
    %6483 = vst [vmem:[%s7 + $0x60] sm:$0xff] %v6481
    %6484 = vst [vmem:[%s7 + $0x68] sm:$0xff] %v6482
    %6485 = vmatpush.msra.mxu0 %v5111
    %6486 = vmatpush.msra.mxu0 %v5108
    %6487 = vmatpush.msra.mxu0 %v5105
    %6488 = vmatpush.msra.mxu0 %v5102
    %6489 = vmatpush.msra.mxu0 %v5099
    %6490 = vmatpush.msra.mxu0 %v5096
    %6491 = vmatpush.msra.mxu0 %v5093
    %6492 = vmatpush.msra.mxu0 %v5090
    %6493 = vmatpush.msra.mxu0 %v5087
    %6494 = vmatpush.msra.mxu0 %v5084
    %6495 = vmatpush.msra.mxu0 %v5081
    %6496 = vmatpush.msra.mxu0 %v5078
    %6497 = vmatpush.msra.mxu0 %v5075
    %6498 = vmatpush.msra.mxu0 %v5072
    %6499 = vmatpush.msra.mxu0 %v5069
    %6500 = vmatpush.msra.mxu0 %v5066
    %6501 = vmatmul.f32.gmra.mxu0 %v6481
    %v6502 = vpop.f32.mrf.mxu0
    %v6503 = vadd.f32 %v5327, %v6502
    %6504 = vmatmul.f32.gmra.mxu0 %v6482
    %v6505 = vpop.f32.mrf.mxu0
    %v6506 = vadd.f32 %v5327, %v6505
    %6507 = vdwg.mxu0
    %6508 = vmatpush.msra.mxu0 %v5112
    %6509 = vmatpush.msra.mxu0 %v5109
    %6510 = vmatpush.msra.mxu0 %v5106
    %6511 = vmatpush.msra.mxu0 %v5103
    %6512 = vmatpush.msra.mxu0 %v5100
    %6513 = vmatpush.msra.mxu0 %v5097
    %6514 = vmatpush.msra.mxu0 %v5094
    %6515 = vmatpush.msra.mxu0 %v5091
    %6516 = vmatpush.msra.mxu0 %v5088
    %6517 = vmatpush.msra.mxu0 %v5085
    %6518 = vmatpush.msra.mxu0 %v5082
    %6519 = vmatpush.msra.mxu0 %v5079
    %6520 = vmatpush.msra.mxu0 %v5076
    %6521 = vmatpush.msra.mxu0 %v5073
    %6522 = vmatpush.msra.mxu0 %v5070
    %6523 = vmatpush.msra.mxu0 %v5067
    %6524 = vmatmul.f32.gmra.mxu0 %v6481
    %v6525 = vpop.f32.mrf.mxu0
    %v6526 = vadd.f32 %v5328, %v6525
    %6527 = vmatmul.f32.gmra.mxu0 %v6482
    %v6528 = vpop.f32.mrf.mxu0
    %v6529 = vadd.f32 %v5328, %v6528
    %6530 = vdwg.mxu0
    %6531 = vmatpush.msra.mxu0 %v5113
    %6532 = vmatpush.msra.mxu0 %v5110
    %6533 = vmatpush.msra.mxu0 %v5107
    %6534 = vmatpush.msra.mxu0 %v5104
    %6535 = vmatpush.msra.mxu0 %v5101
    %6536 = vmatpush.msra.mxu0 %v5098
    %6537 = vmatpush.msra.mxu0 %v5095
    %6538 = vmatpush.msra.mxu0 %v5092
    %6539 = vmatpush.msra.mxu0 %v5089
    %6540 = vmatpush.msra.mxu0 %v5086
    %6541 = vmatpush.msra.mxu0 %v5083
    %6542 = vmatpush.msra.mxu0 %v5080
    %6543 = vmatpush.msra.mxu0 %v5077
    %6544 = vmatpush.msra.mxu0 %v5074
    %6545 = vmatpush.msra.mxu0 %v5071
    %6546 = vmatpush.msra.mxu0 %v5068
    %6547 = vmatmul.f32.gmra.mxu0 %v6481
    %v6548 = vpop.f32.mrf.mxu0
    %v6549 = vadd.f32 %v5329, %v6548
    %6550 = vmatmul.f32.gmra.mxu0 %v6482
    %v6551 = vpop.f32.mrf.mxu0
    %v6552 = vadd.f32 %v5329, %v6551
    %6553 = vdwg.mxu0
    %v6554 = vadd.f32 %v5186, %v6503
    %v6555 = vadd.f32 %v5189, %v6506
    %v6556 = vxor.u32 %v6554, 2147483648
    %v6557 = vxor.u32 %v6555, 2147483648
    %v6558 = vmul.f32 %v6556, 1.442695
    %v6559 = vpow.pop %v6558
    %v6560 = vmul.f32 %v6557, 1.442695
    %v6561 = vpow.pop %v6560
    %v6562 = vadd.f32 %v6559, 1.0
    %v6563 = vadd.f32 %v6561, 1.0
    %v6564 = vrcp.pop %v6562
    %v6565 = vmul.f32 %v6562, %v6564
    %v6566 = vsub.f32 1.0, %v6565
    %v6567 = vmul.f32 %v6564, %v6566
    %v6568 = vadd.f32 %v6564, %v6567
    %vm6569 = vweird.f32 %v6562
    %vm6570 = vweird.f32 %v6564
    %vm6571 = vmor %vm6569, %vm6570
    %v6572 = vsel %vm6571, %v6564, %v6568
    %v6573 = vand.u32 2147483647, %v6562
    %vm6574 = vcmp.eq.f32.partialorder %v6573, 8.507059e+37
    %v6575 = vand.u32 %v6562, 2147483648
    %v6576 = vor.u32 1.1754944e-38, %v6575
    %v6577 = vsel %vm6574, %v6576, %v6572
    %v6578 = vmul.f32 1.0, %v6577
    %v6579 = vrcp.pop %v6563
    %v6580 = vmul.f32 %v6563, %v6579
    %v6581 = vsub.f32 1.0, %v6580
    %v6582 = vmul.f32 %v6579, %v6581
    %v6583 = vadd.f32 %v6579, %v6582
    %vm6584 = vweird.f32 %v6563
    %vm6585 = vweird.f32 %v6579
    %vm6586 = vmor %vm6584, %vm6585
    %v6587 = vsel %vm6586, %v6579, %v6583
    %v6588 = vand.u32 2147483647, %v6563
    %vm6589 = vcmp.eq.f32.partialorder %v6588, 8.507059e+37
    %v6590 = vand.u32 %v6563, 2147483648
    %v6591 = vor.u32 1.1754944e-38, %v6590
    %v6592 = vsel %vm6589, %v6591, %v6587
    %v6593 = vmul.f32 1.0, %v6592
    %v6594 = vadd.f32 %v5251, %v6526
    %v6595 = vadd.f32 %v5254, %v6529
    %v6596 = vxor.u32 %v6594, 2147483648
    %v6597 = vxor.u32 %v6595, 2147483648
    %v6598 = vmul.f32 %v6596, 1.442695
    %v6599 = vpow.pop %v6598
    %v6600 = vmul.f32 %v6597, 1.442695
    %v6601 = vpow.pop %v6600
    %v6602 = vadd.f32 %v6599, 1.0
    %v6603 = vadd.f32 %v6601, 1.0
    %v6604 = vrcp.pop %v6602
    %v6605 = vmul.f32 %v6602, %v6604
    %v6606 = vsub.f32 1.0, %v6605
    %v6607 = vmul.f32 %v6604, %v6606
    %v6608 = vadd.f32 %v6604, %v6607
    %vm6609 = vweird.f32 %v6602
    %vm6610 = vweird.f32 %v6604
    %vm6611 = vmor %vm6609, %vm6610
    %v6612 = vsel %vm6611, %v6604, %v6608
    %v6613 = vand.u32 2147483647, %v6602
    %vm6614 = vcmp.eq.f32.partialorder %v6613, 8.507059e+37
    %v6615 = vand.u32 %v6602, 2147483648
    %v6616 = vor.u32 1.1754944e-38, %v6615
    %v6617 = vsel %vm6614, %v6616, %v6612
    %v6618 = vmul.f32 1.0, %v6617
    %v6619 = vrcp.pop %v6603
    %v6620 = vmul.f32 %v6603, %v6619
    %v6621 = vsub.f32 1.0, %v6620
    %v6622 = vmul.f32 %v6619, %v6621
    %v6623 = vadd.f32 %v6619, %v6622
    %vm6624 = vweird.f32 %v6603
    %vm6625 = vweird.f32 %v6619
    %vm6626 = vmor %vm6624, %vm6625
    %v6627 = vsel %vm6626, %v6619, %v6623
    %v6628 = vand.u32 2147483647, %v6603
    %vm6629 = vcmp.eq.f32.partialorder %v6628, 8.507059e+37
    %v6630 = vand.u32 %v6603, 2147483648
    %v6631 = vor.u32 1.1754944e-38, %v6630
    %v6632 = vsel %vm6629, %v6631, %v6627
    %v6633 = vmul.f32 1.0, %v6632
    %v6634 = vmul.f32 %v6578, %v6549
    %v6635 = vmul.f32 %v6593, %v6552
    %v6636 = vadd.f32 %v5316, %v6634
    %v6637 = vadd.f32 %v5319, %v6635
    %v6638 = vtanh.pop %v6636
    %v6639 = vtanh.pop %v6637
    %v6640 = vsub.f32 1.0, %v6618
    %v6641 = vsub.f32 1.0, %v6633
    %v6642 = vmul.f32 %v6640, %v6638
    %v6643 = vmul.f32 %v6641, %v6639
    %v6644 = vmul.f32 %v6618, %v6481
    %v6645 = vmul.f32 %v6633, %v6482
    %v6646 = vadd.f32 %v6642, %v6644
    %v6647 = vadd.f32 %v6643, %v6645
    %6648 = vst [vmem:[%s7 + $0x70] sm:$0xff] %v6646
    %6649 = vst [vmem:[%s7 + $0x78] sm:$0xff] %v6647
    %s6650 = scalar_lea.vmem %s8, 48
    %6651 = vst [vmem:[%s6650] sm:$0xff] %v6646
    %6652 = vst [vmem:[%s6650 + $0x8] sm:$0xff] %v6647
    %v6653 = vld [vmem:[%s7] ss:$16 sm:$0x3]
    %v6654 = vld [vmem:[%s7] ss:$16 sm:$0xc]
    %v6655 = vor.u32 %v6653, %v6654
    %v6656 = vld [vmem:[%s7] ss:$16 sm:$0x30]
    %v6657 = vor.u32 %v6655, %v6656
    %v6658 = vld [vmem:[%s7] ss:$16 sm:$0xc0]
    %v6659 = vor.u32 %v6657, %v6658
    %v6660 = vld [vmem:[%s4] sm:$0xff]
    %v6661 = vld [vmem:[%s4 + $0x8] sm:$0xff]
    %v6662 = vld [vmem:[%s4 + $0x10] sm:$0xff]
    %v6663 = vld [vmem:[%s4 + $0x18] sm:$0xff]
    %v6664 = vld [vmem:[%s4 + $0x20] sm:$0xff]
    %v6665 = vld [vmem:[%s4 + $0x28] sm:$0xff]
    %v6666 = vld [vmem:[%s4 + $0x30] sm:$0xff]
    %v6667 = vld [vmem:[%s4 + $0x38] sm:$0xff]
    %v6668 = vld [vmem:[%s4 + $0x40] sm:$0xff]
    %v6669 = vld [vmem:[%s4 + $0x48] sm:$0xff]
    %v6670 = vld [vmem:[%s4 + $0x50] sm:$0xff]
    %v6671 = vld [vmem:[%s4 + $0x58] sm:$0xff]
    %v6672 = vld [vmem:[%s4 + $0x60] sm:$0xff]
    %v6673 = vld [vmem:[%s4 + $0x68] sm:$0xff]
    %v6674 = vld [vmem:[%s4 + $0x70] sm:$0xff]
    %v6675 = vld [vmem:[%s4 + $0x78] sm:$0xff]
    %s6676 = scalar_lea.vmem %s7, 1
    %v6677 = vld [vmem:[%s6676] ss:$16 sm:$0x3]
    %v6678 = vld [vmem:[%s6676] ss:$16 sm:$0xc]
    %v6679 = vor.u32 %v6677, %v6678
    %v6680 = vld [vmem:[%s6676] ss:$16 sm:$0x30]
    %v6681 = vor.u32 %v6679, %v6680
    %v6682 = vld [vmem:[%s6676] ss:$16 sm:$0xc0]
    %v6683 = vor.u32 %v6681, %v6682
    %v6684 = vld [vmem:[%s4 + $0x80] sm:$0xff]
    %v6685 = vld [vmem:[%s4 + $0x88] sm:$0xff]
    %v6686 = vld [vmem:[%s4 + $0x90] sm:$0xff]
    %v6687 = vld [vmem:[%s4 + $0x98] sm:$0xff]
    %v6688 = vld [vmem:[%s4 + $0xa0] sm:$0xff]
    %v6689 = vld [vmem:[%s4 + $0xa8] sm:$0xff]
    %v6690 = vld [vmem:[%s4 + $0xb0] sm:$0xff]
    %v6691 = vld [vmem:[%s4 + $0xb8] sm:$0xff]
    %v6692 = vld [vmem:[%s4 + $0xc0] sm:$0xff]
    %v6693 = vld [vmem:[%s4 + $0xc8] sm:$0xff]
    %v6694 = vld [vmem:[%s4 + $0xd0] sm:$0xff]
    %v6695 = vld [vmem:[%s4 + $0xd8] sm:$0xff]
    %v6696 = vld [vmem:[%s4 + $0xe0] sm:$0xff]
    %v6697 = vld [vmem:[%s4 + $0xe8] sm:$0xff]
    %v6698 = vld [vmem:[%s4 + $0xf0] sm:$0xff]
    %v6699 = vld [vmem:[%s4 + $0xf8] sm:$0xff]
    %6700 = vmatpush.msra.mxu0 %v6699
    %6701 = vmatpush.msra.mxu0 %v6698
    %6702 = vmatpush.msra.mxu0 %v6697
    %6703 = vmatpush.msra.mxu0 %v6696
    %6704 = vmatpush.msra.mxu0 %v6695
    %6705 = vmatpush.msra.mxu0 %v6694
    %6706 = vmatpush.msra.mxu0 %v6693
    %6707 = vmatpush.msra.mxu0 %v6692
    %6708 = vmatpush.msra.mxu0 %v6691
    %6709 = vmatpush.msra.mxu0 %v6690
    %6710 = vmatpush.msra.mxu0 %v6689
    %6711 = vmatpush.msra.mxu0 %v6688
    %6712 = vmatpush.msra.mxu0 %v6687
    %6713 = vmatpush.msra.mxu0 %v6686
    %6714 = vmatpush.msra.mxu0 %v6685
    %6715 = vmatpush.msra.mxu0 %v6684
    %6716 = vmatmul.f32.gmra.mxu0 %v6683
    %v6717 = vpop.f32.mrf.mxu0
    %v6718 = vadd.f32 0.0, %v6717
    %6719 = vdwg.mxu0
    %6720 = vmatpush.msra.mxu0 %v6675
    %6721 = vmatpush.msra.mxu0 %v6674
    %6722 = vmatpush.msra.mxu0 %v6673
    %6723 = vmatpush.msra.mxu0 %v6672
    %6724 = vmatpush.msra.mxu0 %v6671
    %6725 = vmatpush.msra.mxu0 %v6670
    %6726 = vmatpush.msra.mxu0 %v6669
    %6727 = vmatpush.msra.mxu0 %v6668
    %6728 = vmatpush.msra.mxu0 %v6667
    %6729 = vmatpush.msra.mxu0 %v6666
    %6730 = vmatpush.msra.mxu0 %v6665
    %6731 = vmatpush.msra.mxu0 %v6664
    %6732 = vmatpush.msra.mxu0 %v6663
    %6733 = vmatpush.msra.mxu0 %v6662
    %6734 = vmatpush.msra.mxu0 %v6661
    %6735 = vmatpush.msra.mxu0 %v6660
    %6736 = vmatmul.f32.gmra.mxu0 %v6659
    %v6737 = vpop.f32.mrf.mxu0
    %v6738 = vadd.f32 %v6718, %v6737
    %6739 = vdwg.mxu0
    %s6740 = scalar_lea.vmem %s7, 2
    %v6741 = vld [vmem:[%s6740] ss:$16 sm:$0x3]
    %v6742 = vld [vmem:[%s6740] ss:$16 sm:$0xc]
    %v6743 = vor.u32 %v6741, %v6742
    %v6744 = vld [vmem:[%s6740] ss:$16 sm:$0x30]
    %v6745 = vor.u32 %v6743, %v6744
    %v6746 = vld [vmem:[%s6740] ss:$16 sm:$0xc0]
    %v6747 = vor.u32 %v6745, %v6746
    %v6748 = vld [vmem:[%s4 + $0x100] sm:$0xff]
    %v6749 = vld [vmem:[%s4 + $0x108] sm:$0xff]
    %v6750 = vld [vmem:[%s4 + $0x110] sm:$0xff]
    %v6751 = vld [vmem:[%s4 + $0x118] sm:$0xff]
    %v6752 = vld [vmem:[%s4 + $0x120] sm:$0xff]
    %v6753 = vld [vmem:[%s4 + $0x128] sm:$0xff]
    %v6754 = vld [vmem:[%s4 + $0x130] sm:$0xff]
    %v6755 = vld [vmem:[%s4 + $0x138] sm:$0xff]
    %v6756 = vld [vmem:[%s4 + $0x140] sm:$0xff]
    %v6757 = vld [vmem:[%s4 + $0x148] sm:$0xff]
    %v6758 = vld [vmem:[%s4 + $0x150] sm:$0xff]
    %v6759 = vld [vmem:[%s4 + $0x158] sm:$0xff]
    %v6760 = vld [vmem:[%s4 + $0x160] sm:$0xff]
    %v6761 = vld [vmem:[%s4 + $0x168] sm:$0xff]
    %v6762 = vld [vmem:[%s4 + $0x170] sm:$0xff]
    %v6763 = vld [vmem:[%s4 + $0x178] sm:$0xff]
    %6764 = vmatpush.msra.mxu0 %v6763
    %6765 = vmatpush.msra.mxu0 %v6762
    %6766 = vmatpush.msra.mxu0 %v6761
    %6767 = vmatpush.msra.mxu0 %v6760
    %6768 = vmatpush.msra.mxu0 %v6759
    %6769 = vmatpush.msra.mxu0 %v6758
    %6770 = vmatpush.msra.mxu0 %v6757
    %6771 = vmatpush.msra.mxu0 %v6756
    %6772 = vmatpush.msra.mxu0 %v6755
    %6773 = vmatpush.msra.mxu0 %v6754
    %6774 = vmatpush.msra.mxu0 %v6753
    %6775 = vmatpush.msra.mxu0 %v6752
    %6776 = vmatpush.msra.mxu0 %v6751
    %6777 = vmatpush.msra.mxu0 %v6750
    %6778 = vmatpush.msra.mxu0 %v6749
    %6779 = vmatpush.msra.mxu0 %v6748
    %6780 = vmatmul.f32.gmra.mxu0 %v6747
    %v6781 = vpop.f32.mrf.mxu0
    %v6782 = vadd.f32 0.0, %v6781
    %6783 = vdwg.mxu0
    %v6784 = vadd.f32 %v6738, %v6782
    %s6785 = scalar_lea.vmem %s7, 3
    %v6786 = vld [vmem:[%s6785] ss:$16 sm:$0x3]
    %v6787 = vld [vmem:[%s6785] ss:$16 sm:$0xc]
    %v6788 = vor.u32 %v6786, %v6787
    %v6789 = vld [vmem:[%s6785] ss:$16 sm:$0x30]
    %v6790 = vor.u32 %v6788, %v6789
    %v6791 = vld [vmem:[%s6785] ss:$16 sm:$0xc0]
    %v6792 = vor.u32 %v6790, %v6791
    %v6793 = vld [vmem:[%s4 + $0x180] sm:$0xff]
    %v6794 = vld [vmem:[%s4 + $0x188] sm:$0xff]
    %v6795 = vld [vmem:[%s4 + $0x190] sm:$0xff]
    %v6796 = vld [vmem:[%s4 + $0x198] sm:$0xff]
    %v6797 = vld [vmem:[%s4 + $0x1a0] sm:$0xff]
    %v6798 = vld [vmem:[%s4 + $0x1a8] sm:$0xff]
    %v6799 = vld [vmem:[%s4 + $0x1b0] sm:$0xff]
    %v6800 = vld [vmem:[%s4 + $0x1b8] sm:$0xff]
    %v6801 = vld [vmem:[%s4 + $0x1c0] sm:$0xff]
    %v6802 = vld [vmem:[%s4 + $0x1c8] sm:$0xff]
    %v6803 = vld [vmem:[%s4 + $0x1d0] sm:$0xff]
    %v6804 = vld [vmem:[%s4 + $0x1d8] sm:$0xff]
    %v6805 = vld [vmem:[%s4 + $0x1e0] sm:$0xff]
    %v6806 = vld [vmem:[%s4 + $0x1e8] sm:$0xff]
    %v6807 = vld [vmem:[%s4 + $0x1f0] sm:$0xff]
    %v6808 = vld [vmem:[%s4 + $0x1f8] sm:$0xff]
    %6809 = vmatpush.msra.mxu0 %v6808
    %6810 = vmatpush.msra.mxu0 %v6807
    %6811 = vmatpush.msra.mxu0 %v6806
    %6812 = vmatpush.msra.mxu0 %v6805
    %6813 = vmatpush.msra.mxu0 %v6804
    %6814 = vmatpush.msra.mxu0 %v6803
    %6815 = vmatpush.msra.mxu0 %v6802
    %6816 = vmatpush.msra.mxu0 %v6801
    %6817 = vmatpush.msra.mxu0 %v6800
    %6818 = vmatpush.msra.mxu0 %v6799
    %6819 = vmatpush.msra.mxu0 %v6798
    %6820 = vmatpush.msra.mxu0 %v6797
    %6821 = vmatpush.msra.mxu0 %v6796
    %6822 = vmatpush.msra.mxu0 %v6795
    %6823 = vmatpush.msra.mxu0 %v6794
    %6824 = vmatpush.msra.mxu0 %v6793
    %6825 = vmatmul.f32.gmra.mxu0 %v6792
    %v6826 = vpop.f32.mrf.mxu0
    %v6827 = vadd.f32 0.0, %v6826
    %6828 = vdwg.mxu0
    %v6829 = vadd.f32 %v6784, %v6827
    %s6830 = scalar_lea.vmem %s7, 4
    %v6831 = vld [vmem:[%s6830] ss:$16 sm:$0x3]
    %v6832 = vld [vmem:[%s6830] ss:$16 sm:$0xc]
    %v6833 = vor.u32 %v6831, %v6832
    %v6834 = vld [vmem:[%s6830] ss:$16 sm:$0x30]
    %v6835 = vor.u32 %v6833, %v6834
    %v6836 = vld [vmem:[%s6830] ss:$16 sm:$0xc0]
    %v6837 = vor.u32 %v6835, %v6836
    %v6838 = vld [vmem:[%s4 + $0x200] sm:$0xff]
    %v6839 = vld [vmem:[%s4 + $0x208] sm:$0xff]
    %v6840 = vld [vmem:[%s4 + $0x210] sm:$0xff]
    %v6841 = vld [vmem:[%s4 + $0x218] sm:$0xff]
    %v6842 = vld [vmem:[%s4 + $0x220] sm:$0xff]
    %v6843 = vld [vmem:[%s4 + $0x228] sm:$0xff]
    %v6844 = vld [vmem:[%s4 + $0x230] sm:$0xff]
    %v6845 = vld [vmem:[%s4 + $0x238] sm:$0xff]
    %v6846 = vld [vmem:[%s4 + $0x240] sm:$0xff]
    %v6847 = vld [vmem:[%s4 + $0x248] sm:$0xff]
    %v6848 = vld [vmem:[%s4 + $0x250] sm:$0xff]
    %v6849 = vld [vmem:[%s4 + $0x258] sm:$0xff]
    %v6850 = vld [vmem:[%s4 + $0x260] sm:$0xff]
    %v6851 = vld [vmem:[%s4 + $0x268] sm:$0xff]
    %v6852 = vld [vmem:[%s4 + $0x270] sm:$0xff]
    %v6853 = vld [vmem:[%s4 + $0x278] sm:$0xff]
    %6854 = vmatpush.msra.mxu0 %v6853
    %6855 = vmatpush.msra.mxu0 %v6852
    %6856 = vmatpush.msra.mxu0 %v6851
    %6857 = vmatpush.msra.mxu0 %v6850
    %6858 = vmatpush.msra.mxu0 %v6849
    %6859 = vmatpush.msra.mxu0 %v6848
    %6860 = vmatpush.msra.mxu0 %v6847
    %6861 = vmatpush.msra.mxu0 %v6846
    %6862 = vmatpush.msra.mxu0 %v6845
    %6863 = vmatpush.msra.mxu0 %v6844
    %6864 = vmatpush.msra.mxu0 %v6843
    %6865 = vmatpush.msra.mxu0 %v6842
    %6866 = vmatpush.msra.mxu0 %v6841
    %6867 = vmatpush.msra.mxu0 %v6840
    %6868 = vmatpush.msra.mxu0 %v6839
    %6869 = vmatpush.msra.mxu0 %v6838
    %6870 = vmatmul.f32.gmra.mxu0 %v6837
    %v6871 = vpop.f32.mrf.mxu0
    %v6872 = vadd.f32 0.0, %v6871
    %6873 = vdwg.mxu0
    %v6874 = vadd.f32 %v6829, %v6872
    %s6875 = scalar_lea.vmem %s7, 5
    %v6876 = vld [vmem:[%s6875] ss:$16 sm:$0x3]
    %v6877 = vld [vmem:[%s6875] ss:$16 sm:$0xc]
    %v6878 = vor.u32 %v6876, %v6877
    %v6879 = vld [vmem:[%s6875] ss:$16 sm:$0x30]
    %v6880 = vor.u32 %v6878, %v6879
    %v6881 = vld [vmem:[%s6875] ss:$16 sm:$0xc0]
    %v6882 = vor.u32 %v6880, %v6881
    %v6883 = vld [vmem:[%s4 + $0x280] sm:$0xff]
    %v6884 = vld [vmem:[%s4 + $0x288] sm:$0xff]
    %v6885 = vld [vmem:[%s4 + $0x290] sm:$0xff]
    %v6886 = vld [vmem:[%s4 + $0x298] sm:$0xff]
    %v6887 = vld [vmem:[%s4 + $0x2a0] sm:$0xff]
    %v6888 = vld [vmem:[%s4 + $0x2a8] sm:$0xff]
    %v6889 = vld [vmem:[%s4 + $0x2b0] sm:$0xff]
    %v6890 = vld [vmem:[%s4 + $0x2b8] sm:$0xff]
    %v6891 = vld [vmem:[%s4 + $0x2c0] sm:$0xff]
    %v6892 = vld [vmem:[%s4 + $0x2c8] sm:$0xff]
    %v6893 = vld [vmem:[%s4 + $0x2d0] sm:$0xff]
    %v6894 = vld [vmem:[%s4 + $0x2d8] sm:$0xff]
    %v6895 = vld [vmem:[%s4 + $0x2e0] sm:$0xff]
    %v6896 = vld [vmem:[%s4 + $0x2e8] sm:$0xff]
    %v6897 = vld [vmem:[%s4 + $0x2f0] sm:$0xff]
    %v6898 = vld [vmem:[%s4 + $0x2f8] sm:$0xff]
    %6899 = vmatpush.msra.mxu0 %v6898
    %6900 = vmatpush.msra.mxu0 %v6897
    %6901 = vmatpush.msra.mxu0 %v6896
    %6902 = vmatpush.msra.mxu0 %v6895
    %6903 = vmatpush.msra.mxu0 %v6894
    %6904 = vmatpush.msra.mxu0 %v6893
    %6905 = vmatpush.msra.mxu0 %v6892
    %6906 = vmatpush.msra.mxu0 %v6891
    %6907 = vmatpush.msra.mxu0 %v6890
    %6908 = vmatpush.msra.mxu0 %v6889
    %6909 = vmatpush.msra.mxu0 %v6888
    %6910 = vmatpush.msra.mxu0 %v6887
    %6911 = vmatpush.msra.mxu0 %v6886
    %6912 = vmatpush.msra.mxu0 %v6885
    %6913 = vmatpush.msra.mxu0 %v6884
    %6914 = vmatpush.msra.mxu0 %v6883
    %6915 = vmatmul.f32.gmra.mxu0 %v6882
    %v6916 = vpop.f32.mrf.mxu0
    %v6917 = vadd.f32 0.0, %v6916
    %6918 = vdwg.mxu0
    %v6919 = vadd.f32 %v6874, %v6917
    %s6920 = scalar_lea.vmem %s7, 6
    %v6921 = vld [vmem:[%s6920] ss:$16 sm:$0x3]
    %v6922 = vld [vmem:[%s6920] ss:$16 sm:$0xc]
    %v6923 = vor.u32 %v6921, %v6922
    %v6924 = vld [vmem:[%s6920] ss:$16 sm:$0x30]
    %v6925 = vor.u32 %v6923, %v6924
    %v6926 = vld [vmem:[%s6920] ss:$16 sm:$0xc0]
    %v6927 = vor.u32 %v6925, %v6926
    %v6928 = vld [vmem:[%s4 + $0x300] sm:$0xff]
    %v6929 = vld [vmem:[%s4 + $0x308] sm:$0xff]
    %v6930 = vld [vmem:[%s4 + $0x310] sm:$0xff]
    %v6931 = vld [vmem:[%s4 + $0x318] sm:$0xff]
    %v6932 = vld [vmem:[%s4 + $0x320] sm:$0xff]
    %v6933 = vld [vmem:[%s4 + $0x328] sm:$0xff]
    %v6934 = vld [vmem:[%s4 + $0x330] sm:$0xff]
    %v6935 = vld [vmem:[%s4 + $0x338] sm:$0xff]
    %v6936 = vld [vmem:[%s4 + $0x340] sm:$0xff]
    %v6937 = vld [vmem:[%s4 + $0x348] sm:$0xff]
    %v6938 = vld [vmem:[%s4 + $0x350] sm:$0xff]
    %v6939 = vld [vmem:[%s4 + $0x358] sm:$0xff]
    %v6940 = vld [vmem:[%s4 + $0x360] sm:$0xff]
    %v6941 = vld [vmem:[%s4 + $0x368] sm:$0xff]
    %v6942 = vld [vmem:[%s4 + $0x370] sm:$0xff]
    %v6943 = vld [vmem:[%s4 + $0x378] sm:$0xff]
    %6944 = vmatpush.msra.mxu0 %v6943
    %6945 = vmatpush.msra.mxu0 %v6942
    %6946 = vmatpush.msra.mxu0 %v6941
    %6947 = vmatpush.msra.mxu0 %v6940
    %6948 = vmatpush.msra.mxu0 %v6939
    %6949 = vmatpush.msra.mxu0 %v6938
    %6950 = vmatpush.msra.mxu0 %v6937
    %6951 = vmatpush.msra.mxu0 %v6936
    %6952 = vmatpush.msra.mxu0 %v6935
    %6953 = vmatpush.msra.mxu0 %v6934
    %6954 = vmatpush.msra.mxu0 %v6933
    %6955 = vmatpush.msra.mxu0 %v6932
    %6956 = vmatpush.msra.mxu0 %v6931
    %6957 = vmatpush.msra.mxu0 %v6930
    %6958 = vmatpush.msra.mxu0 %v6929
    %6959 = vmatpush.msra.mxu0 %v6928
    %6960 = vmatmul.f32.gmra.mxu0 %v6927
    %v6961 = vpop.f32.mrf.mxu0
    %v6962 = vadd.f32 0.0, %v6961
    %6963 = vdwg.mxu0
    %v6964 = vadd.f32 %v6919, %v6962
    %s6965 = scalar_lea.vmem %s7, 7
    %v6966 = vld [vmem:[%s6965] ss:$16 sm:$0x3]
    %v6967 = vld [vmem:[%s6965] ss:$16 sm:$0xc]
    %v6968 = vor.u32 %v6966, %v6967
    %v6969 = vld [vmem:[%s6965] ss:$16 sm:$0x30]
    %v6970 = vor.u32 %v6968, %v6969
    %v6971 = vld [vmem:[%s6965] ss:$16 sm:$0xc0]
    %v6972 = vor.u32 %v6970, %v6971
    %v6973 = vld [vmem:[%s4 + $0x380] sm:$0xff]
    %v6974 = vld [vmem:[%s4 + $0x388] sm:$0xff]
    %v6975 = vld [vmem:[%s4 + $0x390] sm:$0xff]
    %v6976 = vld [vmem:[%s4 + $0x398] sm:$0xff]
    %v6977 = vld [vmem:[%s4 + $0x3a0] sm:$0xff]
    %v6978 = vld [vmem:[%s4 + $0x3a8] sm:$0xff]
    %v6979 = vld [vmem:[%s4 + $0x3b0] sm:$0xff]
    %v6980 = vld [vmem:[%s4 + $0x3b8] sm:$0xff]
    %v6981 = vld [vmem:[%s4 + $0x3c0] sm:$0xff]
    %v6982 = vld [vmem:[%s4 + $0x3c8] sm:$0xff]
    %v6983 = vld [vmem:[%s4 + $0x3d0] sm:$0xff]
    %v6984 = vld [vmem:[%s4 + $0x3d8] sm:$0xff]
    %v6985 = vld [vmem:[%s4 + $0x3e0] sm:$0xff]
    %v6986 = vld [vmem:[%s4 + $0x3e8] sm:$0xff]
    %v6987 = vld [vmem:[%s4 + $0x3f0] sm:$0xff]
    %v6988 = vld [vmem:[%s4 + $0x3f8] sm:$0xff]
    %6989 = vmatpush.msra.mxu0 %v6988
    %6990 = vmatpush.msra.mxu0 %v6987
    %6991 = vmatpush.msra.mxu0 %v6986
    %6992 = vmatpush.msra.mxu0 %v6985
    %6993 = vmatpush.msra.mxu0 %v6984
    %6994 = vmatpush.msra.mxu0 %v6983
    %6995 = vmatpush.msra.mxu0 %v6982
    %6996 = vmatpush.msra.mxu0 %v6981
    %6997 = vmatpush.msra.mxu0 %v6980
    %6998 = vmatpush.msra.mxu0 %v6979
    %6999 = vmatpush.msra.mxu0 %v6978
    %7000 = vmatpush.msra.mxu0 %v6977
    %7001 = vmatpush.msra.mxu0 %v6976
    %7002 = vmatpush.msra.mxu0 %v6975
    %7003 = vmatpush.msra.mxu0 %v6974
    %7004 = vmatpush.msra.mxu0 %v6973
    %7005 = vmatmul.f32.gmra.mxu0 %v6972
    %v7006 = vpop.f32.mrf.mxu0
    %v7007 = vadd.f32 0.0, %v7006
    %7008 = vdwg.mxu0
    %v7009 = vadd.f32 %v6964, %v7007
    %s7010 = scalar_lea.vmem %s7, 8
    %v7011 = vld [vmem:[%s7010] ss:$16 sm:$0x3]
    %v7012 = vld [vmem:[%s7010] ss:$16 sm:$0xc]
    %v7013 = vor.u32 %v7011, %v7012
    %v7014 = vld [vmem:[%s7010] ss:$16 sm:$0x30]
    %v7015 = vor.u32 %v7013, %v7014
    %v7016 = vld [vmem:[%s7010] ss:$16 sm:$0xc0]
    %v7017 = vor.u32 %v7015, %v7016
    %v7018 = vld [vmem:[%s4 + $0x400] sm:$0xff]
    %v7019 = vld [vmem:[%s4 + $0x408] sm:$0xff]
    %v7020 = vld [vmem:[%s4 + $0x410] sm:$0xff]
    %v7021 = vld [vmem:[%s4 + $0x418] sm:$0xff]
    %v7022 = vld [vmem:[%s4 + $0x420] sm:$0xff]
    %v7023 = vld [vmem:[%s4 + $0x428] sm:$0xff]
    %v7024 = vld [vmem:[%s4 + $0x430] sm:$0xff]
    %v7025 = vld [vmem:[%s4 + $0x438] sm:$0xff]
    %v7026 = vld [vmem:[%s4 + $0x440] sm:$0xff]
    %v7027 = vld [vmem:[%s4 + $0x448] sm:$0xff]
    %v7028 = vld [vmem:[%s4 + $0x450] sm:$0xff]
    %v7029 = vld [vmem:[%s4 + $0x458] sm:$0xff]
    %v7030 = vld [vmem:[%s4 + $0x460] sm:$0xff]
    %v7031 = vld [vmem:[%s4 + $0x468] sm:$0xff]
    %v7032 = vld [vmem:[%s4 + $0x470] sm:$0xff]
    %v7033 = vld [vmem:[%s4 + $0x478] sm:$0xff]
    %7034 = vmatpush.msra.mxu0 %v7033
    %7035 = vmatpush.msra.mxu0 %v7032
    %7036 = vmatpush.msra.mxu0 %v7031
    %7037 = vmatpush.msra.mxu0 %v7030
    %7038 = vmatpush.msra.mxu0 %v7029
    %7039 = vmatpush.msra.mxu0 %v7028
    %7040 = vmatpush.msra.mxu0 %v7027
    %7041 = vmatpush.msra.mxu0 %v7026
    %7042 = vmatpush.msra.mxu0 %v7025
    %7043 = vmatpush.msra.mxu0 %v7024
    %7044 = vmatpush.msra.mxu0 %v7023
    %7045 = vmatpush.msra.mxu0 %v7022
    %7046 = vmatpush.msra.mxu0 %v7021
    %7047 = vmatpush.msra.mxu0 %v7020
    %7048 = vmatpush.msra.mxu0 %v7019
    %7049 = vmatpush.msra.mxu0 %v7018
    %7050 = vmatmul.f32.gmra.mxu0 %v7017
    %v7051 = vpop.f32.mrf.mxu0
    %v7052 = vadd.f32 0.0, %v7051
    %7053 = vdwg.mxu0
    %v7054 = vadd.f32 %v7009, %v7052
    %s7055 = scalar_lea.vmem %s7, 9
    %v7056 = vld [vmem:[%s7055] ss:$16 sm:$0x3]
    %v7057 = vld [vmem:[%s7055] ss:$16 sm:$0xc]
    %v7058 = vor.u32 %v7056, %v7057
    %v7059 = vld [vmem:[%s7055] ss:$16 sm:$0x30]
    %v7060 = vor.u32 %v7058, %v7059
    %v7061 = vld [vmem:[%s7055] ss:$16 sm:$0xc0]
    %v7062 = vor.u32 %v7060, %v7061
    %v7063 = vld [vmem:[%s4 + $0x480] sm:$0xff]
    %v7064 = vld [vmem:[%s4 + $0x488] sm:$0xff]
    %v7065 = vld [vmem:[%s4 + $0x490] sm:$0xff]
    %v7066 = vld [vmem:[%s4 + $0x498] sm:$0xff]
    %v7067 = vld [vmem:[%s4 + $0x4a0] sm:$0xff]
    %v7068 = vld [vmem:[%s4 + $0x4a8] sm:$0xff]
    %v7069 = vld [vmem:[%s4 + $0x4b0] sm:$0xff]
    %v7070 = vld [vmem:[%s4 + $0x4b8] sm:$0xff]
    %v7071 = vld [vmem:[%s4 + $0x4c0] sm:$0xff]
    %v7072 = vld [vmem:[%s4 + $0x4c8] sm:$0xff]
    %v7073 = vld [vmem:[%s4 + $0x4d0] sm:$0xff]
    %v7074 = vld [vmem:[%s4 + $0x4d8] sm:$0xff]
    %v7075 = vld [vmem:[%s4 + $0x4e0] sm:$0xff]
    %v7076 = vld [vmem:[%s4 + $0x4e8] sm:$0xff]
    %v7077 = vld [vmem:[%s4 + $0x4f0] sm:$0xff]
    %v7078 = vld [vmem:[%s4 + $0x4f8] sm:$0xff]
    %7079 = vmatpush.msra.mxu0 %v7078
    %7080 = vmatpush.msra.mxu0 %v7077
    %7081 = vmatpush.msra.mxu0 %v7076
    %7082 = vmatpush.msra.mxu0 %v7075
    %7083 = vmatpush.msra.mxu0 %v7074
    %7084 = vmatpush.msra.mxu0 %v7073
    %7085 = vmatpush.msra.mxu0 %v7072
    %7086 = vmatpush.msra.mxu0 %v7071
    %7087 = vmatpush.msra.mxu0 %v7070
    %7088 = vmatpush.msra.mxu0 %v7069
    %7089 = vmatpush.msra.mxu0 %v7068
    %7090 = vmatpush.msra.mxu0 %v7067
    %7091 = vmatpush.msra.mxu0 %v7066
    %7092 = vmatpush.msra.mxu0 %v7065
    %7093 = vmatpush.msra.mxu0 %v7064
    %7094 = vmatpush.msra.mxu0 %v7063
    %7095 = vmatmul.f32.gmra.mxu0 %v7062
    %v7096 = vpop.f32.mrf.mxu0
    %v7097 = vadd.f32 0.0, %v7096
    %7098 = vdwg.mxu0
    %v7099 = vadd.f32 %v7054, %v7097
    %s7100 = scalar_lea.vmem %s7, 10
    %v7101 = vld [vmem:[%s7100] ss:$16 sm:$0x3]
    %v7102 = vld [vmem:[%s7100] ss:$16 sm:$0xc]
    %v7103 = vor.u32 %v7101, %v7102
    %v7104 = vld [vmem:[%s7100] ss:$16 sm:$0x30]
    %v7105 = vor.u32 %v7103, %v7104
    %v7106 = vld [vmem:[%s7100] ss:$16 sm:$0xc0]
    %v7107 = vor.u32 %v7105, %v7106
    %v7108 = vld [vmem:[%s4 + $0x500] sm:$0xff]
    %v7109 = vld [vmem:[%s4 + $0x508] sm:$0xff]
    %v7110 = vld [vmem:[%s4 + $0x510] sm:$0xff]
    %v7111 = vld [vmem:[%s4 + $0x518] sm:$0xff]
    %v7112 = vld [vmem:[%s4 + $0x520] sm:$0xff]
    %v7113 = vld [vmem:[%s4 + $0x528] sm:$0xff]
    %v7114 = vld [vmem:[%s4 + $0x530] sm:$0xff]
    %v7115 = vld [vmem:[%s4 + $0x538] sm:$0xff]
    %v7116 = vld [vmem:[%s4 + $0x540] sm:$0xff]
    %v7117 = vld [vmem:[%s4 + $0x548] sm:$0xff]
    %v7118 = vld [vmem:[%s4 + $0x550] sm:$0xff]
    %v7119 = vld [vmem:[%s4 + $0x558] sm:$0xff]
    %v7120 = vld [vmem:[%s4 + $0x560] sm:$0xff]
    %v7121 = vld [vmem:[%s4 + $0x568] sm:$0xff]
    %v7122 = vld [vmem:[%s4 + $0x570] sm:$0xff]
    %v7123 = vld [vmem:[%s4 + $0x578] sm:$0xff]
    %7124 = vmatpush.msra.mxu0 %v7123
    %7125 = vmatpush.msra.mxu0 %v7122
    %7126 = vmatpush.msra.mxu0 %v7121
    %7127 = vmatpush.msra.mxu0 %v7120
    %7128 = vmatpush.msra.mxu0 %v7119
    %7129 = vmatpush.msra.mxu0 %v7118
    %7130 = vmatpush.msra.mxu0 %v7117
    %7131 = vmatpush.msra.mxu0 %v7116
    %7132 = vmatpush.msra.mxu0 %v7115
    %7133 = vmatpush.msra.mxu0 %v7114
    %7134 = vmatpush.msra.mxu0 %v7113
    %7135 = vmatpush.msra.mxu0 %v7112
    %7136 = vmatpush.msra.mxu0 %v7111
    %7137 = vmatpush.msra.mxu0 %v7110
    %7138 = vmatpush.msra.mxu0 %v7109
    %7139 = vmatpush.msra.mxu0 %v7108
    %7140 = vmatmul.f32.gmra.mxu0 %v7107
    %v7141 = vpop.f32.mrf.mxu0
    %v7142 = vadd.f32 0.0, %v7141
    %7143 = vdwg.mxu0
    %v7144 = vadd.f32 %v7099, %v7142
    %s7145 = scalar_lea.vmem %s7, 11
    %v7146 = vld [vmem:[%s7145] ss:$16 sm:$0x3]
    %v7147 = vld [vmem:[%s7145] ss:$16 sm:$0xc]
    %v7148 = vor.u32 %v7146, %v7147
    %v7149 = vld [vmem:[%s7145] ss:$16 sm:$0x30]
    %v7150 = vor.u32 %v7148, %v7149
    %v7151 = vld [vmem:[%s7145] ss:$16 sm:$0xc0]
    %v7152 = vor.u32 %v7150, %v7151
    %v7153 = vld [vmem:[%s4 + $0x580] sm:$0xff]
    %v7154 = vld [vmem:[%s4 + $0x588] sm:$0xff]
    %v7155 = vld [vmem:[%s4 + $0x590] sm:$0xff]
    %v7156 = vld [vmem:[%s4 + $0x598] sm:$0xff]
    %v7157 = vld [vmem:[%s4 + $0x5a0] sm:$0xff]
    %v7158 = vld [vmem:[%s4 + $0x5a8] sm:$0xff]
    %v7159 = vld [vmem:[%s4 + $0x5b0] sm:$0xff]
    %v7160 = vld [vmem:[%s4 + $0x5b8] sm:$0xff]
    %v7161 = vld [vmem:[%s4 + $0x5c0] sm:$0xff]
    %v7162 = vld [vmem:[%s4 + $0x5c8] sm:$0xff]
    %v7163 = vld [vmem:[%s4 + $0x5d0] sm:$0xff]
    %v7164 = vld [vmem:[%s4 + $0x5d8] sm:$0xff]
    %v7165 = vld [vmem:[%s4 + $0x5e0] sm:$0xff]
    %v7166 = vld [vmem:[%s4 + $0x5e8] sm:$0xff]
    %v7167 = vld [vmem:[%s4 + $0x5f0] sm:$0xff]
    %v7168 = vld [vmem:[%s4 + $0x5f8] sm:$0xff]
    %7169 = vmatpush.msra.mxu0 %v7168
    %7170 = vmatpush.msra.mxu0 %v7167
    %7171 = vmatpush.msra.mxu0 %v7166
    %7172 = vmatpush.msra.mxu0 %v7165
    %7173 = vmatpush.msra.mxu0 %v7164
    %7174 = vmatpush.msra.mxu0 %v7163
    %7175 = vmatpush.msra.mxu0 %v7162
    %7176 = vmatpush.msra.mxu0 %v7161
    %7177 = vmatpush.msra.mxu0 %v7160
    %7178 = vmatpush.msra.mxu0 %v7159
    %7179 = vmatpush.msra.mxu0 %v7158
    %7180 = vmatpush.msra.mxu0 %v7157
    %7181 = vmatpush.msra.mxu0 %v7156
    %7182 = vmatpush.msra.mxu0 %v7155
    %7183 = vmatpush.msra.mxu0 %v7154
    %7184 = vmatpush.msra.mxu0 %v7153
    %7185 = vmatmul.f32.gmra.mxu0 %v7152
    %v7186 = vpop.f32.mrf.mxu0
    %v7187 = vadd.f32 0.0, %v7186
    %7188 = vdwg.mxu0
    %v7189 = vadd.f32 %v7144, %v7187
    %v7190 = vld [vmem:[%s6] sm:$0x1]
    %v7191 = vperm.slane %v7190, 0
    %v7192 = vadd.f32 %v7189, %v7191
    %v7193 = vmax.f32 %v7192, 0.0
    %v7194 = vld [vmem:[%s5] sm:$0xff]
    %v7195 = vld [vmem:[%s5 + $0x8] sm:$0xff]
    %v7196 = vld [vmem:[%s5 + $0x10] sm:$0xff]
    %v7197 = vld [vmem:[%s5 + $0x18] sm:$0xff]
    %v7198 = vld [vmem:[%s5 + $0x20] sm:$0xff]
    %v7199 = vld [vmem:[%s5 + $0x28] sm:$0xff]
    %v7200 = vld [vmem:[%s5 + $0x30] sm:$0xff]
    %v7201 = vld [vmem:[%s5 + $0x38] sm:$0xff]
    %v7202 = vld [vmem:[%s6 + $0x1] sm:$0x1]
    %v7203 = vperm.slane %v7202, 0
    %vm7204 = vcmask 523264
    %v7206 = vsel %vm7204, %v7193, 0
    %7208 = vmatpush.msra.mxu0 0.0
    %7209 = vmatpush.msra.mxu0 0.0
    %7210 = vmatpush.msra.mxu0 0.0
    %7211 = vmatpush.msra.mxu0 0.0
    %7212 = vmatpush.msra.mxu0 0.0
    %7213 = vmatpush.msra.mxu0 0.0
    %7214 = vmatpush.msra.mxu0 0.0
    %7215 = vmatpush.msra.mxu0 0.0
    %7216 = vmatpush.msra.mxu0 %v7201
    %7217 = vmatpush.msra.mxu0 %v7200
    %7218 = vmatpush.msra.mxu0 %v7199
    %7219 = vmatpush.msra.mxu0 %v7198
    %7220 = vmatpush.msra.mxu0 %v7197
    %7221 = vmatpush.msra.mxu0 %v7196
    %7222 = vmatpush.msra.mxu0 %v7195
    %7223 = vmatpush.msra.mxu0 %v7194
    %7224 = vmatmul.f32.gmra.mxu0 %v7206
    %v7225 = vpop.f32.mrf.mxu0
    %v7226 = vadd.f32 %v7203, %v7225
    %7227 = vdwg.mxu0
    %v7228 = vmax.f32 %v7226, 0.0
    %v7229 = vld [vmem:[%s5 + $0x40] sm:$0xff]
    %v7230 = vld [vmem:[%s5 + $0x48] sm:$0xff]
    %v7231 = vld [vmem:[%s5 + $0x50] sm:$0xff]
    %v7232 = vld [vmem:[%s5 + $0x58] sm:$0xff]
    %v7233 = vld [vmem:[%s5 + $0x60] sm:$0xff]
    %v7234 = vld [vmem:[%s5 + $0x68] sm:$0xff]
    %v7235 = vld [vmem:[%s5 + $0x70] sm:$0xff]
    %v7236 = vld [vmem:[%s5 + $0x78] sm:$0xff]
    %v7237 = vld [vmem:[%s6 + $0x2] sm:$0x1]
    %v7238 = vperm.slane %v7237, 0
    %v7240 = vsel %vm7204, %v7228, 0
    %7242 = vmatpush.msra.mxu0 0.0
    %7243 = vmatpush.msra.mxu0 0.0
    %7244 = vmatpush.msra.mxu0 0.0
    %7245 = vmatpush.msra.mxu0 0.0
    %7246 = vmatpush.msra.mxu0 0.0
    %7247 = vmatpush.msra.mxu0 0.0
    %7248 = vmatpush.msra.mxu0 0.0
    %7249 = vmatpush.msra.mxu0 0.0
    %7250 = vmatpush.msra.mxu0 %v7236
    %7251 = vmatpush.msra.mxu0 %v7235
    %7252 = vmatpush.msra.mxu0 %v7234
    %7253 = vmatpush.msra.mxu0 %v7233
    %7254 = vmatpush.msra.mxu0 %v7232
    %7255 = vmatpush.msra.mxu0 %v7231
    %7256 = vmatpush.msra.mxu0 %v7230
    %7257 = vmatpush.msra.mxu0 %v7229
    %7258 = vmatmul.f32.gmra.mxu0 %v7240
    %v7259 = vpop.f32.mrf.mxu0
    %v7260 = vadd.f32 %v7238, %v7259
    %7261 = vdwg.mxu0
    %v7262 = vmax.f32 %v7260, 0.0
    %v7263 = vld [vmem:[%s5 + $0x80] sm:$0xff]
    %v7264 = vld [vmem:[%s5 + $0x88] sm:$0xff]
    %v7265 = vld [vmem:[%s5 + $0x90] sm:$0xff]
    %v7266 = vld [vmem:[%s5 + $0x98] sm:$0xff]
    %v7267 = vld [vmem:[%s5 + $0xa0] sm:$0xff]
    %v7268 = vld [vmem:[%s5 + $0xa8] sm:$0xff]
    %v7269 = vld [vmem:[%s5 + $0xb0] sm:$0xff]
    %v7270 = vld [vmem:[%s5 + $0xb8] sm:$0xff]
    %v7271 = vld [vmem:[%s6 + $0x3] sm:$0x1]
    %v7272 = vperm.slane %v7271, 0
    %v7274 = vsel %vm7204, %v7262, 0
    %7276 = vmatpush.msra.mxu0 0.0
    %7277 = vmatpush.msra.mxu0 0.0
    %7278 = vmatpush.msra.mxu0 0.0
    %7279 = vmatpush.msra.mxu0 0.0
    %7280 = vmatpush.msra.mxu0 0.0
    %7281 = vmatpush.msra.mxu0 0.0
    %7282 = vmatpush.msra.mxu0 0.0
    %7283 = vmatpush.msra.mxu0 0.0
    %7284 = vmatpush.msra.mxu0 %v7270
    %7285 = vmatpush.msra.mxu0 %v7269
    %7286 = vmatpush.msra.mxu0 %v7268
    %7287 = vmatpush.msra.mxu0 %v7267
    %7288 = vmatpush.msra.mxu0 %v7266
    %7289 = vmatpush.msra.mxu0 %v7265
    %7290 = vmatpush.msra.mxu0 %v7264
    %7291 = vmatpush.msra.mxu0 %v7263
    %7292 = vmatmul.f32.gmra.mxu0 %v7274
    %v7293 = vpop.f32.mrf.mxu0
    %v7294 = vadd.f32 %v7272, %v7293
    %7295 = vdwg.mxu0
    %v7296 = vmax.f32 %v7294, 0.0
    %v7297 = vld [vmem:[%s5 + $0xc0] sm:$0xff]
    %v7298 = vld [vmem:[%s5 + $0xc8] sm:$0xff]
    %v7299 = vld [vmem:[%s5 + $0xd0] sm:$0xff]
    %v7300 = vld [vmem:[%s5 + $0xd8] sm:$0xff]
    %v7301 = vld [vmem:[%s5 + $0xe0] sm:$0xff]
    %v7302 = vld [vmem:[%s5 + $0xe8] sm:$0xff]
    %v7303 = vld [vmem:[%s5 + $0xf0] sm:$0xff]
    %v7304 = vld [vmem:[%s5 + $0xf8] sm:$0xff]
    %v7305 = vld [vmem:[%s6 + $0x4] sm:$0x1]
    %v7306 = vperm.slane %v7305, 0
    %v7308 = vsel %vm7204, %v7296, 0
    %7310 = vmatpush.msra.mxu0 0.0
    %7311 = vmatpush.msra.mxu0 0.0
    %7312 = vmatpush.msra.mxu0 0.0
    %7313 = vmatpush.msra.mxu0 0.0
    %7314 = vmatpush.msra.mxu0 0.0
    %7315 = vmatpush.msra.mxu0 0.0
    %7316 = vmatpush.msra.mxu0 0.0
    %7317 = vmatpush.msra.mxu0 0.0
    %7318 = vmatpush.msra.mxu0 %v7304
    %7319 = vmatpush.msra.mxu0 %v7303
    %7320 = vmatpush.msra.mxu0 %v7302
    %7321 = vmatpush.msra.mxu0 %v7301
    %7322 = vmatpush.msra.mxu0 %v7300
    %7323 = vmatpush.msra.mxu0 %v7299
    %7324 = vmatpush.msra.mxu0 %v7298
    %7325 = vmatpush.msra.mxu0 %v7297
    %7326 = vmatmul.f32.gmra.mxu0 %v7308
    %v7327 = vpop.f32.mrf.mxu0
    %v7328 = vadd.f32 %v7306, %v7327
    %7329 = vdwg.mxu0
    %vm7330 = vcmask 23552
    %v7331 = vsel %vm7330, %v7328, -inf
    %7332 = vmax.xlane.f32.xlu0 %v7331
    %v7333 = vpop.xlane.xlu0 %7332
    %v7334 = vsub.f32 %v7328, %v7333
    %v7335 = vmul.f32 %v7334, 1.442695
    %v7336 = vpow.pop %v7335
    %v7337 = vsel %vm7330, %v7336, 0.0
    %7338 = vadd.xlane.f32.xlu0 %v7337
    %v7339 = vpop.xlane.xlu0 %7338
    %v7340 = vrcp.pop %v7339
    %v7341 = vmul.f32 %v7339, %v7340
    %v7342 = vsub.f32 1.0, %v7341
    %v7343 = vmul.f32 %v7340, %v7342
    %v7344 = vadd.f32 %v7340, %v7343
    %vm7345 = vweird.f32 %v7339
    %vm7346 = vweird.f32 %v7340
    %vm7347 = vmor %vm7345, %vm7346
    %v7348 = vsel %vm7347, %v7340, %v7344
    %v7349 = vand.u32 2147483647, %v7339
    %vm7350 = vcmp.eq.f32.partialorder %v7349, 8.507059e+37
    %v7351 = vand.u32 %v7339, 2147483648
    %v7352 = vor.u32 1.1754944e-38, %v7351
    %v7353 = vsel %vm7350, %v7352, %v7348
    %v7354 = vmul.f32 %v7336, %v7353
    %7355 = vst.msk [vmem:[%s9] sm:$0xff] %vm7330, %v7354
    // Predicated region
    $region34: #{forward.1} parent=1 // pred_check
      _
    $region35: #{forward.1} parent=1 // pred_check_branch
      %7357 = sbr.rel (0) target = $region37
    $region36: #{forward.1} parent=1 // pred_region
      _
    $region37: #{forward.1} parent=1 // pred_fallthru
      _
    // Predicated region
    $region38: #{forward.1} parent=1 // pred_check
      _
    $region39: #{forward.1} parent=1 // pred_check_branch
      %7359 = sbr.rel (0) target = $region41
    $region40: #{forward.1} parent=1 // pred_region
      _
    $region41: #{forward.1} parent=1 // pred_fallthru
      _
    // Predicated region
    $region42: #{forward.1} parent=1 // pred_check
      _
    $region43: #{forward.1} parent=1 // pred_check_branch
      %7361 = sbr.rel (0) target = $region45
    $region44: #{forward.1} parent=1 // pred_region
      _
    $region45: #{forward.1} parent=1 // pred_fallthru
      _
    // Predicated region
    $region46: #{forward.1} parent=1 // pred_check
      _
    $region47: #{forward.1} parent=1 // pred_check_branch
      %7363 = sbr.rel (0) target = $region49
    $region48: #{forward.1} parent=1 // pred_region
      _
    $region49: #{forward.1} parent=1 // pred_fallthru
      _
    // Predicated region
    $region50: #{forward.1} parent=1 // pred_check
      _
    $region51: #{forward.1} parent=1 // pred_check_branch
      %7365 = sbr.rel (0) target = $region53
    $region52: #{forward.1} parent=1 // pred_region
      _
    $region53: #{forward.1} parent=1 // pred_fallthru
      _
    // Predicated region
    $region54: #{forward.1} parent=1 // pred_check
      _
    $region55: #{forward.1} parent=1 // pred_check_branch
      %7367 = sbr.rel (0) target = $region57
    $region56: #{forward.1} parent=1 // pred_region
      _
    $region57: #{forward.1} parent=1 // pred_fallthru
      _
    %7368 = vsyncpa [#allocation4], 1

</llo_original>
